<compile_context>
chip_gen: v5e
topology: v5e:2x2
jax: 0.10.0
libtpu: 0.0.40
codegen_flags: <defaults>
</compile_context>

<pallas_src>
import jax
import jax.numpy as jnp
import numpy as np
from jax.experimental import pallas as pl
from jax.experimental.pallas import tpu as pltpu

# ----------------------------- model config ---------------------------------
INPUT_X = 32          # positional-encoding channels (small synthetic size)
INPUT_D = 16          # view-direction channels
D_LAYERS = 8
W = 256
SKIP = 5
TM_MAX = 512          # max row tile per grid step (multiple of 256 fills MXU M)


# ------------------------------ Pallas kernel --------------------------------
def nerf_kernel(
    x_ref,
    # packed pts weight: [w0 | w5a]  -> (INPUT_X, 2W)
    w_pts, b0,
    w1, b1, w2, b2, w3, b3, w4, b4,
    w5b, b5,                     # hidden-rows part of the skip layer
    w6, b6, w7, b7,
    w_fa, b_fa,                  # packed [feature | alpha] head -> (W, W+1)
    wv_a, wv_b, bv,              # views layer split: feat rows / views rows
    wr, br,                      # rgb head
    out_ref,
):
    bf16 = jnp.bfloat16
    f32 = jnp.float32
    relu = lambda v: jnp.maximum(v, 0.0)

    pts = x_ref[:, :INPUT_X].astype(bf16)      # (TM, INPUT_X)
    views = x_ref[:, INPUT_X:].astype(bf16)    # (TM, INPUT_D)

    def lin(h, w_r, b_r):
        # bf16 operands on the MXU, f32 accumulation, f32 bias add on the VPU.
        return jnp.dot(h.astype(bf16), w_r[...], preferred_element_type=f32) + b_r[...]

    # One short-K dot covers both layer 0 and the layer-5 skip contribution.
    pts_mm = jnp.dot(pts, w_pts[...], preferred_element_type=f32)   # (TM, 2W)
    h = relu(pts_mm[:, :W] + b0[...])                                # layer 0
    skip_contrib = pts_mm[:, W:]                                     # pts @ w5a

    h = relu(lin(h, w1, b1))
    h = relu(lin(h, w2, b2))
    h = relu(lin(h, w3, b3))
    h = relu(lin(h, w4, b4))
    # skip layer: relu(Linear(cat(pts, h))) == pts @ w5a + h @ w5b + b5
    h = relu(
        jnp.dot(h.astype(bf16), w5b[...], preferred_element_type=f32)
        + skip_contrib
        + b5[...]
    )
    h = relu(lin(h, w6, b6))
    h = relu(lin(h, w7, b7))

    # fused feature + alpha head: cols [0, W) = feature, col W = alpha pre-act
    fa = lin(h, w_fa, b_fa)                    # (TM, W + 1)
    feat = fa[:, :W]                           # (TM, W)   no activation
    alpha = relu(fa[:, W:W + 1])               # (TM, 1)

    # views branch: relu(Linear(cat(feat, views))) == feat @ wv_a + views @ wv_b
    hv = relu(
        jnp.dot(feat.astype(bf16), wv_a[...], preferred_element_type=f32)
        + jnp.dot(views, wv_b[...], preferred_element_type=f32)
        + bv[...]
    )
    rgb = jax.nn.sigmoid(lin(hv, wr, br))      # (TM, 3)

    # direct slice stores into the 4-lane output (no lane-axis concat)
    out_ref[:, 0:3] = rgb.astype(out_ref.dtype)
    out_ref[:, 3:4] = alpha.astype(out_ref.dtype)


# ------------------------------ wrapper --------------------------------------
def nerf_forward(x, params):
    N, din = x.shape
    assert din == INPUT_X + INPUT_D

    # Row tile: full (sublane-rounded) batch when small, else TM_MAX rows per
    # grid step.  Keeps padded/wasted rows minimal for small point batches.
    tm = min(TM_MAX, max(8, pl.cdiv(N, 8) * 8))
    n_pad = pl.cdiv(N, tm) * tm
    if n_pad != N:
        x = jnp.pad(x, ((0, n_pad - N), (0, 0)))

    x_spec = pl.BlockSpec((tm, din), lambda i: (i, 0))
    # weights/biases: full-array blocks with constant index_map -> DMA'd once,
    # kept resident in VMEM across the whole grid.
    param_specs = [pl.BlockSpec(p.shape, lambda i: (0, 0)) for p in params]
    out_spec = pl.BlockSpec((tm, 4), lambda i: (i, 0))

    out = pl.pallas_call(
        nerf_kernel,
        out_shape=jax.ShapeDtypeStruct((n_pad, 4), jnp.float32),
        grid_spec=pl.GridSpec(
            grid=(n_pad // tm,),
            in_specs=[x_spec] + param_specs,
            out_specs=out_spec,
        ),
        compiler_params=pltpu.CompilerParams(
            dimension_semantics=("parallel",),
        ),
    )(x, *params)
    return out[:N] if n_pad != N else out


# --------------------------- parameter construction --------------------------
def init_params(key):
    """Deterministic synthetic weights, packed for the kernel.

    Linear(in, out) is stored as weight (in, out) bf16 + bias (1, out) f32.
    Packing: w_pts = [w0 | w5a] (INPUT_X, 2W); w_fa = [wf | wa] (W, W+1).
    Packing column-wise is bit-exact vs. the unpacked matmuls (each output
    column is computed independently with f32 accumulation).
    """
    keys = iter(jax.random.split(key, 64))

    def lin_params(fan_in, fan_out):
        w = jax.random.normal(next(keys), (fan_in, fan_out), jnp.float32) * (
            1.0 / np.sqrt(fan_in)
        )
        b = jax.random.normal(next(keys), (1, fan_out), jnp.float32) * 0.01
        return w, b

    bf16 = jnp.bfloat16

    # pts_linears
    w0, b0 = lin_params(INPUT_X, W)
    mids = []
    w5a = w5b = b5 = None
    for i in range(1, D_LAYERS):
        if i == SKIP:
            w, b = lin_params(W + INPUT_X, W)
            # torch order is cat((input_pts, out)) -> split weight rows accordingly
            w5a, w5b, b5 = w[:INPUT_X, :], w[INPUT_X:, :], b
        else:
            w, b = lin_params(W, W)
            mids.append((w, b))
    (w1, b1), (w2, b2), (w3, b3), (w4, b4), (w6, b6), (w7, b7) = mids

    # heads
    wa, ba = lin_params(W, 1)
    wf, bf_ = lin_params(W, W)
    wv, bv = lin_params(W + INPUT_D, W // 2)   # input is cat((feature, views))
    wv_a, wv_b = wv[:W, :], wv[W:, :]
    wr, br = lin_params(W // 2, 3)

    # pack: [w0 | w5a] and [wf | wa] (+ matching bias)
    w_pts = jnp.concatenate([w0, w5a], axis=1)           # (INPUT_X, 2W)
    w_fa = jnp.concatenate([wf, wa], axis=1)             # (W, W+1)
    b_fa = jnp.concatenate([bf_, ba], axis=1)            # (1, W+1)

    params = [
        w_pts.astype(bf16), b0,
        w1.astype(bf16), b1, w2.astype(bf16), b2,
        w3.astype(bf16), b3, w4.astype(bf16), b4,
        w5b.astype(bf16), b5,
        w6.astype(bf16), b6, w7.astype(bf16), b7,
        w_fa.astype(bf16), b_fa,
        wv_a.astype(bf16), wv_b.astype(bf16), bv,
        wr.astype(bf16), br,
    ]
    return params


# ------------------------------ pure-JAX reference ---------------------------
def nerf_reference(x, params):
    """Same math as the kernel (bf16 matmul operands, f32 accumulation)."""
    (w_pts, b0, w1, b1, w2, b2, w3, b3, w4, b4, w5b, b5, w6, b6, w7, b7,
     w_fa, b_fa, wv_a, wv_b, bv, wr, br) = params
    bf16, f32 = jnp.bfloat16, jnp.float32
    relu = lambda v: jnp.maximum(v, 0.0)

    def dot(a, b):
        return jnp.dot(a.astype(bf16), b, preferred_element_type=f32)

    pts, views = x[:, :INPUT_X], x[:, INPUT_X:]
    pts_mm = dot(pts, w_pts)
    h = relu(pts_mm[:, :W] + b0)
    skip_contrib = pts_mm[:, W:]
    h = relu(dot(h, w1) + b1)
    h = relu(dot(h, w2) + b2)
    h = relu(dot(h, w3) + b3)
    h = relu(dot(h, w4) + b4)
    h = relu(dot(h, w5b) + skip_contrib + b5)
    h = relu(dot(h, w6) + b6)
    h = relu(dot(h, w7) + b7)
    fa = dot(h, w_fa) + b_fa
    feat, alpha = fa[:, :W], relu(fa[:, W:W + 1])
    hv = relu(dot(feat, wv_a) + dot(views, wv_b) + bv)
    rgb = jax.nn.sigmoid(dot(hv, wr) + br)
    return jnp.concatenate([rgb, alpha], axis=-1)


# ---------------------------------- main --------------------------------------
if __name__ == "__main__":
    key = jax.random.PRNGKey(0)
    k_x, k_p = jax.random.split(key)

    N = 256  # number of sampled points (rows); tiled/padded inside the wrapper
    x = jax.random.normal(k_x, (N, INPUT_X + INPUT_D), jnp.float32)
    params = init_params(k_p)

    out = nerf_forward(x, params)
    out = jax.block_until_ready(out)

    ref = nerf_reference(x, params)
    np.testing.assert_allclose(np.asarray(out), np.asarray(ref), rtol=2e-3, atol=2e-3)

    print("KERNEL_OK")
</pallas_src>

<mosaic_0001>
module attributes {stable_mosaic.version = 11 : i64} {
  func.func @nerf_kernel(%arg0: i32, %arg1: memref<256x48xf32, #tpu.memory_space<vmem>>, %arg2: memref<32x512xbf16, #tpu.memory_space<vmem>>, %arg3: memref<1x256xf32, #tpu.memory_space<vmem>>, %arg4: memref<256x256xbf16, #tpu.memory_space<vmem>>, %arg5: memref<1x256xf32, #tpu.memory_space<vmem>>, %arg6: memref<256x256xbf16, #tpu.memory_space<vmem>>, %arg7: memref<1x256xf32, #tpu.memory_space<vmem>>, %arg8: memref<256x256xbf16, #tpu.memory_space<vmem>>, %arg9: memref<1x256xf32, #tpu.memory_space<vmem>>, %arg10: memref<256x256xbf16, #tpu.memory_space<vmem>>, %arg11: memref<1x256xf32, #tpu.memory_space<vmem>>, %arg12: memref<256x256xbf16, #tpu.memory_space<vmem>>, %arg13: memref<1x256xf32, #tpu.memory_space<vmem>>, %arg14: memref<256x256xbf16, #tpu.memory_space<vmem>>, %arg15: memref<1x256xf32, #tpu.memory_space<vmem>>, %arg16: memref<256x256xbf16, #tpu.memory_space<vmem>>, %arg17: memref<1x256xf32, #tpu.memory_space<vmem>>, %arg18: memref<256x257xbf16, #tpu.memory_space<vmem>>, %arg19: memref<1x257xf32, #tpu.memory_space<vmem>>, %arg20: memref<256x128xbf16, #tpu.memory_space<vmem>>, %arg21: memref<16x128xbf16, #tpu.memory_space<vmem>>, %arg22: memref<1x128xf32, #tpu.memory_space<vmem>>, %arg23: memref<128x3xbf16, #tpu.memory_space<vmem>>, %arg24: memref<1x3xf32, #tpu.memory_space<vmem>>, %arg25: memref<256x4xf32, #tpu.memory_space<vmem>>) attributes {dimension_semantics = [#tpu.dimension_semantics<parallel>], iteration_bounds = array<i64: 1>, scalar_prefetch = 0 : i64, scratch_operands = 0 : i64, tpu.core_type = #tpu.core_type<tc>, window_params = [{transform_indices = @transform_0, window_bounds = array<i64: 256, 48>}, {pipeline_mode = #tpu.pipeline_mode<synchronous>, transform_indices = @transform_1, window_bounds = array<i64: 32, 512>}, {pipeline_mode = #tpu.pipeline_mode<synchronous>, transform_indices = @transform_2, window_bounds = array<i64: 1, 256>}, {pipeline_mode = #tpu.pipeline_mode<synchronous>, transform_indices = @transform_3, window_bounds = array<i64: 256, 256>}, {pipeline_mode = #tpu.pipeline_mode<synchronous>, transform_indices = @transform_4, window_bounds = array<i64: 1, 256>}, {pipeline_mode = #tpu.pipeline_mode<synchronous>, transform_indices = @transform_5, window_bounds = array<i64: 256, 256>}, {pipeline_mode = #tpu.pipeline_mode<synchronous>, transform_indices = @transform_6, window_bounds = array<i64: 1, 256>}, {pipeline_mode = #tpu.pipeline_mode<synchronous>, transform_indices = @transform_7, window_bounds = array<i64: 256, 256>}, {pipeline_mode = #tpu.pipeline_mode<synchronous>, transform_indices = @transform_8, window_bounds = array<i64: 1, 256>}, {pipeline_mode = #tpu.pipeline_mode<synchronous>, transform_indices = @transform_9, window_bounds = array<i64: 256, 256>}, {pipeline_mode = #tpu.pipeline_mode<synchronous>, transform_indices = @transform_10, window_bounds = array<i64: 1, 256>}, {pipeline_mode = #tpu.pipeline_mode<synchronous>, transform_indices = @transform_11, window_bounds = array<i64: 256, 256>}, {pipeline_mode = #tpu.pipeline_mode<synchronous>, transform_indices = @transform_12, window_bounds = array<i64: 1, 256>}, {pipeline_mode = #tpu.pipeline_mode<synchronous>, transform_indices = @transform_13, window_bounds = array<i64: 256, 256>}, {pipeline_mode = #tpu.pipeline_mode<synchronous>, transform_indices = @transform_14, window_bounds = array<i64: 1, 256>}, {pipeline_mode = #tpu.pipeline_mode<synchronous>, transform_indices = @transform_15, window_bounds = array<i64: 256, 256>}, {pipeline_mode = #tpu.pipeline_mode<synchronous>, transform_indices = @transform_16, window_bounds = array<i64: 1, 256>}, {pipeline_mode = #tpu.pipeline_mode<synchronous>, transform_indices = @transform_17, window_bounds = array<i64: 256, 257>}, {pipeline_mode = #tpu.pipeline_mode<synchronous>, transform_indices = @transform_18, window_bounds = array<i64: 1, 257>}, {pipeline_mode = #tpu.pipeline_mode<synchronous>, transform_indices = @transform_19, window_bounds = array<i64: 256, 128>}, {pipeline_mode = #tpu.pipeline_mode<synchronous>, transform_indices = @transform_20, window_bounds = array<i64: 16, 128>}, {pipeline_mode = #tpu.pipeline_mode<synchronous>, transform_indices = @transform_21, window_bounds = array<i64: 1, 128>}, {pipeline_mode = #tpu.pipeline_mode<synchronous>, transform_indices = @transform_22, window_bounds = array<i64: 128, 3>}, {pipeline_mode = #tpu.pipeline_mode<synchronous>, transform_indices = @transform_23, window_bounds = array<i64: 1, 3>}, {transform_indices = @transform_24, window_bounds = array<i64: 256, 4>}]} {
    %c0 = arith.constant 0 : index
    %c0_0 = arith.constant 0 : index
    %0 = vector.load %arg1[%c0, %c0_0] : memref<256x48xf32, #tpu.memory_space<vmem>>, vector<256x32xf32>
    %1 = arith.truncf %0 : vector<256x32xf32> to vector<256x32xbf16>
    %c0_1 = arith.constant 0 : index
    %c32 = arith.constant 32 : index
    %2 = vector.load %arg1[%c0_1, %c32] : memref<256x48xf32, #tpu.memory_space<vmem>>, vector<256x16xf32>
    %3 = arith.truncf %2 : vector<256x16xf32> to vector<256x16xbf16>
    %c0_2 = arith.constant 0 : index
    %c0_3 = arith.constant 0 : index
    %4 = vector.load %arg2[%c0_2, %c0_3] : memref<32x512xbf16, #tpu.memory_space<vmem>>, vector<32x512xbf16>
    %cst = arith.constant dense<0.000000e+00> : vector<256x512xf32>
    %5 = tpu.matmul %1, %4, %cst {dimension_numbers = #tpu.dot_dimension_numbers<[1], [0], [0], [1], [0, 0, 1, 1], [], []>} : vector<256x32xbf16>, vector<32x512xbf16>, vector<256x512xf32> -> vector<256x512xf32>
    %6 = vector.extract_strided_slice %5 {offsets = [0, 0], sizes = [256, 256], strides = [1, 1]} : vector<256x512xf32> to vector<256x256xf32>
    %c0_4 = arith.constant 0 : index
    %c0_5 = arith.constant 0 : index
    %7 = vector.load %arg3[%c0_4, %c0_5] : memref<1x256xf32, #tpu.memory_space<vmem>>, vector<1x256xf32>
    %8 = vector.broadcast %7 : vector<1x256xf32> to vector<256x256xf32>
    %9 = arith.addf %6, %8 : vector<256x256xf32>
    %cst_6 = arith.constant 0.000000e+00 : f32
    %10 = vector.broadcast %cst_6 : f32 to vector<256x256xf32>
    %11 = arith.maximumf %9, %10 : vector<256x256xf32>
    %12 = vector.extract_strided_slice %5 {offsets = [0, 256], sizes = [256, 256], strides = [1, 1]} : vector<256x512xf32> to vector<256x256xf32>
    %13 = arith.truncf %11 : vector<256x256xf32> to vector<256x256xbf16>
    %c0_7 = arith.constant 0 : index
    %c0_8 = arith.constant 0 : index
    %14 = vector.load %arg4[%c0_7, %c0_8] : memref<256x256xbf16, #tpu.memory_space<vmem>>, vector<256x256xbf16>
    %cst_9 = arith.constant dense<0.000000e+00> : vector<256x256xf32>
    %15 = tpu.matmul %13, %14, %cst_9 {dimension_numbers = #tpu.dot_dimension_numbers<[1], [0], [0], [1], [0, 0, 1, 1], [], []>} : vector<256x256xbf16>, vector<256x256xbf16>, vector<256x256xf32> -> vector<256x256xf32>
    %c0_10 = arith.constant 0 : index
    %c0_11 = arith.constant 0 : index
    %16 = vector.load %arg5[%c0_10, %c0_11] : memref<1x256xf32, #tpu.memory_space<vmem>>, vector<1x256xf32>
    %17 = vector.broadcast %16 : vector<1x256xf32> to vector<256x256xf32>
    %18 = arith.addf %15, %17 : vector<256x256xf32>
    %cst_12 = arith.constant 0.000000e+00 : f32
    %19 = vector.broadcast %cst_12 : f32 to vector<256x256xf32>
    %20 = arith.maximumf %18, %19 : vector<256x256xf32>
    %21 = arith.truncf %20 : vector<256x256xf32> to vector<256x256xbf16>
    %c0_13 = arith.constant 0 : index
    %c0_14 = arith.constant 0 : index
    %22 = vector.load %arg6[%c0_13, %c0_14] : memref<256x256xbf16, #tpu.memory_space<vmem>>, vector<256x256xbf16>
    %cst_15 = arith.constant dense<0.000000e+00> : vector<256x256xf32>
    %23 = tpu.matmul %21, %22, %cst_15 {dimension_numbers = #tpu.dot_dimension_numbers<[1], [0], [0], [1], [0, 0, 1, 1], [], []>} : vector<256x256xbf16>, vector<256x256xbf16>, vector<256x256xf32> -> vector<256x256xf32>
    %c0_16 = arith.constant 0 : index
    %c0_17 = arith.constant 0 : index
    %24 = vector.load %arg7[%c0_16, %c0_17] : memref<1x256xf32, #tpu.memory_space<vmem>>, vector<1x256xf32>
    %25 = vector.broadcast %24 : vector<1x256xf32> to vector<256x256xf32>
    %26 = arith.addf %23, %25 : vector<256x256xf32>
    %cst_18 = arith.constant 0.000000e+00 : f32
    %27 = vector.broadcast %cst_18 : f32 to vector<256x256xf32>
    %28 = arith.maximumf %26, %27 : vector<256x256xf32>
    %29 = arith.truncf %28 : vector<256x256xf32> to vector<256x256xbf16>
    %c0_19 = arith.constant 0 : index
    %c0_20 = arith.constant 0 : index
    %30 = vector.load %arg8[%c0_19, %c0_20] : memref<256x256xbf16, #tpu.memory_space<vmem>>, vector<256x256xbf16>
    %cst_21 = arith.constant dense<0.000000e+00> : vector<256x256xf32>
    %31 = tpu.matmul %29, %30, %cst_21 {dimension_numbers = #tpu.dot_dimension_numbers<[1], [0], [0], [1], [0, 0, 1, 1], [], []>} : vector<256x256xbf16>, vector<256x256xbf16>, vector<256x256xf32> -> vector<256x256xf32>
    %c0_22 = arith.constant 0 : index
    %c0_23 = arith.constant 0 : index
    %32 = vector.load %arg9[%c0_22, %c0_23] : memref<1x256xf32, #tpu.memory_space<vmem>>, vector<1x256xf32>
    %33 = vector.broadcast %32 : vector<1x256xf32> to vector<256x256xf32>
    %34 = arith.addf %31, %33 : vector<256x256xf32>
    %cst_24 = arith.constant 0.000000e+00 : f32
    %35 = vector.broadcast %cst_24 : f32 to vector<256x256xf32>
    %36 = arith.maximumf %34, %35 : vector<256x256xf32>
    %37 = arith.truncf %36 : vector<256x256xf32> to vector<256x256xbf16>
    %c0_25 = arith.constant 0 : index
    %c0_26 = arith.constant 0 : index
    %38 = vector.load %arg10[%c0_25, %c0_26] : memref<256x256xbf16, #tpu.memory_space<vmem>>, vector<256x256xbf16>
    %cst_27 = arith.constant dense<0.000000e+00> : vector<256x256xf32>
    %39 = tpu.matmul %37, %38, %cst_27 {dimension_numbers = #tpu.dot_dimension_numbers<[1], [0], [0], [1], [0, 0, 1, 1], [], []>} : vector<256x256xbf16>, vector<256x256xbf16>, vector<256x256xf32> -> vector<256x256xf32>
    %c0_28 = arith.constant 0 : index
    %c0_29 = arith.constant 0 : index
    %40 = vector.load %arg11[%c0_28, %c0_29] : memref<1x256xf32, #tpu.memory_space<vmem>>, vector<1x256xf32>
    %41 = vector.broadcast %40 : vector<1x256xf32> to vector<256x256xf32>
    %42 = arith.addf %39, %41 : vector<256x256xf32>
    %cst_30 = arith.constant 0.000000e+00 : f32
    %43 = vector.broadcast %cst_30 : f32 to vector<256x256xf32>
    %44 = arith.maximumf %42, %43 : vector<256x256xf32>
    %45 = arith.truncf %44 : vector<256x256xf32> to vector<256x256xbf16>
    %c0_31 = arith.constant 0 : index
    %c0_32 = arith.constant 0 : index
    %46 = vector.load %arg12[%c0_31, %c0_32] : memref<256x256xbf16, #tpu.memory_space<vmem>>, vector<256x256xbf16>
    %cst_33 = arith.constant dense<0.000000e+00> : vector<256x256xf32>
    %47 = tpu.matmul %45, %46, %cst_33 {dimension_numbers = #tpu.dot_dimension_numbers<[1], [0], [0], [1], [0, 0, 1, 1], [], []>} : vector<256x256xbf16>, vector<256x256xbf16>, vector<256x256xf32> -> vector<256x256xf32>
    %48 = arith.addf %47, %12 : vector<256x256xf32>
    %c0_34 = arith.constant 0 : index
    %c0_35 = arith.constant 0 : index
    %49 = vector.load %arg13[%c0_34, %c0_35] : memref<1x256xf32, #tpu.memory_space<vmem>>, vector<1x256xf32>
    %50 = vector.broadcast %49 : vector<1x256xf32> to vector<256x256xf32>
    %51 = arith.addf %48, %50 : vector<256x256xf32>
    %cst_36 = arith.constant 0.000000e+00 : f32
    %52 = vector.broadcast %cst_36 : f32 to vector<256x256xf32>
    %53 = arith.maximumf %51, %52 : vector<256x256xf32>
    %54 = arith.truncf %53 : vector<256x256xf32> to vector<256x256xbf16>
    %c0_37 = arith.constant 0 : index
    %c0_38 = arith.constant 0 : index
    %55 = vector.load %arg14[%c0_37, %c0_38] : memref<256x256xbf16, #tpu.memory_space<vmem>>, vector<256x256xbf16>
    %cst_39 = arith.constant dense<0.000000e+00> : vector<256x256xf32>
    %56 = tpu.matmul %54, %55, %cst_39 {dimension_numbers = #tpu.dot_dimension_numbers<[1], [0], [0], [1], [0, 0, 1, 1], [], []>} : vector<256x256xbf16>, vector<256x256xbf16>, vector<256x256xf32> -> vector<256x256xf32>
    %c0_40 = arith.constant 0 : index
    %c0_41 = arith.constant 0 : index
    %57 = vector.load %arg15[%c0_40, %c0_41] : memref<1x256xf32, #tpu.memory_space<vmem>>, vector<1x256xf32>
    %58 = vector.broadcast %57 : vector<1x256xf32> to vector<256x256xf32>
    %59 = arith.addf %56, %58 : vector<256x256xf32>
    %cst_42 = arith.constant 0.000000e+00 : f32
    %60 = vector.broadcast %cst_42 : f32 to vector<256x256xf32>
    %61 = arith.maximumf %59, %60 : vector<256x256xf32>
    %62 = arith.truncf %61 : vector<256x256xf32> to vector<256x256xbf16>
    %c0_43 = arith.constant 0 : index
    %c0_44 = arith.constant 0 : index
    %63 = vector.load %arg16[%c0_43, %c0_44] : memref<256x256xbf16, #tpu.memory_space<vmem>>, vector<256x256xbf16>
    %cst_45 = arith.constant dense<0.000000e+00> : vector<256x256xf32>
    %64 = tpu.matmul %62, %63, %cst_45 {dimension_numbers = #tpu.dot_dimension_numbers<[1], [0], [0], [1], [0, 0, 1, 1], [], []>} : vector<256x256xbf16>, vector<256x256xbf16>, vector<256x256xf32> -> vector<256x256xf32>
    %c0_46 = arith.constant 0 : index
    %c0_47 = arith.constant 0 : index
    %65 = vector.load %arg17[%c0_46, %c0_47] : memref<1x256xf32, #tpu.memory_space<vmem>>, vector<1x256xf32>
    %66 = vector.broadcast %65 : vector<1x256xf32> to vector<256x256xf32>
    %67 = arith.addf %64, %66 : vector<256x256xf32>
    %cst_48 = arith.constant 0.000000e+00 : f32
    %68 = vector.broadcast %cst_48 : f32 to vector<256x256xf32>
    %69 = arith.maximumf %67, %68 : vector<256x256xf32>
    %70 = arith.truncf %69 : vector<256x256xf32> to vector<256x256xbf16>
    %c0_49 = arith.constant 0 : index
    %c0_50 = arith.constant 0 : index
    %71 = vector.load %arg18[%c0_49, %c0_50] : memref<256x257xbf16, #tpu.memory_space<vmem>>, vector<256x257xbf16>
    %cst_51 = arith.constant dense<0.000000e+00> : vector<256x257xf32>
    %72 = tpu.matmul %70, %71, %cst_51 {dimension_numbers = #tpu.dot_dimension_numbers<[1], [0], [0], [1], [0, 0, 1, 1], [], []>} : vector<256x256xbf16>, vector<256x257xbf16>, vector<256x257xf32> -> vector<256x257xf32>
    %c0_52 = arith.constant 0 : index
    %c0_53 = arith.constant 0 : index
    %73 = vector.load %arg19[%c0_52, %c0_53] : memref<1x257xf32, #tpu.memory_space<vmem>>, vector<1x257xf32>
    %74 = vector.broadcast %73 : vector<1x257xf32> to vector<256x257xf32>
    %75 = arith.addf %72, %74 : vector<256x257xf32>
    %76 = vector.extract_strided_slice %75 {offsets = [0, 0], sizes = [256, 256], strides = [1, 1]} : vector<256x257xf32> to vector<256x256xf32>
    %77 = vector.extract_strided_slice %75 {offsets = [0, 256], sizes = [256, 1], strides = [1, 1]} : vector<256x257xf32> to vector<256x1xf32>
    %cst_54 = arith.constant 0.000000e+00 : f32
    %78 = vector.broadcast %cst_54 : f32 to vector<256x1xf32>
    %79 = arith.maximumf %77, %78 : vector<256x1xf32>
    %80 = arith.truncf %76 : vector<256x256xf32> to vector<256x256xbf16>
    %c0_55 = arith.constant 0 : index
    %c0_56 = arith.constant 0 : index
    %81 = vector.load %arg20[%c0_55, %c0_56] : memref<256x128xbf16, #tpu.memory_space<vmem>>, vector<256x128xbf16>
    %cst_57 = arith.constant dense<0.000000e+00> : vector<256x128xf32>
    %82 = tpu.matmul %80, %81, %cst_57 {dimension_numbers = #tpu.dot_dimension_numbers<[1], [0], [0], [1], [0, 0, 1, 1], [], []>} : vector<256x256xbf16>, vector<256x128xbf16>, vector<256x128xf32> -> vector<256x128xf32>
    %c0_58 = arith.constant 0 : index
    %c0_59 = arith.constant 0 : index
    %83 = vector.load %arg21[%c0_58, %c0_59] : memref<16x128xbf16, #tpu.memory_space<vmem>>, vector<16x128xbf16>
    %cst_60 = arith.constant dense<0.000000e+00> : vector<256x128xf32>
    %84 = tpu.matmul %3, %83, %cst_60 {dimension_numbers = #tpu.dot_dimension_numbers<[1], [0], [0], [1], [0, 0, 1, 1], [], []>} : vector<256x16xbf16>, vector<16x128xbf16>, vector<256x128xf32> -> vector<256x128xf32>
    %85 = arith.addf %82, %84 : vector<256x128xf32>
    %c0_61 = arith.constant 0 : index
    %c0_62 = arith.constant 0 : index
    %86 = vector.load %arg22[%c0_61, %c0_62] : memref<1x128xf32, #tpu.memory_space<vmem>>, vector<1x128xf32>
    %87 = vector.broadcast %86 : vector<1x128xf32> to vector<256x128xf32>
    %88 = arith.addf %85, %87 : vector<256x128xf32>
    %cst_63 = arith.constant 0.000000e+00 : f32
    %89 = vector.broadcast %cst_63 : f32 to vector<256x128xf32>
    %90 = arith.maximumf %88, %89 : vector<256x128xf32>
    %91 = arith.truncf %90 : vector<256x128xf32> to vector<256x128xbf16>
    %c0_64 = arith.constant 0 : index
    %c0_65 = arith.constant 0 : index
    %92 = vector.load %arg23[%c0_64, %c0_65] : memref<128x3xbf16, #tpu.memory_space<vmem>>, vector<128x3xbf16>
    %cst_66 = arith.constant dense<0.000000e+00> : vector<256x3xf32>
    %93 = tpu.matmul %91, %92, %cst_66 {dimension_numbers = #tpu.dot_dimension_numbers<[1], [0], [0], [1], [0, 0, 1, 1], [], []>} : vector<256x128xbf16>, vector<128x3xbf16>, vector<256x3xf32> -> vector<256x3xf32>
    %c0_67 = arith.constant 0 : index
    %c0_68 = arith.constant 0 : index
    %94 = vector.load %arg24[%c0_67, %c0_68] : memref<1x3xf32, #tpu.memory_space<vmem>>, vector<1x3xf32>
    %95 = vector.broadcast %94 : vector<1x3xf32> to vector<256x3xf32>
    %96 = arith.addf %93, %95 : vector<256x3xf32>
    %97 = arith.negf %96 : vector<256x3xf32>
    %98 = math.exp %97 : vector<256x3xf32>
    %cst_69 = arith.constant 1.000000e+00 : f32
    %99 = vector.broadcast %cst_69 : f32 to vector<256x3xf32>
    %100 = arith.addf %99, %98 : vector<256x3xf32>
    %101 = arith.divf %99, %100 : vector<256x3xf32>
    %c0_70 = arith.constant 0 : index
    %c0_71 = arith.constant 0 : index
    %102 = vector.load %arg25[%c0_70, %c0_71] : memref<256x4xf32, #tpu.memory_space<vmem>>, vector<256x3xf32>
    tpu.vector_store %arg25[%c0_70, %c0_71], %101 {strides = array<i32>} : memref<256x4xf32, #tpu.memory_space<vmem>>, vector<256x3xf32>,
    %c0_72 = arith.constant 0 : index
    %c3 = arith.constant 3 : index
    %103 = vector.load %arg25[%c0_72, %c3] : memref<256x4xf32, #tpu.memory_space<vmem>>, vector<256x1xf32>
    tpu.vector_store %arg25[%c0_72, %c3], %79 {strides = array<i32>} : memref<256x4xf32, #tpu.memory_space<vmem>>, vector<256x1xf32>,
    return
  }
  func.func @transform_0(%arg0: i32) -> (i32, i32) {
    %c0_i32 = arith.constant 0 : i32
    %c0_i32_0 = arith.constant 0 : i32
    return %arg0, %c0_i32 : i32, i32
  }
  func.func @transform_1(%arg0: i32) -> (i32, i32) {
    %c0_i32 = arith.constant 0 : i32
    %c0_i32_0 = arith.constant 0 : i32
    %c0_i32_1 = arith.constant 0 : i32
    return %c0_i32, %c0_i32_0 : i32, i32
  }
  func.func @transform_2(%arg0: i32) -> (i32, i32) {
    %c0_i32 = arith.constant 0 : i32
    %c0_i32_0 = arith.constant 0 : i32
    %c0_i32_1 = arith.constant 0 : i32
    return %c0_i32, %c0_i32_0 : i32, i32
  }
  func.func @transform_3(%arg0: i32) -> (i32, i32) {
    %c0_i32 = arith.constant 0 : i32
    %c0_i32_0 = arith.constant 0 : i32
    %c0_i32_1 = arith.constant 0 : i32
    return %c0_i32, %c0_i32_0 : i32, i32
  }
  func.func @transform_4(%arg0: i32) -> (i32, i32) {
    %c0_i32 = arith.constant 0 : i32
    %c0_i32_0 = arith.constant 0 : i32
    %c0_i32_1 = arith.constant 0 : i32
    return %c0_i32, %c0_i32_0 : i32, i32
  }
  func.func @transform_5(%arg0: i32) -> (i32, i32) {
    %c0_i32 = arith.constant 0 : i32
    %c0_i32_0 = arith.constant 0 : i32
    %c0_i32_1 = arith.constant 0 : i32
    return %c0_i32, %c0_i32_0 : i32, i32
  }
  func.func @transform_6(%arg0: i32) -> (i32, i32) {
    %c0_i32 = arith.constant 0 : i32
    %c0_i32_0 = arith.constant 0 : i32
    %c0_i32_1 = arith.constant 0 : i32
    return %c0_i32, %c0_i32_0 : i32, i32
  }
  func.func @transform_7(%arg0: i32) -> (i32, i32) {
    %c0_i32 = arith.constant 0 : i32
    %c0_i32_0 = arith.constant 0 : i32
    %c0_i32_1 = arith.constant 0 : i32
    return %c0_i32, %c0_i32_0 : i32, i32
  }
  func.func @transform_8(%arg0: i32) -> (i32, i32) {
    %c0_i32 = arith.constant 0 : i32
    %c0_i32_0 = arith.constant 0 : i32
    %c0_i32_1 = arith.constant 0 : i32
    return %c0_i32, %c0_i32_0 : i32, i32
  }
  func.func @transform_9(%arg0: i32) -> (i32, i32) {
    %c0_i32 = arith.constant 0 : i32
    %c0_i32_0 = arith.constant 0 : i32
    %c0_i32_1 = arith.constant 0 : i32
    return %c0_i32, %c0_i32_0 : i32, i32
  }
  func.func @transform_10(%arg0: i32) -> (i32, i32) {
    %c0_i32 = arith.constant 0 : i32
    %c0_i32_0 = arith.constant 0 : i32
    %c0_i32_1 = arith.constant 0 : i32
    return %c0_i32, %c0_i32_0 : i32, i32
  }
  func.func @transform_11(%arg0: i32) -> (i32, i32) {
    %c0_i32 = arith.constant 0 : i32
    %c0_i32_0 = arith.constant 0 : i32
    %c0_i32_1 = arith.constant 0 : i32
    return %c0_i32, %c0_i32_0 : i32, i32
  }
  func.func @transform_12(%arg0: i32) -> (i32, i32) {
    %c0_i32 = arith.constant 0 : i32
    %c0_i32_0 = arith.constant 0 : i32
    %c0_i32_1 = arith.constant 0 : i32
    return %c0_i32, %c0_i32_0 : i32, i32
  }
  func.func @transform_13(%arg0: i32) -> (i32, i32) {
    %c0_i32 = arith.constant 0 : i32
    %c0_i32_0 = arith.constant 0 : i32
    %c0_i32_1 = arith.constant 0 : i32
    return %c0_i32, %c0_i32_0 : i32, i32
  }
  func.func @transform_14(%arg0: i32) -> (i32, i32) {
    %c0_i32 = arith.constant 0 : i32
    %c0_i32_0 = arith.constant 0 : i32
    %c0_i32_1 = arith.constant 0 : i32
    return %c0_i32, %c0_i32_0 : i32, i32
  }
  func.func @transform_15(%arg0: i32) -> (i32, i32) {
    %c0_i32 = arith.constant 0 : i32
    %c0_i32_0 = arith.constant 0 : i32
    %c0_i32_1 = arith.constant 0 : i32
    return %c0_i32, %c0_i32_0 : i32, i32
  }
  func.func @transform_16(%arg0: i32) -> (i32, i32) {
    %c0_i32 = arith.constant 0 : i32
    %c0_i32_0 = arith.constant 0 : i32
    %c0_i32_1 = arith.constant 0 : i32
    return %c0_i32, %c0_i32_0 : i32, i32
  }
  func.func @transform_17(%arg0: i32) -> (i32, i32) {
    %c0_i32 = arith.constant 0 : i32
    %c0_i32_0 = arith.constant 0 : i32
    %c0_i32_1 = arith.constant 0 : i32
    return %c0_i32, %c0_i32_0 : i32, i32
  }
  func.func @transform_18(%arg0: i32) -> (i32, i32) {
    %c0_i32 = arith.constant 0 : i32
    %c0_i32_0 = arith.constant 0 : i32
    %c0_i32_1 = arith.constant 0 : i32
    return %c0_i32, %c0_i32_0 : i32, i32
  }
  func.func @transform_19(%arg0: i32) -> (i32, i32) {
    %c0_i32 = arith.constant 0 : i32
    %c0_i32_0 = arith.constant 0 : i32
    %c0_i32_1 = arith.constant 0 : i32
    return %c0_i32, %c0_i32_0 : i32, i32
  }
  func.func @transform_20(%arg0: i32) -> (i32, i32) {
    %c0_i32 = arith.constant 0 : i32
    %c0_i32_0 = arith.constant 0 : i32
    %c0_i32_1 = arith.constant 0 : i32
    return %c0_i32, %c0_i32_0 : i32, i32
  }
  func.func @transform_21(%arg0: i32) -> (i32, i32) {
    %c0_i32 = arith.constant 0 : i32
    %c0_i32_0 = arith.constant 0 : i32
    %c0_i32_1 = arith.constant 0 : i32
    return %c0_i32, %c0_i32_0 : i32, i32
  }
  func.func @transform_22(%arg0: i32) -> (i32, i32) {
    %c0_i32 = arith.constant 0 : i32
    %c0_i32_0 = arith.constant 0 : i32
    %c0_i32_1 = arith.constant 0 : i32
    return %c0_i32, %c0_i32_0 : i32, i32
  }
  func.func @transform_23(%arg0: i32) -> (i32, i32) {
    %c0_i32 = arith.constant 0 : i32
    %c0_i32_0 = arith.constant 0 : i32
    %c0_i32_1 = arith.constant 0 : i32
    return %c0_i32, %c0_i32_0 : i32, i32
  }
  func.func @transform_24(%arg0: i32) -> (i32, i32) {
    %c0_i32 = arith.constant 0 : i32
    %c0_i32_0 = arith.constant 0 : i32
    return %arg0, %c0_i32 : i32, i32
  }
}

</mosaic_0001>

<llo_original>
// kernel: tpu_custom_call.1
$region0: #{tpu_custom_call.1}
  #allocation0 [shape = 'u32[]', space=smem, size = 0x4, offset = 0x4, fixed_abs, tag = 'smem constant byte address 0x4 - core index']
  #allocation1 [shape = 'u32[72,128]{1,0:T(1,128)}', space=vmem, size = 0x9000, scoped, tag = 'internal scratch']
  %s0 = inlined_call_operand.vmem [shape: f32[256,48], index: 0, kind: input, shape index: {}]
  %s1 = inlined_call_operand.hbm [shape: bf16[32,512], index: 1, kind: input, shape index: {}]
  %s2 = inlined_call_operand.vmem [shape: f32[1,256], index: 2, kind: input, shape index: {}]
  %s3 = inlined_call_operand.vmem [shape: bf16[256,256], index: 3, kind: input, shape index: {}]
  %s4 = inlined_call_operand.vmem [shape: f32[1,256], index: 4, kind: input, shape index: {}]
  %s5 = inlined_call_operand.vmem [shape: bf16[256,256], index: 5, kind: input, shape index: {}]
  %s6 = inlined_call_operand.vmem [shape: f32[1,256], index: 6, kind: input, shape index: {}]
  %s7 = inlined_call_operand.vmem [shape: bf16[256,256], index: 7, kind: input, shape index: {}]
  %s8 = inlined_call_operand.vmem [shape: f32[1,256], index: 8, kind: input, shape index: {}]
  %s9 = inlined_call_operand.hbm [shape: bf16[256,256], index: 9, kind: input, shape index: {}]
  %s10 = inlined_call_operand.vmem [shape: f32[1,256], index: 10, kind: input, shape index: {}]
  %s11 = inlined_call_operand.hbm [shape: bf16[256,256], index: 11, kind: input, shape index: {}]
  %s12 = inlined_call_operand.vmem [shape: f32[1,256], index: 12, kind: input, shape index: {}]
  %s13 = inlined_call_operand.hbm [shape: bf16[256,256], index: 13, kind: input, shape index: {}]
  %s14 = inlined_call_operand.vmem [shape: f32[1,256], index: 14, kind: input, shape index: {}]
  %s15 = inlined_call_operand.hbm [shape: bf16[256,256], index: 15, kind: input, shape index: {}]
  %s16 = inlined_call_operand.vmem [shape: f32[1,256], index: 16, kind: input, shape index: {}]
  %s17 = inlined_call_operand.vmem [shape: bf16[256,257], index: 17, kind: input, shape index: {}]
  %s18 = inlined_call_operand.vmem [shape: f32[1,257], index: 18, kind: input, shape index: {}]
  %s19 = inlined_call_operand.hbm [shape: bf16[256,128], index: 19, kind: input, shape index: {}]
  %s20 = inlined_call_operand.vmem [shape: bf16[16,128], index: 20, kind: input, shape index: {}]
  %s21 = inlined_call_operand.vmem [shape: f32[1,128], index: 21, kind: input, shape index: {}]
  %s22 = inlined_call_operand.vmem [shape: bf16[128,3], index: 22, kind: input, shape index: {}]
  %s23 = inlined_call_operand.vmem [shape: f32[1,3], index: 23, kind: input, shape index: {}]
  %s24 = inlined_call_operand.vmem [shape: f32[256,4], index: 24, kind: output, shape index: {}]
  %s25 = sld [smem:[#allocation0]]
  $region130: #{tpu_custom_call.1} parent=0
    _
  %s27 = ssub.s32 1, %s25
  %s28 = scalar_select 0, %s27, %s25
  $region1: #{tpu_custom_call.1} parent=0
    #allocation2 [shape = 'u8[32768]{0}', space=vmem, size = 0x8000, scoped, tag = 'input window, operand 1, single buffered']
    #allocation3 [shape = 's32[1]{0}', space=sflag, size = 0x4, scoped, tag = 'scoped memory for tpu_custom_call.1']
    #allocation4 [shape = 'u8[131072]{0}', space=vmem, size = 0x20000, scoped, tag = 'input window, operand 9, single buffered']
    #allocation5 [shape = 's32[1]{0}', space=sflag, size = 0x4, scoped, tag = 'scoped memory for tpu_custom_call.1']
    #allocation6 [shape = 'u8[131072]{0}', space=vmem, size = 0x20000, scoped, tag = 'input window, operand 11, single buffered']
    #allocation7 [shape = 'u8[131072]{0}', space=vmem, size = 0x20000, scoped, tag = 'input window, operand 13, single buffered']
    #allocation8 [shape = 's32[1]{0}', space=sflag, size = 0x4, scoped, tag = 'scoped memory for tpu_custom_call.1']
    #allocation9 [shape = 'u8[131072]{0}', space=vmem, size = 0x20000, scoped, tag = 'input window, operand 15, single buffered']
    #allocation10 [shape = 'u8[65536]{0}', space=vmem, size = 0x10000, scoped, tag = 'input window, operand 19, single buffered']
    #allocation11 [shape = 's32[1]{0}', space=sflag, size = 0x4, scoped, tag = 'scoped memory for tpu_custom_call.1']
    %29 = vsyncpa [#allocation3], 0
    %30 = vsyncpa [#allocation5], 0
    %31 = vsyncpa [#allocation8], 0
    %32 = vsyncpa [#allocation11], 0
    // Predicated region
    $region2: #{tpu_custom_call.1} parent=1 // pred_check
      _
    $region3: #{tpu_custom_call.1} parent=1 // pred_check_branch
      %34 = sbr.rel (0) target = $region5
    $region4: #{tpu_custom_call.1} parent=1 // pred_region
      _
    $region5: #{tpu_custom_call.1} parent=1 // pred_fallthru
      _
    // Predicated region
    $region6: #{tpu_custom_call.1} parent=1 // pred_check
      _
    $region7: #{tpu_custom_call.1} parent=1 // pred_check_branch
      %36 = sbr.rel (0) target = $region9
    $region8: #{tpu_custom_call.1} parent=1 // pred_region
      %38 = vsyncadd [#allocation3], 0
      %s39 = sshll.u32 %s1, 4
      %s40 = int_to_ptr.hbm [resolvable:$true] %s39
      %s41 = sshll.u32 [#allocation2], 4
      %s42 = int_to_ptr.vmem [resolvable:$true] %s41
      %47 = dma.hbm_to_vmem [thread:$0]  %s40, 1024, %s42, [#allocation3], 256, 256, 16
    $region9: #{tpu_custom_call.1} parent=1 // pred_fallthru
      _
    // Predicated region
    $region10: #{tpu_custom_call.1} parent=1 // pred_check
      _
    $region11: #{tpu_custom_call.1} parent=1 // pred_check_branch
      %49 = sbr.rel (0) target = $region13
    $region12: #{tpu_custom_call.1} parent=1 // pred_region
      _
    $region13: #{tpu_custom_call.1} parent=1 // pred_fallthru
      _
    // Predicated region
    $region14: #{tpu_custom_call.1} parent=1 // pred_check
      _
    $region15: #{tpu_custom_call.1} parent=1 // pred_check_branch
      %51 = sbr.rel (0) target = $region17
    $region16: #{tpu_custom_call.1} parent=1 // pred_region
      _
    $region17: #{tpu_custom_call.1} parent=1 // pred_fallthru
      _
    // Predicated region
    $region18: #{tpu_custom_call.1} parent=1 // pred_check
      _
    $region19: #{tpu_custom_call.1} parent=1 // pred_check_branch
      %53 = sbr.rel (0) target = $region21
    $region20: #{tpu_custom_call.1} parent=1 // pred_region
      _
    $region21: #{tpu_custom_call.1} parent=1 // pred_fallthru
      _
    // Predicated region
    $region22: #{tpu_custom_call.1} parent=1 // pred_check
      _
    $region23: #{tpu_custom_call.1} parent=1 // pred_check_branch
      %55 = sbr.rel (0) target = $region25
    $region24: #{tpu_custom_call.1} parent=1 // pred_region
      _
    $region25: #{tpu_custom_call.1} parent=1 // pred_fallthru
      _
    // Predicated region
    $region26: #{tpu_custom_call.1} parent=1 // pred_check
      _
    $region27: #{tpu_custom_call.1} parent=1 // pred_check_branch
      %57 = sbr.rel (0) target = $region29
    $region28: #{tpu_custom_call.1} parent=1 // pred_region
      _
    $region29: #{tpu_custom_call.1} parent=1 // pred_fallthru
      _
    // Predicated region
    $region30: #{tpu_custom_call.1} parent=1 // pred_check
      _
    $region31: #{tpu_custom_call.1} parent=1 // pred_check_branch
      %59 = sbr.rel (0) target = $region33
    $region32: #{tpu_custom_call.1} parent=1 // pred_region
      _
    $region33: #{tpu_custom_call.1} parent=1 // pred_fallthru
      _
    // Predicated region
    $region34: #{tpu_custom_call.1} parent=1 // pred_check
      _
    $region35: #{tpu_custom_call.1} parent=1 // pred_check_branch
      %61 = sbr.rel (0) target = $region37
    $region36: #{tpu_custom_call.1} parent=1 // pred_region
      _
    $region37: #{tpu_custom_call.1} parent=1 // pred_fallthru
      _
    // Predicated region
    $region38: #{tpu_custom_call.1} parent=1 // pred_check
      _
    $region39: #{tpu_custom_call.1} parent=1 // pred_check_branch
      %63 = sbr.rel (0) target = $region41
    $region40: #{tpu_custom_call.1} parent=1 // pred_region
      %65 = vsyncadd [#allocation5], 0
      %s66 = sshll.u32 %s9, 4
      %s67 = int_to_ptr.hbm [resolvable:$true] %s66
      %s68 = sshll.u32 [#allocation4], 4
      %s69 = int_to_ptr.vmem [resolvable:$true] %s68
      %74 = dma.hbm_to_vmem [thread:$0]  %s67, 4096, %s69, [#allocation5], 128, 128, 8
    $region41: #{tpu_custom_call.1} parent=1 // pred_fallthru
      _
    // Predicated region
    $region42: #{tpu_custom_call.1} parent=1 // pred_check
      _
    $region43: #{tpu_custom_call.1} parent=1 // pred_check_branch
      %76 = sbr.rel (0) target = $region45
    $region44: #{tpu_custom_call.1} parent=1 // pred_region
      _
    $region45: #{tpu_custom_call.1} parent=1 // pred_fallthru
      _
    // Predicated region
    $region46: #{tpu_custom_call.1} parent=1 // pred_check
      _
    $region47: #{tpu_custom_call.1} parent=1 // pred_check_branch
      %78 = sbr.rel (0) target = $region49
    $region48: #{tpu_custom_call.1} parent=1 // pred_region
      %80 = vsyncadd [#allocation5], 0
      %s81 = sshll.u32 %s11, 4
      %s82 = int_to_ptr.hbm [resolvable:$true] %s81
      %s83 = sshll.u32 [#allocation6], 4
      %s84 = int_to_ptr.vmem [resolvable:$true] %s83
      %89 = dma.hbm_to_vmem [thread:$0]  %s82, 4096, %s84, [#allocation5], 128, 128, 8
    $region49: #{tpu_custom_call.1} parent=1 // pred_fallthru
      _
    // Predicated region
    $region50: #{tpu_custom_call.1} parent=1 // pred_check
      _
    $region51: #{tpu_custom_call.1} parent=1 // pred_check_branch
      %91 = sbr.rel (0) target = $region53
    $region52: #{tpu_custom_call.1} parent=1 // pred_region
      _
    $region53: #{tpu_custom_call.1} parent=1 // pred_fallthru
      _
    // Predicated region
    $region54: #{tpu_custom_call.1} parent=1 // pred_check
      _
    $region55: #{tpu_custom_call.1} parent=1 // pred_check_branch
      %93 = sbr.rel (0) target = $region57
    $region56: #{tpu_custom_call.1} parent=1 // pred_region
      %95 = vsyncadd [#allocation8], 0
      %s96 = sshll.u32 %s13, 4
      %s97 = int_to_ptr.hbm [resolvable:$true] %s96
      %s98 = sshll.u32 [#allocation7], 4
      %s99 = int_to_ptr.vmem [resolvable:$true] %s98
      %104 = dma.hbm_to_vmem [thread:$0]  %s97, 4096, %s99, [#allocation8], 128, 128, 8
    $region57: #{tpu_custom_call.1} parent=1 // pred_fallthru
      _
    // Predicated region
    $region58: #{tpu_custom_call.1} parent=1 // pred_check
      _
    $region59: #{tpu_custom_call.1} parent=1 // pred_check_branch
      %106 = sbr.rel (0) target = $region61
    $region60: #{tpu_custom_call.1} parent=1 // pred_region
      _
    $region61: #{tpu_custom_call.1} parent=1 // pred_fallthru
      _
    // Predicated region
    $region62: #{tpu_custom_call.1} parent=1 // pred_check
      _
    $region63: #{tpu_custom_call.1} parent=1 // pred_check_branch
      %108 = sbr.rel (0) target = $region65
    $region64: #{tpu_custom_call.1} parent=1 // pred_region
      %110 = vsyncadd [#allocation8], 0
      %s111 = sshll.u32 %s15, 4
      %s112 = int_to_ptr.hbm [resolvable:$true] %s111
      %s113 = sshll.u32 [#allocation9], 4
      %s114 = int_to_ptr.vmem [resolvable:$true] %s113
      %119 = dma.hbm_to_vmem [thread:$0]  %s112, 4096, %s114, [#allocation8], 128, 128, 8
    $region65: #{tpu_custom_call.1} parent=1 // pred_fallthru
      _
    // Predicated region
    $region66: #{tpu_custom_call.1} parent=1 // pred_check
      _
    $region67: #{tpu_custom_call.1} parent=1 // pred_check_branch
      %121 = sbr.rel (0) target = $region69
    $region68: #{tpu_custom_call.1} parent=1 // pred_region
      _
    $region69: #{tpu_custom_call.1} parent=1 // pred_fallthru
      _
    // Predicated region
    $region70: #{tpu_custom_call.1} parent=1 // pred_check
      _
    $region71: #{tpu_custom_call.1} parent=1 // pred_check_branch
      %123 = sbr.rel (0) target = $region73
    $region72: #{tpu_custom_call.1} parent=1 // pred_region
      _
    $region73: #{tpu_custom_call.1} parent=1 // pred_fallthru
      _
    // Predicated region
    $region74: #{tpu_custom_call.1} parent=1 // pred_check
      _
    $region75: #{tpu_custom_call.1} parent=1 // pred_check_branch
      %125 = sbr.rel (0) target = $region77
    $region76: #{tpu_custom_call.1} parent=1 // pred_region
      _
    $region77: #{tpu_custom_call.1} parent=1 // pred_fallthru
      _
    // Predicated region
    $region78: #{tpu_custom_call.1} parent=1 // pred_check
      _
    $region79: #{tpu_custom_call.1} parent=1 // pred_check_branch
      %127 = sbr.rel (0) target = $region81
    $region80: #{tpu_custom_call.1} parent=1 // pred_region
      %129 = vsyncadd [#allocation11], 0
      %s130 = sshll.u32 %s19, 4
      %s131 = int_to_ptr.hbm [resolvable:$true] %s130
      %s132 = sshll.u32 [#allocation10], 4
      %s133 = int_to_ptr.vmem [resolvable:$true] %s132
      %138 = dma.hbm_to_vmem [thread:$0]  %s131, 2048, %s133, [#allocation11], 64, 64, 4
    $region81: #{tpu_custom_call.1} parent=1 // pred_fallthru
      _
    // Predicated region
    $region82: #{tpu_custom_call.1} parent=1 // pred_check
      _
    $region83: #{tpu_custom_call.1} parent=1 // pred_check_branch
      %140 = sbr.rel (0) target = $region85
    $region84: #{tpu_custom_call.1} parent=1 // pred_region
      _
    $region85: #{tpu_custom_call.1} parent=1 // pred_fallthru
      _
    // Predicated region
    $region86: #{tpu_custom_call.1} parent=1 // pred_check
      _
    $region87: #{tpu_custom_call.1} parent=1 // pred_check_branch
      %142 = sbr.rel (0) target = $region89
    $region88: #{tpu_custom_call.1} parent=1 // pred_region
      _
    $region89: #{tpu_custom_call.1} parent=1 // pred_fallthru
      _
    // Predicated region
    $region90: #{tpu_custom_call.1} parent=1 // pred_check
      _
    $region91: #{tpu_custom_call.1} parent=1 // pred_check_branch
      %144 = sbr.rel (0) target = $region93
    $region92: #{tpu_custom_call.1} parent=1 // pred_region
      _
    $region93: #{tpu_custom_call.1} parent=1 // pred_fallthru
      _
    // Predicated region
    $region94: #{tpu_custom_call.1} parent=1 // pred_check
      _
    $region95: #{tpu_custom_call.1} parent=1 // pred_check_branch
      %146 = sbr.rel (0) target = $region97
    $region96: #{tpu_custom_call.1} parent=1 // pred_region
      _
    $region97: #{tpu_custom_call.1} parent=1 // pred_fallthru
      _
    // Predicated region
    $region98: #{tpu_custom_call.1} parent=1 // pred_check
      _
    $region99: #{tpu_custom_call.1} parent=1 // pred_check_branch
      %148 = sbr.rel (0) target = $region101
    $region100: #{tpu_custom_call.1} parent=1 // pred_region
      %150 = dma.done [#allocation3], 1024
    $region101: #{tpu_custom_call.1} parent=1 // pred_fallthru
      _
    // Predicated region
    $region102: #{tpu_custom_call.1} parent=1 // pred_check
      _
    $region103: #{tpu_custom_call.1} parent=1 // pred_check_branch
      %152 = sbr.rel (0) target = $region105
    $region104: #{tpu_custom_call.1} parent=1 // pred_region
      %154 = dma.done [#allocation5], 4096
    $region105: #{tpu_custom_call.1} parent=1 // pred_fallthru
      _
    // Predicated region
    $region106: #{tpu_custom_call.1} parent=1 // pred_check
      _
    $region107: #{tpu_custom_call.1} parent=1 // pred_check_branch
      %156 = sbr.rel (0) target = $region109
    $region108: #{tpu_custom_call.1} parent=1 // pred_region
      %158 = dma.done [#allocation5], 4096
    $region109: #{tpu_custom_call.1} parent=1 // pred_fallthru
      _
    // Predicated region
    $region110: #{tpu_custom_call.1} parent=1 // pred_check
      _
    $region111: #{tpu_custom_call.1} parent=1 // pred_check_branch
      %160 = sbr.rel (0) target = $region113
    $region112: #{tpu_custom_call.1} parent=1 // pred_region
      %162 = dma.done [#allocation8], 4096
    $region113: #{tpu_custom_call.1} parent=1 // pred_fallthru
      _
    // Predicated region
    $region114: #{tpu_custom_call.1} parent=1 // pred_check
      _
    $region115: #{tpu_custom_call.1} parent=1 // pred_check_branch
      %164 = sbr.rel (0) target = $region117
    $region116: #{tpu_custom_call.1} parent=1 // pred_region
      %166 = dma.done [#allocation8], 4096
    $region117: #{tpu_custom_call.1} parent=1 // pred_fallthru
      _
    // Predicated region
    $region118: #{tpu_custom_call.1} parent=1 // pred_check
      _
    $region119: #{tpu_custom_call.1} parent=1 // pred_check_branch
      %168 = sbr.rel (0) target = $region121
    $region120: #{tpu_custom_call.1} parent=1 // pred_region
      %170 = dma.done [#allocation11], 2048
    $region121: #{tpu_custom_call.1} parent=1 // pred_fallthru
      _
    %v172 = vld [vmem:[%s0] sm:$0xff]
    %v173 = vld [vmem:[%s0 + $0x8] sm:$0xff]
    %v174 = vld [vmem:[%s0 + $0x10] sm:$0xff]
    %v175 = vld [vmem:[%s0 + $0x18] sm:$0xff]
    %v176 = vld [vmem:[%s0 + $0x20] sm:$0xff]
    %v177 = vld [vmem:[%s0 + $0x28] sm:$0xff]
    %v178 = vld [vmem:[%s0 + $0x30] sm:$0xff]
    %v179 = vld [vmem:[%s0 + $0x38] sm:$0xff]
    %v180 = vld [vmem:[%s0 + $0x40] sm:$0xff]
    %v181 = vld [vmem:[%s0 + $0x48] sm:$0xff]
    %v182 = vld [vmem:[%s0 + $0x50] sm:$0xff]
    %v183 = vld [vmem:[%s0 + $0x58] sm:$0xff]
    %v184 = vld [vmem:[%s0 + $0x60] sm:$0xff]
    %v185 = vld [vmem:[%s0 + $0x68] sm:$0xff]
    %v186 = vld [vmem:[%s0 + $0x70] sm:$0xff]
    %v187 = vld [vmem:[%s0 + $0x78] sm:$0xff]
    %v188 = vld [vmem:[%s0 + $0x80] sm:$0xff]
    %v189 = vld [vmem:[%s0 + $0x88] sm:$0xff]
    %v190 = vld [vmem:[%s0 + $0x90] sm:$0xff]
    %v191 = vld [vmem:[%s0 + $0x98] sm:$0xff]
    %v192 = vld [vmem:[%s0 + $0xa0] sm:$0xff]
    %v193 = vld [vmem:[%s0 + $0xa8] sm:$0xff]
    %v194 = vld [vmem:[%s0 + $0xb0] sm:$0xff]
    %v195 = vld [vmem:[%s0 + $0xb8] sm:$0xff]
    %v196 = vld [vmem:[%s0 + $0xc0] sm:$0xff]
    %v197 = vld [vmem:[%s0 + $0xc8] sm:$0xff]
    %v198 = vld [vmem:[%s0 + $0xd0] sm:$0xff]
    %v199 = vld [vmem:[%s0 + $0xd8] sm:$0xff]
    %v200 = vld [vmem:[%s0 + $0xe0] sm:$0xff]
    %v201 = vld [vmem:[%s0 + $0xe8] sm:$0xff]
    %v202 = vld [vmem:[%s0 + $0xf0] sm:$0xff]
    %v203 = vld [vmem:[%s0 + $0xf8] sm:$0xff]
    %v204 = vpack.c.bf16 %v173, %v172
    %v205 = vpack.c.bf16 %v175, %v174
    %v206 = vpack.c.bf16 %v177, %v176
    %v207 = vpack.c.bf16 %v179, %v178
    %v208 = vpack.c.bf16 %v181, %v180
    %v209 = vpack.c.bf16 %v183, %v182
    %v210 = vpack.c.bf16 %v185, %v184
    %v211 = vpack.c.bf16 %v187, %v186
    %v212 = vpack.c.bf16 %v189, %v188
    %v213 = vpack.c.bf16 %v191, %v190
    %v214 = vpack.c.bf16 %v193, %v192
    %v215 = vpack.c.bf16 %v195, %v194
    %v216 = vpack.c.bf16 %v197, %v196
    %v217 = vpack.c.bf16 %v199, %v198
    %v218 = vpack.c.bf16 %v201, %v200
    %v219 = vpack.c.bf16 %v203, %v202
    %v220 = vld [vmem:[#allocation2] sm:$0xff]
    %v221 = vld [vmem:[#allocation2 + $0x8] sm:$0xff]
    %v222 = vld [vmem:[#allocation2 + $0x10] sm:$0xff]
    %v223 = vld [vmem:[#allocation2 + $0x18] sm:$0xff]
    %v224 = vld [vmem:[#allocation2 + $0x20] sm:$0xff]
    %v225 = vld [vmem:[#allocation2 + $0x28] sm:$0xff]
    %v226 = vld [vmem:[#allocation2 + $0x30] sm:$0xff]
    %v227 = vld [vmem:[#allocation2 + $0x38] sm:$0xff]
    %v236 = vunpack.c.l.b16 %v220
    %v237 = vunpack.c.h.b16 %v220
    %v238 = vunpack.c.l.b16 %v221
    %v239 = vunpack.c.h.b16 %v221
    %v240 = vunpack.c.l.b16 %v222
    %v241 = vunpack.c.h.b16 %v222
    %v242 = vunpack.c.l.b16 %v223
    %v243 = vunpack.c.h.b16 %v223
    %v244 = vunpack.c.l.b16 %v224
    %v245 = vunpack.c.h.b16 %v224
    %v246 = vunpack.c.l.b16 %v225
    %v247 = vunpack.c.h.b16 %v225
    %v248 = vunpack.c.l.b16 %v226
    %v249 = vunpack.c.h.b16 %v226
    %v250 = vunpack.c.l.b16 %v227
    %v251 = vunpack.c.h.b16 %v227
    %v252 = vpack.c.b16 %v240, %v236
    %v253 = vpack.c.b16 %v241, %v237
    %v254 = vpack.c.b16 %v242, %v238
    %v255 = vpack.c.b16 %v243, %v239
    %v256 = vpack.c.b16 %v248, %v244
    %v257 = vpack.c.b16 %v249, %v245
    %v258 = vpack.c.b16 %v250, %v246
    %v259 = vpack.c.b16 %v251, %v247
    %vm268 = vcmask 261120
    %v270 = vsel %vm268, %v204, 0
    %v273 = vsel %vm268, %v205, 0
    %v276 = vsel %vm268, %v206, 0
    %v279 = vsel %vm268, %v207, 0
    %v282 = vsel %vm268, %v208, 0
    %v285 = vsel %vm268, %v209, 0
    %v288 = vsel %vm268, %v210, 0
    %v291 = vsel %vm268, %v211, 0
    %v294 = vsel %vm268, %v212, 0
    %v297 = vsel %vm268, %v213, 0
    %v300 = vsel %vm268, %v214, 0
    %v303 = vsel %vm268, %v215, 0
    %v306 = vsel %vm268, %v216, 0
    %v309 = vsel %vm268, %v217, 0
    %v312 = vsel %vm268, %v218, 0
    %v315 = vsel %vm268, %v219, 0
    %317 = vmatpush.bf16.msra.mxu0 0
    %318 = vmatpush.bf16.msra.mxu0 0
    %319 = vmatpush.bf16.msra.mxu0 0
    %320 = vmatpush.bf16.msra.mxu0 0
    %321 = vmatpush.bf16.msra.mxu0 0
    %322 = vmatpush.bf16.msra.mxu0 0
    %323 = vmatpush.bf16.msra.mxu0 %v256
    %324 = vmatpush.bf16.msra.mxu0 %v252
    %325 = vmatmul.bf16.gmra.mxu0 %v270
    %v326 = vpop.f32.mrf.mxu0
    %v327 = vadd.f32 0.0, %v326
    %v328 = vpop.f32.mrf.mxu0
    %v329 = vadd.f32 0.0, %v328
    %330 = vmatmul.bf16.gmra.mxu0 %v273
    %v331 = vpop.f32.mrf.mxu0
    %v332 = vadd.f32 0.0, %v331
    %v333 = vpop.f32.mrf.mxu0
    %v334 = vadd.f32 0.0, %v333
    %335 = vmatmul.bf16.gmra.mxu0 %v276
    %v336 = vpop.f32.mrf.mxu0
    %v337 = vadd.f32 0.0, %v336
    %v338 = vpop.f32.mrf.mxu0
    %v339 = vadd.f32 0.0, %v338
    %340 = vmatmul.bf16.gmra.mxu0 %v279
    %v341 = vpop.f32.mrf.mxu0
    %v342 = vadd.f32 0.0, %v341
    %v343 = vpop.f32.mrf.mxu0
    %v344 = vadd.f32 0.0, %v343
    %345 = vmatmul.bf16.gmra.mxu0 %v282
    %v346 = vpop.f32.mrf.mxu0
    %v347 = vadd.f32 0.0, %v346
    %v348 = vpop.f32.mrf.mxu0
    %v349 = vadd.f32 0.0, %v348
    %350 = vmatmul.bf16.gmra.mxu0 %v285
    %v351 = vpop.f32.mrf.mxu0
    %v352 = vadd.f32 0.0, %v351
    %v353 = vpop.f32.mrf.mxu0
    %v354 = vadd.f32 0.0, %v353
    %355 = vmatmul.bf16.gmra.mxu0 %v288
    %v356 = vpop.f32.mrf.mxu0
    %v357 = vadd.f32 0.0, %v356
    %v358 = vpop.f32.mrf.mxu0
    %v359 = vadd.f32 0.0, %v358
    %360 = vmatmul.bf16.gmra.mxu0 %v291
    %v361 = vpop.f32.mrf.mxu0
    %v362 = vadd.f32 0.0, %v361
    %v363 = vpop.f32.mrf.mxu0
    %v364 = vadd.f32 0.0, %v363
    %365 = vmatmul.bf16.gmra.mxu0 %v294
    %v366 = vpop.f32.mrf.mxu0
    %v367 = vadd.f32 0.0, %v366
    %v368 = vpop.f32.mrf.mxu0
    %v369 = vadd.f32 0.0, %v368
    %370 = vmatmul.bf16.gmra.mxu0 %v297
    %v371 = vpop.f32.mrf.mxu0
    %v372 = vadd.f32 0.0, %v371
    %v373 = vpop.f32.mrf.mxu0
    %v374 = vadd.f32 0.0, %v373
    %375 = vmatmul.bf16.gmra.mxu0 %v300
    %v376 = vpop.f32.mrf.mxu0
    %v377 = vadd.f32 0.0, %v376
    %v378 = vpop.f32.mrf.mxu0
    %v379 = vadd.f32 0.0, %v378
    %380 = vmatmul.bf16.gmra.mxu0 %v303
    %v381 = vpop.f32.mrf.mxu0
    %v382 = vadd.f32 0.0, %v381
    %v383 = vpop.f32.mrf.mxu0
    %v384 = vadd.f32 0.0, %v383
    %385 = vmatmul.bf16.gmra.mxu0 %v306
    %v386 = vpop.f32.mrf.mxu0
    %v387 = vadd.f32 0.0, %v386
    %v388 = vpop.f32.mrf.mxu0
    %v389 = vadd.f32 0.0, %v388
    %390 = vmatmul.bf16.gmra.mxu0 %v309
    %v391 = vpop.f32.mrf.mxu0
    %v392 = vadd.f32 0.0, %v391
    %v393 = vpop.f32.mrf.mxu0
    %v394 = vadd.f32 0.0, %v393
    %395 = vmatmul.bf16.gmra.mxu0 %v312
    %v396 = vpop.f32.mrf.mxu0
    %v397 = vadd.f32 0.0, %v396
    %v398 = vpop.f32.mrf.mxu0
    %v399 = vadd.f32 0.0, %v398
    %400 = vmatmul.bf16.gmra.mxu0 %v315
    %v401 = vpop.f32.mrf.mxu0
    %v402 = vadd.f32 0.0, %v401
    %v403 = vpop.f32.mrf.mxu0
    %v404 = vadd.f32 0.0, %v403
    %405 = vdwg.mxu0
    %406 = vmatpush.bf16.msra.mxu0 0
    %407 = vmatpush.bf16.msra.mxu0 0
    %408 = vmatpush.bf16.msra.mxu0 0
    %409 = vmatpush.bf16.msra.mxu0 0
    %410 = vmatpush.bf16.msra.mxu0 0
    %411 = vmatpush.bf16.msra.mxu0 0
    %412 = vmatpush.bf16.msra.mxu0 %v257
    %413 = vmatpush.bf16.msra.mxu0 %v253
    %414 = vmatmul.bf16.gmra.mxu0 %v270
    %v415 = vpop.f32.mrf.mxu0
    %v416 = vadd.f32 0.0, %v415
    %v417 = vpop.f32.mrf.mxu0
    %v418 = vadd.f32 0.0, %v417
    %419 = vmatmul.bf16.gmra.mxu0 %v273
    %v420 = vpop.f32.mrf.mxu0
    %v421 = vadd.f32 0.0, %v420
    %v422 = vpop.f32.mrf.mxu0
    %v423 = vadd.f32 0.0, %v422
    %424 = vmatmul.bf16.gmra.mxu0 %v276
    %v425 = vpop.f32.mrf.mxu0
    %v426 = vadd.f32 0.0, %v425
    %v427 = vpop.f32.mrf.mxu0
    %v428 = vadd.f32 0.0, %v427
    %429 = vmatmul.bf16.gmra.mxu0 %v279
    %v430 = vpop.f32.mrf.mxu0
    %v431 = vadd.f32 0.0, %v430
    %v432 = vpop.f32.mrf.mxu0
    %v433 = vadd.f32 0.0, %v432
    %434 = vmatmul.bf16.gmra.mxu0 %v282
    %v435 = vpop.f32.mrf.mxu0
    %v436 = vadd.f32 0.0, %v435
    %v437 = vpop.f32.mrf.mxu0
    %v438 = vadd.f32 0.0, %v437
    %439 = vmatmul.bf16.gmra.mxu0 %v285
    %v440 = vpop.f32.mrf.mxu0
    %v441 = vadd.f32 0.0, %v440
    %v442 = vpop.f32.mrf.mxu0
    %v443 = vadd.f32 0.0, %v442
    %444 = vmatmul.bf16.gmra.mxu0 %v288
    %v445 = vpop.f32.mrf.mxu0
    %v446 = vadd.f32 0.0, %v445
    %v447 = vpop.f32.mrf.mxu0
    %v448 = vadd.f32 0.0, %v447
    %449 = vmatmul.bf16.gmra.mxu0 %v291
    %v450 = vpop.f32.mrf.mxu0
    %v451 = vadd.f32 0.0, %v450
    %v452 = vpop.f32.mrf.mxu0
    %v453 = vadd.f32 0.0, %v452
    %454 = vmatmul.bf16.gmra.mxu0 %v294
    %v455 = vpop.f32.mrf.mxu0
    %v456 = vadd.f32 0.0, %v455
    %v457 = vpop.f32.mrf.mxu0
    %v458 = vadd.f32 0.0, %v457
    %459 = vmatmul.bf16.gmra.mxu0 %v297
    %v460 = vpop.f32.mrf.mxu0
    %v461 = vadd.f32 0.0, %v460
    %v462 = vpop.f32.mrf.mxu0
    %v463 = vadd.f32 0.0, %v462
    %464 = vmatmul.bf16.gmra.mxu0 %v300
    %v465 = vpop.f32.mrf.mxu0
    %v466 = vadd.f32 0.0, %v465
    %v467 = vpop.f32.mrf.mxu0
    %v468 = vadd.f32 0.0, %v467
    %469 = vmatmul.bf16.gmra.mxu0 %v303
    %v470 = vpop.f32.mrf.mxu0
    %v471 = vadd.f32 0.0, %v470
    %v472 = vpop.f32.mrf.mxu0
    %v473 = vadd.f32 0.0, %v472
    %474 = vmatmul.bf16.gmra.mxu0 %v306
    %v475 = vpop.f32.mrf.mxu0
    %v476 = vadd.f32 0.0, %v475
    %v477 = vpop.f32.mrf.mxu0
    %v478 = vadd.f32 0.0, %v477
    %479 = vmatmul.bf16.gmra.mxu0 %v309
    %v480 = vpop.f32.mrf.mxu0
    %v481 = vadd.f32 0.0, %v480
    %v482 = vpop.f32.mrf.mxu0
    %v483 = vadd.f32 0.0, %v482
    %484 = vmatmul.bf16.gmra.mxu0 %v312
    %v485 = vpop.f32.mrf.mxu0
    %v486 = vadd.f32 0.0, %v485
    %v487 = vpop.f32.mrf.mxu0
    %v488 = vadd.f32 0.0, %v487
    %489 = vmatmul.bf16.gmra.mxu0 %v315
    %v490 = vpop.f32.mrf.mxu0
    %v491 = vadd.f32 0.0, %v490
    %v492 = vpop.f32.mrf.mxu0
    %v493 = vadd.f32 0.0, %v492
    %494 = vdwg.mxu0
    %495 = vmatpush.bf16.msra.mxu0 0
    %496 = vmatpush.bf16.msra.mxu0 0
    %497 = vmatpush.bf16.msra.mxu0 0
    %498 = vmatpush.bf16.msra.mxu0 0
    %499 = vmatpush.bf16.msra.mxu0 0
    %500 = vmatpush.bf16.msra.mxu0 0
    %501 = vmatpush.bf16.msra.mxu0 %v258
    %502 = vmatpush.bf16.msra.mxu0 %v254
    %503 = vmatmul.bf16.gmra.mxu0 %v270
    %v504 = vpop.f32.mrf.mxu0
    %v505 = vadd.f32 0.0, %v504
    %v506 = vpop.f32.mrf.mxu0
    %v507 = vadd.f32 0.0, %v506
    %508 = vmatmul.bf16.gmra.mxu0 %v273
    %v509 = vpop.f32.mrf.mxu0
    %v510 = vadd.f32 0.0, %v509
    %v511 = vpop.f32.mrf.mxu0
    %v512 = vadd.f32 0.0, %v511
    %513 = vmatmul.bf16.gmra.mxu0 %v276
    %v514 = vpop.f32.mrf.mxu0
    %v515 = vadd.f32 0.0, %v514
    %v516 = vpop.f32.mrf.mxu0
    %v517 = vadd.f32 0.0, %v516
    %518 = vmatmul.bf16.gmra.mxu0 %v279
    %v519 = vpop.f32.mrf.mxu0
    %v520 = vadd.f32 0.0, %v519
    %v521 = vpop.f32.mrf.mxu0
    %v522 = vadd.f32 0.0, %v521
    %523 = vmatmul.bf16.gmra.mxu0 %v282
    %v524 = vpop.f32.mrf.mxu0
    %v525 = vadd.f32 0.0, %v524
    %v526 = vpop.f32.mrf.mxu0
    %v527 = vadd.f32 0.0, %v526
    %528 = vmatmul.bf16.gmra.mxu0 %v285
    %v529 = vpop.f32.mrf.mxu0
    %v530 = vadd.f32 0.0, %v529
    %v531 = vpop.f32.mrf.mxu0
    %v532 = vadd.f32 0.0, %v531
    %533 = vmatmul.bf16.gmra.mxu0 %v288
    %v534 = vpop.f32.mrf.mxu0
    %v535 = vadd.f32 0.0, %v534
    %v536 = vpop.f32.mrf.mxu0
    %v537 = vadd.f32 0.0, %v536
    %538 = vmatmul.bf16.gmra.mxu0 %v291
    %v539 = vpop.f32.mrf.mxu0
    %v540 = vadd.f32 0.0, %v539
    %v541 = vpop.f32.mrf.mxu0
    %v542 = vadd.f32 0.0, %v541
    %543 = vmatmul.bf16.gmra.mxu0 %v294
    %v544 = vpop.f32.mrf.mxu0
    %v545 = vadd.f32 0.0, %v544
    %v546 = vpop.f32.mrf.mxu0
    %v547 = vadd.f32 0.0, %v546
    %548 = vmatmul.bf16.gmra.mxu0 %v297
    %v549 = vpop.f32.mrf.mxu0
    %v550 = vadd.f32 0.0, %v549
    %v551 = vpop.f32.mrf.mxu0
    %v552 = vadd.f32 0.0, %v551
    %553 = vmatmul.bf16.gmra.mxu0 %v300
    %v554 = vpop.f32.mrf.mxu0
    %v555 = vadd.f32 0.0, %v554
    %v556 = vpop.f32.mrf.mxu0
    %v557 = vadd.f32 0.0, %v556
    %558 = vmatmul.bf16.gmra.mxu0 %v303
    %v559 = vpop.f32.mrf.mxu0
    %v560 = vadd.f32 0.0, %v559
    %v561 = vpop.f32.mrf.mxu0
    %v562 = vadd.f32 0.0, %v561
    %563 = vmatmul.bf16.gmra.mxu0 %v306
    %v564 = vpop.f32.mrf.mxu0
    %v565 = vadd.f32 0.0, %v564
    %v566 = vpop.f32.mrf.mxu0
    %v567 = vadd.f32 0.0, %v566
    %568 = vmatmul.bf16.gmra.mxu0 %v309
    %v569 = vpop.f32.mrf.mxu0
    %v570 = vadd.f32 0.0, %v569
    %v571 = vpop.f32.mrf.mxu0
    %v572 = vadd.f32 0.0, %v571
    %573 = vmatmul.bf16.gmra.mxu0 %v312
    %v574 = vpop.f32.mrf.mxu0
    %v575 = vadd.f32 0.0, %v574
    %v576 = vpop.f32.mrf.mxu0
    %v577 = vadd.f32 0.0, %v576
    %578 = vmatmul.bf16.gmra.mxu0 %v315
    %v579 = vpop.f32.mrf.mxu0
    %v580 = vadd.f32 0.0, %v579
    %v581 = vpop.f32.mrf.mxu0
    %v582 = vadd.f32 0.0, %v581
    %583 = vdwg.mxu0
    %584 = vmatpush.bf16.msra.mxu0 0
    %585 = vmatpush.bf16.msra.mxu0 0
    %586 = vmatpush.bf16.msra.mxu0 0
    %587 = vmatpush.bf16.msra.mxu0 0
    %588 = vmatpush.bf16.msra.mxu0 0
    %589 = vmatpush.bf16.msra.mxu0 0
    %590 = vmatpush.bf16.msra.mxu0 %v259
    %591 = vmatpush.bf16.msra.mxu0 %v255
    %592 = vmatmul.bf16.gmra.mxu0 %v270
    %v593 = vpop.f32.mrf.mxu0
    %v594 = vadd.f32 0.0, %v593
    %v595 = vpop.f32.mrf.mxu0
    %v596 = vadd.f32 0.0, %v595
    %597 = vmatmul.bf16.gmra.mxu0 %v273
    %v598 = vpop.f32.mrf.mxu0
    %v599 = vadd.f32 0.0, %v598
    %v600 = vpop.f32.mrf.mxu0
    %v601 = vadd.f32 0.0, %v600
    %602 = vmatmul.bf16.gmra.mxu0 %v276
    %v603 = vpop.f32.mrf.mxu0
    %v604 = vadd.f32 0.0, %v603
    %v605 = vpop.f32.mrf.mxu0
    %v606 = vadd.f32 0.0, %v605
    %607 = vmatmul.bf16.gmra.mxu0 %v279
    %v608 = vpop.f32.mrf.mxu0
    %v609 = vadd.f32 0.0, %v608
    %v610 = vpop.f32.mrf.mxu0
    %v611 = vadd.f32 0.0, %v610
    %612 = vmatmul.bf16.gmra.mxu0 %v282
    %v613 = vpop.f32.mrf.mxu0
    %v614 = vadd.f32 0.0, %v613
    %v615 = vpop.f32.mrf.mxu0
    %v616 = vadd.f32 0.0, %v615
    %617 = vmatmul.bf16.gmra.mxu0 %v285
    %v618 = vpop.f32.mrf.mxu0
    %v619 = vadd.f32 0.0, %v618
    %v620 = vpop.f32.mrf.mxu0
    %v621 = vadd.f32 0.0, %v620
    %622 = vmatmul.bf16.gmra.mxu0 %v288
    %v623 = vpop.f32.mrf.mxu0
    %v624 = vadd.f32 0.0, %v623
    %v625 = vpop.f32.mrf.mxu0
    %v626 = vadd.f32 0.0, %v625
    %627 = vmatmul.bf16.gmra.mxu0 %v291
    %v628 = vpop.f32.mrf.mxu0
    %v629 = vadd.f32 0.0, %v628
    %v630 = vpop.f32.mrf.mxu0
    %v631 = vadd.f32 0.0, %v630
    %632 = vmatmul.bf16.gmra.mxu0 %v294
    %v633 = vpop.f32.mrf.mxu0
    %v634 = vadd.f32 0.0, %v633
    %v635 = vpop.f32.mrf.mxu0
    %v636 = vadd.f32 0.0, %v635
    %637 = vmatmul.bf16.gmra.mxu0 %v297
    %v638 = vpop.f32.mrf.mxu0
    %v639 = vadd.f32 0.0, %v638
    %v640 = vpop.f32.mrf.mxu0
    %v641 = vadd.f32 0.0, %v640
    %642 = vmatmul.bf16.gmra.mxu0 %v300
    %v643 = vpop.f32.mrf.mxu0
    %v644 = vadd.f32 0.0, %v643
    %v645 = vpop.f32.mrf.mxu0
    %v646 = vadd.f32 0.0, %v645
    %647 = vmatmul.bf16.gmra.mxu0 %v303
    %v648 = vpop.f32.mrf.mxu0
    %v649 = vadd.f32 0.0, %v648
    %v650 = vpop.f32.mrf.mxu0
    %v651 = vadd.f32 0.0, %v650
    %652 = vmatmul.bf16.gmra.mxu0 %v306
    %v653 = vpop.f32.mrf.mxu0
    %v654 = vadd.f32 0.0, %v653
    %v655 = vpop.f32.mrf.mxu0
    %v656 = vadd.f32 0.0, %v655
    %657 = vmatmul.bf16.gmra.mxu0 %v309
    %v658 = vpop.f32.mrf.mxu0
    %v659 = vadd.f32 0.0, %v658
    %v660 = vpop.f32.mrf.mxu0
    %v661 = vadd.f32 0.0, %v660
    %662 = vmatmul.bf16.gmra.mxu0 %v312
    %v663 = vpop.f32.mrf.mxu0
    %v664 = vadd.f32 0.0, %v663
    %v665 = vpop.f32.mrf.mxu0
    %v666 = vadd.f32 0.0, %v665
    %667 = vmatmul.bf16.gmra.mxu0 %v315
    %v668 = vpop.f32.mrf.mxu0
    %v669 = vadd.f32 0.0, %v668
    %v670 = vpop.f32.mrf.mxu0
    %v671 = vadd.f32 0.0, %v670
    %672 = vdwg.mxu0
    %v673 = vld [vmem:[%s2] sm:$0x3]
    %v675 = vperm.slane %v673, 0
    %v676 = vperm.slane %v673, 1
    %v679 = vadd.f32 %v327, %v675
    %v680 = vadd.f32 %v416, %v676
    %v681 = vadd.f32 %v329, %v675
    %v682 = vadd.f32 %v418, %v676
    %v683 = vadd.f32 %v332, %v675
    %v684 = vadd.f32 %v421, %v676
    %v685 = vadd.f32 %v334, %v675
    %v686 = vadd.f32 %v423, %v676
    %v687 = vadd.f32 %v337, %v675
    %v688 = vadd.f32 %v426, %v676
    %v689 = vadd.f32 %v339, %v675
    %v690 = vadd.f32 %v428, %v676
    %v691 = vadd.f32 %v342, %v675
    %v692 = vadd.f32 %v431, %v676
    %v693 = vadd.f32 %v344, %v675
    %v694 = vadd.f32 %v433, %v676
    %v695 = vadd.f32 %v347, %v675
    %v696 = vadd.f32 %v436, %v676
    %v697 = vadd.f32 %v349, %v675
    %v698 = vadd.f32 %v438, %v676
    %v699 = vadd.f32 %v352, %v675
    %v700 = vadd.f32 %v441, %v676
    %v701 = vadd.f32 %v354, %v675
    %v702 = vadd.f32 %v443, %v676
    %v703 = vadd.f32 %v357, %v675
    %v704 = vadd.f32 %v446, %v676
    %v705 = vadd.f32 %v359, %v675
    %v706 = vadd.f32 %v448, %v676
    %v707 = vadd.f32 %v362, %v675
    %v708 = vadd.f32 %v451, %v676
    %v709 = vadd.f32 %v364, %v675
    %v710 = vadd.f32 %v453, %v676
    %v711 = vadd.f32 %v367, %v675
    %v712 = vadd.f32 %v456, %v676
    %v713 = vadd.f32 %v369, %v675
    %v714 = vadd.f32 %v458, %v676
    %v715 = vadd.f32 %v372, %v675
    %v716 = vadd.f32 %v461, %v676
    %v717 = vadd.f32 %v374, %v675
    %v718 = vadd.f32 %v463, %v676
    %v719 = vadd.f32 %v377, %v675
    %v720 = vadd.f32 %v466, %v676
    %v721 = vadd.f32 %v379, %v675
    %v722 = vadd.f32 %v468, %v676
    %v723 = vadd.f32 %v382, %v675
    %v724 = vadd.f32 %v471, %v676
    %v725 = vadd.f32 %v384, %v675
    %v726 = vadd.f32 %v473, %v676
    %v727 = vadd.f32 %v387, %v675
    %v728 = vadd.f32 %v476, %v676
    %v729 = vadd.f32 %v389, %v675
    %v730 = vadd.f32 %v478, %v676
    %v731 = vadd.f32 %v392, %v675
    %v732 = vadd.f32 %v481, %v676
    %v733 = vadd.f32 %v394, %v675
    %v734 = vadd.f32 %v483, %v676
    %v735 = vadd.f32 %v397, %v675
    %v736 = vadd.f32 %v486, %v676
    %v737 = vadd.f32 %v399, %v675
    %v738 = vadd.f32 %v488, %v676
    %v739 = vadd.f32 %v402, %v675
    %v740 = vadd.f32 %v491, %v676
    %v741 = vadd.f32 %v404, %v675
    %v742 = vadd.f32 %v493, %v676
    %v743 = vmax.f32 %v679, 0.0
    %v744 = vmax.f32 %v680, 0.0
    %v745 = vmax.f32 %v681, 0.0
    %v746 = vmax.f32 %v682, 0.0
    %v747 = vmax.f32 %v683, 0.0
    %v748 = vmax.f32 %v684, 0.0
    %v749 = vmax.f32 %v685, 0.0
    %v750 = vmax.f32 %v686, 0.0
    %v751 = vmax.f32 %v687, 0.0
    %v752 = vmax.f32 %v688, 0.0
    %v753 = vmax.f32 %v689, 0.0
    %v754 = vmax.f32 %v690, 0.0
    %v755 = vmax.f32 %v691, 0.0
    %v756 = vmax.f32 %v692, 0.0
    %v757 = vmax.f32 %v693, 0.0
    %v758 = vmax.f32 %v694, 0.0
    %v759 = vmax.f32 %v695, 0.0
    %v760 = vmax.f32 %v696, 0.0
    %v761 = vmax.f32 %v697, 0.0
    %v762 = vmax.f32 %v698, 0.0
    %v763 = vmax.f32 %v699, 0.0
    %v764 = vmax.f32 %v700, 0.0
    %v765 = vmax.f32 %v701, 0.0
    %v766 = vmax.f32 %v702, 0.0
    %v767 = vmax.f32 %v703, 0.0
    %v768 = vmax.f32 %v704, 0.0
    %v769 = vmax.f32 %v705, 0.0
    %v770 = vmax.f32 %v706, 0.0
    %v771 = vmax.f32 %v707, 0.0
    %v772 = vmax.f32 %v708, 0.0
    %v773 = vmax.f32 %v709, 0.0
    %v774 = vmax.f32 %v710, 0.0
    %v775 = vmax.f32 %v711, 0.0
    %v776 = vmax.f32 %v712, 0.0
    %v777 = vmax.f32 %v713, 0.0
    %v778 = vmax.f32 %v714, 0.0
    %v779 = vmax.f32 %v715, 0.0
    %v780 = vmax.f32 %v716, 0.0
    %v781 = vmax.f32 %v717, 0.0
    %v782 = vmax.f32 %v718, 0.0
    %v783 = vmax.f32 %v719, 0.0
    %v784 = vmax.f32 %v720, 0.0
    %v785 = vmax.f32 %v721, 0.0
    %v786 = vmax.f32 %v722, 0.0
    %v787 = vmax.f32 %v723, 0.0
    %v788 = vmax.f32 %v724, 0.0
    %v789 = vmax.f32 %v725, 0.0
    %v790 = vmax.f32 %v726, 0.0
    %v791 = vmax.f32 %v727, 0.0
    %v792 = vmax.f32 %v728, 0.0
    %v793 = vmax.f32 %v729, 0.0
    %v794 = vmax.f32 %v730, 0.0
    %v795 = vmax.f32 %v731, 0.0
    %v796 = vmax.f32 %v732, 0.0
    %v797 = vmax.f32 %v733, 0.0
    %v798 = vmax.f32 %v734, 0.0
    %v799 = vmax.f32 %v735, 0.0
    %v800 = vmax.f32 %v736, 0.0
    %v801 = vmax.f32 %v737, 0.0
    %v802 = vmax.f32 %v738, 0.0
    %v803 = vmax.f32 %v739, 0.0
    %v804 = vmax.f32 %v740, 0.0
    %v805 = vmax.f32 %v741, 0.0
    %v806 = vmax.f32 %v742, 0.0
    %v807 = vpack.c.bf16 %v745, %v743
    %v808 = vpack.c.bf16 %v746, %v744
    %v809 = vpack.c.bf16 %v749, %v747
    %v810 = vpack.c.bf16 %v750, %v748
    %v811 = vpack.c.bf16 %v753, %v751
    %v812 = vpack.c.bf16 %v754, %v752
    %v813 = vpack.c.bf16 %v757, %v755
    %v814 = vpack.c.bf16 %v758, %v756
    %v815 = vpack.c.bf16 %v761, %v759
    %v816 = vpack.c.bf16 %v762, %v760
    %v817 = vpack.c.bf16 %v765, %v763
    %v818 = vpack.c.bf16 %v766, %v764
    %v819 = vpack.c.bf16 %v769, %v767
    %v820 = vpack.c.bf16 %v770, %v768
    %v821 = vpack.c.bf16 %v773, %v771
    %v822 = vpack.c.bf16 %v774, %v772
    %v823 = vpack.c.bf16 %v777, %v775
    %v824 = vpack.c.bf16 %v778, %v776
    %v825 = vpack.c.bf16 %v781, %v779
    %v826 = vpack.c.bf16 %v782, %v780
    %v827 = vpack.c.bf16 %v785, %v783
    %v828 = vpack.c.bf16 %v786, %v784
    %v829 = vpack.c.bf16 %v789, %v787
    %v830 = vpack.c.bf16 %v790, %v788
    %v831 = vpack.c.bf16 %v793, %v791
    %v832 = vpack.c.bf16 %v794, %v792
    %v833 = vpack.c.bf16 %v797, %v795
    %v834 = vpack.c.bf16 %v798, %v796
    %v835 = vpack.c.bf16 %v801, %v799
    %v836 = vpack.c.bf16 %v802, %v800
    %v837 = vpack.c.bf16 %v805, %v803
    %v838 = vpack.c.bf16 %v806, %v804
    %v839 = vld [vmem:[%s3] sm:$0xff]
    %v840 = vld [vmem:[%s3 + $0x8] sm:$0xff]
    %v841 = vld [vmem:[%s3 + $0x10] sm:$0xff]
    %v842 = vld [vmem:[%s3 + $0x18] sm:$0xff]
    %v843 = vld [vmem:[%s3 + $0x20] sm:$0xff]
    %v844 = vld [vmem:[%s3 + $0x28] sm:$0xff]
    %v845 = vld [vmem:[%s3 + $0x30] sm:$0xff]
    %v846 = vld [vmem:[%s3 + $0x38] sm:$0xff]
    %v847 = vld [vmem:[%s3 + $0x40] sm:$0xff]
    %v848 = vld [vmem:[%s3 + $0x48] sm:$0xff]
    %v849 = vld [vmem:[%s3 + $0x50] sm:$0xff]
    %v850 = vld [vmem:[%s3 + $0x58] sm:$0xff]
    %v851 = vld [vmem:[%s3 + $0x60] sm:$0xff]
    %v852 = vld [vmem:[%s3 + $0x68] sm:$0xff]
    %v853 = vld [vmem:[%s3 + $0x70] sm:$0xff]
    %v854 = vld [vmem:[%s3 + $0x78] sm:$0xff]
    %v855 = vld [vmem:[%s3 + $0x80] sm:$0xff]
    %v856 = vld [vmem:[%s3 + $0x88] sm:$0xff]
    %v857 = vld [vmem:[%s3 + $0x90] sm:$0xff]
    %v858 = vld [vmem:[%s3 + $0x98] sm:$0xff]
    %v859 = vld [vmem:[%s3 + $0xa0] sm:$0xff]
    %v860 = vld [vmem:[%s3 + $0xa8] sm:$0xff]
    %v861 = vld [vmem:[%s3 + $0xb0] sm:$0xff]
    %v862 = vld [vmem:[%s3 + $0xb8] sm:$0xff]
    %v863 = vld [vmem:[%s3 + $0xc0] sm:$0xff]
    %v864 = vld [vmem:[%s3 + $0xc8] sm:$0xff]
    %v865 = vld [vmem:[%s3 + $0xd0] sm:$0xff]
    %v866 = vld [vmem:[%s3 + $0xd8] sm:$0xff]
    %v867 = vld [vmem:[%s3 + $0xe0] sm:$0xff]
    %v868 = vld [vmem:[%s3 + $0xe8] sm:$0xff]
    %v869 = vld [vmem:[%s3 + $0xf0] sm:$0xff]
    %v870 = vld [vmem:[%s3 + $0xf8] sm:$0xff]
    %v871 = vld [vmem:[%s4] sm:$0x3]
    %v873 = vperm.slane %v871, 0
    %v874 = vperm.slane %v871, 1
    %v909 = vunpack.c.l.b16 %v839
    %v910 = vunpack.c.h.b16 %v839
    %v911 = vunpack.c.l.b16 %v840
    %v912 = vunpack.c.h.b16 %v840
    %v913 = vunpack.c.l.b16 %v841
    %v914 = vunpack.c.h.b16 %v841
    %v915 = vunpack.c.l.b16 %v842
    %v916 = vunpack.c.h.b16 %v842
    %v917 = vunpack.c.l.b16 %v843
    %v918 = vunpack.c.h.b16 %v843
    %v919 = vunpack.c.l.b16 %v844
    %v920 = vunpack.c.h.b16 %v844
    %v921 = vunpack.c.l.b16 %v845
    %v922 = vunpack.c.h.b16 %v845
    %v923 = vunpack.c.l.b16 %v846
    %v924 = vunpack.c.h.b16 %v846
    %v925 = vunpack.c.l.b16 %v847
    %v926 = vunpack.c.h.b16 %v847
    %v927 = vunpack.c.l.b16 %v848
    %v928 = vunpack.c.h.b16 %v848
    %v929 = vunpack.c.l.b16 %v849
    %v930 = vunpack.c.h.b16 %v849
    %v931 = vunpack.c.l.b16 %v850
    %v932 = vunpack.c.h.b16 %v850
    %v933 = vunpack.c.l.b16 %v851
    %v934 = vunpack.c.h.b16 %v851
    %v935 = vunpack.c.l.b16 %v852
    %v936 = vunpack.c.h.b16 %v852
    %v937 = vunpack.c.l.b16 %v853
    %v938 = vunpack.c.h.b16 %v853
    %v939 = vunpack.c.l.b16 %v854
    %v940 = vunpack.c.h.b16 %v854
    %v941 = vunpack.c.l.b16 %v855
    %v942 = vunpack.c.h.b16 %v855
    %v943 = vunpack.c.l.b16 %v856
    %v944 = vunpack.c.h.b16 %v856
    %v945 = vunpack.c.l.b16 %v857
    %v946 = vunpack.c.h.b16 %v857
    %v947 = vunpack.c.l.b16 %v858
    %v948 = vunpack.c.h.b16 %v858
    %v949 = vunpack.c.l.b16 %v859
    %v950 = vunpack.c.h.b16 %v859
    %v951 = vunpack.c.l.b16 %v860
    %v952 = vunpack.c.h.b16 %v860
    %v953 = vunpack.c.l.b16 %v861
    %v954 = vunpack.c.h.b16 %v861
    %v955 = vunpack.c.l.b16 %v862
    %v956 = vunpack.c.h.b16 %v862
    %v957 = vunpack.c.l.b16 %v863
    %v958 = vunpack.c.h.b16 %v863
    %v959 = vunpack.c.l.b16 %v864
    %v960 = vunpack.c.h.b16 %v864
    %v961 = vunpack.c.l.b16 %v865
    %v962 = vunpack.c.h.b16 %v865
    %v963 = vunpack.c.l.b16 %v866
    %v964 = vunpack.c.h.b16 %v866
    %v965 = vunpack.c.l.b16 %v867
    %v966 = vunpack.c.h.b16 %v867
    %v967 = vunpack.c.l.b16 %v868
    %v968 = vunpack.c.h.b16 %v868
    %v969 = vunpack.c.l.b16 %v869
    %v970 = vunpack.c.h.b16 %v869
    %v971 = vunpack.c.l.b16 %v870
    %v972 = vunpack.c.h.b16 %v870
    %v973 = vpack.c.b16 %v911, %v909
    %v974 = vpack.c.b16 %v912, %v910
    %v975 = vpack.c.b16 %v915, %v913
    %v976 = vpack.c.b16 %v916, %v914
    %v977 = vpack.c.b16 %v919, %v917
    %v978 = vpack.c.b16 %v920, %v918
    %v979 = vpack.c.b16 %v923, %v921
    %v980 = vpack.c.b16 %v924, %v922
    %v981 = vpack.c.b16 %v927, %v925
    %v982 = vpack.c.b16 %v928, %v926
    %v983 = vpack.c.b16 %v931, %v929
    %v984 = vpack.c.b16 %v932, %v930
    %v985 = vpack.c.b16 %v935, %v933
    %v986 = vpack.c.b16 %v936, %v934
    %v987 = vpack.c.b16 %v939, %v937
    %v988 = vpack.c.b16 %v940, %v938
    %v989 = vpack.c.b16 %v943, %v941
    %v990 = vpack.c.b16 %v944, %v942
    %v991 = vpack.c.b16 %v947, %v945
    %v992 = vpack.c.b16 %v948, %v946
    %v993 = vpack.c.b16 %v951, %v949
    %v994 = vpack.c.b16 %v952, %v950
    %v995 = vpack.c.b16 %v955, %v953
    %v996 = vpack.c.b16 %v956, %v954
    %v997 = vpack.c.b16 %v959, %v957
    %v998 = vpack.c.b16 %v960, %v958
    %v999 = vpack.c.b16 %v963, %v961
    %v1000 = vpack.c.b16 %v964, %v962
    %v1001 = vpack.c.b16 %v967, %v965
    %v1002 = vpack.c.b16 %v968, %v966
    %v1003 = vpack.c.b16 %v971, %v969
    %v1004 = vpack.c.b16 %v972, %v970
    %1037 = vmatpush.bf16.msra.mxu0 %v987
    %1038 = vmatpush.bf16.msra.mxu0 %v985
    %1039 = vmatpush.bf16.msra.mxu0 %v983
    %1040 = vmatpush.bf16.msra.mxu0 %v981
    %1041 = vmatpush.bf16.msra.mxu0 %v979
    %1042 = vmatpush.bf16.msra.mxu0 %v977
    %1043 = vmatpush.bf16.msra.mxu0 %v975
    %1044 = vmatpush.bf16.msra.mxu0 %v973
    %1045 = vmatmul.bf16.gmra.mxu0 %v807
    %v1046 = vpop.f32.mrf.mxu0
    %v1047 = vadd.f32 %v873, %v1046
    %v1048 = vpop.f32.mrf.mxu0
    %v1049 = vadd.f32 %v873, %v1048
    %1050 = vmatmul.bf16.gmra.mxu0 %v809
    %v1051 = vpop.f32.mrf.mxu0
    %v1052 = vadd.f32 %v873, %v1051
    %v1053 = vpop.f32.mrf.mxu0
    %v1054 = vadd.f32 %v873, %v1053
    %1055 = vmatmul.bf16.gmra.mxu0 %v811
    %v1056 = vpop.f32.mrf.mxu0
    %v1057 = vadd.f32 %v873, %v1056
    %v1058 = vpop.f32.mrf.mxu0
    %v1059 = vadd.f32 %v873, %v1058
    %1060 = vmatmul.bf16.gmra.mxu0 %v813
    %v1061 = vpop.f32.mrf.mxu0
    %v1062 = vadd.f32 %v873, %v1061
    %v1063 = vpop.f32.mrf.mxu0
    %v1064 = vadd.f32 %v873, %v1063
    %1065 = vmatmul.bf16.gmra.mxu0 %v815
    %v1066 = vpop.f32.mrf.mxu0
    %v1067 = vadd.f32 %v873, %v1066
    %v1068 = vpop.f32.mrf.mxu0
    %v1069 = vadd.f32 %v873, %v1068
    %1070 = vmatmul.bf16.gmra.mxu0 %v817
    %v1071 = vpop.f32.mrf.mxu0
    %v1072 = vadd.f32 %v873, %v1071
    %v1073 = vpop.f32.mrf.mxu0
    %v1074 = vadd.f32 %v873, %v1073
    %1075 = vmatmul.bf16.gmra.mxu0 %v819
    %v1076 = vpop.f32.mrf.mxu0
    %v1077 = vadd.f32 %v873, %v1076
    %v1078 = vpop.f32.mrf.mxu0
    %v1079 = vadd.f32 %v873, %v1078
    %1080 = vmatmul.bf16.gmra.mxu0 %v821
    %v1081 = vpop.f32.mrf.mxu0
    %v1082 = vadd.f32 %v873, %v1081
    %v1083 = vpop.f32.mrf.mxu0
    %v1084 = vadd.f32 %v873, %v1083
    %1085 = vmatmul.bf16.gmra.mxu0 %v823
    %v1086 = vpop.f32.mrf.mxu0
    %v1087 = vadd.f32 %v873, %v1086
    %v1088 = vpop.f32.mrf.mxu0
    %v1089 = vadd.f32 %v873, %v1088
    %1090 = vmatmul.bf16.gmra.mxu0 %v825
    %v1091 = vpop.f32.mrf.mxu0
    %v1092 = vadd.f32 %v873, %v1091
    %v1093 = vpop.f32.mrf.mxu0
    %v1094 = vadd.f32 %v873, %v1093
    %1095 = vmatmul.bf16.gmra.mxu0 %v827
    %v1096 = vpop.f32.mrf.mxu0
    %v1097 = vadd.f32 %v873, %v1096
    %v1098 = vpop.f32.mrf.mxu0
    %v1099 = vadd.f32 %v873, %v1098
    %1100 = vmatmul.bf16.gmra.mxu0 %v829
    %v1101 = vpop.f32.mrf.mxu0
    %v1102 = vadd.f32 %v873, %v1101
    %v1103 = vpop.f32.mrf.mxu0
    %v1104 = vadd.f32 %v873, %v1103
    %1105 = vmatmul.bf16.gmra.mxu0 %v831
    %v1106 = vpop.f32.mrf.mxu0
    %v1107 = vadd.f32 %v873, %v1106
    %v1108 = vpop.f32.mrf.mxu0
    %v1109 = vadd.f32 %v873, %v1108
    %1110 = vmatmul.bf16.gmra.mxu0 %v833
    %v1111 = vpop.f32.mrf.mxu0
    %v1112 = vadd.f32 %v873, %v1111
    %v1113 = vpop.f32.mrf.mxu0
    %v1114 = vadd.f32 %v873, %v1113
    %1115 = vmatmul.bf16.gmra.mxu0 %v835
    %v1116 = vpop.f32.mrf.mxu0
    %v1117 = vadd.f32 %v873, %v1116
    %v1118 = vpop.f32.mrf.mxu0
    %v1119 = vadd.f32 %v873, %v1118
    %1120 = vmatmul.bf16.gmra.mxu0 %v837
    %v1121 = vpop.f32.mrf.mxu0
    %v1122 = vadd.f32 %v873, %v1121
    %v1123 = vpop.f32.mrf.mxu0
    %v1124 = vadd.f32 %v873, %v1123
    %1125 = vdwg.mxu0
    %1126 = vmatpush.bf16.msra.mxu0 %v1003
    %1127 = vmatpush.bf16.msra.mxu0 %v1001
    %1128 = vmatpush.bf16.msra.mxu0 %v999
    %1129 = vmatpush.bf16.msra.mxu0 %v997
    %1130 = vmatpush.bf16.msra.mxu0 %v995
    %1131 = vmatpush.bf16.msra.mxu0 %v993
    %1132 = vmatpush.bf16.msra.mxu0 %v991
    %1133 = vmatpush.bf16.msra.mxu0 %v989
    %1134 = vmatmul.bf16.gmra.mxu0 %v808
    %v1135 = vpop.f32.mrf.mxu0
    %v1136 = vadd.f32 %v1047, %v1135
    %v1137 = vpop.f32.mrf.mxu0
    %v1138 = vadd.f32 %v1049, %v1137
    %1139 = vmatmul.bf16.gmra.mxu0 %v810
    %v1140 = vpop.f32.mrf.mxu0
    %v1141 = vadd.f32 %v1052, %v1140
    %v1142 = vpop.f32.mrf.mxu0
    %v1143 = vadd.f32 %v1054, %v1142
    %1144 = vmatmul.bf16.gmra.mxu0 %v812
    %v1145 = vpop.f32.mrf.mxu0
    %v1146 = vadd.f32 %v1057, %v1145
    %v1147 = vpop.f32.mrf.mxu0
    %v1148 = vadd.f32 %v1059, %v1147
    %1149 = vmatmul.bf16.gmra.mxu0 %v814
    %v1150 = vpop.f32.mrf.mxu0
    %v1151 = vadd.f32 %v1062, %v1150
    %v1152 = vpop.f32.mrf.mxu0
    %v1153 = vadd.f32 %v1064, %v1152
    %1154 = vmatmul.bf16.gmra.mxu0 %v816
    %v1155 = vpop.f32.mrf.mxu0
    %v1156 = vadd.f32 %v1067, %v1155
    %v1157 = vpop.f32.mrf.mxu0
    %v1158 = vadd.f32 %v1069, %v1157
    %1159 = vmatmul.bf16.gmra.mxu0 %v818
    %v1160 = vpop.f32.mrf.mxu0
    %v1161 = vadd.f32 %v1072, %v1160
    %v1162 = vpop.f32.mrf.mxu0
    %v1163 = vadd.f32 %v1074, %v1162
    %1164 = vmatmul.bf16.gmra.mxu0 %v820
    %v1165 = vpop.f32.mrf.mxu0
    %v1166 = vadd.f32 %v1077, %v1165
    %v1167 = vpop.f32.mrf.mxu0
    %v1168 = vadd.f32 %v1079, %v1167
    %1169 = vmatmul.bf16.gmra.mxu0 %v822
    %v1170 = vpop.f32.mrf.mxu0
    %v1171 = vadd.f32 %v1082, %v1170
    %v1172 = vpop.f32.mrf.mxu0
    %v1173 = vadd.f32 %v1084, %v1172
    %1174 = vmatmul.bf16.gmra.mxu0 %v824
    %v1175 = vpop.f32.mrf.mxu0
    %v1176 = vadd.f32 %v1087, %v1175
    %v1177 = vpop.f32.mrf.mxu0
    %v1178 = vadd.f32 %v1089, %v1177
    %1179 = vmatmul.bf16.gmra.mxu0 %v826
    %v1180 = vpop.f32.mrf.mxu0
    %v1181 = vadd.f32 %v1092, %v1180
    %v1182 = vpop.f32.mrf.mxu0
    %v1183 = vadd.f32 %v1094, %v1182
    %1184 = vmatmul.bf16.gmra.mxu0 %v828
    %v1185 = vpop.f32.mrf.mxu0
    %v1186 = vadd.f32 %v1097, %v1185
    %v1187 = vpop.f32.mrf.mxu0
    %v1188 = vadd.f32 %v1099, %v1187
    %1189 = vmatmul.bf16.gmra.mxu0 %v830
    %v1190 = vpop.f32.mrf.mxu0
    %v1191 = vadd.f32 %v1102, %v1190
    %v1192 = vpop.f32.mrf.mxu0
    %v1193 = vadd.f32 %v1104, %v1192
    %1194 = vmatmul.bf16.gmra.mxu0 %v832
    %v1195 = vpop.f32.mrf.mxu0
    %v1196 = vadd.f32 %v1107, %v1195
    %v1197 = vpop.f32.mrf.mxu0
    %v1198 = vadd.f32 %v1109, %v1197
    %1199 = vmatmul.bf16.gmra.mxu0 %v834
    %v1200 = vpop.f32.mrf.mxu0
    %v1201 = vadd.f32 %v1112, %v1200
    %v1202 = vpop.f32.mrf.mxu0
    %v1203 = vadd.f32 %v1114, %v1202
    %1204 = vmatmul.bf16.gmra.mxu0 %v836
    %v1205 = vpop.f32.mrf.mxu0
    %v1206 = vadd.f32 %v1117, %v1205
    %v1207 = vpop.f32.mrf.mxu0
    %v1208 = vadd.f32 %v1119, %v1207
    %1209 = vmatmul.bf16.gmra.mxu0 %v838
    %v1210 = vpop.f32.mrf.mxu0
    %v1211 = vadd.f32 %v1122, %v1210
    %v1212 = vpop.f32.mrf.mxu0
    %v1213 = vadd.f32 %v1124, %v1212
    %1214 = vdwg.mxu0
    %1215 = vmatpush.bf16.msra.mxu0 %v988
    %1216 = vmatpush.bf16.msra.mxu0 %v986
    %1217 = vmatpush.bf16.msra.mxu0 %v984
    %1218 = vmatpush.bf16.msra.mxu0 %v982
    %1219 = vmatpush.bf16.msra.mxu0 %v980
    %1220 = vmatpush.bf16.msra.mxu0 %v978
    %1221 = vmatpush.bf16.msra.mxu0 %v976
    %1222 = vmatpush.bf16.msra.mxu0 %v974
    %1223 = vmatmul.bf16.gmra.mxu0 %v807
    %v1224 = vpop.f32.mrf.mxu0
    %v1225 = vadd.f32 %v874, %v1224
    %v1226 = vpop.f32.mrf.mxu0
    %v1227 = vadd.f32 %v874, %v1226
    %1228 = vmatmul.bf16.gmra.mxu0 %v809
    %v1229 = vpop.f32.mrf.mxu0
    %v1230 = vadd.f32 %v874, %v1229
    %v1231 = vpop.f32.mrf.mxu0
    %v1232 = vadd.f32 %v874, %v1231
    %1233 = vmatmul.bf16.gmra.mxu0 %v811
    %v1234 = vpop.f32.mrf.mxu0
    %v1235 = vadd.f32 %v874, %v1234
    %v1236 = vpop.f32.mrf.mxu0
    %v1237 = vadd.f32 %v874, %v1236
    %1238 = vmatmul.bf16.gmra.mxu0 %v813
    %v1239 = vpop.f32.mrf.mxu0
    %v1240 = vadd.f32 %v874, %v1239
    %v1241 = vpop.f32.mrf.mxu0
    %v1242 = vadd.f32 %v874, %v1241
    %1243 = vmatmul.bf16.gmra.mxu0 %v815
    %v1244 = vpop.f32.mrf.mxu0
    %v1245 = vadd.f32 %v874, %v1244
    %v1246 = vpop.f32.mrf.mxu0
    %v1247 = vadd.f32 %v874, %v1246
    %1248 = vmatmul.bf16.gmra.mxu0 %v817
    %v1249 = vpop.f32.mrf.mxu0
    %v1250 = vadd.f32 %v874, %v1249
    %v1251 = vpop.f32.mrf.mxu0
    %v1252 = vadd.f32 %v874, %v1251
    %1253 = vmatmul.bf16.gmra.mxu0 %v819
    %v1254 = vpop.f32.mrf.mxu0
    %v1255 = vadd.f32 %v874, %v1254
    %v1256 = vpop.f32.mrf.mxu0
    %v1257 = vadd.f32 %v874, %v1256
    %1258 = vmatmul.bf16.gmra.mxu0 %v821
    %v1259 = vpop.f32.mrf.mxu0
    %v1260 = vadd.f32 %v874, %v1259
    %v1261 = vpop.f32.mrf.mxu0
    %v1262 = vadd.f32 %v874, %v1261
    %1263 = vmatmul.bf16.gmra.mxu0 %v823
    %v1264 = vpop.f32.mrf.mxu0
    %v1265 = vadd.f32 %v874, %v1264
    %v1266 = vpop.f32.mrf.mxu0
    %v1267 = vadd.f32 %v874, %v1266
    %1268 = vmatmul.bf16.gmra.mxu0 %v825
    %v1269 = vpop.f32.mrf.mxu0
    %v1270 = vadd.f32 %v874, %v1269
    %v1271 = vpop.f32.mrf.mxu0
    %v1272 = vadd.f32 %v874, %v1271
    %1273 = vmatmul.bf16.gmra.mxu0 %v827
    %v1274 = vpop.f32.mrf.mxu0
    %v1275 = vadd.f32 %v874, %v1274
    %v1276 = vpop.f32.mrf.mxu0
    %v1277 = vadd.f32 %v874, %v1276
    %1278 = vmatmul.bf16.gmra.mxu0 %v829
    %v1279 = vpop.f32.mrf.mxu0
    %v1280 = vadd.f32 %v874, %v1279
    %v1281 = vpop.f32.mrf.mxu0
    %v1282 = vadd.f32 %v874, %v1281
    %1283 = vmatmul.bf16.gmra.mxu0 %v831
    %v1284 = vpop.f32.mrf.mxu0
    %v1285 = vadd.f32 %v874, %v1284
    %v1286 = vpop.f32.mrf.mxu0
    %v1287 = vadd.f32 %v874, %v1286
    %1288 = vmatmul.bf16.gmra.mxu0 %v833
    %v1289 = vpop.f32.mrf.mxu0
    %v1290 = vadd.f32 %v874, %v1289
    %v1291 = vpop.f32.mrf.mxu0
    %v1292 = vadd.f32 %v874, %v1291
    %1293 = vmatmul.bf16.gmra.mxu0 %v835
    %v1294 = vpop.f32.mrf.mxu0
    %v1295 = vadd.f32 %v874, %v1294
    %v1296 = vpop.f32.mrf.mxu0
    %v1297 = vadd.f32 %v874, %v1296
    %1298 = vmatmul.bf16.gmra.mxu0 %v837
    %v1299 = vpop.f32.mrf.mxu0
    %v1300 = vadd.f32 %v874, %v1299
    %v1301 = vpop.f32.mrf.mxu0
    %v1302 = vadd.f32 %v874, %v1301
    %1303 = vdwg.mxu0
    %1304 = vmatpush.bf16.msra.mxu0 %v1004
    %1305 = vmatpush.bf16.msra.mxu0 %v1002
    %1306 = vmatpush.bf16.msra.mxu0 %v1000
    %1307 = vmatpush.bf16.msra.mxu0 %v998
    %1308 = vmatpush.bf16.msra.mxu0 %v996
    %1309 = vmatpush.bf16.msra.mxu0 %v994
    %1310 = vmatpush.bf16.msra.mxu0 %v992
    %1311 = vmatpush.bf16.msra.mxu0 %v990
    %1312 = vmatmul.bf16.gmra.mxu0 %v808
    %v1313 = vpop.f32.mrf.mxu0
    %v1314 = vadd.f32 %v1225, %v1313
    %v1315 = vpop.f32.mrf.mxu0
    %v1316 = vadd.f32 %v1227, %v1315
    %1317 = vmatmul.bf16.gmra.mxu0 %v810
    %v1318 = vpop.f32.mrf.mxu0
    %v1319 = vadd.f32 %v1230, %v1318
    %v1320 = vpop.f32.mrf.mxu0
    %v1321 = vadd.f32 %v1232, %v1320
    %1322 = vmatmul.bf16.gmra.mxu0 %v812
    %v1323 = vpop.f32.mrf.mxu0
    %v1324 = vadd.f32 %v1235, %v1323
    %v1325 = vpop.f32.mrf.mxu0
    %v1326 = vadd.f32 %v1237, %v1325
    %1327 = vmatmul.bf16.gmra.mxu0 %v814
    %v1328 = vpop.f32.mrf.mxu0
    %v1329 = vadd.f32 %v1240, %v1328
    %v1330 = vpop.f32.mrf.mxu0
    %v1331 = vadd.f32 %v1242, %v1330
    %1332 = vmatmul.bf16.gmra.mxu0 %v816
    %v1333 = vpop.f32.mrf.mxu0
    %v1334 = vadd.f32 %v1245, %v1333
    %v1335 = vpop.f32.mrf.mxu0
    %v1336 = vadd.f32 %v1247, %v1335
    %1337 = vmatmul.bf16.gmra.mxu0 %v818
    %v1338 = vpop.f32.mrf.mxu0
    %v1339 = vadd.f32 %v1250, %v1338
    %v1340 = vpop.f32.mrf.mxu0
    %v1341 = vadd.f32 %v1252, %v1340
    %1342 = vmatmul.bf16.gmra.mxu0 %v820
    %v1343 = vpop.f32.mrf.mxu0
    %v1344 = vadd.f32 %v1255, %v1343
    %v1345 = vpop.f32.mrf.mxu0
    %v1346 = vadd.f32 %v1257, %v1345
    %1347 = vmatmul.bf16.gmra.mxu0 %v822
    %v1348 = vpop.f32.mrf.mxu0
    %v1349 = vadd.f32 %v1260, %v1348
    %v1350 = vpop.f32.mrf.mxu0
    %v1351 = vadd.f32 %v1262, %v1350
    %1352 = vmatmul.bf16.gmra.mxu0 %v824
    %v1353 = vpop.f32.mrf.mxu0
    %v1354 = vadd.f32 %v1265, %v1353
    %v1355 = vpop.f32.mrf.mxu0
    %v1356 = vadd.f32 %v1267, %v1355
    %1357 = vmatmul.bf16.gmra.mxu0 %v826
    %v1358 = vpop.f32.mrf.mxu0
    %v1359 = vadd.f32 %v1270, %v1358
    %v1360 = vpop.f32.mrf.mxu0
    %v1361 = vadd.f32 %v1272, %v1360
    %1362 = vmatmul.bf16.gmra.mxu0 %v828
    %v1363 = vpop.f32.mrf.mxu0
    %v1364 = vadd.f32 %v1275, %v1363
    %v1365 = vpop.f32.mrf.mxu0
    %v1366 = vadd.f32 %v1277, %v1365
    %1367 = vmatmul.bf16.gmra.mxu0 %v830
    %v1368 = vpop.f32.mrf.mxu0
    %v1369 = vadd.f32 %v1280, %v1368
    %v1370 = vpop.f32.mrf.mxu0
    %v1371 = vadd.f32 %v1282, %v1370
    %1372 = vmatmul.bf16.gmra.mxu0 %v832
    %v1373 = vpop.f32.mrf.mxu0
    %v1374 = vadd.f32 %v1285, %v1373
    %v1375 = vpop.f32.mrf.mxu0
    %v1376 = vadd.f32 %v1287, %v1375
    %1377 = vmatmul.bf16.gmra.mxu0 %v834
    %v1378 = vpop.f32.mrf.mxu0
    %v1379 = vadd.f32 %v1290, %v1378
    %v1380 = vpop.f32.mrf.mxu0
    %v1381 = vadd.f32 %v1292, %v1380
    %1382 = vmatmul.bf16.gmra.mxu0 %v836
    %v1383 = vpop.f32.mrf.mxu0
    %v1384 = vadd.f32 %v1295, %v1383
    %v1385 = vpop.f32.mrf.mxu0
    %v1386 = vadd.f32 %v1297, %v1385
    %1387 = vmatmul.bf16.gmra.mxu0 %v838
    %v1388 = vpop.f32.mrf.mxu0
    %v1389 = vadd.f32 %v1300, %v1388
    %v1390 = vpop.f32.mrf.mxu0
    %v1391 = vadd.f32 %v1302, %v1390
    %1392 = vdwg.mxu0
    %v1393 = vmax.f32 %v1136, 0.0
    %v1394 = vmax.f32 %v1314, 0.0
    %v1395 = vmax.f32 %v1138, 0.0
    %v1396 = vmax.f32 %v1316, 0.0
    %v1397 = vmax.f32 %v1141, 0.0
    %v1398 = vmax.f32 %v1319, 0.0
    %v1399 = vmax.f32 %v1143, 0.0
    %v1400 = vmax.f32 %v1321, 0.0
    %v1401 = vmax.f32 %v1146, 0.0
    %v1402 = vmax.f32 %v1324, 0.0
    %v1403 = vmax.f32 %v1148, 0.0
    %v1404 = vmax.f32 %v1326, 0.0
    %v1405 = vmax.f32 %v1151, 0.0
    %v1406 = vmax.f32 %v1329, 0.0
    %v1407 = vmax.f32 %v1153, 0.0
    %v1408 = vmax.f32 %v1331, 0.0
    %v1409 = vmax.f32 %v1156, 0.0
    %v1410 = vmax.f32 %v1334, 0.0
    %v1411 = vmax.f32 %v1158, 0.0
    %v1412 = vmax.f32 %v1336, 0.0
    %v1413 = vmax.f32 %v1161, 0.0
    %v1414 = vmax.f32 %v1339, 0.0
    %v1415 = vmax.f32 %v1163, 0.0
    %v1416 = vmax.f32 %v1341, 0.0
    %v1417 = vmax.f32 %v1166, 0.0
    %v1418 = vmax.f32 %v1344, 0.0
    %v1419 = vmax.f32 %v1168, 0.0
    %v1420 = vmax.f32 %v1346, 0.0
    %v1421 = vmax.f32 %v1171, 0.0
    %v1422 = vmax.f32 %v1349, 0.0
    %v1423 = vmax.f32 %v1173, 0.0
    %v1424 = vmax.f32 %v1351, 0.0
    %v1425 = vmax.f32 %v1176, 0.0
    %v1426 = vmax.f32 %v1354, 0.0
    %v1427 = vmax.f32 %v1178, 0.0
    %v1428 = vmax.f32 %v1356, 0.0
    %v1429 = vmax.f32 %v1181, 0.0
    %v1430 = vmax.f32 %v1359, 0.0
    %v1431 = vmax.f32 %v1183, 0.0
    %v1432 = vmax.f32 %v1361, 0.0
    %v1433 = vmax.f32 %v1186, 0.0
    %v1434 = vmax.f32 %v1364, 0.0
    %v1435 = vmax.f32 %v1188, 0.0
    %v1436 = vmax.f32 %v1366, 0.0
    %v1437 = vmax.f32 %v1191, 0.0
    %v1438 = vmax.f32 %v1369, 0.0
    %v1439 = vmax.f32 %v1193, 0.0
    %v1440 = vmax.f32 %v1371, 0.0
    %v1441 = vmax.f32 %v1196, 0.0
    %v1442 = vmax.f32 %v1374, 0.0
    %v1443 = vmax.f32 %v1198, 0.0
    %v1444 = vmax.f32 %v1376, 0.0
    %v1445 = vmax.f32 %v1201, 0.0
    %v1446 = vmax.f32 %v1379, 0.0
    %v1447 = vmax.f32 %v1203, 0.0
    %v1448 = vmax.f32 %v1381, 0.0
    %v1449 = vmax.f32 %v1206, 0.0
    %v1450 = vmax.f32 %v1384, 0.0
    %v1451 = vmax.f32 %v1208, 0.0
    %v1452 = vmax.f32 %v1386, 0.0
    %v1453 = vmax.f32 %v1211, 0.0
    %v1454 = vmax.f32 %v1389, 0.0
    %v1455 = vmax.f32 %v1213, 0.0
    %v1456 = vmax.f32 %v1391, 0.0
    %v1457 = vpack.c.bf16 %v1395, %v1393
    %v1458 = vpack.c.bf16 %v1396, %v1394
    %v1459 = vpack.c.bf16 %v1399, %v1397
    %v1460 = vpack.c.bf16 %v1400, %v1398
    %v1461 = vpack.c.bf16 %v1403, %v1401
    %v1462 = vpack.c.bf16 %v1404, %v1402
    %v1463 = vpack.c.bf16 %v1407, %v1405
    %v1464 = vpack.c.bf16 %v1408, %v1406
    %v1465 = vpack.c.bf16 %v1411, %v1409
    %v1466 = vpack.c.bf16 %v1412, %v1410
    %v1467 = vpack.c.bf16 %v1415, %v1413
    %v1468 = vpack.c.bf16 %v1416, %v1414
    %v1469 = vpack.c.bf16 %v1419, %v1417
    %v1470 = vpack.c.bf16 %v1420, %v1418
    %v1471 = vpack.c.bf16 %v1423, %v1421
    %v1472 = vpack.c.bf16 %v1424, %v1422
    %v1473 = vpack.c.bf16 %v1427, %v1425
    %v1474 = vpack.c.bf16 %v1428, %v1426
    %v1475 = vpack.c.bf16 %v1431, %v1429
    %v1476 = vpack.c.bf16 %v1432, %v1430
    %v1477 = vpack.c.bf16 %v1435, %v1433
    %v1478 = vpack.c.bf16 %v1436, %v1434
    %v1479 = vpack.c.bf16 %v1439, %v1437
    %v1480 = vpack.c.bf16 %v1440, %v1438
    %v1481 = vpack.c.bf16 %v1443, %v1441
    %v1482 = vpack.c.bf16 %v1444, %v1442
    %v1483 = vpack.c.bf16 %v1447, %v1445
    %v1484 = vpack.c.bf16 %v1448, %v1446
    %v1485 = vpack.c.bf16 %v1451, %v1449
    %v1486 = vpack.c.bf16 %v1452, %v1450
    %v1487 = vpack.c.bf16 %v1455, %v1453
    %v1488 = vpack.c.bf16 %v1456, %v1454
    %v1489 = vld [vmem:[%s5] sm:$0xff]
    %v1490 = vld [vmem:[%s5 + $0x8] sm:$0xff]
    %v1491 = vld [vmem:[%s5 + $0x10] sm:$0xff]
    %v1492 = vld [vmem:[%s5 + $0x18] sm:$0xff]
    %v1493 = vld [vmem:[%s5 + $0x20] sm:$0xff]
    %v1494 = vld [vmem:[%s5 + $0x28] sm:$0xff]
    %v1495 = vld [vmem:[%s5 + $0x30] sm:$0xff]
    %v1496 = vld [vmem:[%s5 + $0x38] sm:$0xff]
    %v1497 = vld [vmem:[%s5 + $0x40] sm:$0xff]
    %v1498 = vld [vmem:[%s5 + $0x48] sm:$0xff]
    %v1499 = vld [vmem:[%s5 + $0x50] sm:$0xff]
    %v1500 = vld [vmem:[%s5 + $0x58] sm:$0xff]
    %v1501 = vld [vmem:[%s5 + $0x60] sm:$0xff]
    %v1502 = vld [vmem:[%s5 + $0x68] sm:$0xff]
    %v1503 = vld [vmem:[%s5 + $0x70] sm:$0xff]
    %v1504 = vld [vmem:[%s5 + $0x78] sm:$0xff]
    %v1505 = vld [vmem:[%s5 + $0x80] sm:$0xff]
    %v1506 = vld [vmem:[%s5 + $0x88] sm:$0xff]
    %v1507 = vld [vmem:[%s5 + $0x90] sm:$0xff]
    %v1508 = vld [vmem:[%s5 + $0x98] sm:$0xff]
    %v1509 = vld [vmem:[%s5 + $0xa0] sm:$0xff]
    %v1510 = vld [vmem:[%s5 + $0xa8] sm:$0xff]
    %v1511 = vld [vmem:[%s5 + $0xb0] sm:$0xff]
    %v1512 = vld [vmem:[%s5 + $0xb8] sm:$0xff]
    %v1513 = vld [vmem:[%s5 + $0xc0] sm:$0xff]
    %v1514 = vld [vmem:[%s5 + $0xc8] sm:$0xff]
    %v1515 = vld [vmem:[%s5 + $0xd0] sm:$0xff]
    %v1516 = vld [vmem:[%s5 + $0xd8] sm:$0xff]
    %v1517 = vld [vmem:[%s5 + $0xe0] sm:$0xff]
    %v1518 = vld [vmem:[%s5 + $0xe8] sm:$0xff]
    %v1519 = vld [vmem:[%s5 + $0xf0] sm:$0xff]
    %v1520 = vld [vmem:[%s5 + $0xf8] sm:$0xff]
    %v1521 = vld [vmem:[%s6] sm:$0x3]
    %v1523 = vperm.slane %v1521, 0
    %v1524 = vperm.slane %v1521, 1
    %v1559 = vunpack.c.l.b16 %v1489
    %v1560 = vunpack.c.h.b16 %v1489
    %v1561 = vunpack.c.l.b16 %v1490
    %v1562 = vunpack.c.h.b16 %v1490
    %v1563 = vunpack.c.l.b16 %v1491
    %v1564 = vunpack.c.h.b16 %v1491
    %v1565 = vunpack.c.l.b16 %v1492
    %v1566 = vunpack.c.h.b16 %v1492
    %v1567 = vunpack.c.l.b16 %v1493
    %v1568 = vunpack.c.h.b16 %v1493
    %v1569 = vunpack.c.l.b16 %v1494
    %v1570 = vunpack.c.h.b16 %v1494
    %v1571 = vunpack.c.l.b16 %v1495
    %v1572 = vunpack.c.h.b16 %v1495
    %v1573 = vunpack.c.l.b16 %v1496
    %v1574 = vunpack.c.h.b16 %v1496
    %v1575 = vunpack.c.l.b16 %v1497
    %v1576 = vunpack.c.h.b16 %v1497
    %v1577 = vunpack.c.l.b16 %v1498
    %v1578 = vunpack.c.h.b16 %v1498
    %v1579 = vunpack.c.l.b16 %v1499
    %v1580 = vunpack.c.h.b16 %v1499
    %v1581 = vunpack.c.l.b16 %v1500
    %v1582 = vunpack.c.h.b16 %v1500
    %v1583 = vunpack.c.l.b16 %v1501
    %v1584 = vunpack.c.h.b16 %v1501
    %v1585 = vunpack.c.l.b16 %v1502
    %v1586 = vunpack.c.h.b16 %v1502
    %v1587 = vunpack.c.l.b16 %v1503
    %v1588 = vunpack.c.h.b16 %v1503
    %v1589 = vunpack.c.l.b16 %v1504
    %v1590 = vunpack.c.h.b16 %v1504
    %v1591 = vunpack.c.l.b16 %v1505
    %v1592 = vunpack.c.h.b16 %v1505
    %v1593 = vunpack.c.l.b16 %v1506
    %v1594 = vunpack.c.h.b16 %v1506
    %v1595 = vunpack.c.l.b16 %v1507
    %v1596 = vunpack.c.h.b16 %v1507
    %v1597 = vunpack.c.l.b16 %v1508
    %v1598 = vunpack.c.h.b16 %v1508
    %v1599 = vunpack.c.l.b16 %v1509
    %v1600 = vunpack.c.h.b16 %v1509
    %v1601 = vunpack.c.l.b16 %v1510
    %v1602 = vunpack.c.h.b16 %v1510
    %v1603 = vunpack.c.l.b16 %v1511
    %v1604 = vunpack.c.h.b16 %v1511
    %v1605 = vunpack.c.l.b16 %v1512
    %v1606 = vunpack.c.h.b16 %v1512
    %v1607 = vunpack.c.l.b16 %v1513
    %v1608 = vunpack.c.h.b16 %v1513
    %v1609 = vunpack.c.l.b16 %v1514
    %v1610 = vunpack.c.h.b16 %v1514
    %v1611 = vunpack.c.l.b16 %v1515
    %v1612 = vunpack.c.h.b16 %v1515
    %v1613 = vunpack.c.l.b16 %v1516
    %v1614 = vunpack.c.h.b16 %v1516
    %v1615 = vunpack.c.l.b16 %v1517
    %v1616 = vunpack.c.h.b16 %v1517
    %v1617 = vunpack.c.l.b16 %v1518
    %v1618 = vunpack.c.h.b16 %v1518
    %v1619 = vunpack.c.l.b16 %v1519
    %v1620 = vunpack.c.h.b16 %v1519
    %v1621 = vunpack.c.l.b16 %v1520
    %v1622 = vunpack.c.h.b16 %v1520
    %v1623 = vpack.c.b16 %v1561, %v1559
    %v1624 = vpack.c.b16 %v1562, %v1560
    %v1625 = vpack.c.b16 %v1565, %v1563
    %v1626 = vpack.c.b16 %v1566, %v1564
    %v1627 = vpack.c.b16 %v1569, %v1567
    %v1628 = vpack.c.b16 %v1570, %v1568
    %v1629 = vpack.c.b16 %v1573, %v1571
    %v1630 = vpack.c.b16 %v1574, %v1572
    %v1631 = vpack.c.b16 %v1577, %v1575
    %v1632 = vpack.c.b16 %v1578, %v1576
    %v1633 = vpack.c.b16 %v1581, %v1579
    %v1634 = vpack.c.b16 %v1582, %v1580
    %v1635 = vpack.c.b16 %v1585, %v1583
    %v1636 = vpack.c.b16 %v1586, %v1584
    %v1637 = vpack.c.b16 %v1589, %v1587
    %v1638 = vpack.c.b16 %v1590, %v1588
    %v1639 = vpack.c.b16 %v1593, %v1591
    %v1640 = vpack.c.b16 %v1594, %v1592
    %v1641 = vpack.c.b16 %v1597, %v1595
    %v1642 = vpack.c.b16 %v1598, %v1596
    %v1643 = vpack.c.b16 %v1601, %v1599
    %v1644 = vpack.c.b16 %v1602, %v1600
    %v1645 = vpack.c.b16 %v1605, %v1603
    %v1646 = vpack.c.b16 %v1606, %v1604
    %v1647 = vpack.c.b16 %v1609, %v1607
    %v1648 = vpack.c.b16 %v1610, %v1608
    %v1649 = vpack.c.b16 %v1613, %v1611
    %v1650 = vpack.c.b16 %v1614, %v1612
    %v1651 = vpack.c.b16 %v1617, %v1615
    %v1652 = vpack.c.b16 %v1618, %v1616
    %v1653 = vpack.c.b16 %v1621, %v1619
    %v1654 = vpack.c.b16 %v1622, %v1620
    %1687 = vmatpush.bf16.msra.mxu0 %v1637
    %1688 = vmatpush.bf16.msra.mxu0 %v1635
    %1689 = vmatpush.bf16.msra.mxu0 %v1633
    %1690 = vmatpush.bf16.msra.mxu0 %v1631
    %1691 = vmatpush.bf16.msra.mxu0 %v1629
    %1692 = vmatpush.bf16.msra.mxu0 %v1627
    %1693 = vmatpush.bf16.msra.mxu0 %v1625
    %1694 = vmatpush.bf16.msra.mxu0 %v1623
    %1695 = vmatmul.bf16.gmra.mxu0 %v1457
    %v1696 = vpop.f32.mrf.mxu0
    %v1697 = vadd.f32 %v1523, %v1696
    %v1698 = vpop.f32.mrf.mxu0
    %v1699 = vadd.f32 %v1523, %v1698
    %1700 = vmatmul.bf16.gmra.mxu0 %v1459
    %v1701 = vpop.f32.mrf.mxu0
    %v1702 = vadd.f32 %v1523, %v1701
    %v1703 = vpop.f32.mrf.mxu0
    %v1704 = vadd.f32 %v1523, %v1703
    %1705 = vmatmul.bf16.gmra.mxu0 %v1461
    %v1706 = vpop.f32.mrf.mxu0
    %v1707 = vadd.f32 %v1523, %v1706
    %v1708 = vpop.f32.mrf.mxu0
    %v1709 = vadd.f32 %v1523, %v1708
    %1710 = vmatmul.bf16.gmra.mxu0 %v1463
    %v1711 = vpop.f32.mrf.mxu0
    %v1712 = vadd.f32 %v1523, %v1711
    %v1713 = vpop.f32.mrf.mxu0
    %v1714 = vadd.f32 %v1523, %v1713
    %1715 = vmatmul.bf16.gmra.mxu0 %v1465
    %v1716 = vpop.f32.mrf.mxu0
    %v1717 = vadd.f32 %v1523, %v1716
    %v1718 = vpop.f32.mrf.mxu0
    %v1719 = vadd.f32 %v1523, %v1718
    %1720 = vmatmul.bf16.gmra.mxu0 %v1467
    %v1721 = vpop.f32.mrf.mxu0
    %v1722 = vadd.f32 %v1523, %v1721
    %v1723 = vpop.f32.mrf.mxu0
    %v1724 = vadd.f32 %v1523, %v1723
    %1725 = vmatmul.bf16.gmra.mxu0 %v1469
    %v1726 = vpop.f32.mrf.mxu0
    %v1727 = vadd.f32 %v1523, %v1726
    %v1728 = vpop.f32.mrf.mxu0
    %v1729 = vadd.f32 %v1523, %v1728
    %1730 = vmatmul.bf16.gmra.mxu0 %v1471
    %v1731 = vpop.f32.mrf.mxu0
    %v1732 = vadd.f32 %v1523, %v1731
    %v1733 = vpop.f32.mrf.mxu0
    %v1734 = vadd.f32 %v1523, %v1733
    %1735 = vmatmul.bf16.gmra.mxu0 %v1473
    %v1736 = vpop.f32.mrf.mxu0
    %v1737 = vadd.f32 %v1523, %v1736
    %v1738 = vpop.f32.mrf.mxu0
    %v1739 = vadd.f32 %v1523, %v1738
    %1740 = vmatmul.bf16.gmra.mxu0 %v1475
    %v1741 = vpop.f32.mrf.mxu0
    %v1742 = vadd.f32 %v1523, %v1741
    %v1743 = vpop.f32.mrf.mxu0
    %v1744 = vadd.f32 %v1523, %v1743
    %1745 = vmatmul.bf16.gmra.mxu0 %v1477
    %v1746 = vpop.f32.mrf.mxu0
    %v1747 = vadd.f32 %v1523, %v1746
    %v1748 = vpop.f32.mrf.mxu0
    %v1749 = vadd.f32 %v1523, %v1748
    %1750 = vmatmul.bf16.gmra.mxu0 %v1479
    %v1751 = vpop.f32.mrf.mxu0
    %v1752 = vadd.f32 %v1523, %v1751
    %v1753 = vpop.f32.mrf.mxu0
    %v1754 = vadd.f32 %v1523, %v1753
    %1755 = vmatmul.bf16.gmra.mxu0 %v1481
    %v1756 = vpop.f32.mrf.mxu0
    %v1757 = vadd.f32 %v1523, %v1756
    %v1758 = vpop.f32.mrf.mxu0
    %v1759 = vadd.f32 %v1523, %v1758
    %1760 = vmatmul.bf16.gmra.mxu0 %v1483
    %v1761 = vpop.f32.mrf.mxu0
    %v1762 = vadd.f32 %v1523, %v1761
    %v1763 = vpop.f32.mrf.mxu0
    %v1764 = vadd.f32 %v1523, %v1763
    %1765 = vmatmul.bf16.gmra.mxu0 %v1485
    %v1766 = vpop.f32.mrf.mxu0
    %v1767 = vadd.f32 %v1523, %v1766
    %v1768 = vpop.f32.mrf.mxu0
    %v1769 = vadd.f32 %v1523, %v1768
    %1770 = vmatmul.bf16.gmra.mxu0 %v1487
    %v1771 = vpop.f32.mrf.mxu0
    %v1772 = vadd.f32 %v1523, %v1771
    %v1773 = vpop.f32.mrf.mxu0
    %v1774 = vadd.f32 %v1523, %v1773
    %1775 = vdwg.mxu0
    %1776 = vmatpush.bf16.msra.mxu0 %v1653
    %1777 = vmatpush.bf16.msra.mxu0 %v1651
    %1778 = vmatpush.bf16.msra.mxu0 %v1649
    %1779 = vmatpush.bf16.msra.mxu0 %v1647
    %1780 = vmatpush.bf16.msra.mxu0 %v1645
    %1781 = vmatpush.bf16.msra.mxu0 %v1643
    %1782 = vmatpush.bf16.msra.mxu0 %v1641
    %1783 = vmatpush.bf16.msra.mxu0 %v1639
    %1784 = vmatmul.bf16.gmra.mxu0 %v1458
    %v1785 = vpop.f32.mrf.mxu0
    %v1786 = vadd.f32 %v1697, %v1785
    %v1787 = vpop.f32.mrf.mxu0
    %v1788 = vadd.f32 %v1699, %v1787
    %1789 = vmatmul.bf16.gmra.mxu0 %v1460
    %v1790 = vpop.f32.mrf.mxu0
    %v1791 = vadd.f32 %v1702, %v1790
    %v1792 = vpop.f32.mrf.mxu0
    %v1793 = vadd.f32 %v1704, %v1792
    %1794 = vmatmul.bf16.gmra.mxu0 %v1462
    %v1795 = vpop.f32.mrf.mxu0
    %v1796 = vadd.f32 %v1707, %v1795
    %v1797 = vpop.f32.mrf.mxu0
    %v1798 = vadd.f32 %v1709, %v1797
    %1799 = vmatmul.bf16.gmra.mxu0 %v1464
    %v1800 = vpop.f32.mrf.mxu0
    %v1801 = vadd.f32 %v1712, %v1800
    %v1802 = vpop.f32.mrf.mxu0
    %v1803 = vadd.f32 %v1714, %v1802
    %1804 = vmatmul.bf16.gmra.mxu0 %v1466
    %v1805 = vpop.f32.mrf.mxu0
    %v1806 = vadd.f32 %v1717, %v1805
    %v1807 = vpop.f32.mrf.mxu0
    %v1808 = vadd.f32 %v1719, %v1807
    %1809 = vmatmul.bf16.gmra.mxu0 %v1468
    %v1810 = vpop.f32.mrf.mxu0
    %v1811 = vadd.f32 %v1722, %v1810
    %v1812 = vpop.f32.mrf.mxu0
    %v1813 = vadd.f32 %v1724, %v1812
    %1814 = vmatmul.bf16.gmra.mxu0 %v1470
    %v1815 = vpop.f32.mrf.mxu0
    %v1816 = vadd.f32 %v1727, %v1815
    %v1817 = vpop.f32.mrf.mxu0
    %v1818 = vadd.f32 %v1729, %v1817
    %1819 = vmatmul.bf16.gmra.mxu0 %v1472
    %v1820 = vpop.f32.mrf.mxu0
    %v1821 = vadd.f32 %v1732, %v1820
    %v1822 = vpop.f32.mrf.mxu0
    %v1823 = vadd.f32 %v1734, %v1822
    %1824 = vmatmul.bf16.gmra.mxu0 %v1474
    %v1825 = vpop.f32.mrf.mxu0
    %v1826 = vadd.f32 %v1737, %v1825
    %v1827 = vpop.f32.mrf.mxu0
    %v1828 = vadd.f32 %v1739, %v1827
    %1829 = vmatmul.bf16.gmra.mxu0 %v1476
    %v1830 = vpop.f32.mrf.mxu0
    %v1831 = vadd.f32 %v1742, %v1830
    %v1832 = vpop.f32.mrf.mxu0
    %v1833 = vadd.f32 %v1744, %v1832
    %1834 = vmatmul.bf16.gmra.mxu0 %v1478
    %v1835 = vpop.f32.mrf.mxu0
    %v1836 = vadd.f32 %v1747, %v1835
    %v1837 = vpop.f32.mrf.mxu0
    %v1838 = vadd.f32 %v1749, %v1837
    %1839 = vmatmul.bf16.gmra.mxu0 %v1480
    %v1840 = vpop.f32.mrf.mxu0
    %v1841 = vadd.f32 %v1752, %v1840
    %v1842 = vpop.f32.mrf.mxu0
    %v1843 = vadd.f32 %v1754, %v1842
    %1844 = vmatmul.bf16.gmra.mxu0 %v1482
    %v1845 = vpop.f32.mrf.mxu0
    %v1846 = vadd.f32 %v1757, %v1845
    %v1847 = vpop.f32.mrf.mxu0
    %v1848 = vadd.f32 %v1759, %v1847
    %1849 = vmatmul.bf16.gmra.mxu0 %v1484
    %v1850 = vpop.f32.mrf.mxu0
    %v1851 = vadd.f32 %v1762, %v1850
    %v1852 = vpop.f32.mrf.mxu0
    %v1853 = vadd.f32 %v1764, %v1852
    %1854 = vmatmul.bf16.gmra.mxu0 %v1486
    %v1855 = vpop.f32.mrf.mxu0
    %v1856 = vadd.f32 %v1767, %v1855
    %v1857 = vpop.f32.mrf.mxu0
    %v1858 = vadd.f32 %v1769, %v1857
    %1859 = vmatmul.bf16.gmra.mxu0 %v1488
    %v1860 = vpop.f32.mrf.mxu0
    %v1861 = vadd.f32 %v1772, %v1860
    %v1862 = vpop.f32.mrf.mxu0
    %v1863 = vadd.f32 %v1774, %v1862
    %1864 = vdwg.mxu0
    %1865 = vmatpush.bf16.msra.mxu0 %v1638
    %1866 = vmatpush.bf16.msra.mxu0 %v1636
    %1867 = vmatpush.bf16.msra.mxu0 %v1634
    %1868 = vmatpush.bf16.msra.mxu0 %v1632
    %1869 = vmatpush.bf16.msra.mxu0 %v1630
    %1870 = vmatpush.bf16.msra.mxu0 %v1628
    %1871 = vmatpush.bf16.msra.mxu0 %v1626
    %1872 = vmatpush.bf16.msra.mxu0 %v1624
    %1873 = vmatmul.bf16.gmra.mxu0 %v1457
    %v1874 = vpop.f32.mrf.mxu0
    %v1875 = vadd.f32 %v1524, %v1874
    %v1876 = vpop.f32.mrf.mxu0
    %v1877 = vadd.f32 %v1524, %v1876
    %1878 = vmatmul.bf16.gmra.mxu0 %v1459
    %v1879 = vpop.f32.mrf.mxu0
    %v1880 = vadd.f32 %v1524, %v1879
    %v1881 = vpop.f32.mrf.mxu0
    %v1882 = vadd.f32 %v1524, %v1881
    %1883 = vmatmul.bf16.gmra.mxu0 %v1461
    %v1884 = vpop.f32.mrf.mxu0
    %v1885 = vadd.f32 %v1524, %v1884
    %v1886 = vpop.f32.mrf.mxu0
    %v1887 = vadd.f32 %v1524, %v1886
    %1888 = vmatmul.bf16.gmra.mxu0 %v1463
    %v1889 = vpop.f32.mrf.mxu0
    %v1890 = vadd.f32 %v1524, %v1889
    %v1891 = vpop.f32.mrf.mxu0
    %v1892 = vadd.f32 %v1524, %v1891
    %1893 = vmatmul.bf16.gmra.mxu0 %v1465
    %v1894 = vpop.f32.mrf.mxu0
    %v1895 = vadd.f32 %v1524, %v1894
    %v1896 = vpop.f32.mrf.mxu0
    %v1897 = vadd.f32 %v1524, %v1896
    %1898 = vmatmul.bf16.gmra.mxu0 %v1467
    %v1899 = vpop.f32.mrf.mxu0
    %v1900 = vadd.f32 %v1524, %v1899
    %v1901 = vpop.f32.mrf.mxu0
    %v1902 = vadd.f32 %v1524, %v1901
    %1903 = vmatmul.bf16.gmra.mxu0 %v1469
    %v1904 = vpop.f32.mrf.mxu0
    %v1905 = vadd.f32 %v1524, %v1904
    %v1906 = vpop.f32.mrf.mxu0
    %v1907 = vadd.f32 %v1524, %v1906
    %1908 = vmatmul.bf16.gmra.mxu0 %v1471
    %v1909 = vpop.f32.mrf.mxu0
    %v1910 = vadd.f32 %v1524, %v1909
    %v1911 = vpop.f32.mrf.mxu0
    %v1912 = vadd.f32 %v1524, %v1911
    %1913 = vmatmul.bf16.gmra.mxu0 %v1473
    %v1914 = vpop.f32.mrf.mxu0
    %v1915 = vadd.f32 %v1524, %v1914
    %v1916 = vpop.f32.mrf.mxu0
    %v1917 = vadd.f32 %v1524, %v1916
    %1918 = vmatmul.bf16.gmra.mxu0 %v1475
    %v1919 = vpop.f32.mrf.mxu0
    %v1920 = vadd.f32 %v1524, %v1919
    %v1921 = vpop.f32.mrf.mxu0
    %v1922 = vadd.f32 %v1524, %v1921
    %1923 = vmatmul.bf16.gmra.mxu0 %v1477
    %v1924 = vpop.f32.mrf.mxu0
    %v1925 = vadd.f32 %v1524, %v1924
    %v1926 = vpop.f32.mrf.mxu0
    %v1927 = vadd.f32 %v1524, %v1926
    %1928 = vmatmul.bf16.gmra.mxu0 %v1479
    %v1929 = vpop.f32.mrf.mxu0
    %v1930 = vadd.f32 %v1524, %v1929
    %v1931 = vpop.f32.mrf.mxu0
    %v1932 = vadd.f32 %v1524, %v1931
    %1933 = vmatmul.bf16.gmra.mxu0 %v1481
    %v1934 = vpop.f32.mrf.mxu0
    %v1935 = vadd.f32 %v1524, %v1934
    %v1936 = vpop.f32.mrf.mxu0
    %v1937 = vadd.f32 %v1524, %v1936
    %1938 = vmatmul.bf16.gmra.mxu0 %v1483
    %v1939 = vpop.f32.mrf.mxu0
    %v1940 = vadd.f32 %v1524, %v1939
    %v1941 = vpop.f32.mrf.mxu0
    %v1942 = vadd.f32 %v1524, %v1941
    %1943 = vmatmul.bf16.gmra.mxu0 %v1485
    %v1944 = vpop.f32.mrf.mxu0
    %v1945 = vadd.f32 %v1524, %v1944
    %v1946 = vpop.f32.mrf.mxu0
    %v1947 = vadd.f32 %v1524, %v1946
    %1948 = vmatmul.bf16.gmra.mxu0 %v1487
    %v1949 = vpop.f32.mrf.mxu0
    %v1950 = vadd.f32 %v1524, %v1949
    %v1951 = vpop.f32.mrf.mxu0
    %v1952 = vadd.f32 %v1524, %v1951
    %1953 = vdwg.mxu0
    %1954 = vmatpush.bf16.msra.mxu0 %v1654
    %1955 = vmatpush.bf16.msra.mxu0 %v1652
    %1956 = vmatpush.bf16.msra.mxu0 %v1650
    %1957 = vmatpush.bf16.msra.mxu0 %v1648
    %1958 = vmatpush.bf16.msra.mxu0 %v1646
    %1959 = vmatpush.bf16.msra.mxu0 %v1644
    %1960 = vmatpush.bf16.msra.mxu0 %v1642
    %1961 = vmatpush.bf16.msra.mxu0 %v1640
    %1962 = vmatmul.bf16.gmra.mxu0 %v1458
    %v1963 = vpop.f32.mrf.mxu0
    %v1964 = vadd.f32 %v1875, %v1963
    %v1965 = vpop.f32.mrf.mxu0
    %v1966 = vadd.f32 %v1877, %v1965
    %1967 = vmatmul.bf16.gmra.mxu0 %v1460
    %v1968 = vpop.f32.mrf.mxu0
    %v1969 = vadd.f32 %v1880, %v1968
    %v1970 = vpop.f32.mrf.mxu0
    %v1971 = vadd.f32 %v1882, %v1970
    %1972 = vmatmul.bf16.gmra.mxu0 %v1462
    %v1973 = vpop.f32.mrf.mxu0
    %v1974 = vadd.f32 %v1885, %v1973
    %v1975 = vpop.f32.mrf.mxu0
    %v1976 = vadd.f32 %v1887, %v1975
    %1977 = vmatmul.bf16.gmra.mxu0 %v1464
    %v1978 = vpop.f32.mrf.mxu0
    %v1979 = vadd.f32 %v1890, %v1978
    %v1980 = vpop.f32.mrf.mxu0
    %v1981 = vadd.f32 %v1892, %v1980
    %1982 = vmatmul.bf16.gmra.mxu0 %v1466
    %v1983 = vpop.f32.mrf.mxu0
    %v1984 = vadd.f32 %v1895, %v1983
    %v1985 = vpop.f32.mrf.mxu0
    %v1986 = vadd.f32 %v1897, %v1985
    %1987 = vmatmul.bf16.gmra.mxu0 %v1468
    %v1988 = vpop.f32.mrf.mxu0
    %v1989 = vadd.f32 %v1900, %v1988
    %v1990 = vpop.f32.mrf.mxu0
    %v1991 = vadd.f32 %v1902, %v1990
    %1992 = vmatmul.bf16.gmra.mxu0 %v1470
    %v1993 = vpop.f32.mrf.mxu0
    %v1994 = vadd.f32 %v1905, %v1993
    %v1995 = vpop.f32.mrf.mxu0
    %v1996 = vadd.f32 %v1907, %v1995
    %1997 = vmatmul.bf16.gmra.mxu0 %v1472
    %v1998 = vpop.f32.mrf.mxu0
    %v1999 = vadd.f32 %v1910, %v1998
    %v2000 = vpop.f32.mrf.mxu0
    %v2001 = vadd.f32 %v1912, %v2000
    %2002 = vmatmul.bf16.gmra.mxu0 %v1474
    %v2003 = vpop.f32.mrf.mxu0
    %v2004 = vadd.f32 %v1915, %v2003
    %v2005 = vpop.f32.mrf.mxu0
    %v2006 = vadd.f32 %v1917, %v2005
    %2007 = vmatmul.bf16.gmra.mxu0 %v1476
    %v2008 = vpop.f32.mrf.mxu0
    %v2009 = vadd.f32 %v1920, %v2008
    %v2010 = vpop.f32.mrf.mxu0
    %v2011 = vadd.f32 %v1922, %v2010
    %2012 = vmatmul.bf16.gmra.mxu0 %v1478
    %v2013 = vpop.f32.mrf.mxu0
    %v2014 = vadd.f32 %v1925, %v2013
    %v2015 = vpop.f32.mrf.mxu0
    %v2016 = vadd.f32 %v1927, %v2015
    %2017 = vmatmul.bf16.gmra.mxu0 %v1480
    %v2018 = vpop.f32.mrf.mxu0
    %v2019 = vadd.f32 %v1930, %v2018
    %v2020 = vpop.f32.mrf.mxu0
    %v2021 = vadd.f32 %v1932, %v2020
    %2022 = vmatmul.bf16.gmra.mxu0 %v1482
    %v2023 = vpop.f32.mrf.mxu0
    %v2024 = vadd.f32 %v1935, %v2023
    %v2025 = vpop.f32.mrf.mxu0
    %v2026 = vadd.f32 %v1937, %v2025
    %2027 = vmatmul.bf16.gmra.mxu0 %v1484
    %v2028 = vpop.f32.mrf.mxu0
    %v2029 = vadd.f32 %v1940, %v2028
    %v2030 = vpop.f32.mrf.mxu0
    %v2031 = vadd.f32 %v1942, %v2030
    %2032 = vmatmul.bf16.gmra.mxu0 %v1486
    %v2033 = vpop.f32.mrf.mxu0
    %v2034 = vadd.f32 %v1945, %v2033
    %v2035 = vpop.f32.mrf.mxu0
    %v2036 = vadd.f32 %v1947, %v2035
    %2037 = vmatmul.bf16.gmra.mxu0 %v1488
    %v2038 = vpop.f32.mrf.mxu0
    %v2039 = vadd.f32 %v1950, %v2038
    %v2040 = vpop.f32.mrf.mxu0
    %v2041 = vadd.f32 %v1952, %v2040
    %2042 = vdwg.mxu0
    %v2043 = vmax.f32 %v1786, 0.0
    %v2044 = vmax.f32 %v1964, 0.0
    %v2045 = vmax.f32 %v1788, 0.0
    %v2046 = vmax.f32 %v1966, 0.0
    %v2047 = vmax.f32 %v1791, 0.0
    %v2048 = vmax.f32 %v1969, 0.0
    %v2049 = vmax.f32 %v1793, 0.0
    %v2050 = vmax.f32 %v1971, 0.0
    %v2051 = vmax.f32 %v1796, 0.0
    %v2052 = vmax.f32 %v1974, 0.0
    %v2053 = vmax.f32 %v1798, 0.0
    %v2054 = vmax.f32 %v1976, 0.0
    %v2055 = vmax.f32 %v1801, 0.0
    %v2056 = vmax.f32 %v1979, 0.0
    %v2057 = vmax.f32 %v1803, 0.0
    %v2058 = vmax.f32 %v1981, 0.0
    %v2059 = vmax.f32 %v1806, 0.0
    %v2060 = vmax.f32 %v1984, 0.0
    %v2061 = vmax.f32 %v1808, 0.0
    %v2062 = vmax.f32 %v1986, 0.0
    %v2063 = vmax.f32 %v1811, 0.0
    %v2064 = vmax.f32 %v1989, 0.0
    %v2065 = vmax.f32 %v1813, 0.0
    %v2066 = vmax.f32 %v1991, 0.0
    %v2067 = vmax.f32 %v1816, 0.0
    %v2068 = vmax.f32 %v1994, 0.0
    %v2069 = vmax.f32 %v1818, 0.0
    %v2070 = vmax.f32 %v1996, 0.0
    %v2071 = vmax.f32 %v1821, 0.0
    %v2072 = vmax.f32 %v1999, 0.0
    %v2073 = vmax.f32 %v1823, 0.0
    %v2074 = vmax.f32 %v2001, 0.0
    %v2075 = vmax.f32 %v1826, 0.0
    %v2076 = vmax.f32 %v2004, 0.0
    %v2077 = vmax.f32 %v1828, 0.0
    %v2078 = vmax.f32 %v2006, 0.0
    %v2079 = vmax.f32 %v1831, 0.0
    %v2080 = vmax.f32 %v2009, 0.0
    %v2081 = vmax.f32 %v1833, 0.0
    %v2082 = vmax.f32 %v2011, 0.0
    %v2083 = vmax.f32 %v1836, 0.0
    %v2084 = vmax.f32 %v2014, 0.0
    %v2085 = vmax.f32 %v1838, 0.0
    %v2086 = vmax.f32 %v2016, 0.0
    %v2087 = vmax.f32 %v1841, 0.0
    %v2088 = vmax.f32 %v2019, 0.0
    %v2089 = vmax.f32 %v1843, 0.0
    %v2090 = vmax.f32 %v2021, 0.0
    %v2091 = vmax.f32 %v1846, 0.0
    %v2092 = vmax.f32 %v2024, 0.0
    %v2093 = vmax.f32 %v1848, 0.0
    %v2094 = vmax.f32 %v2026, 0.0
    %v2095 = vmax.f32 %v1851, 0.0
    %v2096 = vmax.f32 %v2029, 0.0
    %v2097 = vmax.f32 %v1853, 0.0
    %v2098 = vmax.f32 %v2031, 0.0
    %v2099 = vmax.f32 %v1856, 0.0
    %v2100 = vmax.f32 %v2034, 0.0
    %v2101 = vmax.f32 %v1858, 0.0
    %v2102 = vmax.f32 %v2036, 0.0
    %v2103 = vmax.f32 %v1861, 0.0
    %v2104 = vmax.f32 %v2039, 0.0
    %v2105 = vmax.f32 %v1863, 0.0
    %v2106 = vmax.f32 %v2041, 0.0
    %v2107 = vpack.c.bf16 %v2045, %v2043
    %v2108 = vpack.c.bf16 %v2046, %v2044
    %v2109 = vpack.c.bf16 %v2049, %v2047
    %v2110 = vpack.c.bf16 %v2050, %v2048
    %v2111 = vpack.c.bf16 %v2053, %v2051
    %v2112 = vpack.c.bf16 %v2054, %v2052
    %v2113 = vpack.c.bf16 %v2057, %v2055
    %v2114 = vpack.c.bf16 %v2058, %v2056
    %v2115 = vpack.c.bf16 %v2061, %v2059
    %v2116 = vpack.c.bf16 %v2062, %v2060
    %v2117 = vpack.c.bf16 %v2065, %v2063
    %v2118 = vpack.c.bf16 %v2066, %v2064
    %v2119 = vpack.c.bf16 %v2069, %v2067
    %v2120 = vpack.c.bf16 %v2070, %v2068
    %v2121 = vpack.c.bf16 %v2073, %v2071
    %v2122 = vpack.c.bf16 %v2074, %v2072
    %v2123 = vpack.c.bf16 %v2077, %v2075
    %v2124 = vpack.c.bf16 %v2078, %v2076
    %v2125 = vpack.c.bf16 %v2081, %v2079
    %v2126 = vpack.c.bf16 %v2082, %v2080
    %v2127 = vpack.c.bf16 %v2085, %v2083
    %v2128 = vpack.c.bf16 %v2086, %v2084
    %v2129 = vpack.c.bf16 %v2089, %v2087
    %v2130 = vpack.c.bf16 %v2090, %v2088
    %v2131 = vpack.c.bf16 %v2093, %v2091
    %v2132 = vpack.c.bf16 %v2094, %v2092
    %v2133 = vpack.c.bf16 %v2097, %v2095
    %v2134 = vpack.c.bf16 %v2098, %v2096
    %v2135 = vpack.c.bf16 %v2101, %v2099
    %v2136 = vpack.c.bf16 %v2102, %v2100
    %v2137 = vpack.c.bf16 %v2105, %v2103
    %v2138 = vpack.c.bf16 %v2106, %v2104
    %v2139 = vld [vmem:[%s7] sm:$0xff]
    %v2140 = vld [vmem:[%s7 + $0x8] sm:$0xff]
    %v2141 = vld [vmem:[%s7 + $0x10] sm:$0xff]
    %v2142 = vld [vmem:[%s7 + $0x18] sm:$0xff]
    %v2143 = vld [vmem:[%s7 + $0x20] sm:$0xff]
    %v2144 = vld [vmem:[%s7 + $0x28] sm:$0xff]
    %v2145 = vld [vmem:[%s7 + $0x30] sm:$0xff]
    %v2146 = vld [vmem:[%s7 + $0x38] sm:$0xff]
    %v2147 = vld [vmem:[%s7 + $0x40] sm:$0xff]
    %v2148 = vld [vmem:[%s7 + $0x48] sm:$0xff]
    %v2149 = vld [vmem:[%s7 + $0x50] sm:$0xff]
    %v2150 = vld [vmem:[%s7 + $0x58] sm:$0xff]
    %v2151 = vld [vmem:[%s7 + $0x60] sm:$0xff]
    %v2152 = vld [vmem:[%s7 + $0x68] sm:$0xff]
    %v2153 = vld [vmem:[%s7 + $0x70] sm:$0xff]
    %v2154 = vld [vmem:[%s7 + $0x78] sm:$0xff]
    %v2155 = vld [vmem:[%s7 + $0x80] sm:$0xff]
    %v2156 = vld [vmem:[%s7 + $0x88] sm:$0xff]
    %v2157 = vld [vmem:[%s7 + $0x90] sm:$0xff]
    %v2158 = vld [vmem:[%s7 + $0x98] sm:$0xff]
    %v2159 = vld [vmem:[%s7 + $0xa0] sm:$0xff]
    %v2160 = vld [vmem:[%s7 + $0xa8] sm:$0xff]
    %v2161 = vld [vmem:[%s7 + $0xb0] sm:$0xff]
    %v2162 = vld [vmem:[%s7 + $0xb8] sm:$0xff]
    %v2163 = vld [vmem:[%s7 + $0xc0] sm:$0xff]
    %v2164 = vld [vmem:[%s7 + $0xc8] sm:$0xff]
    %v2165 = vld [vmem:[%s7 + $0xd0] sm:$0xff]
    %v2166 = vld [vmem:[%s7 + $0xd8] sm:$0xff]
    %v2167 = vld [vmem:[%s7 + $0xe0] sm:$0xff]
    %v2168 = vld [vmem:[%s7 + $0xe8] sm:$0xff]
    %v2169 = vld [vmem:[%s7 + $0xf0] sm:$0xff]
    %v2170 = vld [vmem:[%s7 + $0xf8] sm:$0xff]
    %v2171 = vld [vmem:[%s8] sm:$0x3]
    %v2173 = vperm.slane %v2171, 0
    %v2174 = vperm.slane %v2171, 1
    %v2209 = vunpack.c.l.b16 %v2139
    %v2210 = vunpack.c.h.b16 %v2139
    %v2211 = vunpack.c.l.b16 %v2140
    %v2212 = vunpack.c.h.b16 %v2140
    %v2213 = vunpack.c.l.b16 %v2141
    %v2214 = vunpack.c.h.b16 %v2141
    %v2215 = vunpack.c.l.b16 %v2142
    %v2216 = vunpack.c.h.b16 %v2142
    %v2217 = vunpack.c.l.b16 %v2143
    %v2218 = vunpack.c.h.b16 %v2143
    %v2219 = vunpack.c.l.b16 %v2144
    %v2220 = vunpack.c.h.b16 %v2144
    %v2221 = vunpack.c.l.b16 %v2145
    %v2222 = vunpack.c.h.b16 %v2145
    %v2223 = vunpack.c.l.b16 %v2146
    %v2224 = vunpack.c.h.b16 %v2146
    %v2225 = vunpack.c.l.b16 %v2147
    %v2226 = vunpack.c.h.b16 %v2147
    %v2227 = vunpack.c.l.b16 %v2148
    %v2228 = vunpack.c.h.b16 %v2148
    %v2229 = vunpack.c.l.b16 %v2149
    %v2230 = vunpack.c.h.b16 %v2149
    %v2231 = vunpack.c.l.b16 %v2150
    %v2232 = vunpack.c.h.b16 %v2150
    %v2233 = vunpack.c.l.b16 %v2151
    %v2234 = vunpack.c.h.b16 %v2151
    %v2235 = vunpack.c.l.b16 %v2152
    %v2236 = vunpack.c.h.b16 %v2152
    %v2237 = vunpack.c.l.b16 %v2153
    %v2238 = vunpack.c.h.b16 %v2153
    %v2239 = vunpack.c.l.b16 %v2154
    %v2240 = vunpack.c.h.b16 %v2154
    %v2241 = vunpack.c.l.b16 %v2155
    %v2242 = vunpack.c.h.b16 %v2155
    %v2243 = vunpack.c.l.b16 %v2156
    %v2244 = vunpack.c.h.b16 %v2156
    %v2245 = vunpack.c.l.b16 %v2157
    %v2246 = vunpack.c.h.b16 %v2157
    %v2247 = vunpack.c.l.b16 %v2158
    %v2248 = vunpack.c.h.b16 %v2158
    %v2249 = vunpack.c.l.b16 %v2159
    %v2250 = vunpack.c.h.b16 %v2159
    %v2251 = vunpack.c.l.b16 %v2160
    %v2252 = vunpack.c.h.b16 %v2160
    %v2253 = vunpack.c.l.b16 %v2161
    %v2254 = vunpack.c.h.b16 %v2161
    %v2255 = vunpack.c.l.b16 %v2162
    %v2256 = vunpack.c.h.b16 %v2162
    %v2257 = vunpack.c.l.b16 %v2163
    %v2258 = vunpack.c.h.b16 %v2163
    %v2259 = vunpack.c.l.b16 %v2164
    %v2260 = vunpack.c.h.b16 %v2164
    %v2261 = vunpack.c.l.b16 %v2165
    %v2262 = vunpack.c.h.b16 %v2165
    %v2263 = vunpack.c.l.b16 %v2166
    %v2264 = vunpack.c.h.b16 %v2166
    %v2265 = vunpack.c.l.b16 %v2167
    %v2266 = vunpack.c.h.b16 %v2167
    %v2267 = vunpack.c.l.b16 %v2168
    %v2268 = vunpack.c.h.b16 %v2168
    %v2269 = vunpack.c.l.b16 %v2169
    %v2270 = vunpack.c.h.b16 %v2169
    %v2271 = vunpack.c.l.b16 %v2170
    %v2272 = vunpack.c.h.b16 %v2170
    %v2273 = vpack.c.b16 %v2211, %v2209
    %v2274 = vpack.c.b16 %v2212, %v2210
    %v2275 = vpack.c.b16 %v2215, %v2213
    %v2276 = vpack.c.b16 %v2216, %v2214
    %v2277 = vpack.c.b16 %v2219, %v2217
    %v2278 = vpack.c.b16 %v2220, %v2218
    %v2279 = vpack.c.b16 %v2223, %v2221
    %v2280 = vpack.c.b16 %v2224, %v2222
    %v2281 = vpack.c.b16 %v2227, %v2225
    %v2282 = vpack.c.b16 %v2228, %v2226
    %v2283 = vpack.c.b16 %v2231, %v2229
    %v2284 = vpack.c.b16 %v2232, %v2230
    %v2285 = vpack.c.b16 %v2235, %v2233
    %v2286 = vpack.c.b16 %v2236, %v2234
    %v2287 = vpack.c.b16 %v2239, %v2237
    %v2288 = vpack.c.b16 %v2240, %v2238
    %v2289 = vpack.c.b16 %v2243, %v2241
    %v2290 = vpack.c.b16 %v2244, %v2242
    %v2291 = vpack.c.b16 %v2247, %v2245
    %v2292 = vpack.c.b16 %v2248, %v2246
    %v2293 = vpack.c.b16 %v2251, %v2249
    %v2294 = vpack.c.b16 %v2252, %v2250
    %v2295 = vpack.c.b16 %v2255, %v2253
    %v2296 = vpack.c.b16 %v2256, %v2254
    %v2297 = vpack.c.b16 %v2259, %v2257
    %v2298 = vpack.c.b16 %v2260, %v2258
    %v2299 = vpack.c.b16 %v2263, %v2261
    %v2300 = vpack.c.b16 %v2264, %v2262
    %v2301 = vpack.c.b16 %v2267, %v2265
    %v2302 = vpack.c.b16 %v2268, %v2266
    %v2303 = vpack.c.b16 %v2271, %v2269
    %v2304 = vpack.c.b16 %v2272, %v2270
    %2337 = vmatpush.bf16.msra.mxu0 %v2287
    %2338 = vmatpush.bf16.msra.mxu0 %v2285
    %2339 = vmatpush.bf16.msra.mxu0 %v2283
    %2340 = vmatpush.bf16.msra.mxu0 %v2281
    %2341 = vmatpush.bf16.msra.mxu0 %v2279
    %2342 = vmatpush.bf16.msra.mxu0 %v2277
    %2343 = vmatpush.bf16.msra.mxu0 %v2275
    %2344 = vmatpush.bf16.msra.mxu0 %v2273
    %2345 = vmatmul.bf16.gmra.mxu0 %v2107
    %v2346 = vpop.f32.mrf.mxu0
    %v2347 = vadd.f32 %v2173, %v2346
    %v2348 = vpop.f32.mrf.mxu0
    %v2349 = vadd.f32 %v2173, %v2348
    %2350 = vmatmul.bf16.gmra.mxu0 %v2109
    %v2351 = vpop.f32.mrf.mxu0
    %v2352 = vadd.f32 %v2173, %v2351
    %v2353 = vpop.f32.mrf.mxu0
    %v2354 = vadd.f32 %v2173, %v2353
    %2355 = vmatmul.bf16.gmra.mxu0 %v2111
    %v2356 = vpop.f32.mrf.mxu0
    %v2357 = vadd.f32 %v2173, %v2356
    %v2358 = vpop.f32.mrf.mxu0
    %v2359 = vadd.f32 %v2173, %v2358
    %2360 = vmatmul.bf16.gmra.mxu0 %v2113
    %v2361 = vpop.f32.mrf.mxu0
    %v2362 = vadd.f32 %v2173, %v2361
    %v2363 = vpop.f32.mrf.mxu0
    %v2364 = vadd.f32 %v2173, %v2363
    %2365 = vmatmul.bf16.gmra.mxu0 %v2115
    %v2366 = vpop.f32.mrf.mxu0
    %v2367 = vadd.f32 %v2173, %v2366
    %v2368 = vpop.f32.mrf.mxu0
    %v2369 = vadd.f32 %v2173, %v2368
    %2370 = vmatmul.bf16.gmra.mxu0 %v2117
    %v2371 = vpop.f32.mrf.mxu0
    %v2372 = vadd.f32 %v2173, %v2371
    %v2373 = vpop.f32.mrf.mxu0
    %v2374 = vadd.f32 %v2173, %v2373
    %2375 = vmatmul.bf16.gmra.mxu0 %v2119
    %v2376 = vpop.f32.mrf.mxu0
    %v2377 = vadd.f32 %v2173, %v2376
    %v2378 = vpop.f32.mrf.mxu0
    %v2379 = vadd.f32 %v2173, %v2378
    %2380 = vmatmul.bf16.gmra.mxu0 %v2121
    %v2381 = vpop.f32.mrf.mxu0
    %v2382 = vadd.f32 %v2173, %v2381
    %v2383 = vpop.f32.mrf.mxu0
    %v2384 = vadd.f32 %v2173, %v2383
    %2385 = vmatmul.bf16.gmra.mxu0 %v2123
    %v2386 = vpop.f32.mrf.mxu0
    %v2387 = vadd.f32 %v2173, %v2386
    %v2388 = vpop.f32.mrf.mxu0
    %v2389 = vadd.f32 %v2173, %v2388
    %2390 = vmatmul.bf16.gmra.mxu0 %v2125
    %v2391 = vpop.f32.mrf.mxu0
    %v2392 = vadd.f32 %v2173, %v2391
    %v2393 = vpop.f32.mrf.mxu0
    %v2394 = vadd.f32 %v2173, %v2393
    %2395 = vmatmul.bf16.gmra.mxu0 %v2127
    %v2396 = vpop.f32.mrf.mxu0
    %v2397 = vadd.f32 %v2173, %v2396
    %v2398 = vpop.f32.mrf.mxu0
    %v2399 = vadd.f32 %v2173, %v2398
    %2400 = vmatmul.bf16.gmra.mxu0 %v2129
    %v2401 = vpop.f32.mrf.mxu0
    %v2402 = vadd.f32 %v2173, %v2401
    %v2403 = vpop.f32.mrf.mxu0
    %v2404 = vadd.f32 %v2173, %v2403
    %2405 = vmatmul.bf16.gmra.mxu0 %v2131
    %v2406 = vpop.f32.mrf.mxu0
    %v2407 = vadd.f32 %v2173, %v2406
    %v2408 = vpop.f32.mrf.mxu0
    %v2409 = vadd.f32 %v2173, %v2408
    %2410 = vmatmul.bf16.gmra.mxu0 %v2133
    %v2411 = vpop.f32.mrf.mxu0
    %v2412 = vadd.f32 %v2173, %v2411
    %v2413 = vpop.f32.mrf.mxu0
    %v2414 = vadd.f32 %v2173, %v2413
    %2415 = vmatmul.bf16.gmra.mxu0 %v2135
    %v2416 = vpop.f32.mrf.mxu0
    %v2417 = vadd.f32 %v2173, %v2416
    %v2418 = vpop.f32.mrf.mxu0
    %v2419 = vadd.f32 %v2173, %v2418
    %2420 = vmatmul.bf16.gmra.mxu0 %v2137
    %v2421 = vpop.f32.mrf.mxu0
    %v2422 = vadd.f32 %v2173, %v2421
    %v2423 = vpop.f32.mrf.mxu0
    %v2424 = vadd.f32 %v2173, %v2423
    %2425 = vdwg.mxu0
    %2426 = vmatpush.bf16.msra.mxu0 %v2303
    %2427 = vmatpush.bf16.msra.mxu0 %v2301
    %2428 = vmatpush.bf16.msra.mxu0 %v2299
    %2429 = vmatpush.bf16.msra.mxu0 %v2297
    %2430 = vmatpush.bf16.msra.mxu0 %v2295
    %2431 = vmatpush.bf16.msra.mxu0 %v2293
    %2432 = vmatpush.bf16.msra.mxu0 %v2291
    %2433 = vmatpush.bf16.msra.mxu0 %v2289
    %2434 = vmatmul.bf16.gmra.mxu0 %v2108
    %v2435 = vpop.f32.mrf.mxu0
    %v2436 = vadd.f32 %v2347, %v2435
    %v2437 = vpop.f32.mrf.mxu0
    %v2438 = vadd.f32 %v2349, %v2437
    %2439 = vmatmul.bf16.gmra.mxu0 %v2110
    %v2440 = vpop.f32.mrf.mxu0
    %v2441 = vadd.f32 %v2352, %v2440
    %v2442 = vpop.f32.mrf.mxu0
    %v2443 = vadd.f32 %v2354, %v2442
    %2444 = vmatmul.bf16.gmra.mxu0 %v2112
    %v2445 = vpop.f32.mrf.mxu0
    %v2446 = vadd.f32 %v2357, %v2445
    %v2447 = vpop.f32.mrf.mxu0
    %v2448 = vadd.f32 %v2359, %v2447
    %2449 = vmatmul.bf16.gmra.mxu0 %v2114
    %v2450 = vpop.f32.mrf.mxu0
    %v2451 = vadd.f32 %v2362, %v2450
    %v2452 = vpop.f32.mrf.mxu0
    %v2453 = vadd.f32 %v2364, %v2452
    %2454 = vmatmul.bf16.gmra.mxu0 %v2116
    %v2455 = vpop.f32.mrf.mxu0
    %v2456 = vadd.f32 %v2367, %v2455
    %v2457 = vpop.f32.mrf.mxu0
    %v2458 = vadd.f32 %v2369, %v2457
    %2459 = vmatmul.bf16.gmra.mxu0 %v2118
    %v2460 = vpop.f32.mrf.mxu0
    %v2461 = vadd.f32 %v2372, %v2460
    %v2462 = vpop.f32.mrf.mxu0
    %v2463 = vadd.f32 %v2374, %v2462
    %2464 = vmatmul.bf16.gmra.mxu0 %v2120
    %v2465 = vpop.f32.mrf.mxu0
    %v2466 = vadd.f32 %v2377, %v2465
    %v2467 = vpop.f32.mrf.mxu0
    %v2468 = vadd.f32 %v2379, %v2467
    %2469 = vmatmul.bf16.gmra.mxu0 %v2122
    %v2470 = vpop.f32.mrf.mxu0
    %v2471 = vadd.f32 %v2382, %v2470
    %v2472 = vpop.f32.mrf.mxu0
    %v2473 = vadd.f32 %v2384, %v2472
    %2474 = vmatmul.bf16.gmra.mxu0 %v2124
    %v2475 = vpop.f32.mrf.mxu0
    %v2476 = vadd.f32 %v2387, %v2475
    %v2477 = vpop.f32.mrf.mxu0
    %v2478 = vadd.f32 %v2389, %v2477
    %2479 = vmatmul.bf16.gmra.mxu0 %v2126
    %v2480 = vpop.f32.mrf.mxu0
    %v2481 = vadd.f32 %v2392, %v2480
    %v2482 = vpop.f32.mrf.mxu0
    %v2483 = vadd.f32 %v2394, %v2482
    %2484 = vmatmul.bf16.gmra.mxu0 %v2128
    %v2485 = vpop.f32.mrf.mxu0
    %v2486 = vadd.f32 %v2397, %v2485
    %v2487 = vpop.f32.mrf.mxu0
    %v2488 = vadd.f32 %v2399, %v2487
    %2489 = vmatmul.bf16.gmra.mxu0 %v2130
    %v2490 = vpop.f32.mrf.mxu0
    %v2491 = vadd.f32 %v2402, %v2490
    %v2492 = vpop.f32.mrf.mxu0
    %v2493 = vadd.f32 %v2404, %v2492
    %2494 = vmatmul.bf16.gmra.mxu0 %v2132
    %v2495 = vpop.f32.mrf.mxu0
    %v2496 = vadd.f32 %v2407, %v2495
    %v2497 = vpop.f32.mrf.mxu0
    %v2498 = vadd.f32 %v2409, %v2497
    %2499 = vmatmul.bf16.gmra.mxu0 %v2134
    %v2500 = vpop.f32.mrf.mxu0
    %v2501 = vadd.f32 %v2412, %v2500
    %v2502 = vpop.f32.mrf.mxu0
    %v2503 = vadd.f32 %v2414, %v2502
    %2504 = vmatmul.bf16.gmra.mxu0 %v2136
    %v2505 = vpop.f32.mrf.mxu0
    %v2506 = vadd.f32 %v2417, %v2505
    %v2507 = vpop.f32.mrf.mxu0
    %v2508 = vadd.f32 %v2419, %v2507
    %2509 = vmatmul.bf16.gmra.mxu0 %v2138
    %v2510 = vpop.f32.mrf.mxu0
    %v2511 = vadd.f32 %v2422, %v2510
    %v2512 = vpop.f32.mrf.mxu0
    %v2513 = vadd.f32 %v2424, %v2512
    %2514 = vdwg.mxu0
    %2515 = vmatpush.bf16.msra.mxu0 %v2288
    %2516 = vmatpush.bf16.msra.mxu0 %v2286
    %2517 = vmatpush.bf16.msra.mxu0 %v2284
    %2518 = vmatpush.bf16.msra.mxu0 %v2282
    %2519 = vmatpush.bf16.msra.mxu0 %v2280
    %2520 = vmatpush.bf16.msra.mxu0 %v2278
    %2521 = vmatpush.bf16.msra.mxu0 %v2276
    %2522 = vmatpush.bf16.msra.mxu0 %v2274
    %2523 = vmatmul.bf16.gmra.mxu0 %v2107
    %v2524 = vpop.f32.mrf.mxu0
    %v2525 = vadd.f32 %v2174, %v2524
    %v2526 = vpop.f32.mrf.mxu0
    %v2527 = vadd.f32 %v2174, %v2526
    %2528 = vmatmul.bf16.gmra.mxu0 %v2109
    %v2529 = vpop.f32.mrf.mxu0
    %v2530 = vadd.f32 %v2174, %v2529
    %v2531 = vpop.f32.mrf.mxu0
    %v2532 = vadd.f32 %v2174, %v2531
    %2533 = vmatmul.bf16.gmra.mxu0 %v2111
    %v2534 = vpop.f32.mrf.mxu0
    %v2535 = vadd.f32 %v2174, %v2534
    %v2536 = vpop.f32.mrf.mxu0
    %v2537 = vadd.f32 %v2174, %v2536
    %2538 = vmatmul.bf16.gmra.mxu0 %v2113
    %v2539 = vpop.f32.mrf.mxu0
    %v2540 = vadd.f32 %v2174, %v2539
    %v2541 = vpop.f32.mrf.mxu0
    %v2542 = vadd.f32 %v2174, %v2541
    %2543 = vmatmul.bf16.gmra.mxu0 %v2115
    %v2544 = vpop.f32.mrf.mxu0
    %v2545 = vadd.f32 %v2174, %v2544
    %v2546 = vpop.f32.mrf.mxu0
    %v2547 = vadd.f32 %v2174, %v2546
    %2548 = vmatmul.bf16.gmra.mxu0 %v2117
    %v2549 = vpop.f32.mrf.mxu0
    %v2550 = vadd.f32 %v2174, %v2549
    %v2551 = vpop.f32.mrf.mxu0
    %v2552 = vadd.f32 %v2174, %v2551
    %2553 = vmatmul.bf16.gmra.mxu0 %v2119
    %v2554 = vpop.f32.mrf.mxu0
    %v2555 = vadd.f32 %v2174, %v2554
    %v2556 = vpop.f32.mrf.mxu0
    %v2557 = vadd.f32 %v2174, %v2556
    %2558 = vmatmul.bf16.gmra.mxu0 %v2121
    %v2559 = vpop.f32.mrf.mxu0
    %v2560 = vadd.f32 %v2174, %v2559
    %v2561 = vpop.f32.mrf.mxu0
    %v2562 = vadd.f32 %v2174, %v2561
    %2563 = vmatmul.bf16.gmra.mxu0 %v2123
    %v2564 = vpop.f32.mrf.mxu0
    %v2565 = vadd.f32 %v2174, %v2564
    %v2566 = vpop.f32.mrf.mxu0
    %v2567 = vadd.f32 %v2174, %v2566
    %2568 = vmatmul.bf16.gmra.mxu0 %v2125
    %v2569 = vpop.f32.mrf.mxu0
    %v2570 = vadd.f32 %v2174, %v2569
    %v2571 = vpop.f32.mrf.mxu0
    %v2572 = vadd.f32 %v2174, %v2571
    %2573 = vmatmul.bf16.gmra.mxu0 %v2127
    %v2574 = vpop.f32.mrf.mxu0
    %v2575 = vadd.f32 %v2174, %v2574
    %v2576 = vpop.f32.mrf.mxu0
    %v2577 = vadd.f32 %v2174, %v2576
    %2578 = vmatmul.bf16.gmra.mxu0 %v2129
    %v2579 = vpop.f32.mrf.mxu0
    %v2580 = vadd.f32 %v2174, %v2579
    %v2581 = vpop.f32.mrf.mxu0
    %v2582 = vadd.f32 %v2174, %v2581
    %2583 = vmatmul.bf16.gmra.mxu0 %v2131
    %v2584 = vpop.f32.mrf.mxu0
    %v2585 = vadd.f32 %v2174, %v2584
    %v2586 = vpop.f32.mrf.mxu0
    %v2587 = vadd.f32 %v2174, %v2586
    %2588 = vmatmul.bf16.gmra.mxu0 %v2133
    %v2589 = vpop.f32.mrf.mxu0
    %v2590 = vadd.f32 %v2174, %v2589
    %v2591 = vpop.f32.mrf.mxu0
    %v2592 = vadd.f32 %v2174, %v2591
    %2593 = vmatmul.bf16.gmra.mxu0 %v2135
    %v2594 = vpop.f32.mrf.mxu0
    %v2595 = vadd.f32 %v2174, %v2594
    %v2596 = vpop.f32.mrf.mxu0
    %v2597 = vadd.f32 %v2174, %v2596
    %2598 = vmatmul.bf16.gmra.mxu0 %v2137
    %v2599 = vpop.f32.mrf.mxu0
    %v2600 = vadd.f32 %v2174, %v2599
    %v2601 = vpop.f32.mrf.mxu0
    %v2602 = vadd.f32 %v2174, %v2601
    %2603 = vdwg.mxu0
    %2604 = vmatpush.bf16.msra.mxu0 %v2304
    %2605 = vmatpush.bf16.msra.mxu0 %v2302
    %2606 = vmatpush.bf16.msra.mxu0 %v2300
    %2607 = vmatpush.bf16.msra.mxu0 %v2298
    %2608 = vmatpush.bf16.msra.mxu0 %v2296
    %2609 = vmatpush.bf16.msra.mxu0 %v2294
    %2610 = vmatpush.bf16.msra.mxu0 %v2292
    %2611 = vmatpush.bf16.msra.mxu0 %v2290
    %2612 = vmatmul.bf16.gmra.mxu0 %v2108
    %v2613 = vpop.f32.mrf.mxu0
    %v2614 = vadd.f32 %v2525, %v2613
    %v2615 = vpop.f32.mrf.mxu0
    %v2616 = vadd.f32 %v2527, %v2615
    %2617 = vmatmul.bf16.gmra.mxu0 %v2110
    %v2618 = vpop.f32.mrf.mxu0
    %v2619 = vadd.f32 %v2530, %v2618
    %v2620 = vpop.f32.mrf.mxu0
    %v2621 = vadd.f32 %v2532, %v2620
    %2622 = vmatmul.bf16.gmra.mxu0 %v2112
    %v2623 = vpop.f32.mrf.mxu0
    %v2624 = vadd.f32 %v2535, %v2623
    %v2625 = vpop.f32.mrf.mxu0
    %v2626 = vadd.f32 %v2537, %v2625
    %2627 = vmatmul.bf16.gmra.mxu0 %v2114
    %v2628 = vpop.f32.mrf.mxu0
    %v2629 = vadd.f32 %v2540, %v2628
    %v2630 = vpop.f32.mrf.mxu0
    %v2631 = vadd.f32 %v2542, %v2630
    %2632 = vmatmul.bf16.gmra.mxu0 %v2116
    %v2633 = vpop.f32.mrf.mxu0
    %v2634 = vadd.f32 %v2545, %v2633
    %v2635 = vpop.f32.mrf.mxu0
    %v2636 = vadd.f32 %v2547, %v2635
    %2637 = vmatmul.bf16.gmra.mxu0 %v2118
    %v2638 = vpop.f32.mrf.mxu0
    %v2639 = vadd.f32 %v2550, %v2638
    %v2640 = vpop.f32.mrf.mxu0
    %v2641 = vadd.f32 %v2552, %v2640
    %2642 = vmatmul.bf16.gmra.mxu0 %v2120
    %v2643 = vpop.f32.mrf.mxu0
    %v2644 = vadd.f32 %v2555, %v2643
    %v2645 = vpop.f32.mrf.mxu0
    %v2646 = vadd.f32 %v2557, %v2645
    %2647 = vmatmul.bf16.gmra.mxu0 %v2122
    %v2648 = vpop.f32.mrf.mxu0
    %v2649 = vadd.f32 %v2560, %v2648
    %v2650 = vpop.f32.mrf.mxu0
    %v2651 = vadd.f32 %v2562, %v2650
    %2652 = vmatmul.bf16.gmra.mxu0 %v2124
    %v2653 = vpop.f32.mrf.mxu0
    %v2654 = vadd.f32 %v2565, %v2653
    %v2655 = vpop.f32.mrf.mxu0
    %v2656 = vadd.f32 %v2567, %v2655
    %2657 = vmatmul.bf16.gmra.mxu0 %v2126
    %v2658 = vpop.f32.mrf.mxu0
    %v2659 = vadd.f32 %v2570, %v2658
    %v2660 = vpop.f32.mrf.mxu0
    %v2661 = vadd.f32 %v2572, %v2660
    %2662 = vmatmul.bf16.gmra.mxu0 %v2128
    %v2663 = vpop.f32.mrf.mxu0
    %v2664 = vadd.f32 %v2575, %v2663
    %v2665 = vpop.f32.mrf.mxu0
    %v2666 = vadd.f32 %v2577, %v2665
    %2667 = vmatmul.bf16.gmra.mxu0 %v2130
    %v2668 = vpop.f32.mrf.mxu0
    %v2669 = vadd.f32 %v2580, %v2668
    %v2670 = vpop.f32.mrf.mxu0
    %v2671 = vadd.f32 %v2582, %v2670
    %2672 = vmatmul.bf16.gmra.mxu0 %v2132
    %v2673 = vpop.f32.mrf.mxu0
    %v2674 = vadd.f32 %v2585, %v2673
    %v2675 = vpop.f32.mrf.mxu0
    %v2676 = vadd.f32 %v2587, %v2675
    %2677 = vmatmul.bf16.gmra.mxu0 %v2134
    %v2678 = vpop.f32.mrf.mxu0
    %v2679 = vadd.f32 %v2590, %v2678
    %v2680 = vpop.f32.mrf.mxu0
    %v2681 = vadd.f32 %v2592, %v2680
    %2682 = vmatmul.bf16.gmra.mxu0 %v2136
    %v2683 = vpop.f32.mrf.mxu0
    %v2684 = vadd.f32 %v2595, %v2683
    %v2685 = vpop.f32.mrf.mxu0
    %v2686 = vadd.f32 %v2597, %v2685
    %2687 = vmatmul.bf16.gmra.mxu0 %v2138
    %v2688 = vpop.f32.mrf.mxu0
    %v2689 = vadd.f32 %v2600, %v2688
    %v2690 = vpop.f32.mrf.mxu0
    %v2691 = vadd.f32 %v2602, %v2690
    %2692 = vdwg.mxu0
    %v2693 = vmax.f32 %v2436, 0.0
    %v2694 = vmax.f32 %v2614, 0.0
    %v2695 = vmax.f32 %v2438, 0.0
    %v2696 = vmax.f32 %v2616, 0.0
    %v2697 = vmax.f32 %v2441, 0.0
    %v2698 = vmax.f32 %v2619, 0.0
    %v2699 = vmax.f32 %v2443, 0.0
    %v2700 = vmax.f32 %v2621, 0.0
    %v2701 = vmax.f32 %v2446, 0.0
    %v2702 = vmax.f32 %v2624, 0.0
    %v2703 = vmax.f32 %v2448, 0.0
    %v2704 = vmax.f32 %v2626, 0.0
    %v2705 = vmax.f32 %v2451, 0.0
    %v2706 = vmax.f32 %v2629, 0.0
    %v2707 = vmax.f32 %v2453, 0.0
    %v2708 = vmax.f32 %v2631, 0.0
    %v2709 = vmax.f32 %v2456, 0.0
    %v2710 = vmax.f32 %v2634, 0.0
    %v2711 = vmax.f32 %v2458, 0.0
    %v2712 = vmax.f32 %v2636, 0.0
    %v2713 = vmax.f32 %v2461, 0.0
    %v2714 = vmax.f32 %v2639, 0.0
    %v2715 = vmax.f32 %v2463, 0.0
    %v2716 = vmax.f32 %v2641, 0.0
    %v2717 = vmax.f32 %v2466, 0.0
    %v2718 = vmax.f32 %v2644, 0.0
    %v2719 = vmax.f32 %v2468, 0.0
    %v2720 = vmax.f32 %v2646, 0.0
    %v2721 = vmax.f32 %v2471, 0.0
    %v2722 = vmax.f32 %v2649, 0.0
    %v2723 = vmax.f32 %v2473, 0.0
    %v2724 = vmax.f32 %v2651, 0.0
    %v2725 = vmax.f32 %v2476, 0.0
    %v2726 = vmax.f32 %v2654, 0.0
    %v2727 = vmax.f32 %v2478, 0.0
    %v2728 = vmax.f32 %v2656, 0.0
    %v2729 = vmax.f32 %v2481, 0.0
    %v2730 = vmax.f32 %v2659, 0.0
    %v2731 = vmax.f32 %v2483, 0.0
    %v2732 = vmax.f32 %v2661, 0.0
    %v2733 = vmax.f32 %v2486, 0.0
    %v2734 = vmax.f32 %v2664, 0.0
    %v2735 = vmax.f32 %v2488, 0.0
    %v2736 = vmax.f32 %v2666, 0.0
    %v2737 = vmax.f32 %v2491, 0.0
    %v2738 = vmax.f32 %v2669, 0.0
    %v2739 = vmax.f32 %v2493, 0.0
    %v2740 = vmax.f32 %v2671, 0.0
    %v2741 = vmax.f32 %v2496, 0.0
    %v2742 = vmax.f32 %v2674, 0.0
    %v2743 = vmax.f32 %v2498, 0.0
    %v2744 = vmax.f32 %v2676, 0.0
    %v2745 = vmax.f32 %v2501, 0.0
    %v2746 = vmax.f32 %v2679, 0.0
    %v2747 = vmax.f32 %v2503, 0.0
    %v2748 = vmax.f32 %v2681, 0.0
    %v2749 = vmax.f32 %v2506, 0.0
    %v2750 = vmax.f32 %v2684, 0.0
    %v2751 = vmax.f32 %v2508, 0.0
    %v2752 = vmax.f32 %v2686, 0.0
    %v2753 = vmax.f32 %v2511, 0.0
    %v2754 = vmax.f32 %v2689, 0.0
    %v2755 = vmax.f32 %v2513, 0.0
    %v2756 = vmax.f32 %v2691, 0.0
    %v2757 = vpack.c.bf16 %v2695, %v2693
    %v2758 = vpack.c.bf16 %v2696, %v2694
    %v2759 = vpack.c.bf16 %v2699, %v2697
    %v2760 = vpack.c.bf16 %v2700, %v2698
    %v2761 = vpack.c.bf16 %v2703, %v2701
    %v2762 = vpack.c.bf16 %v2704, %v2702
    %v2763 = vpack.c.bf16 %v2707, %v2705
    %v2764 = vpack.c.bf16 %v2708, %v2706
    %v2765 = vpack.c.bf16 %v2711, %v2709
    %v2766 = vpack.c.bf16 %v2712, %v2710
    %v2767 = vpack.c.bf16 %v2715, %v2713
    %v2768 = vpack.c.bf16 %v2716, %v2714
    %v2769 = vpack.c.bf16 %v2719, %v2717
    %v2770 = vpack.c.bf16 %v2720, %v2718
    %v2771 = vpack.c.bf16 %v2723, %v2721
    %v2772 = vpack.c.bf16 %v2724, %v2722
    %v2773 = vpack.c.bf16 %v2727, %v2725
    %v2774 = vpack.c.bf16 %v2728, %v2726
    %v2775 = vpack.c.bf16 %v2731, %v2729
    %v2776 = vpack.c.bf16 %v2732, %v2730
    %v2777 = vpack.c.bf16 %v2735, %v2733
    %v2778 = vpack.c.bf16 %v2736, %v2734
    %v2779 = vpack.c.bf16 %v2739, %v2737
    %v2780 = vpack.c.bf16 %v2740, %v2738
    %v2781 = vpack.c.bf16 %v2743, %v2741
    %v2782 = vpack.c.bf16 %v2744, %v2742
    %v2783 = vpack.c.bf16 %v2747, %v2745
    %v2784 = vpack.c.bf16 %v2748, %v2746
    %v2785 = vpack.c.bf16 %v2751, %v2749
    %v2786 = vpack.c.bf16 %v2752, %v2750
    %v2787 = vpack.c.bf16 %v2755, %v2753
    %v2788 = vpack.c.bf16 %v2756, %v2754
    %v2789 = vld [vmem:[#allocation4] sm:$0xff]
    %v2790 = vld [vmem:[#allocation4 + $0x8] sm:$0xff]
    %v2791 = vld [vmem:[#allocation4 + $0x10] sm:$0xff]
    %v2792 = vld [vmem:[#allocation4 + $0x18] sm:$0xff]
    %v2793 = vld [vmem:[#allocation4 + $0x20] sm:$0xff]
    %v2794 = vld [vmem:[#allocation4 + $0x28] sm:$0xff]
    %v2795 = vld [vmem:[#allocation4 + $0x30] sm:$0xff]
    %v2796 = vld [vmem:[#allocation4 + $0x38] sm:$0xff]
    %v2797 = vld [vmem:[#allocation4 + $0x40] sm:$0xff]
    %v2798 = vld [vmem:[#allocation4 + $0x48] sm:$0xff]
    %v2799 = vld [vmem:[#allocation4 + $0x50] sm:$0xff]
    %v2800 = vld [vmem:[#allocation4 + $0x58] sm:$0xff]
    %v2801 = vld [vmem:[#allocation4 + $0x60] sm:$0xff]
    %v2802 = vld [vmem:[#allocation4 + $0x68] sm:$0xff]
    %v2803 = vld [vmem:[#allocation4 + $0x70] sm:$0xff]
    %v2804 = vld [vmem:[#allocation4 + $0x78] sm:$0xff]
    %v2805 = vld [vmem:[#allocation4 + $0x80] sm:$0xff]
    %v2806 = vld [vmem:[#allocation4 + $0x88] sm:$0xff]
    %v2807 = vld [vmem:[#allocation4 + $0x90] sm:$0xff]
    %v2808 = vld [vmem:[#allocation4 + $0x98] sm:$0xff]
    %v2809 = vld [vmem:[#allocation4 + $0xa0] sm:$0xff]
    %v2810 = vld [vmem:[#allocation4 + $0xa8] sm:$0xff]
    %v2811 = vld [vmem:[#allocation4 + $0xb0] sm:$0xff]
    %v2812 = vld [vmem:[#allocation4 + $0xb8] sm:$0xff]
    %v2813 = vld [vmem:[#allocation4 + $0xc0] sm:$0xff]
    %v2814 = vld [vmem:[#allocation4 + $0xc8] sm:$0xff]
    %v2815 = vld [vmem:[#allocation4 + $0xd0] sm:$0xff]
    %v2816 = vld [vmem:[#allocation4 + $0xd8] sm:$0xff]
    %v2817 = vld [vmem:[#allocation4 + $0xe0] sm:$0xff]
    %v2818 = vld [vmem:[#allocation4 + $0xe8] sm:$0xff]
    %v2819 = vld [vmem:[#allocation4 + $0xf0] sm:$0xff]
    %v2820 = vld [vmem:[#allocation4 + $0xf8] sm:$0xff]
    %v2821 = vld [vmem:[%s10] sm:$0x3]
    %v2823 = vperm.slane %v2821, 0
    %v2824 = vperm.slane %v2821, 1
    %v2859 = vunpack.c.l.b16 %v2789
    %v2860 = vunpack.c.h.b16 %v2789
    %v2861 = vunpack.c.l.b16 %v2790
    %v2862 = vunpack.c.h.b16 %v2790
    %v2863 = vunpack.c.l.b16 %v2791
    %v2864 = vunpack.c.h.b16 %v2791
    %v2865 = vunpack.c.l.b16 %v2792
    %v2866 = vunpack.c.h.b16 %v2792
    %v2867 = vunpack.c.l.b16 %v2793
    %v2868 = vunpack.c.h.b16 %v2793
    %v2869 = vunpack.c.l.b16 %v2794
    %v2870 = vunpack.c.h.b16 %v2794
    %v2871 = vunpack.c.l.b16 %v2795
    %v2872 = vunpack.c.h.b16 %v2795
    %v2873 = vunpack.c.l.b16 %v2796
    %v2874 = vunpack.c.h.b16 %v2796
    %v2875 = vunpack.c.l.b16 %v2797
    %v2876 = vunpack.c.h.b16 %v2797
    %v2877 = vunpack.c.l.b16 %v2798
    %v2878 = vunpack.c.h.b16 %v2798
    %v2879 = vunpack.c.l.b16 %v2799
    %v2880 = vunpack.c.h.b16 %v2799
    %v2881 = vunpack.c.l.b16 %v2800
    %v2882 = vunpack.c.h.b16 %v2800
    %v2883 = vunpack.c.l.b16 %v2801
    %v2884 = vunpack.c.h.b16 %v2801
    %v2885 = vunpack.c.l.b16 %v2802
    %v2886 = vunpack.c.h.b16 %v2802
    %v2887 = vunpack.c.l.b16 %v2803
    %v2888 = vunpack.c.h.b16 %v2803
    %v2889 = vunpack.c.l.b16 %v2804
    %v2890 = vunpack.c.h.b16 %v2804
    %v2891 = vunpack.c.l.b16 %v2805
    %v2892 = vunpack.c.h.b16 %v2805
    %v2893 = vunpack.c.l.b16 %v2806
    %v2894 = vunpack.c.h.b16 %v2806
    %v2895 = vunpack.c.l.b16 %v2807
    %v2896 = vunpack.c.h.b16 %v2807
    %v2897 = vunpack.c.l.b16 %v2808
    %v2898 = vunpack.c.h.b16 %v2808
    %v2899 = vunpack.c.l.b16 %v2809
    %v2900 = vunpack.c.h.b16 %v2809
    %v2901 = vunpack.c.l.b16 %v2810
    %v2902 = vunpack.c.h.b16 %v2810
    %v2903 = vunpack.c.l.b16 %v2811
    %v2904 = vunpack.c.h.b16 %v2811
    %v2905 = vunpack.c.l.b16 %v2812
    %v2906 = vunpack.c.h.b16 %v2812
    %v2907 = vunpack.c.l.b16 %v2813
    %v2908 = vunpack.c.h.b16 %v2813
    %v2909 = vunpack.c.l.b16 %v2814
    %v2910 = vunpack.c.h.b16 %v2814
    %v2911 = vunpack.c.l.b16 %v2815
    %v2912 = vunpack.c.h.b16 %v2815
    %v2913 = vunpack.c.l.b16 %v2816
    %v2914 = vunpack.c.h.b16 %v2816
    %v2915 = vunpack.c.l.b16 %v2817
    %v2916 = vunpack.c.h.b16 %v2817
    %v2917 = vunpack.c.l.b16 %v2818
    %v2918 = vunpack.c.h.b16 %v2818
    %v2919 = vunpack.c.l.b16 %v2819
    %v2920 = vunpack.c.h.b16 %v2819
    %v2921 = vunpack.c.l.b16 %v2820
    %v2922 = vunpack.c.h.b16 %v2820
    %v2923 = vpack.c.b16 %v2861, %v2859
    %v2924 = vpack.c.b16 %v2862, %v2860
    %v2925 = vpack.c.b16 %v2865, %v2863
    %v2926 = vpack.c.b16 %v2866, %v2864
    %v2927 = vpack.c.b16 %v2869, %v2867
    %v2928 = vpack.c.b16 %v2870, %v2868
    %v2929 = vpack.c.b16 %v2873, %v2871
    %v2930 = vpack.c.b16 %v2874, %v2872
    %v2931 = vpack.c.b16 %v2877, %v2875
    %v2932 = vpack.c.b16 %v2878, %v2876
    %v2933 = vpack.c.b16 %v2881, %v2879
    %v2934 = vpack.c.b16 %v2882, %v2880
    %v2935 = vpack.c.b16 %v2885, %v2883
    %v2936 = vpack.c.b16 %v2886, %v2884
    %v2937 = vpack.c.b16 %v2889, %v2887
    %v2938 = vpack.c.b16 %v2890, %v2888
    %v2939 = vpack.c.b16 %v2893, %v2891
    %v2940 = vpack.c.b16 %v2894, %v2892
    %v2941 = vpack.c.b16 %v2897, %v2895
    %v2942 = vpack.c.b16 %v2898, %v2896
    %v2943 = vpack.c.b16 %v2901, %v2899
    %v2944 = vpack.c.b16 %v2902, %v2900
    %v2945 = vpack.c.b16 %v2905, %v2903
    %v2946 = vpack.c.b16 %v2906, %v2904
    %v2947 = vpack.c.b16 %v2909, %v2907
    %v2948 = vpack.c.b16 %v2910, %v2908
    %v2949 = vpack.c.b16 %v2913, %v2911
    %v2950 = vpack.c.b16 %v2914, %v2912
    %v2951 = vpack.c.b16 %v2917, %v2915
    %v2952 = vpack.c.b16 %v2918, %v2916
    %v2953 = vpack.c.b16 %v2921, %v2919
    %v2954 = vpack.c.b16 %v2922, %v2920
    %2987 = vmatpush.bf16.msra.mxu0 %v2937
    %2988 = vmatpush.bf16.msra.mxu0 %v2935
    %2989 = vmatpush.bf16.msra.mxu0 %v2933
    %2990 = vmatpush.bf16.msra.mxu0 %v2931
    %2991 = vmatpush.bf16.msra.mxu0 %v2929
    %2992 = vmatpush.bf16.msra.mxu0 %v2927
    %2993 = vmatpush.bf16.msra.mxu0 %v2925
    %2994 = vmatpush.bf16.msra.mxu0 %v2923
    %2995 = vmatmul.bf16.gmra.mxu0 %v2757
    %v2996 = vpop.f32.mrf.mxu0
    %v2997 = vadd.f32 %v2823, %v2996
    %v2998 = vpop.f32.mrf.mxu0
    %v2999 = vadd.f32 %v2823, %v2998
    %3000 = vmatmul.bf16.gmra.mxu0 %v2759
    %v3001 = vpop.f32.mrf.mxu0
    %v3002 = vadd.f32 %v2823, %v3001
    %v3003 = vpop.f32.mrf.mxu0
    %v3004 = vadd.f32 %v2823, %v3003
    %3005 = vmatmul.bf16.gmra.mxu0 %v2761
    %v3006 = vpop.f32.mrf.mxu0
    %v3007 = vadd.f32 %v2823, %v3006
    %v3008 = vpop.f32.mrf.mxu0
    %v3009 = vadd.f32 %v2823, %v3008
    %3010 = vmatmul.bf16.gmra.mxu0 %v2763
    %v3011 = vpop.f32.mrf.mxu0
    %v3012 = vadd.f32 %v2823, %v3011
    %v3013 = vpop.f32.mrf.mxu0
    %v3014 = vadd.f32 %v2823, %v3013
    %3015 = vmatmul.bf16.gmra.mxu0 %v2765
    %v3016 = vpop.f32.mrf.mxu0
    %v3017 = vadd.f32 %v2823, %v3016
    %v3018 = vpop.f32.mrf.mxu0
    %v3019 = vadd.f32 %v2823, %v3018
    %3020 = vmatmul.bf16.gmra.mxu0 %v2767
    %v3021 = vpop.f32.mrf.mxu0
    %v3022 = vadd.f32 %v2823, %v3021
    %v3023 = vpop.f32.mrf.mxu0
    %v3024 = vadd.f32 %v2823, %v3023
    %3025 = vmatmul.bf16.gmra.mxu0 %v2769
    %v3026 = vpop.f32.mrf.mxu0
    %v3027 = vadd.f32 %v2823, %v3026
    %v3028 = vpop.f32.mrf.mxu0
    %v3029 = vadd.f32 %v2823, %v3028
    %3030 = vmatmul.bf16.gmra.mxu0 %v2771
    %v3031 = vpop.f32.mrf.mxu0
    %v3032 = vadd.f32 %v2823, %v3031
    %v3033 = vpop.f32.mrf.mxu0
    %v3034 = vadd.f32 %v2823, %v3033
    %3035 = vmatmul.bf16.gmra.mxu0 %v2773
    %v3036 = vpop.f32.mrf.mxu0
    %v3037 = vadd.f32 %v2823, %v3036
    %v3038 = vpop.f32.mrf.mxu0
    %v3039 = vadd.f32 %v2823, %v3038
    %3040 = vmatmul.bf16.gmra.mxu0 %v2775
    %v3041 = vpop.f32.mrf.mxu0
    %v3042 = vadd.f32 %v2823, %v3041
    %v3043 = vpop.f32.mrf.mxu0
    %v3044 = vadd.f32 %v2823, %v3043
    %3045 = vmatmul.bf16.gmra.mxu0 %v2777
    %v3046 = vpop.f32.mrf.mxu0
    %v3047 = vadd.f32 %v2823, %v3046
    %v3048 = vpop.f32.mrf.mxu0
    %v3049 = vadd.f32 %v2823, %v3048
    %3050 = vmatmul.bf16.gmra.mxu0 %v2779
    %v3051 = vpop.f32.mrf.mxu0
    %v3052 = vadd.f32 %v2823, %v3051
    %v3053 = vpop.f32.mrf.mxu0
    %v3054 = vadd.f32 %v2823, %v3053
    %3055 = vmatmul.bf16.gmra.mxu0 %v2781
    %v3056 = vpop.f32.mrf.mxu0
    %v3057 = vadd.f32 %v2823, %v3056
    %v3058 = vpop.f32.mrf.mxu0
    %v3059 = vadd.f32 %v2823, %v3058
    %3060 = vmatmul.bf16.gmra.mxu0 %v2783
    %v3061 = vpop.f32.mrf.mxu0
    %v3062 = vadd.f32 %v2823, %v3061
    %v3063 = vpop.f32.mrf.mxu0
    %v3064 = vadd.f32 %v2823, %v3063
    %3065 = vmatmul.bf16.gmra.mxu0 %v2785
    %v3066 = vpop.f32.mrf.mxu0
    %v3067 = vadd.f32 %v2823, %v3066
    %v3068 = vpop.f32.mrf.mxu0
    %v3069 = vadd.f32 %v2823, %v3068
    %3070 = vmatmul.bf16.gmra.mxu0 %v2787
    %v3071 = vpop.f32.mrf.mxu0
    %v3072 = vadd.f32 %v2823, %v3071
    %v3073 = vpop.f32.mrf.mxu0
    %v3074 = vadd.f32 %v2823, %v3073
    %3075 = vdwg.mxu0
    %3076 = vmatpush.bf16.msra.mxu0 %v2953
    %3077 = vmatpush.bf16.msra.mxu0 %v2951
    %3078 = vmatpush.bf16.msra.mxu0 %v2949
    %3079 = vmatpush.bf16.msra.mxu0 %v2947
    %3080 = vmatpush.bf16.msra.mxu0 %v2945
    %3081 = vmatpush.bf16.msra.mxu0 %v2943
    %3082 = vmatpush.bf16.msra.mxu0 %v2941
    %3083 = vmatpush.bf16.msra.mxu0 %v2939
    %3084 = vmatmul.bf16.gmra.mxu0 %v2758
    %v3085 = vpop.f32.mrf.mxu0
    %v3086 = vadd.f32 %v2997, %v3085
    %v3087 = vpop.f32.mrf.mxu0
    %v3088 = vadd.f32 %v2999, %v3087
    %3089 = vmatmul.bf16.gmra.mxu0 %v2760
    %v3090 = vpop.f32.mrf.mxu0
    %v3091 = vadd.f32 %v3002, %v3090
    %v3092 = vpop.f32.mrf.mxu0
    %v3093 = vadd.f32 %v3004, %v3092
    %3094 = vmatmul.bf16.gmra.mxu0 %v2762
    %v3095 = vpop.f32.mrf.mxu0
    %v3096 = vadd.f32 %v3007, %v3095
    %v3097 = vpop.f32.mrf.mxu0
    %v3098 = vadd.f32 %v3009, %v3097
    %3099 = vmatmul.bf16.gmra.mxu0 %v2764
    %v3100 = vpop.f32.mrf.mxu0
    %v3101 = vadd.f32 %v3012, %v3100
    %v3102 = vpop.f32.mrf.mxu0
    %v3103 = vadd.f32 %v3014, %v3102
    %3104 = vmatmul.bf16.gmra.mxu0 %v2766
    %v3105 = vpop.f32.mrf.mxu0
    %v3106 = vadd.f32 %v3017, %v3105
    %v3107 = vpop.f32.mrf.mxu0
    %v3108 = vadd.f32 %v3019, %v3107
    %3109 = vmatmul.bf16.gmra.mxu0 %v2768
    %v3110 = vpop.f32.mrf.mxu0
    %v3111 = vadd.f32 %v3022, %v3110
    %v3112 = vpop.f32.mrf.mxu0
    %v3113 = vadd.f32 %v3024, %v3112
    %3114 = vmatmul.bf16.gmra.mxu0 %v2770
    %v3115 = vpop.f32.mrf.mxu0
    %v3116 = vadd.f32 %v3027, %v3115
    %v3117 = vpop.f32.mrf.mxu0
    %v3118 = vadd.f32 %v3029, %v3117
    %3119 = vmatmul.bf16.gmra.mxu0 %v2772
    %v3120 = vpop.f32.mrf.mxu0
    %v3121 = vadd.f32 %v3032, %v3120
    %v3122 = vpop.f32.mrf.mxu0
    %v3123 = vadd.f32 %v3034, %v3122
    %3124 = vmatmul.bf16.gmra.mxu0 %v2774
    %v3125 = vpop.f32.mrf.mxu0
    %v3126 = vadd.f32 %v3037, %v3125
    %v3127 = vpop.f32.mrf.mxu0
    %v3128 = vadd.f32 %v3039, %v3127
    %3129 = vmatmul.bf16.gmra.mxu0 %v2776
    %v3130 = vpop.f32.mrf.mxu0
    %v3131 = vadd.f32 %v3042, %v3130
    %v3132 = vpop.f32.mrf.mxu0
    %v3133 = vadd.f32 %v3044, %v3132
    %3134 = vmatmul.bf16.gmra.mxu0 %v2778
    %v3135 = vpop.f32.mrf.mxu0
    %v3136 = vadd.f32 %v3047, %v3135
    %v3137 = vpop.f32.mrf.mxu0
    %v3138 = vadd.f32 %v3049, %v3137
    %3139 = vmatmul.bf16.gmra.mxu0 %v2780
    %v3140 = vpop.f32.mrf.mxu0
    %v3141 = vadd.f32 %v3052, %v3140
    %v3142 = vpop.f32.mrf.mxu0
    %v3143 = vadd.f32 %v3054, %v3142
    %3144 = vmatmul.bf16.gmra.mxu0 %v2782
    %v3145 = vpop.f32.mrf.mxu0
    %v3146 = vadd.f32 %v3057, %v3145
    %v3147 = vpop.f32.mrf.mxu0
    %v3148 = vadd.f32 %v3059, %v3147
    %3149 = vmatmul.bf16.gmra.mxu0 %v2784
    %v3150 = vpop.f32.mrf.mxu0
    %v3151 = vadd.f32 %v3062, %v3150
    %v3152 = vpop.f32.mrf.mxu0
    %v3153 = vadd.f32 %v3064, %v3152
    %3154 = vmatmul.bf16.gmra.mxu0 %v2786
    %v3155 = vpop.f32.mrf.mxu0
    %v3156 = vadd.f32 %v3067, %v3155
    %v3157 = vpop.f32.mrf.mxu0
    %v3158 = vadd.f32 %v3069, %v3157
    %3159 = vmatmul.bf16.gmra.mxu0 %v2788
    %v3160 = vpop.f32.mrf.mxu0
    %v3161 = vadd.f32 %v3072, %v3160
    %v3162 = vpop.f32.mrf.mxu0
    %v3163 = vadd.f32 %v3074, %v3162
    %3164 = vdwg.mxu0
    %3165 = vmatpush.bf16.msra.mxu0 %v2938
    %3166 = vmatpush.bf16.msra.mxu0 %v2936
    %3167 = vmatpush.bf16.msra.mxu0 %v2934
    %3168 = vmatpush.bf16.msra.mxu0 %v2932
    %3169 = vmatpush.bf16.msra.mxu0 %v2930
    %3170 = vmatpush.bf16.msra.mxu0 %v2928
    %3171 = vmatpush.bf16.msra.mxu0 %v2926
    %3172 = vmatpush.bf16.msra.mxu0 %v2924
    %3173 = vmatmul.bf16.gmra.mxu0 %v2757
    %v3174 = vpop.f32.mrf.mxu0
    %v3175 = vadd.f32 %v2824, %v3174
    %v3176 = vpop.f32.mrf.mxu0
    %v3177 = vadd.f32 %v2824, %v3176
    %3178 = vmatmul.bf16.gmra.mxu0 %v2759
    %v3179 = vpop.f32.mrf.mxu0
    %v3180 = vadd.f32 %v2824, %v3179
    %v3181 = vpop.f32.mrf.mxu0
    %v3182 = vadd.f32 %v2824, %v3181
    %3183 = vmatmul.bf16.gmra.mxu0 %v2761
    %v3184 = vpop.f32.mrf.mxu0
    %v3185 = vadd.f32 %v2824, %v3184
    %v3186 = vpop.f32.mrf.mxu0
    %v3187 = vadd.f32 %v2824, %v3186
    %3188 = vmatmul.bf16.gmra.mxu0 %v2763
    %v3189 = vpop.f32.mrf.mxu0
    %v3190 = vadd.f32 %v2824, %v3189
    %v3191 = vpop.f32.mrf.mxu0
    %v3192 = vadd.f32 %v2824, %v3191
    %3193 = vmatmul.bf16.gmra.mxu0 %v2765
    %v3194 = vpop.f32.mrf.mxu0
    %v3195 = vadd.f32 %v2824, %v3194
    %v3196 = vpop.f32.mrf.mxu0
    %v3197 = vadd.f32 %v2824, %v3196
    %3198 = vmatmul.bf16.gmra.mxu0 %v2767
    %v3199 = vpop.f32.mrf.mxu0
    %v3200 = vadd.f32 %v2824, %v3199
    %v3201 = vpop.f32.mrf.mxu0
    %v3202 = vadd.f32 %v2824, %v3201
    %3203 = vmatmul.bf16.gmra.mxu0 %v2769
    %v3204 = vpop.f32.mrf.mxu0
    %v3205 = vadd.f32 %v2824, %v3204
    %v3206 = vpop.f32.mrf.mxu0
    %v3207 = vadd.f32 %v2824, %v3206
    %3208 = vmatmul.bf16.gmra.mxu0 %v2771
    %v3209 = vpop.f32.mrf.mxu0
    %v3210 = vadd.f32 %v2824, %v3209
    %v3211 = vpop.f32.mrf.mxu0
    %v3212 = vadd.f32 %v2824, %v3211
    %3213 = vmatmul.bf16.gmra.mxu0 %v2773
    %v3214 = vpop.f32.mrf.mxu0
    %v3215 = vadd.f32 %v2824, %v3214
    %v3216 = vpop.f32.mrf.mxu0
    %v3217 = vadd.f32 %v2824, %v3216
    %3218 = vmatmul.bf16.gmra.mxu0 %v2775
    %v3219 = vpop.f32.mrf.mxu0
    %v3220 = vadd.f32 %v2824, %v3219
    %v3221 = vpop.f32.mrf.mxu0
    %v3222 = vadd.f32 %v2824, %v3221
    %3223 = vmatmul.bf16.gmra.mxu0 %v2777
    %v3224 = vpop.f32.mrf.mxu0
    %v3225 = vadd.f32 %v2824, %v3224
    %v3226 = vpop.f32.mrf.mxu0
    %v3227 = vadd.f32 %v2824, %v3226
    %3228 = vmatmul.bf16.gmra.mxu0 %v2779
    %v3229 = vpop.f32.mrf.mxu0
    %v3230 = vadd.f32 %v2824, %v3229
    %v3231 = vpop.f32.mrf.mxu0
    %v3232 = vadd.f32 %v2824, %v3231
    %3233 = vmatmul.bf16.gmra.mxu0 %v2781
    %v3234 = vpop.f32.mrf.mxu0
    %v3235 = vadd.f32 %v2824, %v3234
    %v3236 = vpop.f32.mrf.mxu0
    %v3237 = vadd.f32 %v2824, %v3236
    %3238 = vmatmul.bf16.gmra.mxu0 %v2783
    %v3239 = vpop.f32.mrf.mxu0
    %v3240 = vadd.f32 %v2824, %v3239
    %v3241 = vpop.f32.mrf.mxu0
    %v3242 = vadd.f32 %v2824, %v3241
    %3243 = vmatmul.bf16.gmra.mxu0 %v2785
    %v3244 = vpop.f32.mrf.mxu0
    %v3245 = vadd.f32 %v2824, %v3244
    %v3246 = vpop.f32.mrf.mxu0
    %v3247 = vadd.f32 %v2824, %v3246
    %3248 = vmatmul.bf16.gmra.mxu0 %v2787
    %v3249 = vpop.f32.mrf.mxu0
    %v3250 = vadd.f32 %v2824, %v3249
    %v3251 = vpop.f32.mrf.mxu0
    %v3252 = vadd.f32 %v2824, %v3251
    %3253 = vdwg.mxu0
    %3254 = vmatpush.bf16.msra.mxu0 %v2954
    %3255 = vmatpush.bf16.msra.mxu0 %v2952
    %3256 = vmatpush.bf16.msra.mxu0 %v2950
    %3257 = vmatpush.bf16.msra.mxu0 %v2948
    %3258 = vmatpush.bf16.msra.mxu0 %v2946
    %3259 = vmatpush.bf16.msra.mxu0 %v2944
    %3260 = vmatpush.bf16.msra.mxu0 %v2942
    %3261 = vmatpush.bf16.msra.mxu0 %v2940
    %3262 = vmatmul.bf16.gmra.mxu0 %v2758
    %v3263 = vpop.f32.mrf.mxu0
    %v3264 = vadd.f32 %v3175, %v3263
    %v3265 = vpop.f32.mrf.mxu0
    %v3266 = vadd.f32 %v3177, %v3265
    %3267 = vmatmul.bf16.gmra.mxu0 %v2760
    %v3268 = vpop.f32.mrf.mxu0
    %v3269 = vadd.f32 %v3180, %v3268
    %v3270 = vpop.f32.mrf.mxu0
    %v3271 = vadd.f32 %v3182, %v3270
    %3272 = vmatmul.bf16.gmra.mxu0 %v2762
    %v3273 = vpop.f32.mrf.mxu0
    %v3274 = vadd.f32 %v3185, %v3273
    %v3275 = vpop.f32.mrf.mxu0
    %v3276 = vadd.f32 %v3187, %v3275
    %3277 = vmatmul.bf16.gmra.mxu0 %v2764
    %v3278 = vpop.f32.mrf.mxu0
    %v3279 = vadd.f32 %v3190, %v3278
    %v3280 = vpop.f32.mrf.mxu0
    %v3281 = vadd.f32 %v3192, %v3280
    %3282 = vmatmul.bf16.gmra.mxu0 %v2766
    %v3283 = vpop.f32.mrf.mxu0
    %v3284 = vadd.f32 %v3195, %v3283
    %v3285 = vpop.f32.mrf.mxu0
    %v3286 = vadd.f32 %v3197, %v3285
    %3287 = vmatmul.bf16.gmra.mxu0 %v2768
    %v3288 = vpop.f32.mrf.mxu0
    %v3289 = vadd.f32 %v3200, %v3288
    %v3290 = vpop.f32.mrf.mxu0
    %v3291 = vadd.f32 %v3202, %v3290
    %3292 = vmatmul.bf16.gmra.mxu0 %v2770
    %v3293 = vpop.f32.mrf.mxu0
    %v3294 = vadd.f32 %v3205, %v3293
    %v3295 = vpop.f32.mrf.mxu0
    %v3296 = vadd.f32 %v3207, %v3295
    %3297 = vmatmul.bf16.gmra.mxu0 %v2772
    %v3298 = vpop.f32.mrf.mxu0
    %v3299 = vadd.f32 %v3210, %v3298
    %v3300 = vpop.f32.mrf.mxu0
    %v3301 = vadd.f32 %v3212, %v3300
    %3302 = vmatmul.bf16.gmra.mxu0 %v2774
    %v3303 = vpop.f32.mrf.mxu0
    %v3304 = vadd.f32 %v3215, %v3303
    %v3305 = vpop.f32.mrf.mxu0
    %v3306 = vadd.f32 %v3217, %v3305
    %3307 = vmatmul.bf16.gmra.mxu0 %v2776
    %v3308 = vpop.f32.mrf.mxu0
    %v3309 = vadd.f32 %v3220, %v3308
    %v3310 = vpop.f32.mrf.mxu0
    %v3311 = vadd.f32 %v3222, %v3310
    %3312 = vmatmul.bf16.gmra.mxu0 %v2778
    %v3313 = vpop.f32.mrf.mxu0
    %v3314 = vadd.f32 %v3225, %v3313
    %v3315 = vpop.f32.mrf.mxu0
    %v3316 = vadd.f32 %v3227, %v3315
    %3317 = vmatmul.bf16.gmra.mxu0 %v2780
    %v3318 = vpop.f32.mrf.mxu0
    %v3319 = vadd.f32 %v3230, %v3318
    %v3320 = vpop.f32.mrf.mxu0
    %v3321 = vadd.f32 %v3232, %v3320
    %3322 = vmatmul.bf16.gmra.mxu0 %v2782
    %v3323 = vpop.f32.mrf.mxu0
    %v3324 = vadd.f32 %v3235, %v3323
    %v3325 = vpop.f32.mrf.mxu0
    %v3326 = vadd.f32 %v3237, %v3325
    %3327 = vmatmul.bf16.gmra.mxu0 %v2784
    %v3328 = vpop.f32.mrf.mxu0
    %v3329 = vadd.f32 %v3240, %v3328
    %v3330 = vpop.f32.mrf.mxu0
    %v3331 = vadd.f32 %v3242, %v3330
    %3332 = vmatmul.bf16.gmra.mxu0 %v2786
    %v3333 = vpop.f32.mrf.mxu0
    %v3334 = vadd.f32 %v3245, %v3333
    %v3335 = vpop.f32.mrf.mxu0
    %v3336 = vadd.f32 %v3247, %v3335
    %3337 = vmatmul.bf16.gmra.mxu0 %v2788
    %v3338 = vpop.f32.mrf.mxu0
    %v3339 = vadd.f32 %v3250, %v3338
    %v3340 = vpop.f32.mrf.mxu0
    %v3341 = vadd.f32 %v3252, %v3340
    %3342 = vdwg.mxu0
    %v3343 = vmax.f32 %v3086, 0.0
    %v3344 = vmax.f32 %v3264, 0.0
    %v3345 = vmax.f32 %v3088, 0.0
    %v3346 = vmax.f32 %v3266, 0.0
    %v3347 = vmax.f32 %v3091, 0.0
    %v3348 = vmax.f32 %v3269, 0.0
    %v3349 = vmax.f32 %v3093, 0.0
    %v3350 = vmax.f32 %v3271, 0.0
    %v3351 = vmax.f32 %v3096, 0.0
    %v3352 = vmax.f32 %v3274, 0.0
    %v3353 = vmax.f32 %v3098, 0.0
    %v3354 = vmax.f32 %v3276, 0.0
    %v3355 = vmax.f32 %v3101, 0.0
    %v3356 = vmax.f32 %v3279, 0.0
    %v3357 = vmax.f32 %v3103, 0.0
    %v3358 = vmax.f32 %v3281, 0.0
    %v3359 = vmax.f32 %v3106, 0.0
    %v3360 = vmax.f32 %v3284, 0.0
    %v3361 = vmax.f32 %v3108, 0.0
    %v3362 = vmax.f32 %v3286, 0.0
    %v3363 = vmax.f32 %v3111, 0.0
    %v3364 = vmax.f32 %v3289, 0.0
    %v3365 = vmax.f32 %v3113, 0.0
    %v3366 = vmax.f32 %v3291, 0.0
    %v3367 = vmax.f32 %v3116, 0.0
    %v3368 = vmax.f32 %v3294, 0.0
    %v3369 = vmax.f32 %v3118, 0.0
    %v3370 = vmax.f32 %v3296, 0.0
    %v3371 = vmax.f32 %v3121, 0.0
    %v3372 = vmax.f32 %v3299, 0.0
    %v3373 = vmax.f32 %v3123, 0.0
    %v3374 = vmax.f32 %v3301, 0.0
    %v3375 = vmax.f32 %v3126, 0.0
    %v3376 = vmax.f32 %v3304, 0.0
    %v3377 = vmax.f32 %v3128, 0.0
    %v3378 = vmax.f32 %v3306, 0.0
    %v3379 = vmax.f32 %v3131, 0.0
    %v3380 = vmax.f32 %v3309, 0.0
    %v3381 = vmax.f32 %v3133, 0.0
    %v3382 = vmax.f32 %v3311, 0.0
    %v3383 = vmax.f32 %v3136, 0.0
    %v3384 = vmax.f32 %v3314, 0.0
    %v3385 = vmax.f32 %v3138, 0.0
    %v3386 = vmax.f32 %v3316, 0.0
    %v3387 = vmax.f32 %v3141, 0.0
    %v3388 = vmax.f32 %v3319, 0.0
    %v3389 = vmax.f32 %v3143, 0.0
    %v3390 = vmax.f32 %v3321, 0.0
    %v3391 = vmax.f32 %v3146, 0.0
    %v3392 = vmax.f32 %v3324, 0.0
    %v3393 = vmax.f32 %v3148, 0.0
    %v3394 = vmax.f32 %v3326, 0.0
    %v3395 = vmax.f32 %v3151, 0.0
    %v3396 = vmax.f32 %v3329, 0.0
    %v3397 = vmax.f32 %v3153, 0.0
    %v3398 = vmax.f32 %v3331, 0.0
    %v3399 = vmax.f32 %v3156, 0.0
    %v3400 = vmax.f32 %v3334, 0.0
    %v3401 = vmax.f32 %v3158, 0.0
    %v3402 = vmax.f32 %v3336, 0.0
    %v3403 = vmax.f32 %v3161, 0.0
    %v3404 = vmax.f32 %v3339, 0.0
    %v3405 = vmax.f32 %v3163, 0.0
    %v3406 = vmax.f32 %v3341, 0.0
    %v3407 = vpack.c.bf16 %v3345, %v3343
    %v3408 = vpack.c.bf16 %v3346, %v3344
    %v3409 = vpack.c.bf16 %v3349, %v3347
    %v3410 = vpack.c.bf16 %v3350, %v3348
    %v3411 = vpack.c.bf16 %v3353, %v3351
    %v3412 = vpack.c.bf16 %v3354, %v3352
    %v3413 = vpack.c.bf16 %v3357, %v3355
    %v3414 = vpack.c.bf16 %v3358, %v3356
    %v3415 = vpack.c.bf16 %v3361, %v3359
    %v3416 = vpack.c.bf16 %v3362, %v3360
    %v3417 = vpack.c.bf16 %v3365, %v3363
    %v3418 = vpack.c.bf16 %v3366, %v3364
    %v3419 = vpack.c.bf16 %v3369, %v3367
    %v3420 = vpack.c.bf16 %v3370, %v3368
    %v3421 = vpack.c.bf16 %v3373, %v3371
    %v3422 = vpack.c.bf16 %v3374, %v3372
    %v3423 = vpack.c.bf16 %v3377, %v3375
    %v3424 = vpack.c.bf16 %v3378, %v3376
    %v3425 = vpack.c.bf16 %v3381, %v3379
    %v3426 = vpack.c.bf16 %v3382, %v3380
    %v3427 = vpack.c.bf16 %v3385, %v3383
    %v3428 = vpack.c.bf16 %v3386, %v3384
    %v3429 = vpack.c.bf16 %v3389, %v3387
    %v3430 = vpack.c.bf16 %v3390, %v3388
    %v3431 = vpack.c.bf16 %v3393, %v3391
    %v3432 = vpack.c.bf16 %v3394, %v3392
    %v3433 = vpack.c.bf16 %v3397, %v3395
    %v3434 = vpack.c.bf16 %v3398, %v3396
    %v3435 = vpack.c.bf16 %v3401, %v3399
    %v3436 = vpack.c.bf16 %v3402, %v3400
    %v3437 = vpack.c.bf16 %v3405, %v3403
    %v3438 = vpack.c.bf16 %v3406, %v3404
    %v3439 = vld [vmem:[#allocation6] sm:$0xff]
    %v3440 = vld [vmem:[#allocation6 + $0x8] sm:$0xff]
    %v3441 = vld [vmem:[#allocation6 + $0x10] sm:$0xff]
    %v3442 = vld [vmem:[#allocation6 + $0x18] sm:$0xff]
    %v3443 = vld [vmem:[#allocation6 + $0x20] sm:$0xff]
    %v3444 = vld [vmem:[#allocation6 + $0x28] sm:$0xff]
    %v3445 = vld [vmem:[#allocation6 + $0x30] sm:$0xff]
    %v3446 = vld [vmem:[#allocation6 + $0x38] sm:$0xff]
    %v3447 = vld [vmem:[#allocation6 + $0x40] sm:$0xff]
    %v3448 = vld [vmem:[#allocation6 + $0x48] sm:$0xff]
    %v3449 = vld [vmem:[#allocation6 + $0x50] sm:$0xff]
    %v3450 = vld [vmem:[#allocation6 + $0x58] sm:$0xff]
    %v3451 = vld [vmem:[#allocation6 + $0x60] sm:$0xff]
    %v3452 = vld [vmem:[#allocation6 + $0x68] sm:$0xff]
    %v3453 = vld [vmem:[#allocation6 + $0x70] sm:$0xff]
    %v3454 = vld [vmem:[#allocation6 + $0x78] sm:$0xff]
    %v3455 = vld [vmem:[#allocation6 + $0x80] sm:$0xff]
    %v3456 = vld [vmem:[#allocation6 + $0x88] sm:$0xff]
    %v3457 = vld [vmem:[#allocation6 + $0x90] sm:$0xff]
    %v3458 = vld [vmem:[#allocation6 + $0x98] sm:$0xff]
    %v3459 = vld [vmem:[#allocation6 + $0xa0] sm:$0xff]
    %v3460 = vld [vmem:[#allocation6 + $0xa8] sm:$0xff]
    %v3461 = vld [vmem:[#allocation6 + $0xb0] sm:$0xff]
    %v3462 = vld [vmem:[#allocation6 + $0xb8] sm:$0xff]
    %v3463 = vld [vmem:[#allocation6 + $0xc0] sm:$0xff]
    %v3464 = vld [vmem:[#allocation6 + $0xc8] sm:$0xff]
    %v3465 = vld [vmem:[#allocation6 + $0xd0] sm:$0xff]
    %v3466 = vld [vmem:[#allocation6 + $0xd8] sm:$0xff]
    %v3467 = vld [vmem:[#allocation6 + $0xe0] sm:$0xff]
    %v3468 = vld [vmem:[#allocation6 + $0xe8] sm:$0xff]
    %v3469 = vld [vmem:[#allocation6 + $0xf0] sm:$0xff]
    %v3470 = vld [vmem:[#allocation6 + $0xf8] sm:$0xff]
    %v3503 = vunpack.c.l.b16 %v3439
    %v3504 = vunpack.c.h.b16 %v3439
    %v3505 = vunpack.c.l.b16 %v3440
    %v3506 = vunpack.c.h.b16 %v3440
    %v3507 = vunpack.c.l.b16 %v3441
    %v3508 = vunpack.c.h.b16 %v3441
    %v3509 = vunpack.c.l.b16 %v3442
    %v3510 = vunpack.c.h.b16 %v3442
    %v3511 = vunpack.c.l.b16 %v3443
    %v3512 = vunpack.c.h.b16 %v3443
    %v3513 = vunpack.c.l.b16 %v3444
    %v3514 = vunpack.c.h.b16 %v3444
    %v3515 = vunpack.c.l.b16 %v3445
    %v3516 = vunpack.c.h.b16 %v3445
    %v3517 = vunpack.c.l.b16 %v3446
    %v3518 = vunpack.c.h.b16 %v3446
    %v3519 = vunpack.c.l.b16 %v3447
    %v3520 = vunpack.c.h.b16 %v3447
    %v3521 = vunpack.c.l.b16 %v3448
    %v3522 = vunpack.c.h.b16 %v3448
    %v3523 = vunpack.c.l.b16 %v3449
    %v3524 = vunpack.c.h.b16 %v3449
    %v3525 = vunpack.c.l.b16 %v3450
    %v3526 = vunpack.c.h.b16 %v3450
    %v3527 = vunpack.c.l.b16 %v3451
    %v3528 = vunpack.c.h.b16 %v3451
    %v3529 = vunpack.c.l.b16 %v3452
    %v3530 = vunpack.c.h.b16 %v3452
    %v3531 = vunpack.c.l.b16 %v3453
    %v3532 = vunpack.c.h.b16 %v3453
    %v3533 = vunpack.c.l.b16 %v3454
    %v3534 = vunpack.c.h.b16 %v3454
    %v3535 = vunpack.c.l.b16 %v3455
    %v3536 = vunpack.c.h.b16 %v3455
    %v3537 = vunpack.c.l.b16 %v3456
    %v3538 = vunpack.c.h.b16 %v3456
    %v3539 = vunpack.c.l.b16 %v3457
    %v3540 = vunpack.c.h.b16 %v3457
    %v3541 = vunpack.c.l.b16 %v3458
    %v3542 = vunpack.c.h.b16 %v3458
    %v3543 = vunpack.c.l.b16 %v3459
    %v3544 = vunpack.c.h.b16 %v3459
    %v3545 = vunpack.c.l.b16 %v3460
    %v3546 = vunpack.c.h.b16 %v3460
    %v3547 = vunpack.c.l.b16 %v3461
    %v3548 = vunpack.c.h.b16 %v3461
    %v3549 = vunpack.c.l.b16 %v3462
    %v3550 = vunpack.c.h.b16 %v3462
    %v3551 = vunpack.c.l.b16 %v3463
    %v3552 = vunpack.c.h.b16 %v3463
    %v3553 = vunpack.c.l.b16 %v3464
    %v3554 = vunpack.c.h.b16 %v3464
    %v3555 = vunpack.c.l.b16 %v3465
    %v3556 = vunpack.c.h.b16 %v3465
    %v3557 = vunpack.c.l.b16 %v3466
    %v3558 = vunpack.c.h.b16 %v3466
    %v3559 = vunpack.c.l.b16 %v3467
    %v3560 = vunpack.c.h.b16 %v3467
    %v3561 = vunpack.c.l.b16 %v3468
    %v3562 = vunpack.c.h.b16 %v3468
    %v3563 = vunpack.c.l.b16 %v3469
    %v3564 = vunpack.c.h.b16 %v3469
    %v3565 = vunpack.c.l.b16 %v3470
    %v3566 = vunpack.c.h.b16 %v3470
    %v3567 = vpack.c.b16 %v3505, %v3503
    %v3568 = vpack.c.b16 %v3506, %v3504
    %v3569 = vpack.c.b16 %v3509, %v3507
    %v3570 = vpack.c.b16 %v3510, %v3508
    %v3571 = vpack.c.b16 %v3513, %v3511
    %v3572 = vpack.c.b16 %v3514, %v3512
    %v3573 = vpack.c.b16 %v3517, %v3515
    %v3574 = vpack.c.b16 %v3518, %v3516
    %v3575 = vpack.c.b16 %v3521, %v3519
    %v3576 = vpack.c.b16 %v3522, %v3520
    %v3577 = vpack.c.b16 %v3525, %v3523
    %v3578 = vpack.c.b16 %v3526, %v3524
    %v3579 = vpack.c.b16 %v3529, %v3527
    %v3580 = vpack.c.b16 %v3530, %v3528
    %v3581 = vpack.c.b16 %v3533, %v3531
    %v3582 = vpack.c.b16 %v3534, %v3532
    %v3583 = vpack.c.b16 %v3537, %v3535
    %v3584 = vpack.c.b16 %v3538, %v3536
    %v3585 = vpack.c.b16 %v3541, %v3539
    %v3586 = vpack.c.b16 %v3542, %v3540
    %v3587 = vpack.c.b16 %v3545, %v3543
    %v3588 = vpack.c.b16 %v3546, %v3544
    %v3589 = vpack.c.b16 %v3549, %v3547
    %v3590 = vpack.c.b16 %v3550, %v3548
    %v3591 = vpack.c.b16 %v3553, %v3551
    %v3592 = vpack.c.b16 %v3554, %v3552
    %v3593 = vpack.c.b16 %v3557, %v3555
    %v3594 = vpack.c.b16 %v3558, %v3556
    %v3595 = vpack.c.b16 %v3561, %v3559
    %v3596 = vpack.c.b16 %v3562, %v3560
    %v3597 = vpack.c.b16 %v3565, %v3563
    %v3598 = vpack.c.b16 %v3566, %v3564
    %3631 = vmatpush.bf16.msra.mxu0 %v3581
    %3632 = vmatpush.bf16.msra.mxu0 %v3579
    %3633 = vmatpush.bf16.msra.mxu0 %v3577
    %3634 = vmatpush.bf16.msra.mxu0 %v3575
    %3635 = vmatpush.bf16.msra.mxu0 %v3573
    %3636 = vmatpush.bf16.msra.mxu0 %v3571
    %3637 = vmatpush.bf16.msra.mxu0 %v3569
    %3638 = vmatpush.bf16.msra.mxu0 %v3567
    %3639 = vmatmul.bf16.gmra.mxu0 %v3407
    %v3640 = vpop.f32.mrf.mxu0
    %v3641 = vadd.f32 %v505, %v3640
    %v3642 = vpop.f32.mrf.mxu0
    %v3643 = vadd.f32 %v507, %v3642
    %3644 = vmatmul.bf16.gmra.mxu0 %v3409
    %v3645 = vpop.f32.mrf.mxu0
    %v3646 = vadd.f32 %v510, %v3645
    %v3647 = vpop.f32.mrf.mxu0
    %v3648 = vadd.f32 %v512, %v3647
    %3649 = vmatmul.bf16.gmra.mxu0 %v3411
    %v3650 = vpop.f32.mrf.mxu0
    %v3651 = vadd.f32 %v515, %v3650
    %v3652 = vpop.f32.mrf.mxu0
    %v3653 = vadd.f32 %v517, %v3652
    %3654 = vmatmul.bf16.gmra.mxu0 %v3413
    %v3655 = vpop.f32.mrf.mxu0
    %v3656 = vadd.f32 %v520, %v3655
    %v3657 = vpop.f32.mrf.mxu0
    %v3658 = vadd.f32 %v522, %v3657
    %3659 = vmatmul.bf16.gmra.mxu0 %v3415
    %v3660 = vpop.f32.mrf.mxu0
    %v3661 = vadd.f32 %v525, %v3660
    %v3662 = vpop.f32.mrf.mxu0
    %v3663 = vadd.f32 %v527, %v3662
    %3664 = vmatmul.bf16.gmra.mxu0 %v3417
    %v3665 = vpop.f32.mrf.mxu0
    %v3666 = vadd.f32 %v530, %v3665
    %v3667 = vpop.f32.mrf.mxu0
    %v3668 = vadd.f32 %v532, %v3667
    %3669 = vmatmul.bf16.gmra.mxu0 %v3419
    %v3670 = vpop.f32.mrf.mxu0
    %v3671 = vadd.f32 %v535, %v3670
    %v3672 = vpop.f32.mrf.mxu0
    %v3673 = vadd.f32 %v537, %v3672
    %3674 = vmatmul.bf16.gmra.mxu0 %v3421
    %v3675 = vpop.f32.mrf.mxu0
    %v3676 = vadd.f32 %v540, %v3675
    %v3677 = vpop.f32.mrf.mxu0
    %v3678 = vadd.f32 %v542, %v3677
    %3679 = vmatmul.bf16.gmra.mxu0 %v3423
    %v3680 = vpop.f32.mrf.mxu0
    %v3681 = vadd.f32 %v545, %v3680
    %v3682 = vpop.f32.mrf.mxu0
    %v3683 = vadd.f32 %v547, %v3682
    %3684 = vmatmul.bf16.gmra.mxu0 %v3425
    %v3685 = vpop.f32.mrf.mxu0
    %v3686 = vadd.f32 %v550, %v3685
    %v3687 = vpop.f32.mrf.mxu0
    %v3688 = vadd.f32 %v552, %v3687
    %3689 = vmatmul.bf16.gmra.mxu0 %v3427
    %v3690 = vpop.f32.mrf.mxu0
    %v3691 = vadd.f32 %v555, %v3690
    %v3692 = vpop.f32.mrf.mxu0
    %v3693 = vadd.f32 %v557, %v3692
    %3694 = vmatmul.bf16.gmra.mxu0 %v3429
    %v3695 = vpop.f32.mrf.mxu0
    %v3696 = vadd.f32 %v560, %v3695
    %v3697 = vpop.f32.mrf.mxu0
    %v3698 = vadd.f32 %v562, %v3697
    %3699 = vmatmul.bf16.gmra.mxu0 %v3431
    %v3700 = vpop.f32.mrf.mxu0
    %v3701 = vadd.f32 %v565, %v3700
    %v3702 = vpop.f32.mrf.mxu0
    %v3703 = vadd.f32 %v567, %v3702
    %3704 = vmatmul.bf16.gmra.mxu0 %v3433
    %v3705 = vpop.f32.mrf.mxu0
    %v3706 = vadd.f32 %v570, %v3705
    %v3707 = vpop.f32.mrf.mxu0
    %v3708 = vadd.f32 %v572, %v3707
    %3709 = vmatmul.bf16.gmra.mxu0 %v3435
    %v3710 = vpop.f32.mrf.mxu0
    %v3711 = vadd.f32 %v575, %v3710
    %v3712 = vpop.f32.mrf.mxu0
    %v3713 = vadd.f32 %v577, %v3712
    %3714 = vmatmul.bf16.gmra.mxu0 %v3437
    %v3715 = vpop.f32.mrf.mxu0
    %v3716 = vadd.f32 %v580, %v3715
    %v3717 = vpop.f32.mrf.mxu0
    %v3718 = vadd.f32 %v582, %v3717
    %3719 = vdwg.mxu0
    %3720 = vmatpush.bf16.msra.mxu0 %v3597
    %3721 = vmatpush.bf16.msra.mxu0 %v3595
    %3722 = vmatpush.bf16.msra.mxu0 %v3593
    %3723 = vmatpush.bf16.msra.mxu0 %v3591
    %3724 = vmatpush.bf16.msra.mxu0 %v3589
    %3725 = vmatpush.bf16.msra.mxu0 %v3587
    %3726 = vmatpush.bf16.msra.mxu0 %v3585
    %3727 = vmatpush.bf16.msra.mxu0 %v3583
    %3728 = vmatmul.bf16.gmra.mxu0 %v3408
    %v3729 = vpop.f32.mrf.mxu0
    %v3730 = vadd.f32 %v3641, %v3729
    %v3731 = vpop.f32.mrf.mxu0
    %v3732 = vadd.f32 %v3643, %v3731
    %3733 = vmatmul.bf16.gmra.mxu0 %v3410
    %v3734 = vpop.f32.mrf.mxu0
    %v3735 = vadd.f32 %v3646, %v3734
    %v3736 = vpop.f32.mrf.mxu0
    %v3737 = vadd.f32 %v3648, %v3736
    %3738 = vmatmul.bf16.gmra.mxu0 %v3412
    %v3739 = vpop.f32.mrf.mxu0
    %v3740 = vadd.f32 %v3651, %v3739
    %v3741 = vpop.f32.mrf.mxu0
    %v3742 = vadd.f32 %v3653, %v3741
    %3743 = vmatmul.bf16.gmra.mxu0 %v3414
    %v3744 = vpop.f32.mrf.mxu0
    %v3745 = vadd.f32 %v3656, %v3744
    %v3746 = vpop.f32.mrf.mxu0
    %v3747 = vadd.f32 %v3658, %v3746
    %3748 = vmatmul.bf16.gmra.mxu0 %v3416
    %v3749 = vpop.f32.mrf.mxu0
    %v3750 = vadd.f32 %v3661, %v3749
    %v3751 = vpop.f32.mrf.mxu0
    %v3752 = vadd.f32 %v3663, %v3751
    %3753 = vmatmul.bf16.gmra.mxu0 %v3418
    %v3754 = vpop.f32.mrf.mxu0
    %v3755 = vadd.f32 %v3666, %v3754
    %v3756 = vpop.f32.mrf.mxu0
    %v3757 = vadd.f32 %v3668, %v3756
    %3758 = vmatmul.bf16.gmra.mxu0 %v3420
    %v3759 = vpop.f32.mrf.mxu0
    %v3760 = vadd.f32 %v3671, %v3759
    %v3761 = vpop.f32.mrf.mxu0
    %v3762 = vadd.f32 %v3673, %v3761
    %3763 = vmatmul.bf16.gmra.mxu0 %v3422
    %v3764 = vpop.f32.mrf.mxu0
    %v3765 = vadd.f32 %v3676, %v3764
    %v3766 = vpop.f32.mrf.mxu0
    %v3767 = vadd.f32 %v3678, %v3766
    %3768 = vmatmul.bf16.gmra.mxu0 %v3424
    %v3769 = vpop.f32.mrf.mxu0
    %v3770 = vadd.f32 %v3681, %v3769
    %v3771 = vpop.f32.mrf.mxu0
    %v3772 = vadd.f32 %v3683, %v3771
    %3773 = vmatmul.bf16.gmra.mxu0 %v3426
    %v3774 = vpop.f32.mrf.mxu0
    %v3775 = vadd.f32 %v3686, %v3774
    %v3776 = vpop.f32.mrf.mxu0
    %v3777 = vadd.f32 %v3688, %v3776
    %3778 = vmatmul.bf16.gmra.mxu0 %v3428
    %v3779 = vpop.f32.mrf.mxu0
    %v3780 = vadd.f32 %v3691, %v3779
    %v3781 = vpop.f32.mrf.mxu0
    %v3782 = vadd.f32 %v3693, %v3781
    %3783 = vmatmul.bf16.gmra.mxu0 %v3430
    %v3784 = vpop.f32.mrf.mxu0
    %v3785 = vadd.f32 %v3696, %v3784
    %v3786 = vpop.f32.mrf.mxu0
    %v3787 = vadd.f32 %v3698, %v3786
    %3788 = vmatmul.bf16.gmra.mxu0 %v3432
    %v3789 = vpop.f32.mrf.mxu0
    %v3790 = vadd.f32 %v3701, %v3789
    %v3791 = vpop.f32.mrf.mxu0
    %v3792 = vadd.f32 %v3703, %v3791
    %3793 = vmatmul.bf16.gmra.mxu0 %v3434
    %v3794 = vpop.f32.mrf.mxu0
    %v3795 = vadd.f32 %v3706, %v3794
    %v3796 = vpop.f32.mrf.mxu0
    %v3797 = vadd.f32 %v3708, %v3796
    %3798 = vmatmul.bf16.gmra.mxu0 %v3436
    %v3799 = vpop.f32.mrf.mxu0
    %v3800 = vadd.f32 %v3711, %v3799
    %v3801 = vpop.f32.mrf.mxu0
    %v3802 = vadd.f32 %v3713, %v3801
    %3803 = vmatmul.bf16.gmra.mxu0 %v3438
    %v3804 = vpop.f32.mrf.mxu0
    %v3805 = vadd.f32 %v3716, %v3804
    %v3806 = vpop.f32.mrf.mxu0
    %v3807 = vadd.f32 %v3718, %v3806
    %3808 = vdwg.mxu0
    %3809 = vmatpush.bf16.msra.mxu0 %v3582
    %3810 = vmatpush.bf16.msra.mxu0 %v3580
    %3811 = vmatpush.bf16.msra.mxu0 %v3578
    %3812 = vmatpush.bf16.msra.mxu0 %v3576
    %3813 = vmatpush.bf16.msra.mxu0 %v3574
    %3814 = vmatpush.bf16.msra.mxu0 %v3572
    %3815 = vmatpush.bf16.msra.mxu0 %v3570
    %3816 = vmatpush.bf16.msra.mxu0 %v3568
    %3817 = vmatmul.bf16.gmra.mxu0 %v3407
    %v3818 = vpop.f32.mrf.mxu0
    %v3819 = vadd.f32 %v594, %v3818
    %v3820 = vpop.f32.mrf.mxu0
    %v3821 = vadd.f32 %v596, %v3820
    %3822 = vmatmul.bf16.gmra.mxu0 %v3409
    %v3823 = vpop.f32.mrf.mxu0
    %v3824 = vadd.f32 %v599, %v3823
    %v3825 = vpop.f32.mrf.mxu0
    %v3826 = vadd.f32 %v601, %v3825
    %3827 = vmatmul.bf16.gmra.mxu0 %v3411
    %v3828 = vpop.f32.mrf.mxu0
    %v3829 = vadd.f32 %v604, %v3828
    %v3830 = vpop.f32.mrf.mxu0
    %v3831 = vadd.f32 %v606, %v3830
    %3832 = vmatmul.bf16.gmra.mxu0 %v3413
    %v3833 = vpop.f32.mrf.mxu0
    %v3834 = vadd.f32 %v609, %v3833
    %v3835 = vpop.f32.mrf.mxu0
    %v3836 = vadd.f32 %v611, %v3835
    %3837 = vmatmul.bf16.gmra.mxu0 %v3415
    %v3838 = vpop.f32.mrf.mxu0
    %v3839 = vadd.f32 %v614, %v3838
    %v3840 = vpop.f32.mrf.mxu0
    %v3841 = vadd.f32 %v616, %v3840
    %3842 = vmatmul.bf16.gmra.mxu0 %v3417
    %v3843 = vpop.f32.mrf.mxu0
    %v3844 = vadd.f32 %v619, %v3843
    %v3845 = vpop.f32.mrf.mxu0
    %v3846 = vadd.f32 %v621, %v3845
    %3847 = vmatmul.bf16.gmra.mxu0 %v3419
    %v3848 = vpop.f32.mrf.mxu0
    %v3849 = vadd.f32 %v624, %v3848
    %v3850 = vpop.f32.mrf.mxu0
    %v3851 = vadd.f32 %v626, %v3850
    %3852 = vmatmul.bf16.gmra.mxu0 %v3421
    %v3853 = vpop.f32.mrf.mxu0
    %v3854 = vadd.f32 %v629, %v3853
    %v3855 = vpop.f32.mrf.mxu0
    %v3856 = vadd.f32 %v631, %v3855
    %3857 = vmatmul.bf16.gmra.mxu0 %v3423
    %v3858 = vpop.f32.mrf.mxu0
    %v3859 = vadd.f32 %v634, %v3858
    %v3860 = vpop.f32.mrf.mxu0
    %v3861 = vadd.f32 %v636, %v3860
    %3862 = vmatmul.bf16.gmra.mxu0 %v3425
    %v3863 = vpop.f32.mrf.mxu0
    %v3864 = vadd.f32 %v639, %v3863
    %v3865 = vpop.f32.mrf.mxu0
    %v3866 = vadd.f32 %v641, %v3865
    %3867 = vmatmul.bf16.gmra.mxu0 %v3427
    %v3868 = vpop.f32.mrf.mxu0
    %v3869 = vadd.f32 %v644, %v3868
    %v3870 = vpop.f32.mrf.mxu0
    %v3871 = vadd.f32 %v646, %v3870
    %3872 = vmatmul.bf16.gmra.mxu0 %v3429
    %v3873 = vpop.f32.mrf.mxu0
    %v3874 = vadd.f32 %v649, %v3873
    %v3875 = vpop.f32.mrf.mxu0
    %v3876 = vadd.f32 %v651, %v3875
    %3877 = vmatmul.bf16.gmra.mxu0 %v3431
    %v3878 = vpop.f32.mrf.mxu0
    %v3879 = vadd.f32 %v654, %v3878
    %v3880 = vpop.f32.mrf.mxu0
    %v3881 = vadd.f32 %v656, %v3880
    %3882 = vmatmul.bf16.gmra.mxu0 %v3433
    %v3883 = vpop.f32.mrf.mxu0
    %v3884 = vadd.f32 %v659, %v3883
    %v3885 = vpop.f32.mrf.mxu0
    %v3886 = vadd.f32 %v661, %v3885
    %3887 = vmatmul.bf16.gmra.mxu0 %v3435
    %v3888 = vpop.f32.mrf.mxu0
    %v3889 = vadd.f32 %v664, %v3888
    %v3890 = vpop.f32.mrf.mxu0
    %v3891 = vadd.f32 %v666, %v3890
    %3892 = vmatmul.bf16.gmra.mxu0 %v3437
    %v3893 = vpop.f32.mrf.mxu0
    %v3894 = vadd.f32 %v669, %v3893
    %v3895 = vpop.f32.mrf.mxu0
    %v3896 = vadd.f32 %v671, %v3895
    %3897 = vdwg.mxu0
    %3898 = vmatpush.bf16.msra.mxu0 %v3598
    %3899 = vmatpush.bf16.msra.mxu0 %v3596
    %3900 = vmatpush.bf16.msra.mxu0 %v3594
    %3901 = vmatpush.bf16.msra.mxu0 %v3592
    %3902 = vmatpush.bf16.msra.mxu0 %v3590
    %3903 = vmatpush.bf16.msra.mxu0 %v3588
    %3904 = vmatpush.bf16.msra.mxu0 %v3586
    %3905 = vmatpush.bf16.msra.mxu0 %v3584
    %3906 = vmatmul.bf16.gmra.mxu0 %v3408
    %v3907 = vpop.f32.mrf.mxu0
    %v3908 = vadd.f32 %v3819, %v3907
    %v3909 = vpop.f32.mrf.mxu0
    %v3910 = vadd.f32 %v3821, %v3909
    %3911 = vmatmul.bf16.gmra.mxu0 %v3410
    %v3912 = vpop.f32.mrf.mxu0
    %v3913 = vadd.f32 %v3824, %v3912
    %v3914 = vpop.f32.mrf.mxu0
    %v3915 = vadd.f32 %v3826, %v3914
    %3916 = vmatmul.bf16.gmra.mxu0 %v3412
    %v3917 = vpop.f32.mrf.mxu0
    %v3918 = vadd.f32 %v3829, %v3917
    %v3919 = vpop.f32.mrf.mxu0
    %v3920 = vadd.f32 %v3831, %v3919
    %3921 = vmatmul.bf16.gmra.mxu0 %v3414
    %v3922 = vpop.f32.mrf.mxu0
    %v3923 = vadd.f32 %v3834, %v3922
    %v3924 = vpop.f32.mrf.mxu0
    %v3925 = vadd.f32 %v3836, %v3924
    %3926 = vmatmul.bf16.gmra.mxu0 %v3416
    %v3927 = vpop.f32.mrf.mxu0
    %v3928 = vadd.f32 %v3839, %v3927
    %v3929 = vpop.f32.mrf.mxu0
    %v3930 = vadd.f32 %v3841, %v3929
    %3931 = vmatmul.bf16.gmra.mxu0 %v3418
    %v3932 = vpop.f32.mrf.mxu0
    %v3933 = vadd.f32 %v3844, %v3932
    %v3934 = vpop.f32.mrf.mxu0
    %v3935 = vadd.f32 %v3846, %v3934
    %3936 = vmatmul.bf16.gmra.mxu0 %v3420
    %v3937 = vpop.f32.mrf.mxu0
    %v3938 = vadd.f32 %v3849, %v3937
    %v3939 = vpop.f32.mrf.mxu0
    %v3940 = vadd.f32 %v3851, %v3939
    %3941 = vmatmul.bf16.gmra.mxu0 %v3422
    %v3942 = vpop.f32.mrf.mxu0
    %v3943 = vadd.f32 %v3854, %v3942
    %v3944 = vpop.f32.mrf.mxu0
    %v3945 = vadd.f32 %v3856, %v3944
    %3946 = vmatmul.bf16.gmra.mxu0 %v3424
    %v3947 = vpop.f32.mrf.mxu0
    %v3948 = vadd.f32 %v3859, %v3947
    %v3949 = vpop.f32.mrf.mxu0
    %v3950 = vadd.f32 %v3861, %v3949
    %3951 = vmatmul.bf16.gmra.mxu0 %v3426
    %v3952 = vpop.f32.mrf.mxu0
    %v3953 = vadd.f32 %v3864, %v3952
    %v3954 = vpop.f32.mrf.mxu0
    %v3955 = vadd.f32 %v3866, %v3954
    %3956 = vmatmul.bf16.gmra.mxu0 %v3428
    %v3957 = vpop.f32.mrf.mxu0
    %v3958 = vadd.f32 %v3869, %v3957
    %v3959 = vpop.f32.mrf.mxu0
    %v3960 = vadd.f32 %v3871, %v3959
    %3961 = vmatmul.bf16.gmra.mxu0 %v3430
    %v3962 = vpop.f32.mrf.mxu0
    %v3963 = vadd.f32 %v3874, %v3962
    %v3964 = vpop.f32.mrf.mxu0
    %v3965 = vadd.f32 %v3876, %v3964
    %3966 = vmatmul.bf16.gmra.mxu0 %v3432
    %v3967 = vpop.f32.mrf.mxu0
    %v3968 = vadd.f32 %v3879, %v3967
    %v3969 = vpop.f32.mrf.mxu0
    %v3970 = vadd.f32 %v3881, %v3969
    %3971 = vmatmul.bf16.gmra.mxu0 %v3434
    %v3972 = vpop.f32.mrf.mxu0
    %v3973 = vadd.f32 %v3884, %v3972
    %v3974 = vpop.f32.mrf.mxu0
    %v3975 = vadd.f32 %v3886, %v3974
    %3976 = vmatmul.bf16.gmra.mxu0 %v3436
    %v3977 = vpop.f32.mrf.mxu0
    %v3978 = vadd.f32 %v3889, %v3977
    %v3979 = vpop.f32.mrf.mxu0
    %v3980 = vadd.f32 %v3891, %v3979
    %3981 = vmatmul.bf16.gmra.mxu0 %v3438
    %v3982 = vpop.f32.mrf.mxu0
    %v3983 = vadd.f32 %v3894, %v3982
    %v3984 = vpop.f32.mrf.mxu0
    %v3985 = vadd.f32 %v3896, %v3984
    %3986 = vdwg.mxu0
    %v3987 = vld [vmem:[%s12] sm:$0x3]
    %v3989 = vperm.slane %v3987, 0
    %v3990 = vperm.slane %v3987, 1
    %v3993 = vadd.f32 %v3730, %v3989
    %v3994 = vadd.f32 %v3908, %v3990
    %v3995 = vadd.f32 %v3732, %v3989
    %v3996 = vadd.f32 %v3910, %v3990
    %v3997 = vadd.f32 %v3735, %v3989
    %v3998 = vadd.f32 %v3913, %v3990
    %v3999 = vadd.f32 %v3737, %v3989
    %v4000 = vadd.f32 %v3915, %v3990
    %v4001 = vadd.f32 %v3740, %v3989
    %v4002 = vadd.f32 %v3918, %v3990
    %v4003 = vadd.f32 %v3742, %v3989
    %v4004 = vadd.f32 %v3920, %v3990
    %v4005 = vadd.f32 %v3745, %v3989
    %v4006 = vadd.f32 %v3923, %v3990
    %v4007 = vadd.f32 %v3747, %v3989
    %v4008 = vadd.f32 %v3925, %v3990
    %v4009 = vadd.f32 %v3750, %v3989
    %v4010 = vadd.f32 %v3928, %v3990
    %v4011 = vadd.f32 %v3752, %v3989
    %v4012 = vadd.f32 %v3930, %v3990
    %v4013 = vadd.f32 %v3755, %v3989
    %v4014 = vadd.f32 %v3933, %v3990
    %v4015 = vadd.f32 %v3757, %v3989
    %v4016 = vadd.f32 %v3935, %v3990
    %v4017 = vadd.f32 %v3760, %v3989
    %v4018 = vadd.f32 %v3938, %v3990
    %v4019 = vadd.f32 %v3762, %v3989
    %v4020 = vadd.f32 %v3940, %v3990
    %v4021 = vadd.f32 %v3765, %v3989
    %v4022 = vadd.f32 %v3943, %v3990
    %v4023 = vadd.f32 %v3767, %v3989
    %v4024 = vadd.f32 %v3945, %v3990
    %v4025 = vadd.f32 %v3770, %v3989
    %v4026 = vadd.f32 %v3948, %v3990
    %v4027 = vadd.f32 %v3772, %v3989
    %v4028 = vadd.f32 %v3950, %v3990
    %v4029 = vadd.f32 %v3775, %v3989
    %v4030 = vadd.f32 %v3953, %v3990
    %v4031 = vadd.f32 %v3777, %v3989
    %v4032 = vadd.f32 %v3955, %v3990
    %v4033 = vadd.f32 %v3780, %v3989
    %v4034 = vadd.f32 %v3958, %v3990
    %v4035 = vadd.f32 %v3782, %v3989
    %v4036 = vadd.f32 %v3960, %v3990
    %v4037 = vadd.f32 %v3785, %v3989
    %v4038 = vadd.f32 %v3963, %v3990
    %v4039 = vadd.f32 %v3787, %v3989
    %v4040 = vadd.f32 %v3965, %v3990
    %v4041 = vadd.f32 %v3790, %v3989
    %v4042 = vadd.f32 %v3968, %v3990
    %v4043 = vadd.f32 %v3792, %v3989
    %v4044 = vadd.f32 %v3970, %v3990
    %v4045 = vadd.f32 %v3795, %v3989
    %v4046 = vadd.f32 %v3973, %v3990
    %v4047 = vadd.f32 %v3797, %v3989
    %v4048 = vadd.f32 %v3975, %v3990
    %v4049 = vadd.f32 %v3800, %v3989
    %v4050 = vadd.f32 %v3978, %v3990
    %v4051 = vadd.f32 %v3802, %v3989
    %v4052 = vadd.f32 %v3980, %v3990
    %v4053 = vadd.f32 %v3805, %v3989
    %v4054 = vadd.f32 %v3983, %v3990
    %v4055 = vadd.f32 %v3807, %v3989
    %v4056 = vadd.f32 %v3985, %v3990
    %v4057 = vmax.f32 %v3993, 0.0
    %v4058 = vmax.f32 %v3994, 0.0
    %v4059 = vmax.f32 %v3995, 0.0
    %v4060 = vmax.f32 %v3996, 0.0
    %v4061 = vmax.f32 %v3997, 0.0
    %v4062 = vmax.f32 %v3998, 0.0
    %v4063 = vmax.f32 %v3999, 0.0
    %v4064 = vmax.f32 %v4000, 0.0
    %v4065 = vmax.f32 %v4001, 0.0
    %v4066 = vmax.f32 %v4002, 0.0
    %v4067 = vmax.f32 %v4003, 0.0
    %v4068 = vmax.f32 %v4004, 0.0
    %v4069 = vmax.f32 %v4005, 0.0
    %v4070 = vmax.f32 %v4006, 0.0
    %v4071 = vmax.f32 %v4007, 0.0
    %v4072 = vmax.f32 %v4008, 0.0
    %v4073 = vmax.f32 %v4009, 0.0
    %v4074 = vmax.f32 %v4010, 0.0
    %v4075 = vmax.f32 %v4011, 0.0
    %v4076 = vmax.f32 %v4012, 0.0
    %v4077 = vmax.f32 %v4013, 0.0
    %v4078 = vmax.f32 %v4014, 0.0
    %v4079 = vmax.f32 %v4015, 0.0
    %v4080 = vmax.f32 %v4016, 0.0
    %v4081 = vmax.f32 %v4017, 0.0
    %v4082 = vmax.f32 %v4018, 0.0
    %v4083 = vmax.f32 %v4019, 0.0
    %v4084 = vmax.f32 %v4020, 0.0
    %v4085 = vmax.f32 %v4021, 0.0
    %v4086 = vmax.f32 %v4022, 0.0
    %v4087 = vmax.f32 %v4023, 0.0
    %v4088 = vmax.f32 %v4024, 0.0
    %v4089 = vmax.f32 %v4025, 0.0
    %v4090 = vmax.f32 %v4026, 0.0
    %v4091 = vmax.f32 %v4027, 0.0
    %v4092 = vmax.f32 %v4028, 0.0
    %v4093 = vmax.f32 %v4029, 0.0
    %v4094 = vmax.f32 %v4030, 0.0
    %v4095 = vmax.f32 %v4031, 0.0
    %v4096 = vmax.f32 %v4032, 0.0
    %v4097 = vmax.f32 %v4033, 0.0
    %v4098 = vmax.f32 %v4034, 0.0
    %v4099 = vmax.f32 %v4035, 0.0
    %v4100 = vmax.f32 %v4036, 0.0
    %v4101 = vmax.f32 %v4037, 0.0
    %v4102 = vmax.f32 %v4038, 0.0
    %v4103 = vmax.f32 %v4039, 0.0
    %v4104 = vmax.f32 %v4040, 0.0
    %v4105 = vmax.f32 %v4041, 0.0
    %v4106 = vmax.f32 %v4042, 0.0
    %v4107 = vmax.f32 %v4043, 0.0
    %v4108 = vmax.f32 %v4044, 0.0
    %v4109 = vmax.f32 %v4045, 0.0
    %v4110 = vmax.f32 %v4046, 0.0
    %v4111 = vmax.f32 %v4047, 0.0
    %v4112 = vmax.f32 %v4048, 0.0
    %v4113 = vmax.f32 %v4049, 0.0
    %v4114 = vmax.f32 %v4050, 0.0
    %v4115 = vmax.f32 %v4051, 0.0
    %v4116 = vmax.f32 %v4052, 0.0
    %v4117 = vmax.f32 %v4053, 0.0
    %v4118 = vmax.f32 %v4054, 0.0
    %v4119 = vmax.f32 %v4055, 0.0
    %v4120 = vmax.f32 %v4056, 0.0
    %v4121 = vpack.c.bf16 %v4059, %v4057
    %v4122 = vpack.c.bf16 %v4060, %v4058
    %v4123 = vpack.c.bf16 %v4063, %v4061
    %v4124 = vpack.c.bf16 %v4064, %v4062
    %v4125 = vpack.c.bf16 %v4067, %v4065
    %v4126 = vpack.c.bf16 %v4068, %v4066
    %v4127 = vpack.c.bf16 %v4071, %v4069
    %v4128 = vpack.c.bf16 %v4072, %v4070
    %v4129 = vpack.c.bf16 %v4075, %v4073
    %v4130 = vpack.c.bf16 %v4076, %v4074
    %v4131 = vpack.c.bf16 %v4079, %v4077
    %v4132 = vpack.c.bf16 %v4080, %v4078
    %v4133 = vpack.c.bf16 %v4083, %v4081
    %v4134 = vpack.c.bf16 %v4084, %v4082
    %v4135 = vpack.c.bf16 %v4087, %v4085
    %v4136 = vpack.c.bf16 %v4088, %v4086
    %v4137 = vpack.c.bf16 %v4091, %v4089
    %v4138 = vpack.c.bf16 %v4092, %v4090
    %v4139 = vpack.c.bf16 %v4095, %v4093
    %v4140 = vpack.c.bf16 %v4096, %v4094
    %v4141 = vpack.c.bf16 %v4099, %v4097
    %v4142 = vpack.c.bf16 %v4100, %v4098
    %v4143 = vpack.c.bf16 %v4103, %v4101
    %v4144 = vpack.c.bf16 %v4104, %v4102
    %v4145 = vpack.c.bf16 %v4107, %v4105
    %v4146 = vpack.c.bf16 %v4108, %v4106
    %v4147 = vpack.c.bf16 %v4111, %v4109
    %v4148 = vpack.c.bf16 %v4112, %v4110
    %v4149 = vpack.c.bf16 %v4115, %v4113
    %v4150 = vpack.c.bf16 %v4116, %v4114
    %v4151 = vpack.c.bf16 %v4119, %v4117
    %v4152 = vpack.c.bf16 %v4120, %v4118
    %v4153 = vld [vmem:[#allocation7] sm:$0xff]
    %v4154 = vld [vmem:[#allocation7 + $0x8] sm:$0xff]
    %v4155 = vld [vmem:[#allocation7 + $0x10] sm:$0xff]
    %v4156 = vld [vmem:[#allocation7 + $0x18] sm:$0xff]
    %v4157 = vld [vmem:[#allocation7 + $0x20] sm:$0xff]
    %v4158 = vld [vmem:[#allocation7 + $0x28] sm:$0xff]
    %v4159 = vld [vmem:[#allocation7 + $0x30] sm:$0xff]
    %v4160 = vld [vmem:[#allocation7 + $0x38] sm:$0xff]
    %v4161 = vld [vmem:[#allocation7 + $0x40] sm:$0xff]
    %v4162 = vld [vmem:[#allocation7 + $0x48] sm:$0xff]
    %v4163 = vld [vmem:[#allocation7 + $0x50] sm:$0xff]
    %v4164 = vld [vmem:[#allocation7 + $0x58] sm:$0xff]
    %v4165 = vld [vmem:[#allocation7 + $0x60] sm:$0xff]
    %v4166 = vld [vmem:[#allocation7 + $0x68] sm:$0xff]
    %v4167 = vld [vmem:[#allocation7 + $0x70] sm:$0xff]
    %v4168 = vld [vmem:[#allocation7 + $0x78] sm:$0xff]
    %v4169 = vld [vmem:[#allocation7 + $0x80] sm:$0xff]
    %v4170 = vld [vmem:[#allocation7 + $0x88] sm:$0xff]
    %v4171 = vld [vmem:[#allocation7 + $0x90] sm:$0xff]
    %v4172 = vld [vmem:[#allocation7 + $0x98] sm:$0xff]
    %v4173 = vld [vmem:[#allocation7 + $0xa0] sm:$0xff]
    %v4174 = vld [vmem:[#allocation7 + $0xa8] sm:$0xff]
    %v4175 = vld [vmem:[#allocation7 + $0xb0] sm:$0xff]
    %v4176 = vld [vmem:[#allocation7 + $0xb8] sm:$0xff]
    %v4177 = vld [vmem:[#allocation7 + $0xc0] sm:$0xff]
    %v4178 = vld [vmem:[#allocation7 + $0xc8] sm:$0xff]
    %v4179 = vld [vmem:[#allocation7 + $0xd0] sm:$0xff]
    %v4180 = vld [vmem:[#allocation7 + $0xd8] sm:$0xff]
    %v4181 = vld [vmem:[#allocation7 + $0xe0] sm:$0xff]
    %v4182 = vld [vmem:[#allocation7 + $0xe8] sm:$0xff]
    %v4183 = vld [vmem:[#allocation7 + $0xf0] sm:$0xff]
    %v4184 = vld [vmem:[#allocation7 + $0xf8] sm:$0xff]
    %v4185 = vld [vmem:[%s14] sm:$0x3]
    %v4187 = vperm.slane %v4185, 0
    %v4188 = vperm.slane %v4185, 1
    %v4223 = vunpack.c.l.b16 %v4153
    %v4224 = vunpack.c.h.b16 %v4153
    %v4225 = vunpack.c.l.b16 %v4154
    %v4226 = vunpack.c.h.b16 %v4154
    %v4227 = vunpack.c.l.b16 %v4155
    %v4228 = vunpack.c.h.b16 %v4155
    %v4229 = vunpack.c.l.b16 %v4156
    %v4230 = vunpack.c.h.b16 %v4156
    %v4231 = vunpack.c.l.b16 %v4157
    %v4232 = vunpack.c.h.b16 %v4157
    %v4233 = vunpack.c.l.b16 %v4158
    %v4234 = vunpack.c.h.b16 %v4158
    %v4235 = vunpack.c.l.b16 %v4159
    %v4236 = vunpack.c.h.b16 %v4159
    %v4237 = vunpack.c.l.b16 %v4160
    %v4238 = vunpack.c.h.b16 %v4160
    %v4239 = vunpack.c.l.b16 %v4161
    %v4240 = vunpack.c.h.b16 %v4161
    %v4241 = vunpack.c.l.b16 %v4162
    %v4242 = vunpack.c.h.b16 %v4162
    %v4243 = vunpack.c.l.b16 %v4163
    %v4244 = vunpack.c.h.b16 %v4163
    %v4245 = vunpack.c.l.b16 %v4164
    %v4246 = vunpack.c.h.b16 %v4164
    %v4247 = vunpack.c.l.b16 %v4165
    %v4248 = vunpack.c.h.b16 %v4165
    %v4249 = vunpack.c.l.b16 %v4166
    %v4250 = vunpack.c.h.b16 %v4166
    %v4251 = vunpack.c.l.b16 %v4167
    %v4252 = vunpack.c.h.b16 %v4167
    %v4253 = vunpack.c.l.b16 %v4168
    %v4254 = vunpack.c.h.b16 %v4168
    %v4255 = vunpack.c.l.b16 %v4169
    %v4256 = vunpack.c.h.b16 %v4169
    %v4257 = vunpack.c.l.b16 %v4170
    %v4258 = vunpack.c.h.b16 %v4170
    %v4259 = vunpack.c.l.b16 %v4171
    %v4260 = vunpack.c.h.b16 %v4171
    %v4261 = vunpack.c.l.b16 %v4172
    %v4262 = vunpack.c.h.b16 %v4172
    %v4263 = vunpack.c.l.b16 %v4173
    %v4264 = vunpack.c.h.b16 %v4173
    %v4265 = vunpack.c.l.b16 %v4174
    %v4266 = vunpack.c.h.b16 %v4174
    %v4267 = vunpack.c.l.b16 %v4175
    %v4268 = vunpack.c.h.b16 %v4175
    %v4269 = vunpack.c.l.b16 %v4176
    %v4270 = vunpack.c.h.b16 %v4176
    %v4271 = vunpack.c.l.b16 %v4177
    %v4272 = vunpack.c.h.b16 %v4177
    %v4273 = vunpack.c.l.b16 %v4178
    %v4274 = vunpack.c.h.b16 %v4178
    %v4275 = vunpack.c.l.b16 %v4179
    %v4276 = vunpack.c.h.b16 %v4179
    %v4277 = vunpack.c.l.b16 %v4180
    %v4278 = vunpack.c.h.b16 %v4180
    %v4279 = vunpack.c.l.b16 %v4181
    %v4280 = vunpack.c.h.b16 %v4181
    %v4281 = vunpack.c.l.b16 %v4182
    %v4282 = vunpack.c.h.b16 %v4182
    %v4283 = vunpack.c.l.b16 %v4183
    %v4284 = vunpack.c.h.b16 %v4183
    %v4285 = vunpack.c.l.b16 %v4184
    %v4286 = vunpack.c.h.b16 %v4184
    %v4287 = vpack.c.b16 %v4225, %v4223
    %v4288 = vpack.c.b16 %v4226, %v4224
    %v4289 = vpack.c.b16 %v4229, %v4227
    %v4290 = vpack.c.b16 %v4230, %v4228
    %v4291 = vpack.c.b16 %v4233, %v4231
    %v4292 = vpack.c.b16 %v4234, %v4232
    %v4293 = vpack.c.b16 %v4237, %v4235
    %v4294 = vpack.c.b16 %v4238, %v4236
    %v4295 = vpack.c.b16 %v4241, %v4239
    %v4296 = vpack.c.b16 %v4242, %v4240
    %v4297 = vpack.c.b16 %v4245, %v4243
    %v4298 = vpack.c.b16 %v4246, %v4244
    %v4299 = vpack.c.b16 %v4249, %v4247
    %v4300 = vpack.c.b16 %v4250, %v4248
    %v4301 = vpack.c.b16 %v4253, %v4251
    %v4302 = vpack.c.b16 %v4254, %v4252
    %v4303 = vpack.c.b16 %v4257, %v4255
    %v4304 = vpack.c.b16 %v4258, %v4256
    %v4305 = vpack.c.b16 %v4261, %v4259
    %v4306 = vpack.c.b16 %v4262, %v4260
    %v4307 = vpack.c.b16 %v4265, %v4263
    %v4308 = vpack.c.b16 %v4266, %v4264
    %v4309 = vpack.c.b16 %v4269, %v4267
    %v4310 = vpack.c.b16 %v4270, %v4268
    %v4311 = vpack.c.b16 %v4273, %v4271
    %v4312 = vpack.c.b16 %v4274, %v4272
    %v4313 = vpack.c.b16 %v4277, %v4275
    %v4314 = vpack.c.b16 %v4278, %v4276
    %v4315 = vpack.c.b16 %v4281, %v4279
    %v4316 = vpack.c.b16 %v4282, %v4280
    %v4317 = vpack.c.b16 %v4285, %v4283
    %v4318 = vpack.c.b16 %v4286, %v4284
    %4351 = vmatpush.bf16.msra.mxu0 %v4301
    %4352 = vmatpush.bf16.msra.mxu0 %v4299
    %4353 = vmatpush.bf16.msra.mxu0 %v4297
    %4354 = vmatpush.bf16.msra.mxu0 %v4295
    %4355 = vmatpush.bf16.msra.mxu0 %v4293
    %4356 = vmatpush.bf16.msra.mxu0 %v4291
    %4357 = vmatpush.bf16.msra.mxu0 %v4289
    %4358 = vmatpush.bf16.msra.mxu0 %v4287
    %4359 = vmatmul.bf16.gmra.mxu0 %v4121
    %v4360 = vpop.f32.mrf.mxu0
    %v4361 = vadd.f32 %v4187, %v4360
    %v4362 = vpop.f32.mrf.mxu0
    %v4363 = vadd.f32 %v4187, %v4362
    %4364 = vmatmul.bf16.gmra.mxu0 %v4123
    %v4365 = vpop.f32.mrf.mxu0
    %v4366 = vadd.f32 %v4187, %v4365
    %v4367 = vpop.f32.mrf.mxu0
    %v4368 = vadd.f32 %v4187, %v4367
    %4369 = vmatmul.bf16.gmra.mxu0 %v4125
    %v4370 = vpop.f32.mrf.mxu0
    %v4371 = vadd.f32 %v4187, %v4370
    %v4372 = vpop.f32.mrf.mxu0
    %v4373 = vadd.f32 %v4187, %v4372
    %4374 = vmatmul.bf16.gmra.mxu0 %v4127
    %v4375 = vpop.f32.mrf.mxu0
    %v4376 = vadd.f32 %v4187, %v4375
    %v4377 = vpop.f32.mrf.mxu0
    %v4378 = vadd.f32 %v4187, %v4377
    %4379 = vmatmul.bf16.gmra.mxu0 %v4129
    %v4380 = vpop.f32.mrf.mxu0
    %v4381 = vadd.f32 %v4187, %v4380
    %v4382 = vpop.f32.mrf.mxu0
    %v4383 = vadd.f32 %v4187, %v4382
    %4384 = vmatmul.bf16.gmra.mxu0 %v4131
    %v4385 = vpop.f32.mrf.mxu0
    %v4386 = vadd.f32 %v4187, %v4385
    %v4387 = vpop.f32.mrf.mxu0
    %v4388 = vadd.f32 %v4187, %v4387
    %4389 = vmatmul.bf16.gmra.mxu0 %v4133
    %v4390 = vpop.f32.mrf.mxu0
    %v4391 = vadd.f32 %v4187, %v4390
    %v4392 = vpop.f32.mrf.mxu0
    %v4393 = vadd.f32 %v4187, %v4392
    %4394 = vmatmul.bf16.gmra.mxu0 %v4135
    %v4395 = vpop.f32.mrf.mxu0
    %v4396 = vadd.f32 %v4187, %v4395
    %v4397 = vpop.f32.mrf.mxu0
    %v4398 = vadd.f32 %v4187, %v4397
    %4399 = vmatmul.bf16.gmra.mxu0 %v4137
    %v4400 = vpop.f32.mrf.mxu0
    %v4401 = vadd.f32 %v4187, %v4400
    %v4402 = vpop.f32.mrf.mxu0
    %v4403 = vadd.f32 %v4187, %v4402
    %4404 = vmatmul.bf16.gmra.mxu0 %v4139
    %v4405 = vpop.f32.mrf.mxu0
    %v4406 = vadd.f32 %v4187, %v4405
    %v4407 = vpop.f32.mrf.mxu0
    %v4408 = vadd.f32 %v4187, %v4407
    %4409 = vmatmul.bf16.gmra.mxu0 %v4141
    %v4410 = vpop.f32.mrf.mxu0
    %v4411 = vadd.f32 %v4187, %v4410
    %v4412 = vpop.f32.mrf.mxu0
    %v4413 = vadd.f32 %v4187, %v4412
    %4414 = vmatmul.bf16.gmra.mxu0 %v4143
    %v4415 = vpop.f32.mrf.mxu0
    %v4416 = vadd.f32 %v4187, %v4415
    %v4417 = vpop.f32.mrf.mxu0
    %v4418 = vadd.f32 %v4187, %v4417
    %4419 = vmatmul.bf16.gmra.mxu0 %v4145
    %v4420 = vpop.f32.mrf.mxu0
    %v4421 = vadd.f32 %v4187, %v4420
    %v4422 = vpop.f32.mrf.mxu0
    %v4423 = vadd.f32 %v4187, %v4422
    %4424 = vmatmul.bf16.gmra.mxu0 %v4147
    %v4425 = vpop.f32.mrf.mxu0
    %v4426 = vadd.f32 %v4187, %v4425
    %v4427 = vpop.f32.mrf.mxu0
    %v4428 = vadd.f32 %v4187, %v4427
    %4429 = vmatmul.bf16.gmra.mxu0 %v4149
    %v4430 = vpop.f32.mrf.mxu0
    %v4431 = vadd.f32 %v4187, %v4430
    %v4432 = vpop.f32.mrf.mxu0
    %v4433 = vadd.f32 %v4187, %v4432
    %4434 = vmatmul.bf16.gmra.mxu0 %v4151
    %v4435 = vpop.f32.mrf.mxu0
    %v4436 = vadd.f32 %v4187, %v4435
    %v4437 = vpop.f32.mrf.mxu0
    %v4438 = vadd.f32 %v4187, %v4437
    %4439 = vdwg.mxu0
    %4440 = vmatpush.bf16.msra.mxu0 %v4317
    %4441 = vmatpush.bf16.msra.mxu0 %v4315
    %4442 = vmatpush.bf16.msra.mxu0 %v4313
    %4443 = vmatpush.bf16.msra.mxu0 %v4311
    %4444 = vmatpush.bf16.msra.mxu0 %v4309
    %4445 = vmatpush.bf16.msra.mxu0 %v4307
    %4446 = vmatpush.bf16.msra.mxu0 %v4305
    %4447 = vmatpush.bf16.msra.mxu0 %v4303
    %4448 = vmatmul.bf16.gmra.mxu0 %v4122
    %v4449 = vpop.f32.mrf.mxu0
    %v4450 = vadd.f32 %v4361, %v4449
    %v4451 = vpop.f32.mrf.mxu0
    %v4452 = vadd.f32 %v4363, %v4451
    %4453 = vmatmul.bf16.gmra.mxu0 %v4124
    %v4454 = vpop.f32.mrf.mxu0
    %v4455 = vadd.f32 %v4366, %v4454
    %v4456 = vpop.f32.mrf.mxu0
    %v4457 = vadd.f32 %v4368, %v4456
    %4458 = vmatmul.bf16.gmra.mxu0 %v4126
    %v4459 = vpop.f32.mrf.mxu0
    %v4460 = vadd.f32 %v4371, %v4459
    %v4461 = vpop.f32.mrf.mxu0
    %v4462 = vadd.f32 %v4373, %v4461
    %4463 = vmatmul.bf16.gmra.mxu0 %v4128
    %v4464 = vpop.f32.mrf.mxu0
    %v4465 = vadd.f32 %v4376, %v4464
    %v4466 = vpop.f32.mrf.mxu0
    %v4467 = vadd.f32 %v4378, %v4466
    %4468 = vmatmul.bf16.gmra.mxu0 %v4130
    %v4469 = vpop.f32.mrf.mxu0
    %v4470 = vadd.f32 %v4381, %v4469
    %v4471 = vpop.f32.mrf.mxu0
    %v4472 = vadd.f32 %v4383, %v4471
    %4473 = vmatmul.bf16.gmra.mxu0 %v4132
    %v4474 = vpop.f32.mrf.mxu0
    %v4475 = vadd.f32 %v4386, %v4474
    %v4476 = vpop.f32.mrf.mxu0
    %v4477 = vadd.f32 %v4388, %v4476
    %4478 = vmatmul.bf16.gmra.mxu0 %v4134
    %v4479 = vpop.f32.mrf.mxu0
    %v4480 = vadd.f32 %v4391, %v4479
    %v4481 = vpop.f32.mrf.mxu0
    %v4482 = vadd.f32 %v4393, %v4481
    %4483 = vmatmul.bf16.gmra.mxu0 %v4136
    %v4484 = vpop.f32.mrf.mxu0
    %v4485 = vadd.f32 %v4396, %v4484
    %v4486 = vpop.f32.mrf.mxu0
    %v4487 = vadd.f32 %v4398, %v4486
    %4488 = vmatmul.bf16.gmra.mxu0 %v4138
    %v4489 = vpop.f32.mrf.mxu0
    %v4490 = vadd.f32 %v4401, %v4489
    %v4491 = vpop.f32.mrf.mxu0
    %v4492 = vadd.f32 %v4403, %v4491
    %4493 = vmatmul.bf16.gmra.mxu0 %v4140
    %v4494 = vpop.f32.mrf.mxu0
    %v4495 = vadd.f32 %v4406, %v4494
    %v4496 = vpop.f32.mrf.mxu0
    %v4497 = vadd.f32 %v4408, %v4496
    %4498 = vmatmul.bf16.gmra.mxu0 %v4142
    %v4499 = vpop.f32.mrf.mxu0
    %v4500 = vadd.f32 %v4411, %v4499
    %v4501 = vpop.f32.mrf.mxu0
    %v4502 = vadd.f32 %v4413, %v4501
    %4503 = vmatmul.bf16.gmra.mxu0 %v4144
    %v4504 = vpop.f32.mrf.mxu0
    %v4505 = vadd.f32 %v4416, %v4504
    %v4506 = vpop.f32.mrf.mxu0
    %v4507 = vadd.f32 %v4418, %v4506
    %4508 = vmatmul.bf16.gmra.mxu0 %v4146
    %v4509 = vpop.f32.mrf.mxu0
    %v4510 = vadd.f32 %v4421, %v4509
    %v4511 = vpop.f32.mrf.mxu0
    %v4512 = vadd.f32 %v4423, %v4511
    %4513 = vmatmul.bf16.gmra.mxu0 %v4148
    %v4514 = vpop.f32.mrf.mxu0
    %v4515 = vadd.f32 %v4426, %v4514
    %v4516 = vpop.f32.mrf.mxu0
    %v4517 = vadd.f32 %v4428, %v4516
    %4518 = vmatmul.bf16.gmra.mxu0 %v4150
    %v4519 = vpop.f32.mrf.mxu0
    %v4520 = vadd.f32 %v4431, %v4519
    %v4521 = vpop.f32.mrf.mxu0
    %v4522 = vadd.f32 %v4433, %v4521
    %4523 = vmatmul.bf16.gmra.mxu0 %v4152
    %v4524 = vpop.f32.mrf.mxu0
    %v4525 = vadd.f32 %v4436, %v4524
    %v4526 = vpop.f32.mrf.mxu0
    %v4527 = vadd.f32 %v4438, %v4526
    %4528 = vdwg.mxu0
    %4529 = vmatpush.bf16.msra.mxu0 %v4302
    %4530 = vmatpush.bf16.msra.mxu0 %v4300
    %4531 = vmatpush.bf16.msra.mxu0 %v4298
    %4532 = vmatpush.bf16.msra.mxu0 %v4296
    %4533 = vmatpush.bf16.msra.mxu0 %v4294
    %4534 = vmatpush.bf16.msra.mxu0 %v4292
    %4535 = vmatpush.bf16.msra.mxu0 %v4290
    %4536 = vmatpush.bf16.msra.mxu0 %v4288
    %4537 = vmatmul.bf16.gmra.mxu0 %v4121
    %v4538 = vpop.f32.mrf.mxu0
    %v4539 = vadd.f32 %v4188, %v4538
    %v4540 = vpop.f32.mrf.mxu0
    %v4541 = vadd.f32 %v4188, %v4540
    %4542 = vmatmul.bf16.gmra.mxu0 %v4123
    %v4543 = vpop.f32.mrf.mxu0
    %v4544 = vadd.f32 %v4188, %v4543
    %v4545 = vpop.f32.mrf.mxu0
    %v4546 = vadd.f32 %v4188, %v4545
    %4547 = vmatmul.bf16.gmra.mxu0 %v4125
    %v4548 = vpop.f32.mrf.mxu0
    %v4549 = vadd.f32 %v4188, %v4548
    %v4550 = vpop.f32.mrf.mxu0
    %v4551 = vadd.f32 %v4188, %v4550
    %4552 = vmatmul.bf16.gmra.mxu0 %v4127
    %v4553 = vpop.f32.mrf.mxu0
    %v4554 = vadd.f32 %v4188, %v4553
    %v4555 = vpop.f32.mrf.mxu0
    %v4556 = vadd.f32 %v4188, %v4555
    %4557 = vmatmul.bf16.gmra.mxu0 %v4129
    %v4558 = vpop.f32.mrf.mxu0
    %v4559 = vadd.f32 %v4188, %v4558
    %v4560 = vpop.f32.mrf.mxu0
    %v4561 = vadd.f32 %v4188, %v4560
    %4562 = vmatmul.bf16.gmra.mxu0 %v4131
    %v4563 = vpop.f32.mrf.mxu0
    %v4564 = vadd.f32 %v4188, %v4563
    %v4565 = vpop.f32.mrf.mxu0
    %v4566 = vadd.f32 %v4188, %v4565
    %4567 = vmatmul.bf16.gmra.mxu0 %v4133
    %v4568 = vpop.f32.mrf.mxu0
    %v4569 = vadd.f32 %v4188, %v4568
    %v4570 = vpop.f32.mrf.mxu0
    %v4571 = vadd.f32 %v4188, %v4570
    %4572 = vmatmul.bf16.gmra.mxu0 %v4135
    %v4573 = vpop.f32.mrf.mxu0
    %v4574 = vadd.f32 %v4188, %v4573
    %v4575 = vpop.f32.mrf.mxu0
    %v4576 = vadd.f32 %v4188, %v4575
    %4577 = vmatmul.bf16.gmra.mxu0 %v4137
    %v4578 = vpop.f32.mrf.mxu0
    %v4579 = vadd.f32 %v4188, %v4578
    %v4580 = vpop.f32.mrf.mxu0
    %v4581 = vadd.f32 %v4188, %v4580
    %4582 = vmatmul.bf16.gmra.mxu0 %v4139
    %v4583 = vpop.f32.mrf.mxu0
    %v4584 = vadd.f32 %v4188, %v4583
    %v4585 = vpop.f32.mrf.mxu0
    %v4586 = vadd.f32 %v4188, %v4585
    %4587 = vmatmul.bf16.gmra.mxu0 %v4141
    %v4588 = vpop.f32.mrf.mxu0
    %v4589 = vadd.f32 %v4188, %v4588
    %v4590 = vpop.f32.mrf.mxu0
    %v4591 = vadd.f32 %v4188, %v4590
    %4592 = vmatmul.bf16.gmra.mxu0 %v4143
    %v4593 = vpop.f32.mrf.mxu0
    %v4594 = vadd.f32 %v4188, %v4593
    %v4595 = vpop.f32.mrf.mxu0
    %v4596 = vadd.f32 %v4188, %v4595
    %4597 = vmatmul.bf16.gmra.mxu0 %v4145
    %v4598 = vpop.f32.mrf.mxu0
    %v4599 = vadd.f32 %v4188, %v4598
    %v4600 = vpop.f32.mrf.mxu0
    %v4601 = vadd.f32 %v4188, %v4600
    %4602 = vmatmul.bf16.gmra.mxu0 %v4147
    %v4603 = vpop.f32.mrf.mxu0
    %v4604 = vadd.f32 %v4188, %v4603
    %v4605 = vpop.f32.mrf.mxu0
    %v4606 = vadd.f32 %v4188, %v4605
    %4607 = vmatmul.bf16.gmra.mxu0 %v4149
    %v4608 = vpop.f32.mrf.mxu0
    %v4609 = vadd.f32 %v4188, %v4608
    %v4610 = vpop.f32.mrf.mxu0
    %v4611 = vadd.f32 %v4188, %v4610
    %4612 = vmatmul.bf16.gmra.mxu0 %v4151
    %v4613 = vpop.f32.mrf.mxu0
    %v4614 = vadd.f32 %v4188, %v4613
    %v4615 = vpop.f32.mrf.mxu0
    %v4616 = vadd.f32 %v4188, %v4615
    %4617 = vdwg.mxu0
    %4618 = vmatpush.bf16.msra.mxu0 %v4318
    %4619 = vmatpush.bf16.msra.mxu0 %v4316
    %4620 = vmatpush.bf16.msra.mxu0 %v4314
    %4621 = vmatpush.bf16.msra.mxu0 %v4312
    %4622 = vmatpush.bf16.msra.mxu0 %v4310
    %4623 = vmatpush.bf16.msra.mxu0 %v4308
    %4624 = vmatpush.bf16.msra.mxu0 %v4306
    %4625 = vmatpush.bf16.msra.mxu0 %v4304
    %4626 = vmatmul.bf16.gmra.mxu0 %v4122
    %v4627 = vpop.f32.mrf.mxu0
    %v4628 = vadd.f32 %v4539, %v4627
    %v4629 = vpop.f32.mrf.mxu0
    %v4630 = vadd.f32 %v4541, %v4629
    %4631 = vmatmul.bf16.gmra.mxu0 %v4124
    %v4632 = vpop.f32.mrf.mxu0
    %v4633 = vadd.f32 %v4544, %v4632
    %v4634 = vpop.f32.mrf.mxu0
    %v4635 = vadd.f32 %v4546, %v4634
    %4636 = vmatmul.bf16.gmra.mxu0 %v4126
    %v4637 = vpop.f32.mrf.mxu0
    %v4638 = vadd.f32 %v4549, %v4637
    %v4639 = vpop.f32.mrf.mxu0
    %v4640 = vadd.f32 %v4551, %v4639
    %4641 = vmatmul.bf16.gmra.mxu0 %v4128
    %v4642 = vpop.f32.mrf.mxu0
    %v4643 = vadd.f32 %v4554, %v4642
    %v4644 = vpop.f32.mrf.mxu0
    %v4645 = vadd.f32 %v4556, %v4644
    %4646 = vmatmul.bf16.gmra.mxu0 %v4130
    %v4647 = vpop.f32.mrf.mxu0
    %v4648 = vadd.f32 %v4559, %v4647
    %v4649 = vpop.f32.mrf.mxu0
    %v4650 = vadd.f32 %v4561, %v4649
    %4651 = vmatmul.bf16.gmra.mxu0 %v4132
    %v4652 = vpop.f32.mrf.mxu0
    %v4653 = vadd.f32 %v4564, %v4652
    %v4654 = vpop.f32.mrf.mxu0
    %v4655 = vadd.f32 %v4566, %v4654
    %4656 = vmatmul.bf16.gmra.mxu0 %v4134
    %v4657 = vpop.f32.mrf.mxu0
    %v4658 = vadd.f32 %v4569, %v4657
    %v4659 = vpop.f32.mrf.mxu0
    %v4660 = vadd.f32 %v4571, %v4659
    %4661 = vmatmul.bf16.gmra.mxu0 %v4136
    %v4662 = vpop.f32.mrf.mxu0
    %v4663 = vadd.f32 %v4574, %v4662
    %v4664 = vpop.f32.mrf.mxu0
    %v4665 = vadd.f32 %v4576, %v4664
    %4666 = vmatmul.bf16.gmra.mxu0 %v4138
    %v4667 = vpop.f32.mrf.mxu0
    %v4668 = vadd.f32 %v4579, %v4667
    %v4669 = vpop.f32.mrf.mxu0
    %v4670 = vadd.f32 %v4581, %v4669
    %4671 = vmatmul.bf16.gmra.mxu0 %v4140
    %v4672 = vpop.f32.mrf.mxu0
    %v4673 = vadd.f32 %v4584, %v4672
    %v4674 = vpop.f32.mrf.mxu0
    %v4675 = vadd.f32 %v4586, %v4674
    %4676 = vmatmul.bf16.gmra.mxu0 %v4142
    %v4677 = vpop.f32.mrf.mxu0
    %v4678 = vadd.f32 %v4589, %v4677
    %v4679 = vpop.f32.mrf.mxu0
    %v4680 = vadd.f32 %v4591, %v4679
    %4681 = vmatmul.bf16.gmra.mxu0 %v4144
    %v4682 = vpop.f32.mrf.mxu0
    %v4683 = vadd.f32 %v4594, %v4682
    %v4684 = vpop.f32.mrf.mxu0
    %v4685 = vadd.f32 %v4596, %v4684
    %4686 = vmatmul.bf16.gmra.mxu0 %v4146
    %v4687 = vpop.f32.mrf.mxu0
    %v4688 = vadd.f32 %v4599, %v4687
    %v4689 = vpop.f32.mrf.mxu0
    %v4690 = vadd.f32 %v4601, %v4689
    %4691 = vmatmul.bf16.gmra.mxu0 %v4148
    %v4692 = vpop.f32.mrf.mxu0
    %v4693 = vadd.f32 %v4604, %v4692
    %v4694 = vpop.f32.mrf.mxu0
    %v4695 = vadd.f32 %v4606, %v4694
    %4696 = vmatmul.bf16.gmra.mxu0 %v4150
    %v4697 = vpop.f32.mrf.mxu0
    %v4698 = vadd.f32 %v4609, %v4697
    %v4699 = vpop.f32.mrf.mxu0
    %v4700 = vadd.f32 %v4611, %v4699
    %4701 = vmatmul.bf16.gmra.mxu0 %v4152
    %v4702 = vpop.f32.mrf.mxu0
    %v4703 = vadd.f32 %v4614, %v4702
    %v4704 = vpop.f32.mrf.mxu0
    %v4705 = vadd.f32 %v4616, %v4704
    %4706 = vdwg.mxu0
    %v4707 = vmax.f32 %v4450, 0.0
    %v4708 = vmax.f32 %v4628, 0.0
    %v4709 = vmax.f32 %v4452, 0.0
    %v4710 = vmax.f32 %v4630, 0.0
    %v4711 = vmax.f32 %v4455, 0.0
    %v4712 = vmax.f32 %v4633, 0.0
    %v4713 = vmax.f32 %v4457, 0.0
    %v4714 = vmax.f32 %v4635, 0.0
    %v4715 = vmax.f32 %v4460, 0.0
    %v4716 = vmax.f32 %v4638, 0.0
    %v4717 = vmax.f32 %v4462, 0.0
    %v4718 = vmax.f32 %v4640, 0.0
    %v4719 = vmax.f32 %v4465, 0.0
    %v4720 = vmax.f32 %v4643, 0.0
    %v4721 = vmax.f32 %v4467, 0.0
    %v4722 = vmax.f32 %v4645, 0.0
    %v4723 = vmax.f32 %v4470, 0.0
    %v4724 = vmax.f32 %v4648, 0.0
    %v4725 = vmax.f32 %v4472, 0.0
    %v4726 = vmax.f32 %v4650, 0.0
    %v4727 = vmax.f32 %v4475, 0.0
    %v4728 = vmax.f32 %v4653, 0.0
    %v4729 = vmax.f32 %v4477, 0.0
    %v4730 = vmax.f32 %v4655, 0.0
    %v4731 = vmax.f32 %v4480, 0.0
    %v4732 = vmax.f32 %v4658, 0.0
    %v4733 = vmax.f32 %v4482, 0.0
    %v4734 = vmax.f32 %v4660, 0.0
    %v4735 = vmax.f32 %v4485, 0.0
    %v4736 = vmax.f32 %v4663, 0.0
    %v4737 = vmax.f32 %v4487, 0.0
    %v4738 = vmax.f32 %v4665, 0.0
    %v4739 = vmax.f32 %v4490, 0.0
    %v4740 = vmax.f32 %v4668, 0.0
    %v4741 = vmax.f32 %v4492, 0.0
    %v4742 = vmax.f32 %v4670, 0.0
    %v4743 = vmax.f32 %v4495, 0.0
    %v4744 = vmax.f32 %v4673, 0.0
    %v4745 = vmax.f32 %v4497, 0.0
    %v4746 = vmax.f32 %v4675, 0.0
    %v4747 = vmax.f32 %v4500, 0.0
    %v4748 = vmax.f32 %v4678, 0.0
    %v4749 = vmax.f32 %v4502, 0.0
    %v4750 = vmax.f32 %v4680, 0.0
    %v4751 = vmax.f32 %v4505, 0.0
    %v4752 = vmax.f32 %v4683, 0.0
    %v4753 = vmax.f32 %v4507, 0.0
    %v4754 = vmax.f32 %v4685, 0.0
    %v4755 = vmax.f32 %v4510, 0.0
    %v4756 = vmax.f32 %v4688, 0.0
    %v4757 = vmax.f32 %v4512, 0.0
    %v4758 = vmax.f32 %v4690, 0.0
    %v4759 = vmax.f32 %v4515, 0.0
    %v4760 = vmax.f32 %v4693, 0.0
    %v4761 = vmax.f32 %v4517, 0.0
    %v4762 = vmax.f32 %v4695, 0.0
    %v4763 = vmax.f32 %v4520, 0.0
    %v4764 = vmax.f32 %v4698, 0.0
    %v4765 = vmax.f32 %v4522, 0.0
    %v4766 = vmax.f32 %v4700, 0.0
    %v4767 = vmax.f32 %v4525, 0.0
    %v4768 = vmax.f32 %v4703, 0.0
    %v4769 = vmax.f32 %v4527, 0.0
    %v4770 = vmax.f32 %v4705, 0.0
    %v4771 = vpack.c.bf16 %v4709, %v4707
    %v4772 = vpack.c.bf16 %v4710, %v4708
    %v4773 = vpack.c.bf16 %v4713, %v4711
    %v4774 = vpack.c.bf16 %v4714, %v4712
    %v4775 = vpack.c.bf16 %v4717, %v4715
    %v4776 = vpack.c.bf16 %v4718, %v4716
    %v4777 = vpack.c.bf16 %v4721, %v4719
    %v4778 = vpack.c.bf16 %v4722, %v4720
    %v4779 = vpack.c.bf16 %v4725, %v4723
    %v4780 = vpack.c.bf16 %v4726, %v4724
    %v4781 = vpack.c.bf16 %v4729, %v4727
    %v4782 = vpack.c.bf16 %v4730, %v4728
    %v4783 = vpack.c.bf16 %v4733, %v4731
    %v4784 = vpack.c.bf16 %v4734, %v4732
    %v4785 = vpack.c.bf16 %v4737, %v4735
    %v4786 = vpack.c.bf16 %v4738, %v4736
    %v4787 = vpack.c.bf16 %v4741, %v4739
    %v4788 = vpack.c.bf16 %v4742, %v4740
    %v4789 = vpack.c.bf16 %v4745, %v4743
    %v4790 = vpack.c.bf16 %v4746, %v4744
    %v4791 = vpack.c.bf16 %v4749, %v4747
    %v4792 = vpack.c.bf16 %v4750, %v4748
    %v4793 = vpack.c.bf16 %v4753, %v4751
    %v4794 = vpack.c.bf16 %v4754, %v4752
    %v4795 = vpack.c.bf16 %v4757, %v4755
    %v4796 = vpack.c.bf16 %v4758, %v4756
    %v4797 = vpack.c.bf16 %v4761, %v4759
    %v4798 = vpack.c.bf16 %v4762, %v4760
    %v4799 = vpack.c.bf16 %v4765, %v4763
    %v4800 = vpack.c.bf16 %v4766, %v4764
    %v4801 = vpack.c.bf16 %v4769, %v4767
    %v4802 = vpack.c.bf16 %v4770, %v4768
    %v4803 = vld [vmem:[#allocation9] sm:$0xff]
    %v4804 = vld [vmem:[#allocation9 + $0x8] sm:$0xff]
    %v4805 = vld [vmem:[#allocation9 + $0x10] sm:$0xff]
    %v4806 = vld [vmem:[#allocation9 + $0x18] sm:$0xff]
    %v4807 = vld [vmem:[#allocation9 + $0x20] sm:$0xff]
    %v4808 = vld [vmem:[#allocation9 + $0x28] sm:$0xff]
    %v4809 = vld [vmem:[#allocation9 + $0x30] sm:$0xff]
    %v4810 = vld [vmem:[#allocation9 + $0x38] sm:$0xff]
    %v4811 = vld [vmem:[#allocation9 + $0x40] sm:$0xff]
    %v4812 = vld [vmem:[#allocation9 + $0x48] sm:$0xff]
    %v4813 = vld [vmem:[#allocation9 + $0x50] sm:$0xff]
    %v4814 = vld [vmem:[#allocation9 + $0x58] sm:$0xff]
    %v4815 = vld [vmem:[#allocation9 + $0x60] sm:$0xff]
    %v4816 = vld [vmem:[#allocation9 + $0x68] sm:$0xff]
    %v4817 = vld [vmem:[#allocation9 + $0x70] sm:$0xff]
    %v4818 = vld [vmem:[#allocation9 + $0x78] sm:$0xff]
    %v4819 = vld [vmem:[#allocation9 + $0x80] sm:$0xff]
    %v4820 = vld [vmem:[#allocation9 + $0x88] sm:$0xff]
    %v4821 = vld [vmem:[#allocation9 + $0x90] sm:$0xff]
    %v4822 = vld [vmem:[#allocation9 + $0x98] sm:$0xff]
    %v4823 = vld [vmem:[#allocation9 + $0xa0] sm:$0xff]
    %v4824 = vld [vmem:[#allocation9 + $0xa8] sm:$0xff]
    %v4825 = vld [vmem:[#allocation9 + $0xb0] sm:$0xff]
    %v4826 = vld [vmem:[#allocation9 + $0xb8] sm:$0xff]
    %v4827 = vld [vmem:[#allocation9 + $0xc0] sm:$0xff]
    %v4828 = vld [vmem:[#allocation9 + $0xc8] sm:$0xff]
    %v4829 = vld [vmem:[#allocation9 + $0xd0] sm:$0xff]
    %v4830 = vld [vmem:[#allocation9 + $0xd8] sm:$0xff]
    %v4831 = vld [vmem:[#allocation9 + $0xe0] sm:$0xff]
    %v4832 = vld [vmem:[#allocation9 + $0xe8] sm:$0xff]
    %v4833 = vld [vmem:[#allocation9 + $0xf0] sm:$0xff]
    %v4834 = vld [vmem:[#allocation9 + $0xf8] sm:$0xff]
    %v4835 = vld [vmem:[%s16] sm:$0x3]
    %v4837 = vperm.slane %v4835, 0
    %v4838 = vperm.slane %v4835, 1
    %v4873 = vunpack.c.l.b16 %v4803
    %v4874 = vunpack.c.h.b16 %v4803
    %v4875 = vunpack.c.l.b16 %v4804
    %v4876 = vunpack.c.h.b16 %v4804
    %v4877 = vunpack.c.l.b16 %v4805
    %v4878 = vunpack.c.h.b16 %v4805
    %v4879 = vunpack.c.l.b16 %v4806
    %v4880 = vunpack.c.h.b16 %v4806
    %v4881 = vunpack.c.l.b16 %v4807
    %v4882 = vunpack.c.h.b16 %v4807
    %v4883 = vunpack.c.l.b16 %v4808
    %v4884 = vunpack.c.h.b16 %v4808
    %v4885 = vunpack.c.l.b16 %v4809
    %v4886 = vunpack.c.h.b16 %v4809
    %v4887 = vunpack.c.l.b16 %v4810
    %v4888 = vunpack.c.h.b16 %v4810
    %v4889 = vunpack.c.l.b16 %v4811
    %v4890 = vunpack.c.h.b16 %v4811
    %v4891 = vunpack.c.l.b16 %v4812
    %v4892 = vunpack.c.h.b16 %v4812
    %v4893 = vunpack.c.l.b16 %v4813
    %v4894 = vunpack.c.h.b16 %v4813
    %v4895 = vunpack.c.l.b16 %v4814
    %v4896 = vunpack.c.h.b16 %v4814
    %v4897 = vunpack.c.l.b16 %v4815
    %v4898 = vunpack.c.h.b16 %v4815
    %v4899 = vunpack.c.l.b16 %v4816
    %v4900 = vunpack.c.h.b16 %v4816
    %v4901 = vunpack.c.l.b16 %v4817
    %v4902 = vunpack.c.h.b16 %v4817
    %v4903 = vunpack.c.l.b16 %v4818
    %v4904 = vunpack.c.h.b16 %v4818
    %v4905 = vunpack.c.l.b16 %v4819
    %v4906 = vunpack.c.h.b16 %v4819
    %v4907 = vunpack.c.l.b16 %v4820
    %v4908 = vunpack.c.h.b16 %v4820
    %v4909 = vunpack.c.l.b16 %v4821
    %v4910 = vunpack.c.h.b16 %v4821
    %v4911 = vunpack.c.l.b16 %v4822
    %v4912 = vunpack.c.h.b16 %v4822
    %v4913 = vunpack.c.l.b16 %v4823
    %v4914 = vunpack.c.h.b16 %v4823
    %v4915 = vunpack.c.l.b16 %v4824
    %v4916 = vunpack.c.h.b16 %v4824
    %v4917 = vunpack.c.l.b16 %v4825
    %v4918 = vunpack.c.h.b16 %v4825
    %v4919 = vunpack.c.l.b16 %v4826
    %v4920 = vunpack.c.h.b16 %v4826
    %v4921 = vunpack.c.l.b16 %v4827
    %v4922 = vunpack.c.h.b16 %v4827
    %v4923 = vunpack.c.l.b16 %v4828
    %v4924 = vunpack.c.h.b16 %v4828
    %v4925 = vunpack.c.l.b16 %v4829
    %v4926 = vunpack.c.h.b16 %v4829
    %v4927 = vunpack.c.l.b16 %v4830
    %v4928 = vunpack.c.h.b16 %v4830
    %v4929 = vunpack.c.l.b16 %v4831
    %v4930 = vunpack.c.h.b16 %v4831
    %v4931 = vunpack.c.l.b16 %v4832
    %v4932 = vunpack.c.h.b16 %v4832
    %v4933 = vunpack.c.l.b16 %v4833
    %v4934 = vunpack.c.h.b16 %v4833
    %v4935 = vunpack.c.l.b16 %v4834
    %v4936 = vunpack.c.h.b16 %v4834
    %v4937 = vpack.c.b16 %v4875, %v4873
    %v4938 = vpack.c.b16 %v4876, %v4874
    %v4939 = vpack.c.b16 %v4879, %v4877
    %v4940 = vpack.c.b16 %v4880, %v4878
    %v4941 = vpack.c.b16 %v4883, %v4881
    %v4942 = vpack.c.b16 %v4884, %v4882
    %v4943 = vpack.c.b16 %v4887, %v4885
    %v4944 = vpack.c.b16 %v4888, %v4886
    %v4945 = vpack.c.b16 %v4891, %v4889
    %v4946 = vpack.c.b16 %v4892, %v4890
    %v4947 = vpack.c.b16 %v4895, %v4893
    %v4948 = vpack.c.b16 %v4896, %v4894
    %v4949 = vpack.c.b16 %v4899, %v4897
    %v4950 = vpack.c.b16 %v4900, %v4898
    %v4951 = vpack.c.b16 %v4903, %v4901
    %v4952 = vpack.c.b16 %v4904, %v4902
    %v4953 = vpack.c.b16 %v4907, %v4905
    %v4954 = vpack.c.b16 %v4908, %v4906
    %v4955 = vpack.c.b16 %v4911, %v4909
    %v4956 = vpack.c.b16 %v4912, %v4910
    %v4957 = vpack.c.b16 %v4915, %v4913
    %v4958 = vpack.c.b16 %v4916, %v4914
    %v4959 = vpack.c.b16 %v4919, %v4917
    %v4960 = vpack.c.b16 %v4920, %v4918
    %v4961 = vpack.c.b16 %v4923, %v4921
    %v4962 = vpack.c.b16 %v4924, %v4922
    %v4963 = vpack.c.b16 %v4927, %v4925
    %v4964 = vpack.c.b16 %v4928, %v4926
    %v4965 = vpack.c.b16 %v4931, %v4929
    %v4966 = vpack.c.b16 %v4932, %v4930
    %v4967 = vpack.c.b16 %v4935, %v4933
    %v4968 = vpack.c.b16 %v4936, %v4934
    %5001 = vmatpush.bf16.msra.mxu0 %v4951
    %5002 = vmatpush.bf16.msra.mxu0 %v4949
    %5003 = vmatpush.bf16.msra.mxu0 %v4947
    %5004 = vmatpush.bf16.msra.mxu0 %v4945
    %5005 = vmatpush.bf16.msra.mxu0 %v4943
    %5006 = vmatpush.bf16.msra.mxu0 %v4941
    %5007 = vmatpush.bf16.msra.mxu0 %v4939
    %5008 = vmatpush.bf16.msra.mxu0 %v4937
    %5009 = vmatmul.bf16.gmra.mxu0 %v4771
    %v5010 = vpop.f32.mrf.mxu0
    %v5011 = vadd.f32 %v4837, %v5010
    %v5012 = vpop.f32.mrf.mxu0
    %v5013 = vadd.f32 %v4837, %v5012
    %5014 = vmatmul.bf16.gmra.mxu0 %v4773
    %v5015 = vpop.f32.mrf.mxu0
    %v5016 = vadd.f32 %v4837, %v5015
    %v5017 = vpop.f32.mrf.mxu0
    %v5018 = vadd.f32 %v4837, %v5017
    %5019 = vmatmul.bf16.gmra.mxu0 %v4775
    %v5020 = vpop.f32.mrf.mxu0
    %v5021 = vadd.f32 %v4837, %v5020
    %v5022 = vpop.f32.mrf.mxu0
    %v5023 = vadd.f32 %v4837, %v5022
    %5024 = vmatmul.bf16.gmra.mxu0 %v4777
    %v5025 = vpop.f32.mrf.mxu0
    %v5026 = vadd.f32 %v4837, %v5025
    %v5027 = vpop.f32.mrf.mxu0
    %v5028 = vadd.f32 %v4837, %v5027
    %5029 = vmatmul.bf16.gmra.mxu0 %v4779
    %v5030 = vpop.f32.mrf.mxu0
    %v5031 = vadd.f32 %v4837, %v5030
    %v5032 = vpop.f32.mrf.mxu0
    %v5033 = vadd.f32 %v4837, %v5032
    %5034 = vmatmul.bf16.gmra.mxu0 %v4781
    %v5035 = vpop.f32.mrf.mxu0
    %v5036 = vadd.f32 %v4837, %v5035
    %v5037 = vpop.f32.mrf.mxu0
    %v5038 = vadd.f32 %v4837, %v5037
    %5039 = vmatmul.bf16.gmra.mxu0 %v4783
    %v5040 = vpop.f32.mrf.mxu0
    %v5041 = vadd.f32 %v4837, %v5040
    %v5042 = vpop.f32.mrf.mxu0
    %v5043 = vadd.f32 %v4837, %v5042
    %5044 = vmatmul.bf16.gmra.mxu0 %v4785
    %v5045 = vpop.f32.mrf.mxu0
    %v5046 = vadd.f32 %v4837, %v5045
    %v5047 = vpop.f32.mrf.mxu0
    %v5048 = vadd.f32 %v4837, %v5047
    %5049 = vmatmul.bf16.gmra.mxu0 %v4787
    %v5050 = vpop.f32.mrf.mxu0
    %v5051 = vadd.f32 %v4837, %v5050
    %v5052 = vpop.f32.mrf.mxu0
    %v5053 = vadd.f32 %v4837, %v5052
    %5054 = vmatmul.bf16.gmra.mxu0 %v4789
    %v5055 = vpop.f32.mrf.mxu0
    %v5056 = vadd.f32 %v4837, %v5055
    %v5057 = vpop.f32.mrf.mxu0
    %v5058 = vadd.f32 %v4837, %v5057
    %5059 = vmatmul.bf16.gmra.mxu0 %v4791
    %v5060 = vpop.f32.mrf.mxu0
    %v5061 = vadd.f32 %v4837, %v5060
    %v5062 = vpop.f32.mrf.mxu0
    %v5063 = vadd.f32 %v4837, %v5062
    %5064 = vmatmul.bf16.gmra.mxu0 %v4793
    %v5065 = vpop.f32.mrf.mxu0
    %v5066 = vadd.f32 %v4837, %v5065
    %v5067 = vpop.f32.mrf.mxu0
    %v5068 = vadd.f32 %v4837, %v5067
    %5069 = vmatmul.bf16.gmra.mxu0 %v4795
    %v5070 = vpop.f32.mrf.mxu0
    %v5071 = vadd.f32 %v4837, %v5070
    %v5072 = vpop.f32.mrf.mxu0
    %v5073 = vadd.f32 %v4837, %v5072
    %5074 = vmatmul.bf16.gmra.mxu0 %v4797
    %v5075 = vpop.f32.mrf.mxu0
    %v5076 = vadd.f32 %v4837, %v5075
    %v5077 = vpop.f32.mrf.mxu0
    %v5078 = vadd.f32 %v4837, %v5077
    %5079 = vmatmul.bf16.gmra.mxu0 %v4799
    %v5080 = vpop.f32.mrf.mxu0
    %v5081 = vadd.f32 %v4837, %v5080
    %v5082 = vpop.f32.mrf.mxu0
    %v5083 = vadd.f32 %v4837, %v5082
    %5084 = vmatmul.bf16.gmra.mxu0 %v4801
    %v5085 = vpop.f32.mrf.mxu0
    %v5086 = vadd.f32 %v4837, %v5085
    %v5087 = vpop.f32.mrf.mxu0
    %v5088 = vadd.f32 %v4837, %v5087
    %5089 = vdwg.mxu0
    %5090 = vmatpush.bf16.msra.mxu0 %v4967
    %5091 = vmatpush.bf16.msra.mxu0 %v4965
    %5092 = vmatpush.bf16.msra.mxu0 %v4963
    %5093 = vmatpush.bf16.msra.mxu0 %v4961
    %5094 = vmatpush.bf16.msra.mxu0 %v4959
    %5095 = vmatpush.bf16.msra.mxu0 %v4957
    %5096 = vmatpush.bf16.msra.mxu0 %v4955
    %5097 = vmatpush.bf16.msra.mxu0 %v4953
    %5098 = vmatmul.bf16.gmra.mxu0 %v4772
    %v5099 = vpop.f32.mrf.mxu0
    %v5100 = vadd.f32 %v5011, %v5099
    %v5101 = vpop.f32.mrf.mxu0
    %v5102 = vadd.f32 %v5013, %v5101
    %5103 = vmatmul.bf16.gmra.mxu0 %v4774
    %v5104 = vpop.f32.mrf.mxu0
    %v5105 = vadd.f32 %v5016, %v5104
    %v5106 = vpop.f32.mrf.mxu0
    %v5107 = vadd.f32 %v5018, %v5106
    %5108 = vmatmul.bf16.gmra.mxu0 %v4776
    %v5109 = vpop.f32.mrf.mxu0
    %v5110 = vadd.f32 %v5021, %v5109
    %v5111 = vpop.f32.mrf.mxu0
    %v5112 = vadd.f32 %v5023, %v5111
    %5113 = vmatmul.bf16.gmra.mxu0 %v4778
    %v5114 = vpop.f32.mrf.mxu0
    %v5115 = vadd.f32 %v5026, %v5114
    %v5116 = vpop.f32.mrf.mxu0
    %v5117 = vadd.f32 %v5028, %v5116
    %5118 = vmatmul.bf16.gmra.mxu0 %v4780
    %v5119 = vpop.f32.mrf.mxu0
    %v5120 = vadd.f32 %v5031, %v5119
    %v5121 = vpop.f32.mrf.mxu0
    %v5122 = vadd.f32 %v5033, %v5121
    %5123 = vmatmul.bf16.gmra.mxu0 %v4782
    %v5124 = vpop.f32.mrf.mxu0
    %v5125 = vadd.f32 %v5036, %v5124
    %v5126 = vpop.f32.mrf.mxu0
    %v5127 = vadd.f32 %v5038, %v5126
    %5128 = vmatmul.bf16.gmra.mxu0 %v4784
    %v5129 = vpop.f32.mrf.mxu0
    %v5130 = vadd.f32 %v5041, %v5129
    %v5131 = vpop.f32.mrf.mxu0
    %v5132 = vadd.f32 %v5043, %v5131
    %5133 = vmatmul.bf16.gmra.mxu0 %v4786
    %v5134 = vpop.f32.mrf.mxu0
    %v5135 = vadd.f32 %v5046, %v5134
    %v5136 = vpop.f32.mrf.mxu0
    %v5137 = vadd.f32 %v5048, %v5136
    %5138 = vmatmul.bf16.gmra.mxu0 %v4788
    %v5139 = vpop.f32.mrf.mxu0
    %v5140 = vadd.f32 %v5051, %v5139
    %v5141 = vpop.f32.mrf.mxu0
    %v5142 = vadd.f32 %v5053, %v5141
    %5143 = vmatmul.bf16.gmra.mxu0 %v4790
    %v5144 = vpop.f32.mrf.mxu0
    %v5145 = vadd.f32 %v5056, %v5144
    %v5146 = vpop.f32.mrf.mxu0
    %v5147 = vadd.f32 %v5058, %v5146
    %5148 = vmatmul.bf16.gmra.mxu0 %v4792
    %v5149 = vpop.f32.mrf.mxu0
    %v5150 = vadd.f32 %v5061, %v5149
    %v5151 = vpop.f32.mrf.mxu0
    %v5152 = vadd.f32 %v5063, %v5151
    %5153 = vmatmul.bf16.gmra.mxu0 %v4794
    %v5154 = vpop.f32.mrf.mxu0
    %v5155 = vadd.f32 %v5066, %v5154
    %v5156 = vpop.f32.mrf.mxu0
    %v5157 = vadd.f32 %v5068, %v5156
    %5158 = vmatmul.bf16.gmra.mxu0 %v4796
    %v5159 = vpop.f32.mrf.mxu0
    %v5160 = vadd.f32 %v5071, %v5159
    %v5161 = vpop.f32.mrf.mxu0
    %v5162 = vadd.f32 %v5073, %v5161
    %5163 = vmatmul.bf16.gmra.mxu0 %v4798
    %v5164 = vpop.f32.mrf.mxu0
    %v5165 = vadd.f32 %v5076, %v5164
    %v5166 = vpop.f32.mrf.mxu0
    %v5167 = vadd.f32 %v5078, %v5166
    %5168 = vmatmul.bf16.gmra.mxu0 %v4800
    %v5169 = vpop.f32.mrf.mxu0
    %v5170 = vadd.f32 %v5081, %v5169
    %v5171 = vpop.f32.mrf.mxu0
    %v5172 = vadd.f32 %v5083, %v5171
    %5173 = vmatmul.bf16.gmra.mxu0 %v4802
    %v5174 = vpop.f32.mrf.mxu0
    %v5175 = vadd.f32 %v5086, %v5174
    %v5176 = vpop.f32.mrf.mxu0
    %v5177 = vadd.f32 %v5088, %v5176
    %5178 = vdwg.mxu0
    %5179 = vmatpush.bf16.msra.mxu0 %v4952
    %5180 = vmatpush.bf16.msra.mxu0 %v4950
    %5181 = vmatpush.bf16.msra.mxu0 %v4948
    %5182 = vmatpush.bf16.msra.mxu0 %v4946
    %5183 = vmatpush.bf16.msra.mxu0 %v4944
    %5184 = vmatpush.bf16.msra.mxu0 %v4942
    %5185 = vmatpush.bf16.msra.mxu0 %v4940
    %5186 = vmatpush.bf16.msra.mxu0 %v4938
    %5187 = vmatmul.bf16.gmra.mxu0 %v4771
    %v5188 = vpop.f32.mrf.mxu0
    %v5189 = vadd.f32 %v4838, %v5188
    %v5190 = vpop.f32.mrf.mxu0
    %v5191 = vadd.f32 %v4838, %v5190
    %5192 = vmatmul.bf16.gmra.mxu0 %v4773
    %v5193 = vpop.f32.mrf.mxu0
    %v5194 = vadd.f32 %v4838, %v5193
    %v5195 = vpop.f32.mrf.mxu0
    %v5196 = vadd.f32 %v4838, %v5195
    %5197 = vmatmul.bf16.gmra.mxu0 %v4775
    %v5198 = vpop.f32.mrf.mxu0
    %v5199 = vadd.f32 %v4838, %v5198
    %v5200 = vpop.f32.mrf.mxu0
    %v5201 = vadd.f32 %v4838, %v5200
    %5202 = vmatmul.bf16.gmra.mxu0 %v4777
    %v5203 = vpop.f32.mrf.mxu0
    %v5204 = vadd.f32 %v4838, %v5203
    %v5205 = vpop.f32.mrf.mxu0
    %v5206 = vadd.f32 %v4838, %v5205
    %5207 = vmatmul.bf16.gmra.mxu0 %v4779
    %v5208 = vpop.f32.mrf.mxu0
    %v5209 = vadd.f32 %v4838, %v5208
    %v5210 = vpop.f32.mrf.mxu0
    %v5211 = vadd.f32 %v4838, %v5210
    %5212 = vmatmul.bf16.gmra.mxu0 %v4781
    %v5213 = vpop.f32.mrf.mxu0
    %v5214 = vadd.f32 %v4838, %v5213
    %v5215 = vpop.f32.mrf.mxu0
    %v5216 = vadd.f32 %v4838, %v5215
    %5217 = vmatmul.bf16.gmra.mxu0 %v4783
    %v5218 = vpop.f32.mrf.mxu0
    %v5219 = vadd.f32 %v4838, %v5218
    %v5220 = vpop.f32.mrf.mxu0
    %v5221 = vadd.f32 %v4838, %v5220
    %5222 = vmatmul.bf16.gmra.mxu0 %v4785
    %v5223 = vpop.f32.mrf.mxu0
    %v5224 = vadd.f32 %v4838, %v5223
    %v5225 = vpop.f32.mrf.mxu0
    %v5226 = vadd.f32 %v4838, %v5225
    %5227 = vmatmul.bf16.gmra.mxu0 %v4787
    %v5228 = vpop.f32.mrf.mxu0
    %v5229 = vadd.f32 %v4838, %v5228
    %v5230 = vpop.f32.mrf.mxu0
    %v5231 = vadd.f32 %v4838, %v5230
    %5232 = vmatmul.bf16.gmra.mxu0 %v4789
    %v5233 = vpop.f32.mrf.mxu0
    %v5234 = vadd.f32 %v4838, %v5233
    %v5235 = vpop.f32.mrf.mxu0
    %v5236 = vadd.f32 %v4838, %v5235
    %5237 = vmatmul.bf16.gmra.mxu0 %v4791
    %v5238 = vpop.f32.mrf.mxu0
    %v5239 = vadd.f32 %v4838, %v5238
    %v5240 = vpop.f32.mrf.mxu0
    %v5241 = vadd.f32 %v4838, %v5240
    %5242 = vmatmul.bf16.gmra.mxu0 %v4793
    %v5243 = vpop.f32.mrf.mxu0
    %v5244 = vadd.f32 %v4838, %v5243
    %v5245 = vpop.f32.mrf.mxu0
    %v5246 = vadd.f32 %v4838, %v5245
    %5247 = vmatmul.bf16.gmra.mxu0 %v4795
    %v5248 = vpop.f32.mrf.mxu0
    %v5249 = vadd.f32 %v4838, %v5248
    %v5250 = vpop.f32.mrf.mxu0
    %v5251 = vadd.f32 %v4838, %v5250
    %5252 = vmatmul.bf16.gmra.mxu0 %v4797
    %v5253 = vpop.f32.mrf.mxu0
    %v5254 = vadd.f32 %v4838, %v5253
    %v5255 = vpop.f32.mrf.mxu0
    %v5256 = vadd.f32 %v4838, %v5255
    %5257 = vmatmul.bf16.gmra.mxu0 %v4799
    %v5258 = vpop.f32.mrf.mxu0
    %v5259 = vadd.f32 %v4838, %v5258
    %v5260 = vpop.f32.mrf.mxu0
    %v5261 = vadd.f32 %v4838, %v5260
    %5262 = vmatmul.bf16.gmra.mxu0 %v4801
    %v5263 = vpop.f32.mrf.mxu0
    %v5264 = vadd.f32 %v4838, %v5263
    %v5265 = vpop.f32.mrf.mxu0
    %v5266 = vadd.f32 %v4838, %v5265
    %5267 = vdwg.mxu0
    %5268 = vmatpush.bf16.msra.mxu0 %v4968
    %5269 = vmatpush.bf16.msra.mxu0 %v4966
    %5270 = vmatpush.bf16.msra.mxu0 %v4964
    %5271 = vmatpush.bf16.msra.mxu0 %v4962
    %5272 = vmatpush.bf16.msra.mxu0 %v4960
    %5273 = vmatpush.bf16.msra.mxu0 %v4958
    %5274 = vmatpush.bf16.msra.mxu0 %v4956
    %5275 = vmatpush.bf16.msra.mxu0 %v4954
    %5276 = vmatmul.bf16.gmra.mxu0 %v4772
    %v5277 = vpop.f32.mrf.mxu0
    %v5278 = vadd.f32 %v5189, %v5277
    %v5279 = vpop.f32.mrf.mxu0
    %v5280 = vadd.f32 %v5191, %v5279
    %5281 = vmatmul.bf16.gmra.mxu0 %v4774
    %v5282 = vpop.f32.mrf.mxu0
    %v5283 = vadd.f32 %v5194, %v5282
    %v5284 = vpop.f32.mrf.mxu0
    %v5285 = vadd.f32 %v5196, %v5284
    %5286 = vmatmul.bf16.gmra.mxu0 %v4776
    %v5287 = vpop.f32.mrf.mxu0
    %v5288 = vadd.f32 %v5199, %v5287
    %v5289 = vpop.f32.mrf.mxu0
    %v5290 = vadd.f32 %v5201, %v5289
    %5291 = vmatmul.bf16.gmra.mxu0 %v4778
    %v5292 = vpop.f32.mrf.mxu0
    %v5293 = vadd.f32 %v5204, %v5292
    %v5294 = vpop.f32.mrf.mxu0
    %v5295 = vadd.f32 %v5206, %v5294
    %5296 = vmatmul.bf16.gmra.mxu0 %v4780
    %v5297 = vpop.f32.mrf.mxu0
    %v5298 = vadd.f32 %v5209, %v5297
    %v5299 = vpop.f32.mrf.mxu0
    %v5300 = vadd.f32 %v5211, %v5299
    %5301 = vmatmul.bf16.gmra.mxu0 %v4782
    %v5302 = vpop.f32.mrf.mxu0
    %v5303 = vadd.f32 %v5214, %v5302
    %v5304 = vpop.f32.mrf.mxu0
    %v5305 = vadd.f32 %v5216, %v5304
    %5306 = vmatmul.bf16.gmra.mxu0 %v4784
    %v5307 = vpop.f32.mrf.mxu0
    %v5308 = vadd.f32 %v5219, %v5307
    %v5309 = vpop.f32.mrf.mxu0
    %v5310 = vadd.f32 %v5221, %v5309
    %5311 = vmatmul.bf16.gmra.mxu0 %v4786
    %v5312 = vpop.f32.mrf.mxu0
    %v5313 = vadd.f32 %v5224, %v5312
    %v5314 = vpop.f32.mrf.mxu0
    %v5315 = vadd.f32 %v5226, %v5314
    %5316 = vmatmul.bf16.gmra.mxu0 %v4788
    %v5317 = vpop.f32.mrf.mxu0
    %v5318 = vadd.f32 %v5229, %v5317
    %v5319 = vpop.f32.mrf.mxu0
    %v5320 = vadd.f32 %v5231, %v5319
    %5321 = vmatmul.bf16.gmra.mxu0 %v4790
    %v5322 = vpop.f32.mrf.mxu0
    %v5323 = vadd.f32 %v5234, %v5322
    %v5324 = vpop.f32.mrf.mxu0
    %v5325 = vadd.f32 %v5236, %v5324
    %5326 = vmatmul.bf16.gmra.mxu0 %v4792
    %v5327 = vpop.f32.mrf.mxu0
    %v5328 = vadd.f32 %v5239, %v5327
    %v5329 = vpop.f32.mrf.mxu0
    %v5330 = vadd.f32 %v5241, %v5329
    %5331 = vmatmul.bf16.gmra.mxu0 %v4794
    %v5332 = vpop.f32.mrf.mxu0
    %v5333 = vadd.f32 %v5244, %v5332
    %v5334 = vpop.f32.mrf.mxu0
    %v5335 = vadd.f32 %v5246, %v5334
    %5336 = vmatmul.bf16.gmra.mxu0 %v4796
    %v5337 = vpop.f32.mrf.mxu0
    %v5338 = vadd.f32 %v5249, %v5337
    %v5339 = vpop.f32.mrf.mxu0
    %v5340 = vadd.f32 %v5251, %v5339
    %5341 = vmatmul.bf16.gmra.mxu0 %v4798
    %v5342 = vpop.f32.mrf.mxu0
    %v5343 = vadd.f32 %v5254, %v5342
    %v5344 = vpop.f32.mrf.mxu0
    %v5345 = vadd.f32 %v5256, %v5344
    %5346 = vmatmul.bf16.gmra.mxu0 %v4800
    %v5347 = vpop.f32.mrf.mxu0
    %v5348 = vadd.f32 %v5259, %v5347
    %v5349 = vpop.f32.mrf.mxu0
    %v5350 = vadd.f32 %v5261, %v5349
    %5351 = vmatmul.bf16.gmra.mxu0 %v4802
    %v5352 = vpop.f32.mrf.mxu0
    %v5353 = vadd.f32 %v5264, %v5352
    %v5354 = vpop.f32.mrf.mxu0
    %v5355 = vadd.f32 %v5266, %v5354
    %5356 = vdwg.mxu0
    %v5357 = vmax.f32 %v5100, 0.0
    %v5358 = vmax.f32 %v5278, 0.0
    %v5359 = vmax.f32 %v5102, 0.0
    %v5360 = vmax.f32 %v5280, 0.0
    %v5361 = vmax.f32 %v5105, 0.0
    %v5362 = vmax.f32 %v5283, 0.0
    %v5363 = vmax.f32 %v5107, 0.0
    %v5364 = vmax.f32 %v5285, 0.0
    %v5365 = vmax.f32 %v5110, 0.0
    %v5366 = vmax.f32 %v5288, 0.0
    %v5367 = vmax.f32 %v5112, 0.0
    %v5368 = vmax.f32 %v5290, 0.0
    %v5369 = vmax.f32 %v5115, 0.0
    %v5370 = vmax.f32 %v5293, 0.0
    %v5371 = vmax.f32 %v5117, 0.0
    %v5372 = vmax.f32 %v5295, 0.0
    %v5373 = vmax.f32 %v5120, 0.0
    %v5374 = vmax.f32 %v5298, 0.0
    %v5375 = vmax.f32 %v5122, 0.0
    %v5376 = vmax.f32 %v5300, 0.0
    %v5377 = vmax.f32 %v5125, 0.0
    %v5378 = vmax.f32 %v5303, 0.0
    %v5379 = vmax.f32 %v5127, 0.0
    %v5380 = vmax.f32 %v5305, 0.0
    %v5381 = vmax.f32 %v5130, 0.0
    %v5382 = vmax.f32 %v5308, 0.0
    %v5383 = vmax.f32 %v5132, 0.0
    %v5384 = vmax.f32 %v5310, 0.0
    %v5385 = vmax.f32 %v5135, 0.0
    %v5386 = vmax.f32 %v5313, 0.0
    %v5387 = vmax.f32 %v5137, 0.0
    %v5388 = vmax.f32 %v5315, 0.0
    %v5389 = vmax.f32 %v5140, 0.0
    %v5390 = vmax.f32 %v5318, 0.0
    %v5391 = vmax.f32 %v5142, 0.0
    %v5392 = vmax.f32 %v5320, 0.0
    %v5393 = vmax.f32 %v5145, 0.0
    %v5394 = vmax.f32 %v5323, 0.0
    %v5395 = vmax.f32 %v5147, 0.0
    %v5396 = vmax.f32 %v5325, 0.0
    %v5397 = vmax.f32 %v5150, 0.0
    %v5398 = vmax.f32 %v5328, 0.0
    %v5399 = vmax.f32 %v5152, 0.0
    %v5400 = vmax.f32 %v5330, 0.0
    %v5401 = vmax.f32 %v5155, 0.0
    %v5402 = vmax.f32 %v5333, 0.0
    %v5403 = vmax.f32 %v5157, 0.0
    %v5404 = vmax.f32 %v5335, 0.0
    %v5405 = vmax.f32 %v5160, 0.0
    %v5406 = vmax.f32 %v5338, 0.0
    %v5407 = vmax.f32 %v5162, 0.0
    %v5408 = vmax.f32 %v5340, 0.0
    %v5409 = vmax.f32 %v5165, 0.0
    %v5410 = vmax.f32 %v5343, 0.0
    %v5411 = vmax.f32 %v5167, 0.0
    %v5412 = vmax.f32 %v5345, 0.0
    %v5413 = vmax.f32 %v5170, 0.0
    %v5414 = vmax.f32 %v5348, 0.0
    %v5415 = vmax.f32 %v5172, 0.0
    %v5416 = vmax.f32 %v5350, 0.0
    %v5417 = vmax.f32 %v5175, 0.0
    %v5418 = vmax.f32 %v5353, 0.0
    %v5419 = vmax.f32 %v5177, 0.0
    %v5420 = vmax.f32 %v5355, 0.0
    %v5421 = vpack.c.bf16 %v5359, %v5357
    %v5422 = vpack.c.bf16 %v5360, %v5358
    %v5423 = vpack.c.bf16 %v5363, %v5361
    %v5424 = vpack.c.bf16 %v5364, %v5362
    %v5425 = vpack.c.bf16 %v5367, %v5365
    %v5426 = vpack.c.bf16 %v5368, %v5366
    %v5427 = vpack.c.bf16 %v5371, %v5369
    %v5428 = vpack.c.bf16 %v5372, %v5370
    %v5429 = vpack.c.bf16 %v5375, %v5373
    %v5430 = vpack.c.bf16 %v5376, %v5374
    %v5431 = vpack.c.bf16 %v5379, %v5377
    %v5432 = vpack.c.bf16 %v5380, %v5378
    %v5433 = vpack.c.bf16 %v5383, %v5381
    %v5434 = vpack.c.bf16 %v5384, %v5382
    %v5435 = vpack.c.bf16 %v5387, %v5385
    %v5436 = vpack.c.bf16 %v5388, %v5386
    %v5437 = vpack.c.bf16 %v5391, %v5389
    %v5438 = vpack.c.bf16 %v5392, %v5390
    %v5439 = vpack.c.bf16 %v5395, %v5393
    %v5440 = vpack.c.bf16 %v5396, %v5394
    %v5441 = vpack.c.bf16 %v5399, %v5397
    %v5442 = vpack.c.bf16 %v5400, %v5398
    %v5443 = vpack.c.bf16 %v5403, %v5401
    %v5444 = vpack.c.bf16 %v5404, %v5402
    %v5445 = vpack.c.bf16 %v5407, %v5405
    %v5446 = vpack.c.bf16 %v5408, %v5406
    %v5447 = vpack.c.bf16 %v5411, %v5409
    %v5448 = vpack.c.bf16 %v5412, %v5410
    %v5449 = vpack.c.bf16 %v5415, %v5413
    %v5450 = vpack.c.bf16 %v5416, %v5414
    %v5451 = vpack.c.bf16 %v5419, %v5417
    %v5452 = vpack.c.bf16 %v5420, %v5418
    %v5453 = vld [vmem:[%s17] sm:$0xff]
    %v5454 = vld [vmem:[%s17 + $0x8] sm:$0xf]
    %v5455 = vld [vmem:[%s17 + $0xc] sm:$0xff]
    %v5456 = vld [vmem:[%s17 + $0x14] sm:$0xf]
    %v5457 = vld [vmem:[%s17 + $0x18] sm:$0xff]
    %v5458 = vld [vmem:[%s17 + $0x20] sm:$0xf]
    %v5459 = vld [vmem:[%s17 + $0x24] sm:$0xff]
    %v5460 = vld [vmem:[%s17 + $0x2c] sm:$0xf]
    %v5461 = vld [vmem:[%s17 + $0x30] sm:$0xff]
    %v5462 = vld [vmem:[%s17 + $0x38] sm:$0xf]
    %v5463 = vld [vmem:[%s17 + $0x3c] sm:$0xff]
    %v5464 = vld [vmem:[%s17 + $0x44] sm:$0xf]
    %v5465 = vld [vmem:[%s17 + $0x48] sm:$0xff]
    %v5466 = vld [vmem:[%s17 + $0x50] sm:$0xf]
    %v5467 = vld [vmem:[%s17 + $0x54] sm:$0xff]
    %v5468 = vld [vmem:[%s17 + $0x5c] sm:$0xf]
    %v5469 = vld [vmem:[%s17 + $0x60] sm:$0xff]
    %v5470 = vld [vmem:[%s17 + $0x68] sm:$0xf]
    %v5471 = vld [vmem:[%s17 + $0x6c] sm:$0xff]
    %v5472 = vld [vmem:[%s17 + $0x74] sm:$0xf]
    %v5473 = vld [vmem:[%s17 + $0x78] sm:$0xff]
    %v5474 = vld [vmem:[%s17 + $0x80] sm:$0xf]
    %v5475 = vld [vmem:[%s17 + $0x84] sm:$0xff]
    %v5476 = vld [vmem:[%s17 + $0x8c] sm:$0xf]
    %v5477 = vld [vmem:[%s17 + $0x90] sm:$0xff]
    %v5478 = vld [vmem:[%s17 + $0x98] sm:$0xf]
    %v5479 = vld [vmem:[%s17 + $0x9c] sm:$0xff]
    %v5480 = vld [vmem:[%s17 + $0xa4] sm:$0xf]
    %v5481 = vld [vmem:[%s17 + $0xa8] sm:$0xff]
    %v5482 = vld [vmem:[%s17 + $0xb0] sm:$0xf]
    %v5483 = vld [vmem:[%s17 + $0xb4] sm:$0xff]
    %v5484 = vld [vmem:[%s17 + $0xbc] sm:$0xf]
    %v5485 = vld [vmem:[%s17 + $0xc0] sm:$0xff]
    %v5486 = vld [vmem:[%s17 + $0xc8] sm:$0xf]
    %v5487 = vld [vmem:[%s17 + $0xcc] sm:$0xff]
    %v5488 = vld [vmem:[%s17 + $0xd4] sm:$0xf]
    %v5489 = vld [vmem:[%s17 + $0xd8] sm:$0xff]
    %v5490 = vld [vmem:[%s17 + $0xe0] sm:$0xf]
    %v5491 = vld [vmem:[%s17 + $0xe4] sm:$0xff]
    %v5492 = vld [vmem:[%s17 + $0xec] sm:$0xf]
    %v5493 = vld [vmem:[%s17 + $0xf0] sm:$0xff]
    %v5494 = vld [vmem:[%s17 + $0xf8] sm:$0xf]
    %v5495 = vld [vmem:[%s17 + $0xfc] sm:$0xff]
    %v5496 = vld [vmem:[%s17 + $0x104] sm:$0xf]
    %v5497 = vld [vmem:[%s17 + $0x108] sm:$0xff]
    %v5498 = vld [vmem:[%s17 + $0x110] sm:$0xf]
    %v5499 = vld [vmem:[%s17 + $0x114] sm:$0xff]
    %v5500 = vld [vmem:[%s17 + $0x11c] sm:$0xf]
    %v5501 = vld [vmem:[%s17 + $0x120] sm:$0xff]
    %v5502 = vld [vmem:[%s17 + $0x128] sm:$0xf]
    %v5503 = vld [vmem:[%s17 + $0x12c] sm:$0xff]
    %v5504 = vld [vmem:[%s17 + $0x134] sm:$0xf]
    %v5505 = vld [vmem:[%s17 + $0x138] sm:$0xff]
    %v5506 = vld [vmem:[%s17 + $0x140] sm:$0xf]
    %v5507 = vld [vmem:[%s17 + $0x144] sm:$0xff]
    %v5508 = vld [vmem:[%s17 + $0x14c] sm:$0xf]
    %v5509 = vld [vmem:[%s17 + $0x150] sm:$0xff]
    %v5510 = vld [vmem:[%s17 + $0x158] sm:$0xf]
    %v5511 = vld [vmem:[%s17 + $0x15c] sm:$0xff]
    %v5512 = vld [vmem:[%s17 + $0x164] sm:$0xf]
    %v5513 = vld [vmem:[%s17 + $0x168] sm:$0xff]
    %v5514 = vld [vmem:[%s17 + $0x170] sm:$0xf]
    %v5515 = vld [vmem:[%s17 + $0x174] sm:$0xff]
    %v5516 = vld [vmem:[%s17 + $0x17c] sm:$0xf]
    %v5517 = vld [vmem:[%s18] sm:$0x7]
    %v5519 = vperm.slane %v5517, 0
    %v5520 = vperm.slane %v5517, 1
    %v5521 = vperm.slane %v5517, 2
    %v5589 = vunpack.c.l.b16 %v5453
    %v5590 = vunpack.c.h.b16 %v5453
    %v5591 = vunpack.c.l.b16 %v5454
    %v5592 = vunpack.c.l.b16 %v5455
    %v5593 = vunpack.c.h.b16 %v5455
    %v5594 = vunpack.c.l.b16 %v5456
    %v5595 = vunpack.c.l.b16 %v5457
    %v5596 = vunpack.c.h.b16 %v5457
    %v5597 = vunpack.c.l.b16 %v5458
    %v5598 = vunpack.c.l.b16 %v5459
    %v5599 = vunpack.c.h.b16 %v5459
    %v5600 = vunpack.c.l.b16 %v5460
    %v5601 = vunpack.c.l.b16 %v5461
    %v5602 = vunpack.c.h.b16 %v5461
    %v5603 = vunpack.c.l.b16 %v5462
    %v5604 = vunpack.c.l.b16 %v5463
    %v5605 = vunpack.c.h.b16 %v5463
    %v5606 = vunpack.c.l.b16 %v5464
    %v5607 = vunpack.c.l.b16 %v5465
    %v5608 = vunpack.c.h.b16 %v5465
    %v5609 = vunpack.c.l.b16 %v5466
    %v5610 = vunpack.c.l.b16 %v5467
    %v5611 = vunpack.c.h.b16 %v5467
    %v5612 = vunpack.c.l.b16 %v5468
    %v5613 = vunpack.c.l.b16 %v5469
    %v5614 = vunpack.c.h.b16 %v5469
    %v5615 = vunpack.c.l.b16 %v5470
    %v5616 = vunpack.c.l.b16 %v5471
    %v5617 = vunpack.c.h.b16 %v5471
    %v5618 = vunpack.c.l.b16 %v5472
    %v5619 = vunpack.c.l.b16 %v5473
    %v5620 = vunpack.c.h.b16 %v5473
    %v5621 = vunpack.c.l.b16 %v5474
    %v5622 = vunpack.c.l.b16 %v5475
    %v5623 = vunpack.c.h.b16 %v5475
    %v5624 = vunpack.c.l.b16 %v5476
    %v5625 = vunpack.c.l.b16 %v5477
    %v5626 = vunpack.c.h.b16 %v5477
    %v5627 = vunpack.c.l.b16 %v5478
    %v5628 = vunpack.c.l.b16 %v5479
    %v5629 = vunpack.c.h.b16 %v5479
    %v5630 = vunpack.c.l.b16 %v5480
    %v5631 = vunpack.c.l.b16 %v5481
    %v5632 = vunpack.c.h.b16 %v5481
    %v5633 = vunpack.c.l.b16 %v5482
    %v5634 = vunpack.c.l.b16 %v5483
    %v5635 = vunpack.c.h.b16 %v5483
    %v5636 = vunpack.c.l.b16 %v5484
    %v5637 = vunpack.c.l.b16 %v5485
    %v5638 = vunpack.c.h.b16 %v5485
    %v5639 = vunpack.c.l.b16 %v5486
    %v5640 = vunpack.c.l.b16 %v5487
    %v5641 = vunpack.c.h.b16 %v5487
    %v5642 = vunpack.c.l.b16 %v5488
    %v5643 = vunpack.c.l.b16 %v5489
    %v5644 = vunpack.c.h.b16 %v5489
    %v5645 = vunpack.c.l.b16 %v5490
    %v5646 = vunpack.c.l.b16 %v5491
    %v5647 = vunpack.c.h.b16 %v5491
    %v5648 = vunpack.c.l.b16 %v5492
    %v5649 = vunpack.c.l.b16 %v5493
    %v5650 = vunpack.c.h.b16 %v5493
    %v5651 = vunpack.c.l.b16 %v5494
    %v5652 = vunpack.c.l.b16 %v5495
    %v5653 = vunpack.c.h.b16 %v5495
    %v5654 = vunpack.c.l.b16 %v5496
    %v5655 = vunpack.c.l.b16 %v5497
    %v5656 = vunpack.c.h.b16 %v5497
    %v5657 = vunpack.c.l.b16 %v5498
    %v5658 = vunpack.c.l.b16 %v5499
    %v5659 = vunpack.c.h.b16 %v5499
    %v5660 = vunpack.c.l.b16 %v5500
    %v5661 = vunpack.c.l.b16 %v5501
    %v5662 = vunpack.c.h.b16 %v5501
    %v5663 = vunpack.c.l.b16 %v5502
    %v5664 = vunpack.c.l.b16 %v5503
    %v5665 = vunpack.c.h.b16 %v5503
    %v5666 = vunpack.c.l.b16 %v5504
    %v5667 = vunpack.c.l.b16 %v5505
    %v5668 = vunpack.c.h.b16 %v5505
    %v5669 = vunpack.c.l.b16 %v5506
    %v5670 = vunpack.c.l.b16 %v5507
    %v5671 = vunpack.c.h.b16 %v5507
    %v5672 = vunpack.c.l.b16 %v5508
    %v5673 = vunpack.c.l.b16 %v5509
    %v5674 = vunpack.c.h.b16 %v5509
    %v5675 = vunpack.c.l.b16 %v5510
    %v5676 = vunpack.c.l.b16 %v5511
    %v5677 = vunpack.c.h.b16 %v5511
    %v5678 = vunpack.c.l.b16 %v5512
    %v5679 = vunpack.c.l.b16 %v5513
    %v5680 = vunpack.c.h.b16 %v5513
    %v5681 = vunpack.c.l.b16 %v5514
    %v5682 = vunpack.c.l.b16 %v5515
    %v5683 = vunpack.c.h.b16 %v5515
    %v5684 = vunpack.c.l.b16 %v5516
    %v5685 = vpack.c.b16 %v5592, %v5589
    %v5686 = vpack.c.b16 %v5593, %v5590
    %v5687 = vpack.c.b16 %v5594, %v5591
    %v5688 = vpack.c.b16 %v5598, %v5595
    %v5689 = vpack.c.b16 %v5599, %v5596
    %v5690 = vpack.c.b16 %v5600, %v5597
    %v5691 = vpack.c.b16 %v5604, %v5601
    %v5692 = vpack.c.b16 %v5605, %v5602
    %v5693 = vpack.c.b16 %v5606, %v5603
    %v5694 = vpack.c.b16 %v5610, %v5607
    %v5695 = vpack.c.b16 %v5611, %v5608
    %v5696 = vpack.c.b16 %v5612, %v5609
    %v5697 = vpack.c.b16 %v5616, %v5613
    %v5698 = vpack.c.b16 %v5617, %v5614
    %v5699 = vpack.c.b16 %v5618, %v5615
    %v5700 = vpack.c.b16 %v5622, %v5619
    %v5701 = vpack.c.b16 %v5623, %v5620
    %v5702 = vpack.c.b16 %v5624, %v5621
    %v5703 = vpack.c.b16 %v5628, %v5625
    %v5704 = vpack.c.b16 %v5629, %v5626
    %v5705 = vpack.c.b16 %v5630, %v5627
    %v5706 = vpack.c.b16 %v5634, %v5631
    %v5707 = vpack.c.b16 %v5635, %v5632
    %v5708 = vpack.c.b16 %v5636, %v5633
    %v5709 = vpack.c.b16 %v5640, %v5637
    %v5710 = vpack.c.b16 %v5641, %v5638
    %v5711 = vpack.c.b16 %v5642, %v5639
    %v5712 = vpack.c.b16 %v5646, %v5643
    %v5713 = vpack.c.b16 %v5647, %v5644
    %v5714 = vpack.c.b16 %v5648, %v5645
    %v5715 = vpack.c.b16 %v5652, %v5649
    %v5716 = vpack.c.b16 %v5653, %v5650
    %v5717 = vpack.c.b16 %v5654, %v5651
    %v5718 = vpack.c.b16 %v5658, %v5655
    %v5719 = vpack.c.b16 %v5659, %v5656
    %v5720 = vpack.c.b16 %v5660, %v5657
    %v5721 = vpack.c.b16 %v5664, %v5661
    %v5722 = vpack.c.b16 %v5665, %v5662
    %v5723 = vpack.c.b16 %v5666, %v5663
    %v5724 = vpack.c.b16 %v5670, %v5667
    %v5725 = vpack.c.b16 %v5671, %v5668
    %v5726 = vpack.c.b16 %v5672, %v5669
    %v5727 = vpack.c.b16 %v5676, %v5673
    %v5728 = vpack.c.b16 %v5677, %v5674
    %v5729 = vpack.c.b16 %v5678, %v5675
    %v5730 = vpack.c.b16 %v5682, %v5679
    %v5731 = vpack.c.b16 %v5683, %v5680
    %v5732 = vpack.c.b16 %v5684, %v5681
    %5781 = vmatpush.bf16.msra.mxu0 %v5706
    %5782 = vmatpush.bf16.msra.mxu0 %v5703
    %5783 = vmatpush.bf16.msra.mxu0 %v5700
    %5784 = vmatpush.bf16.msra.mxu0 %v5697
    %5785 = vmatpush.bf16.msra.mxu0 %v5694
    %5786 = vmatpush.bf16.msra.mxu0 %v5691
    %5787 = vmatpush.bf16.msra.mxu0 %v5688
    %5788 = vmatpush.bf16.msra.mxu0 %v5685
    %5789 = vmatmul.bf16.gmra.mxu0 %v5421
    %v5790 = vpop.f32.mrf.mxu0
    %v5791 = vadd.f32 %v5519, %v5790
    %v5792 = vpop.f32.mrf.mxu0
    %v5793 = vadd.f32 %v5519, %v5792
    %5794 = vmatmul.bf16.gmra.mxu0 %v5423
    %v5795 = vpop.f32.mrf.mxu0
    %v5796 = vadd.f32 %v5519, %v5795
    %v5797 = vpop.f32.mrf.mxu0
    %v5798 = vadd.f32 %v5519, %v5797
    %5799 = vmatmul.bf16.gmra.mxu0 %v5425
    %v5800 = vpop.f32.mrf.mxu0
    %v5801 = vadd.f32 %v5519, %v5800
    %v5802 = vpop.f32.mrf.mxu0
    %v5803 = vadd.f32 %v5519, %v5802
    %5804 = vmatmul.bf16.gmra.mxu0 %v5427
    %v5805 = vpop.f32.mrf.mxu0
    %v5806 = vadd.f32 %v5519, %v5805
    %v5807 = vpop.f32.mrf.mxu0
    %v5808 = vadd.f32 %v5519, %v5807
    %5809 = vmatmul.bf16.gmra.mxu0 %v5429
    %v5810 = vpop.f32.mrf.mxu0
    %v5811 = vadd.f32 %v5519, %v5810
    %v5812 = vpop.f32.mrf.mxu0
    %v5813 = vadd.f32 %v5519, %v5812
    %5814 = vmatmul.bf16.gmra.mxu0 %v5431
    %v5815 = vpop.f32.mrf.mxu0
    %v5816 = vadd.f32 %v5519, %v5815
    %v5817 = vpop.f32.mrf.mxu0
    %v5818 = vadd.f32 %v5519, %v5817
    %5819 = vmatmul.bf16.gmra.mxu0 %v5433
    %v5820 = vpop.f32.mrf.mxu0
    %v5821 = vadd.f32 %v5519, %v5820
    %v5822 = vpop.f32.mrf.mxu0
    %v5823 = vadd.f32 %v5519, %v5822
    %5824 = vmatmul.bf16.gmra.mxu0 %v5435
    %v5825 = vpop.f32.mrf.mxu0
    %v5826 = vadd.f32 %v5519, %v5825
    %v5827 = vpop.f32.mrf.mxu0
    %v5828 = vadd.f32 %v5519, %v5827
    %5829 = vmatmul.bf16.gmra.mxu0 %v5437
    %v5830 = vpop.f32.mrf.mxu0
    %v5831 = vadd.f32 %v5519, %v5830
    %v5832 = vpop.f32.mrf.mxu0
    %v5833 = vadd.f32 %v5519, %v5832
    %5834 = vmatmul.bf16.gmra.mxu0 %v5439
    %v5835 = vpop.f32.mrf.mxu0
    %v5836 = vadd.f32 %v5519, %v5835
    %v5837 = vpop.f32.mrf.mxu0
    %v5838 = vadd.f32 %v5519, %v5837
    %5839 = vmatmul.bf16.gmra.mxu0 %v5441
    %v5840 = vpop.f32.mrf.mxu0
    %v5841 = vadd.f32 %v5519, %v5840
    %v5842 = vpop.f32.mrf.mxu0
    %v5843 = vadd.f32 %v5519, %v5842
    %5844 = vmatmul.bf16.gmra.mxu0 %v5443
    %v5845 = vpop.f32.mrf.mxu0
    %v5846 = vadd.f32 %v5519, %v5845
    %v5847 = vpop.f32.mrf.mxu0
    %v5848 = vadd.f32 %v5519, %v5847
    %5849 = vmatmul.bf16.gmra.mxu0 %v5445
    %v5850 = vpop.f32.mrf.mxu0
    %v5851 = vadd.f32 %v5519, %v5850
    %v5852 = vpop.f32.mrf.mxu0
    %v5853 = vadd.f32 %v5519, %v5852
    %5854 = vmatmul.bf16.gmra.mxu0 %v5447
    %v5855 = vpop.f32.mrf.mxu0
    %v5856 = vadd.f32 %v5519, %v5855
    %v5857 = vpop.f32.mrf.mxu0
    %v5858 = vadd.f32 %v5519, %v5857
    %5859 = vmatmul.bf16.gmra.mxu0 %v5449
    %v5860 = vpop.f32.mrf.mxu0
    %v5861 = vadd.f32 %v5519, %v5860
    %v5862 = vpop.f32.mrf.mxu0
    %v5863 = vadd.f32 %v5519, %v5862
    %5864 = vmatmul.bf16.gmra.mxu0 %v5451
    %v5865 = vpop.f32.mrf.mxu0
    %v5866 = vadd.f32 %v5519, %v5865
    %v5867 = vpop.f32.mrf.mxu0
    %v5868 = vadd.f32 %v5519, %v5867
    %5869 = vdwg.mxu0
    %5870 = vmatpush.bf16.msra.mxu0 %v5730
    %5871 = vmatpush.bf16.msra.mxu0 %v5727
    %5872 = vmatpush.bf16.msra.mxu0 %v5724
    %5873 = vmatpush.bf16.msra.mxu0 %v5721
    %5874 = vmatpush.bf16.msra.mxu0 %v5718
    %5875 = vmatpush.bf16.msra.mxu0 %v5715
    %5876 = vmatpush.bf16.msra.mxu0 %v5712
    %5877 = vmatpush.bf16.msra.mxu0 %v5709
    %5878 = vmatmul.bf16.gmra.mxu0 %v5422
    %v5879 = vpop.f32.mrf.mxu0
    %v5880 = vadd.f32 %v5791, %v5879
    %v5881 = vpop.f32.mrf.mxu0
    %v5882 = vadd.f32 %v5793, %v5881
    %5883 = vmatmul.bf16.gmra.mxu0 %v5424
    %v5884 = vpop.f32.mrf.mxu0
    %v5885 = vadd.f32 %v5796, %v5884
    %v5886 = vpop.f32.mrf.mxu0
    %v5887 = vadd.f32 %v5798, %v5886
    %5888 = vmatmul.bf16.gmra.mxu0 %v5426
    %v5889 = vpop.f32.mrf.mxu0
    %v5890 = vadd.f32 %v5801, %v5889
    %v5891 = vpop.f32.mrf.mxu0
    %v5892 = vadd.f32 %v5803, %v5891
    %5893 = vmatmul.bf16.gmra.mxu0 %v5428
    %v5894 = vpop.f32.mrf.mxu0
    %v5895 = vadd.f32 %v5806, %v5894
    %v5896 = vpop.f32.mrf.mxu0
    %v5897 = vadd.f32 %v5808, %v5896
    %5898 = vmatmul.bf16.gmra.mxu0 %v5430
    %v5899 = vpop.f32.mrf.mxu0
    %v5900 = vadd.f32 %v5811, %v5899
    %v5901 = vpop.f32.mrf.mxu0
    %v5902 = vadd.f32 %v5813, %v5901
    %5903 = vmatmul.bf16.gmra.mxu0 %v5432
    %v5904 = vpop.f32.mrf.mxu0
    %v5905 = vadd.f32 %v5816, %v5904
    %v5906 = vpop.f32.mrf.mxu0
    %v5907 = vadd.f32 %v5818, %v5906
    %5908 = vmatmul.bf16.gmra.mxu0 %v5434
    %v5909 = vpop.f32.mrf.mxu0
    %v5910 = vadd.f32 %v5821, %v5909
    %v5911 = vpop.f32.mrf.mxu0
    %v5912 = vadd.f32 %v5823, %v5911
    %5913 = vmatmul.bf16.gmra.mxu0 %v5436
    %v5914 = vpop.f32.mrf.mxu0
    %v5915 = vadd.f32 %v5826, %v5914
    %v5916 = vpop.f32.mrf.mxu0
    %v5917 = vadd.f32 %v5828, %v5916
    %5918 = vmatmul.bf16.gmra.mxu0 %v5438
    %v5919 = vpop.f32.mrf.mxu0
    %v5920 = vadd.f32 %v5831, %v5919
    %v5921 = vpop.f32.mrf.mxu0
    %v5922 = vadd.f32 %v5833, %v5921
    %5923 = vmatmul.bf16.gmra.mxu0 %v5440
    %v5924 = vpop.f32.mrf.mxu0
    %v5925 = vadd.f32 %v5836, %v5924
    %v5926 = vpop.f32.mrf.mxu0
    %v5927 = vadd.f32 %v5838, %v5926
    %5928 = vmatmul.bf16.gmra.mxu0 %v5442
    %v5929 = vpop.f32.mrf.mxu0
    %v5930 = vadd.f32 %v5841, %v5929
    %v5931 = vpop.f32.mrf.mxu0
    %v5932 = vadd.f32 %v5843, %v5931
    %5933 = vmatmul.bf16.gmra.mxu0 %v5444
    %v5934 = vpop.f32.mrf.mxu0
    %v5935 = vadd.f32 %v5846, %v5934
    %v5936 = vpop.f32.mrf.mxu0
    %v5937 = vadd.f32 %v5848, %v5936
    %5938 = vmatmul.bf16.gmra.mxu0 %v5446
    %v5939 = vpop.f32.mrf.mxu0
    %v5940 = vadd.f32 %v5851, %v5939
    %v5941 = vpop.f32.mrf.mxu0
    %v5942 = vadd.f32 %v5853, %v5941
    %5943 = vmatmul.bf16.gmra.mxu0 %v5448
    %v5944 = vpop.f32.mrf.mxu0
    %v5945 = vadd.f32 %v5856, %v5944
    %v5946 = vpop.f32.mrf.mxu0
    %v5947 = vadd.f32 %v5858, %v5946
    %5948 = vmatmul.bf16.gmra.mxu0 %v5450
    %v5949 = vpop.f32.mrf.mxu0
    %v5950 = vadd.f32 %v5861, %v5949
    %v5951 = vpop.f32.mrf.mxu0
    %v5952 = vadd.f32 %v5863, %v5951
    %5953 = vmatmul.bf16.gmra.mxu0 %v5452
    %v5954 = vpop.f32.mrf.mxu0
    %v5955 = vadd.f32 %v5866, %v5954
    %v5956 = vpop.f32.mrf.mxu0
    %v5957 = vadd.f32 %v5868, %v5956
    %5958 = vdwg.mxu0
    %5959 = vmatpush.bf16.msra.mxu0 %v5707
    %5960 = vmatpush.bf16.msra.mxu0 %v5704
    %5961 = vmatpush.bf16.msra.mxu0 %v5701
    %5962 = vmatpush.bf16.msra.mxu0 %v5698
    %5963 = vmatpush.bf16.msra.mxu0 %v5695
    %5964 = vmatpush.bf16.msra.mxu0 %v5692
    %5965 = vmatpush.bf16.msra.mxu0 %v5689
    %5966 = vmatpush.bf16.msra.mxu0 %v5686
    %5967 = vmatmul.bf16.gmra.mxu0 %v5421
    %v5968 = vpop.f32.mrf.mxu0
    %v5969 = vadd.f32 %v5520, %v5968
    %v5970 = vpop.f32.mrf.mxu0
    %v5971 = vadd.f32 %v5520, %v5970
    %5972 = vmatmul.bf16.gmra.mxu0 %v5423
    %v5973 = vpop.f32.mrf.mxu0
    %v5974 = vadd.f32 %v5520, %v5973
    %v5975 = vpop.f32.mrf.mxu0
    %v5976 = vadd.f32 %v5520, %v5975
    %5977 = vmatmul.bf16.gmra.mxu0 %v5425
    %v5978 = vpop.f32.mrf.mxu0
    %v5979 = vadd.f32 %v5520, %v5978
    %v5980 = vpop.f32.mrf.mxu0
    %v5981 = vadd.f32 %v5520, %v5980
    %5982 = vmatmul.bf16.gmra.mxu0 %v5427
    %v5983 = vpop.f32.mrf.mxu0
    %v5984 = vadd.f32 %v5520, %v5983
    %v5985 = vpop.f32.mrf.mxu0
    %v5986 = vadd.f32 %v5520, %v5985
    %5987 = vmatmul.bf16.gmra.mxu0 %v5429
    %v5988 = vpop.f32.mrf.mxu0
    %v5989 = vadd.f32 %v5520, %v5988
    %v5990 = vpop.f32.mrf.mxu0
    %v5991 = vadd.f32 %v5520, %v5990
    %5992 = vmatmul.bf16.gmra.mxu0 %v5431
    %v5993 = vpop.f32.mrf.mxu0
    %v5994 = vadd.f32 %v5520, %v5993
    %v5995 = vpop.f32.mrf.mxu0
    %v5996 = vadd.f32 %v5520, %v5995
    %5997 = vmatmul.bf16.gmra.mxu0 %v5433
    %v5998 = vpop.f32.mrf.mxu0
    %v5999 = vadd.f32 %v5520, %v5998
    %v6000 = vpop.f32.mrf.mxu0
    %v6001 = vadd.f32 %v5520, %v6000
    %6002 = vmatmul.bf16.gmra.mxu0 %v5435
    %v6003 = vpop.f32.mrf.mxu0
    %v6004 = vadd.f32 %v5520, %v6003
    %v6005 = vpop.f32.mrf.mxu0
    %v6006 = vadd.f32 %v5520, %v6005
    %6007 = vmatmul.bf16.gmra.mxu0 %v5437
    %v6008 = vpop.f32.mrf.mxu0
    %v6009 = vadd.f32 %v5520, %v6008
    %v6010 = vpop.f32.mrf.mxu0
    %v6011 = vadd.f32 %v5520, %v6010
    %6012 = vmatmul.bf16.gmra.mxu0 %v5439
    %v6013 = vpop.f32.mrf.mxu0
    %v6014 = vadd.f32 %v5520, %v6013
    %v6015 = vpop.f32.mrf.mxu0
    %v6016 = vadd.f32 %v5520, %v6015
    %6017 = vmatmul.bf16.gmra.mxu0 %v5441
    %v6018 = vpop.f32.mrf.mxu0
    %v6019 = vadd.f32 %v5520, %v6018
    %v6020 = vpop.f32.mrf.mxu0
    %v6021 = vadd.f32 %v5520, %v6020
    %6022 = vmatmul.bf16.gmra.mxu0 %v5443
    %v6023 = vpop.f32.mrf.mxu0
    %v6024 = vadd.f32 %v5520, %v6023
    %v6025 = vpop.f32.mrf.mxu0
    %v6026 = vadd.f32 %v5520, %v6025
    %6027 = vmatmul.bf16.gmra.mxu0 %v5445
    %v6028 = vpop.f32.mrf.mxu0
    %v6029 = vadd.f32 %v5520, %v6028
    %v6030 = vpop.f32.mrf.mxu0
    %v6031 = vadd.f32 %v5520, %v6030
    %6032 = vmatmul.bf16.gmra.mxu0 %v5447
    %v6033 = vpop.f32.mrf.mxu0
    %v6034 = vadd.f32 %v5520, %v6033
    %v6035 = vpop.f32.mrf.mxu0
    %v6036 = vadd.f32 %v5520, %v6035
    %6037 = vmatmul.bf16.gmra.mxu0 %v5449
    %v6038 = vpop.f32.mrf.mxu0
    %v6039 = vadd.f32 %v5520, %v6038
    %v6040 = vpop.f32.mrf.mxu0
    %v6041 = vadd.f32 %v5520, %v6040
    %6042 = vmatmul.bf16.gmra.mxu0 %v5451
    %v6043 = vpop.f32.mrf.mxu0
    %v6044 = vadd.f32 %v5520, %v6043
    %v6045 = vpop.f32.mrf.mxu0
    %v6046 = vadd.f32 %v5520, %v6045
    %6047 = vdwg.mxu0
    %6048 = vmatpush.bf16.msra.mxu0 %v5731
    %6049 = vmatpush.bf16.msra.mxu0 %v5728
    %6050 = vmatpush.bf16.msra.mxu0 %v5725
    %6051 = vmatpush.bf16.msra.mxu0 %v5722
    %6052 = vmatpush.bf16.msra.mxu0 %v5719
    %6053 = vmatpush.bf16.msra.mxu0 %v5716
    %6054 = vmatpush.bf16.msra.mxu0 %v5713
    %6055 = vmatpush.bf16.msra.mxu0 %v5710
    %6056 = vmatmul.bf16.gmra.mxu0 %v5422
    %v6057 = vpop.f32.mrf.mxu0
    %v6058 = vadd.f32 %v5969, %v6057
    %v6059 = vpop.f32.mrf.mxu0
    %v6060 = vadd.f32 %v5971, %v6059
    %6061 = vmatmul.bf16.gmra.mxu0 %v5424
    %v6062 = vpop.f32.mrf.mxu0
    %v6063 = vadd.f32 %v5974, %v6062
    %v6064 = vpop.f32.mrf.mxu0
    %v6065 = vadd.f32 %v5976, %v6064
    %6066 = vmatmul.bf16.gmra.mxu0 %v5426
    %v6067 = vpop.f32.mrf.mxu0
    %v6068 = vadd.f32 %v5979, %v6067
    %v6069 = vpop.f32.mrf.mxu0
    %v6070 = vadd.f32 %v5981, %v6069
    %6071 = vmatmul.bf16.gmra.mxu0 %v5428
    %v6072 = vpop.f32.mrf.mxu0
    %v6073 = vadd.f32 %v5984, %v6072
    %v6074 = vpop.f32.mrf.mxu0
    %v6075 = vadd.f32 %v5986, %v6074
    %6076 = vmatmul.bf16.gmra.mxu0 %v5430
    %v6077 = vpop.f32.mrf.mxu0
    %v6078 = vadd.f32 %v5989, %v6077
    %v6079 = vpop.f32.mrf.mxu0
    %v6080 = vadd.f32 %v5991, %v6079
    %6081 = vmatmul.bf16.gmra.mxu0 %v5432
    %v6082 = vpop.f32.mrf.mxu0
    %v6083 = vadd.f32 %v5994, %v6082
    %v6084 = vpop.f32.mrf.mxu0
    %v6085 = vadd.f32 %v5996, %v6084
    %6086 = vmatmul.bf16.gmra.mxu0 %v5434
    %v6087 = vpop.f32.mrf.mxu0
    %v6088 = vadd.f32 %v5999, %v6087
    %v6089 = vpop.f32.mrf.mxu0
    %v6090 = vadd.f32 %v6001, %v6089
    %6091 = vmatmul.bf16.gmra.mxu0 %v5436
    %v6092 = vpop.f32.mrf.mxu0
    %v6093 = vadd.f32 %v6004, %v6092
    %v6094 = vpop.f32.mrf.mxu0
    %v6095 = vadd.f32 %v6006, %v6094
    %6096 = vmatmul.bf16.gmra.mxu0 %v5438
    %v6097 = vpop.f32.mrf.mxu0
    %v6098 = vadd.f32 %v6009, %v6097
    %v6099 = vpop.f32.mrf.mxu0
    %v6100 = vadd.f32 %v6011, %v6099
    %6101 = vmatmul.bf16.gmra.mxu0 %v5440
    %v6102 = vpop.f32.mrf.mxu0
    %v6103 = vadd.f32 %v6014, %v6102
    %v6104 = vpop.f32.mrf.mxu0
    %v6105 = vadd.f32 %v6016, %v6104
    %6106 = vmatmul.bf16.gmra.mxu0 %v5442
    %v6107 = vpop.f32.mrf.mxu0
    %v6108 = vadd.f32 %v6019, %v6107
    %v6109 = vpop.f32.mrf.mxu0
    %v6110 = vadd.f32 %v6021, %v6109
    %6111 = vmatmul.bf16.gmra.mxu0 %v5444
    %v6112 = vpop.f32.mrf.mxu0
    %v6113 = vadd.f32 %v6024, %v6112
    %v6114 = vpop.f32.mrf.mxu0
    %v6115 = vadd.f32 %v6026, %v6114
    %6116 = vmatmul.bf16.gmra.mxu0 %v5446
    %v6117 = vpop.f32.mrf.mxu0
    %v6118 = vadd.f32 %v6029, %v6117
    %v6119 = vpop.f32.mrf.mxu0
    %v6120 = vadd.f32 %v6031, %v6119
    %6121 = vmatmul.bf16.gmra.mxu0 %v5448
    %v6122 = vpop.f32.mrf.mxu0
    %v6123 = vadd.f32 %v6034, %v6122
    %v6124 = vpop.f32.mrf.mxu0
    %v6125 = vadd.f32 %v6036, %v6124
    %6126 = vmatmul.bf16.gmra.mxu0 %v5450
    %v6127 = vpop.f32.mrf.mxu0
    %v6128 = vadd.f32 %v6039, %v6127
    %v6129 = vpop.f32.mrf.mxu0
    %v6130 = vadd.f32 %v6041, %v6129
    %6131 = vmatmul.bf16.gmra.mxu0 %v5452
    %v6132 = vpop.f32.mrf.mxu0
    %v6133 = vadd.f32 %v6044, %v6132
    %v6134 = vpop.f32.mrf.mxu0
    %v6135 = vadd.f32 %v6046, %v6134
    %6136 = vdwg.mxu0
    %6137 = vmatpush.bf16.msra.mxu0 %v5708
    %6138 = vmatpush.bf16.msra.mxu0 %v5705
    %6139 = vmatpush.bf16.msra.mxu0 %v5702
    %6140 = vmatpush.bf16.msra.mxu0 %v5699
    %6141 = vmatpush.bf16.msra.mxu0 %v5696
    %6142 = vmatpush.bf16.msra.mxu0 %v5693
    %6143 = vmatpush.bf16.msra.mxu0 %v5690
    %6144 = vmatpush.bf16.msra.mxu0 %v5687
    %6145 = vmatmul.bf16.gmra.mxu0 %v5421
    %v6146 = vpop.f32.mrf.mxu0
    %v6147 = vadd.f32 %v5521, %v6146
    %v6148 = vpop.f32.mrf.mxu0
    %v6149 = vadd.f32 %v5521, %v6148
    %6150 = vmatmul.bf16.gmra.mxu0 %v5423
    %v6151 = vpop.f32.mrf.mxu0
    %v6152 = vadd.f32 %v5521, %v6151
    %v6153 = vpop.f32.mrf.mxu0
    %v6154 = vadd.f32 %v5521, %v6153
    %6155 = vmatmul.bf16.gmra.mxu0 %v5425
    %v6156 = vpop.f32.mrf.mxu0
    %v6157 = vadd.f32 %v5521, %v6156
    %v6158 = vpop.f32.mrf.mxu0
    %v6159 = vadd.f32 %v5521, %v6158
    %6160 = vmatmul.bf16.gmra.mxu0 %v5427
    %v6161 = vpop.f32.mrf.mxu0
    %v6162 = vadd.f32 %v5521, %v6161
    %v6163 = vpop.f32.mrf.mxu0
    %v6164 = vadd.f32 %v5521, %v6163
    %6165 = vmatmul.bf16.gmra.mxu0 %v5429
    %v6166 = vpop.f32.mrf.mxu0
    %v6167 = vadd.f32 %v5521, %v6166
    %v6168 = vpop.f32.mrf.mxu0
    %v6169 = vadd.f32 %v5521, %v6168
    %6170 = vmatmul.bf16.gmra.mxu0 %v5431
    %v6171 = vpop.f32.mrf.mxu0
    %v6172 = vadd.f32 %v5521, %v6171
    %v6173 = vpop.f32.mrf.mxu0
    %v6174 = vadd.f32 %v5521, %v6173
    %6175 = vmatmul.bf16.gmra.mxu0 %v5433
    %v6176 = vpop.f32.mrf.mxu0
    %v6177 = vadd.f32 %v5521, %v6176
    %v6178 = vpop.f32.mrf.mxu0
    %v6179 = vadd.f32 %v5521, %v6178
    %6180 = vmatmul.bf16.gmra.mxu0 %v5435
    %v6181 = vpop.f32.mrf.mxu0
    %v6182 = vadd.f32 %v5521, %v6181
    %v6183 = vpop.f32.mrf.mxu0
    %v6184 = vadd.f32 %v5521, %v6183
    %6185 = vmatmul.bf16.gmra.mxu0 %v5437
    %v6186 = vpop.f32.mrf.mxu0
    %v6187 = vadd.f32 %v5521, %v6186
    %v6188 = vpop.f32.mrf.mxu0
    %v6189 = vadd.f32 %v5521, %v6188
    %6190 = vmatmul.bf16.gmra.mxu0 %v5439
    %v6191 = vpop.f32.mrf.mxu0
    %v6192 = vadd.f32 %v5521, %v6191
    %v6193 = vpop.f32.mrf.mxu0
    %v6194 = vadd.f32 %v5521, %v6193
    %6195 = vmatmul.bf16.gmra.mxu0 %v5441
    %v6196 = vpop.f32.mrf.mxu0
    %v6197 = vadd.f32 %v5521, %v6196
    %v6198 = vpop.f32.mrf.mxu0
    %v6199 = vadd.f32 %v5521, %v6198
    %6200 = vmatmul.bf16.gmra.mxu0 %v5443
    %v6201 = vpop.f32.mrf.mxu0
    %v6202 = vadd.f32 %v5521, %v6201
    %v6203 = vpop.f32.mrf.mxu0
    %v6204 = vadd.f32 %v5521, %v6203
    %6205 = vmatmul.bf16.gmra.mxu0 %v5445
    %v6206 = vpop.f32.mrf.mxu0
    %v6207 = vadd.f32 %v5521, %v6206
    %v6208 = vpop.f32.mrf.mxu0
    %v6209 = vadd.f32 %v5521, %v6208
    %6210 = vmatmul.bf16.gmra.mxu0 %v5447
    %v6211 = vpop.f32.mrf.mxu0
    %v6212 = vadd.f32 %v5521, %v6211
    %v6213 = vpop.f32.mrf.mxu0
    %v6214 = vadd.f32 %v5521, %v6213
    %6215 = vmatmul.bf16.gmra.mxu0 %v5449
    %v6216 = vpop.f32.mrf.mxu0
    %v6217 = vadd.f32 %v5521, %v6216
    %v6218 = vpop.f32.mrf.mxu0
    %v6219 = vadd.f32 %v5521, %v6218
    %6220 = vmatmul.bf16.gmra.mxu0 %v5451
    %v6221 = vpop.f32.mrf.mxu0
    %v6222 = vadd.f32 %v5521, %v6221
    %v6223 = vpop.f32.mrf.mxu0
    %v6224 = vadd.f32 %v5521, %v6223
    %6225 = vdwg.mxu0
    %6226 = vmatpush.bf16.msra.mxu0 %v5732
    %6227 = vmatpush.bf16.msra.mxu0 %v5729
    %6228 = vmatpush.bf16.msra.mxu0 %v5726
    %6229 = vmatpush.bf16.msra.mxu0 %v5723
    %6230 = vmatpush.bf16.msra.mxu0 %v5720
    %6231 = vmatpush.bf16.msra.mxu0 %v5717
    %6232 = vmatpush.bf16.msra.mxu0 %v5714
    %6233 = vmatpush.bf16.msra.mxu0 %v5711
    %6234 = vmatmul.bf16.gmra.mxu0 %v5422
    %v6235 = vpop.f32.mrf.mxu0
    %v6236 = vadd.f32 %v6147, %v6235
    %v6237 = vpop.f32.mrf.mxu0
    %v6238 = vadd.f32 %v6149, %v6237
    %6239 = vmatmul.bf16.gmra.mxu0 %v5424
    %v6240 = vpop.f32.mrf.mxu0
    %v6241 = vadd.f32 %v6152, %v6240
    %v6242 = vpop.f32.mrf.mxu0
    %v6243 = vadd.f32 %v6154, %v6242
    %6244 = vmatmul.bf16.gmra.mxu0 %v5426
    %v6245 = vpop.f32.mrf.mxu0
    %v6246 = vadd.f32 %v6157, %v6245
    %v6247 = vpop.f32.mrf.mxu0
    %v6248 = vadd.f32 %v6159, %v6247
    %6249 = vmatmul.bf16.gmra.mxu0 %v5428
    %v6250 = vpop.f32.mrf.mxu0
    %v6251 = vadd.f32 %v6162, %v6250
    %v6252 = vpop.f32.mrf.mxu0
    %v6253 = vadd.f32 %v6164, %v6252
    %6254 = vmatmul.bf16.gmra.mxu0 %v5430
    %v6255 = vpop.f32.mrf.mxu0
    %v6256 = vadd.f32 %v6167, %v6255
    %v6257 = vpop.f32.mrf.mxu0
    %v6258 = vadd.f32 %v6169, %v6257
    %6259 = vmatmul.bf16.gmra.mxu0 %v5432
    %v6260 = vpop.f32.mrf.mxu0
    %v6261 = vadd.f32 %v6172, %v6260
    %v6262 = vpop.f32.mrf.mxu0
    %v6263 = vadd.f32 %v6174, %v6262
    %6264 = vmatmul.bf16.gmra.mxu0 %v5434
    %v6265 = vpop.f32.mrf.mxu0
    %v6266 = vadd.f32 %v6177, %v6265
    %v6267 = vpop.f32.mrf.mxu0
    %v6268 = vadd.f32 %v6179, %v6267
    %6269 = vmatmul.bf16.gmra.mxu0 %v5436
    %v6270 = vpop.f32.mrf.mxu0
    %v6271 = vadd.f32 %v6182, %v6270
    %v6272 = vpop.f32.mrf.mxu0
    %v6273 = vadd.f32 %v6184, %v6272
    %6274 = vmatmul.bf16.gmra.mxu0 %v5438
    %v6275 = vpop.f32.mrf.mxu0
    %v6276 = vadd.f32 %v6187, %v6275
    %v6277 = vpop.f32.mrf.mxu0
    %v6278 = vadd.f32 %v6189, %v6277
    %6279 = vmatmul.bf16.gmra.mxu0 %v5440
    %v6280 = vpop.f32.mrf.mxu0
    %v6281 = vadd.f32 %v6192, %v6280
    %v6282 = vpop.f32.mrf.mxu0
    %v6283 = vadd.f32 %v6194, %v6282
    %6284 = vmatmul.bf16.gmra.mxu0 %v5442
    %v6285 = vpop.f32.mrf.mxu0
    %v6286 = vadd.f32 %v6197, %v6285
    %v6287 = vpop.f32.mrf.mxu0
    %v6288 = vadd.f32 %v6199, %v6287
    %6289 = vmatmul.bf16.gmra.mxu0 %v5444
    %v6290 = vpop.f32.mrf.mxu0
    %v6291 = vadd.f32 %v6202, %v6290
    %v6292 = vpop.f32.mrf.mxu0
    %v6293 = vadd.f32 %v6204, %v6292
    %6294 = vmatmul.bf16.gmra.mxu0 %v5446
    %v6295 = vpop.f32.mrf.mxu0
    %v6296 = vadd.f32 %v6207, %v6295
    %v6297 = vpop.f32.mrf.mxu0
    %v6298 = vadd.f32 %v6209, %v6297
    %6299 = vmatmul.bf16.gmra.mxu0 %v5448
    %v6300 = vpop.f32.mrf.mxu0
    %v6301 = vadd.f32 %v6212, %v6300
    %v6302 = vpop.f32.mrf.mxu0
    %v6303 = vadd.f32 %v6214, %v6302
    %6304 = vmatmul.bf16.gmra.mxu0 %v5450
    %v6305 = vpop.f32.mrf.mxu0
    %v6306 = vadd.f32 %v6217, %v6305
    %v6307 = vpop.f32.mrf.mxu0
    %v6308 = vadd.f32 %v6219, %v6307
    %6309 = vmatmul.bf16.gmra.mxu0 %v5452
    %v6310 = vpop.f32.mrf.mxu0
    %v6311 = vadd.f32 %v6222, %v6310
    %v6312 = vpop.f32.mrf.mxu0
    %v6313 = vadd.f32 %v6224, %v6312
    %6314 = vdwg.mxu0
    %v6315 = vmax.f32 %v6236, 0.0
    %v6316 = vmax.f32 %v6238, 0.0
    %v6317 = vmax.f32 %v6241, 0.0
    %v6318 = vmax.f32 %v6243, 0.0
    %v6319 = vmax.f32 %v6246, 0.0
    %v6320 = vmax.f32 %v6248, 0.0
    %v6321 = vmax.f32 %v6251, 0.0
    %v6322 = vmax.f32 %v6253, 0.0
    %v6323 = vmax.f32 %v6256, 0.0
    %v6324 = vmax.f32 %v6258, 0.0
    %v6325 = vmax.f32 %v6261, 0.0
    %v6326 = vmax.f32 %v6263, 0.0
    %v6327 = vmax.f32 %v6266, 0.0
    %v6328 = vmax.f32 %v6268, 0.0
    %v6329 = vmax.f32 %v6271, 0.0
    %v6330 = vmax.f32 %v6273, 0.0
    %v6331 = vmax.f32 %v6276, 0.0
    %v6332 = vmax.f32 %v6278, 0.0
    %v6333 = vmax.f32 %v6281, 0.0
    %v6334 = vmax.f32 %v6283, 0.0
    %v6335 = vmax.f32 %v6286, 0.0
    %v6336 = vmax.f32 %v6288, 0.0
    %v6337 = vmax.f32 %v6291, 0.0
    %v6338 = vmax.f32 %v6293, 0.0
    %v6339 = vmax.f32 %v6296, 0.0
    %v6340 = vmax.f32 %v6298, 0.0
    %v6341 = vmax.f32 %v6301, 0.0
    %v6342 = vmax.f32 %v6303, 0.0
    %v6343 = vmax.f32 %v6306, 0.0
    %v6344 = vmax.f32 %v6308, 0.0
    %v6345 = vmax.f32 %v6311, 0.0
    %v6346 = vmax.f32 %v6313, 0.0
    %v6347 = vpack.c.bf16 %v5882, %v5880
    %v6348 = vpack.c.bf16 %v6060, %v6058
    %v6349 = vpack.c.bf16 %v5887, %v5885
    %v6350 = vpack.c.bf16 %v6065, %v6063
    %v6351 = vpack.c.bf16 %v5892, %v5890
    %v6352 = vpack.c.bf16 %v6070, %v6068
    %v6353 = vpack.c.bf16 %v5897, %v5895
    %v6354 = vpack.c.bf16 %v6075, %v6073
    %v6355 = vpack.c.bf16 %v5902, %v5900
    %v6356 = vpack.c.bf16 %v6080, %v6078
    %v6357 = vpack.c.bf16 %v5907, %v5905
    %v6358 = vpack.c.bf16 %v6085, %v6083
    %v6359 = vpack.c.bf16 %v5912, %v5910
    %v6360 = vpack.c.bf16 %v6090, %v6088
    %v6361 = vpack.c.bf16 %v5917, %v5915
    %v6362 = vpack.c.bf16 %v6095, %v6093
    %v6363 = vpack.c.bf16 %v5922, %v5920
    %v6364 = vpack.c.bf16 %v6100, %v6098
    %v6365 = vpack.c.bf16 %v5927, %v5925
    %v6366 = vpack.c.bf16 %v6105, %v6103
    %v6367 = vpack.c.bf16 %v5932, %v5930
    %v6368 = vpack.c.bf16 %v6110, %v6108
    %v6369 = vpack.c.bf16 %v5937, %v5935
    %v6370 = vpack.c.bf16 %v6115, %v6113
    %v6371 = vpack.c.bf16 %v5942, %v5940
    %v6372 = vpack.c.bf16 %v6120, %v6118
    %v6373 = vpack.c.bf16 %v5947, %v5945
    %v6374 = vpack.c.bf16 %v6125, %v6123
    %v6375 = vpack.c.bf16 %v5952, %v5950
    %v6376 = vpack.c.bf16 %v6130, %v6128
    %v6377 = vpack.c.bf16 %v5957, %v5955
    %v6378 = vpack.c.bf16 %v6135, %v6133
    %v6379 = vld [vmem:[#allocation10] sm:$0xf]
    %v6380 = vld [vmem:[#allocation10 + $0x4] sm:$0xf]
    %v6381 = vld [vmem:[#allocation10 + $0x8] sm:$0xf]
    %v6382 = vld [vmem:[#allocation10 + $0xc] sm:$0xf]
    %v6383 = vld [vmem:[#allocation10 + $0x10] sm:$0xf]
    %v6384 = vld [vmem:[#allocation10 + $0x14] sm:$0xf]
    %v6385 = vld [vmem:[#allocation10 + $0x18] sm:$0xf]
    %v6386 = vld [vmem:[#allocation10 + $0x1c] sm:$0xf]
    %v6387 = vld [vmem:[#allocation10 + $0x20] sm:$0xf]
    %v6388 = vld [vmem:[#allocation10 + $0x24] sm:$0xf]
    %v6389 = vld [vmem:[#allocation10 + $0x28] sm:$0xf]
    %v6390 = vld [vmem:[#allocation10 + $0x2c] sm:$0xf]
    %v6391 = vld [vmem:[#allocation10 + $0x30] sm:$0xf]
    %v6392 = vld [vmem:[#allocation10 + $0x34] sm:$0xf]
    %v6393 = vld [vmem:[#allocation10 + $0x38] sm:$0xf]
    %v6394 = vld [vmem:[#allocation10 + $0x3c] sm:$0xf]
    %v6395 = vld [vmem:[#allocation10 + $0x40] sm:$0xf]
    %v6396 = vld [vmem:[#allocation10 + $0x44] sm:$0xf]
    %v6397 = vld [vmem:[#allocation10 + $0x48] sm:$0xf]
    %v6398 = vld [vmem:[#allocation10 + $0x4c] sm:$0xf]
    %v6399 = vld [vmem:[#allocation10 + $0x50] sm:$0xf]
    %v6400 = vld [vmem:[#allocation10 + $0x54] sm:$0xf]
    %v6401 = vld [vmem:[#allocation10 + $0x58] sm:$0xf]
    %v6402 = vld [vmem:[#allocation10 + $0x5c] sm:$0xf]
    %v6403 = vld [vmem:[#allocation10 + $0x60] sm:$0xf]
    %v6404 = vld [vmem:[#allocation10 + $0x64] sm:$0xf]
    %v6405 = vld [vmem:[#allocation10 + $0x68] sm:$0xf]
    %v6406 = vld [vmem:[#allocation10 + $0x6c] sm:$0xf]
    %v6407 = vld [vmem:[#allocation10 + $0x70] sm:$0xf]
    %v6408 = vld [vmem:[#allocation10 + $0x74] sm:$0xf]
    %v6409 = vld [vmem:[#allocation10 + $0x78] sm:$0xf]
    %v6410 = vld [vmem:[#allocation10 + $0x7c] sm:$0xf]
    %v6411 = vld [vmem:[%s20] sm:$0xf]
    %v6412 = vld [vmem:[%s20 + $0x4] sm:$0xf]
    %6429 = vrot.lane.b32.xlu0 %v204, 96
    %v6430 = vpop.permute.xlu0 %6429
    %6431 = vrot.lane.b32.xlu0 %v205, 96
    %v6432 = vpop.permute.xlu0 %6431
    %6433 = vrot.lane.b32.xlu0 %v206, 96
    %v6434 = vpop.permute.xlu0 %6433
    %6435 = vrot.lane.b32.xlu0 %v207, 96
    %v6436 = vpop.permute.xlu0 %6435
    %6437 = vrot.lane.b32.xlu0 %v208, 96
    %v6438 = vpop.permute.xlu0 %6437
    %6439 = vrot.lane.b32.xlu0 %v209, 96
    %v6440 = vpop.permute.xlu0 %6439
    %6441 = vrot.lane.b32.xlu0 %v210, 96
    %v6442 = vpop.permute.xlu0 %6441
    %6443 = vrot.lane.b32.xlu0 %v211, 96
    %v6444 = vpop.permute.xlu0 %6443
    %6445 = vrot.lane.b32.xlu0 %v212, 96
    %v6446 = vpop.permute.xlu0 %6445
    %6447 = vrot.lane.b32.xlu0 %v213, 96
    %v6448 = vpop.permute.xlu0 %6447
    %6449 = vrot.lane.b32.xlu0 %v214, 96
    %v6450 = vpop.permute.xlu0 %6449
    %6451 = vrot.lane.b32.xlu0 %v215, 96
    %v6452 = vpop.permute.xlu0 %6451
    %6453 = vrot.lane.b32.xlu0 %v216, 96
    %v6454 = vpop.permute.xlu0 %6453
    %6455 = vrot.lane.b32.xlu0 %v217, 96
    %v6456 = vpop.permute.xlu0 %6455
    %6457 = vrot.lane.b32.xlu0 %v218, 96
    %v6458 = vpop.permute.xlu0 %6457
    %6459 = vrot.lane.b32.xlu0 %v219, 96
    %v6460 = vpop.permute.xlu0 %6459
    %v6463 = vunpack.c.l.b16 %v6411
    %v6464 = vunpack.c.l.b16 %v6412
    %v6465 = vpack.c.b16 %v6464, %v6463
    %vm6467 = vcmask 130048
    %v6469 = vsel %vm6467, %v6430, 0
    %v6472 = vsel %vm6467, %v6432, 0
    %v6475 = vsel %vm6467, %v6434, 0
    %v6478 = vsel %vm6467, %v6436, 0
    %v6481 = vsel %vm6467, %v6438, 0
    %v6484 = vsel %vm6467, %v6440, 0
    %v6487 = vsel %vm6467, %v6442, 0
    %v6490 = vsel %vm6467, %v6444, 0
    %v6493 = vsel %vm6467, %v6446, 0
    %v6496 = vsel %vm6467, %v6448, 0
    %v6499 = vsel %vm6467, %v6450, 0
    %v6502 = vsel %vm6467, %v6452, 0
    %v6505 = vsel %vm6467, %v6454, 0
    %v6508 = vsel %vm6467, %v6456, 0
    %v6511 = vsel %vm6467, %v6458, 0
    %v6514 = vsel %vm6467, %v6460, 0
    %6516 = vmatpush.bf16.msra.mxu0 0
    %6517 = vmatpush.bf16.msra.mxu0 0
    %6518 = vmatpush.bf16.msra.mxu0 0
    %6519 = vmatpush.bf16.msra.mxu0 0
    %6520 = vmatpush.bf16.msra.mxu0 0
    %6521 = vmatpush.bf16.msra.mxu0 0
    %6522 = vmatpush.bf16.msra.mxu0 0
    %6523 = vmatpush.bf16.msra.mxu0 %v6465
    %6524 = vmatmul.bf16.gmra.mxu0 %v6469
    %v6525 = vpop.f32.mrf.mxu0
    %v6526 = vadd.f32 0.0, %v6525
    %v6527 = vpop.f32.mrf.mxu0
    %v6528 = vadd.f32 0.0, %v6527
    %6529 = vmatmul.bf16.gmra.mxu0 %v6472
    %v6530 = vpop.f32.mrf.mxu0
    %v6531 = vadd.f32 0.0, %v6530
    %v6532 = vpop.f32.mrf.mxu0
    %v6533 = vadd.f32 0.0, %v6532
    %6534 = vmatmul.bf16.gmra.mxu0 %v6475
    %v6535 = vpop.f32.mrf.mxu0
    %v6536 = vadd.f32 0.0, %v6535
    %v6537 = vpop.f32.mrf.mxu0
    %v6538 = vadd.f32 0.0, %v6537
    %6539 = vmatmul.bf16.gmra.mxu0 %v6478
    %v6540 = vpop.f32.mrf.mxu0
    %v6541 = vadd.f32 0.0, %v6540
    %v6542 = vpop.f32.mrf.mxu0
    %v6543 = vadd.f32 0.0, %v6542
    %6544 = vmatmul.bf16.gmra.mxu0 %v6481
    %v6545 = vpop.f32.mrf.mxu0
    %v6546 = vadd.f32 0.0, %v6545
    %v6547 = vpop.f32.mrf.mxu0
    %v6548 = vadd.f32 0.0, %v6547
    %6549 = vmatmul.bf16.gmra.mxu0 %v6484
    %v6550 = vpop.f32.mrf.mxu0
    %v6551 = vadd.f32 0.0, %v6550
    %v6552 = vpop.f32.mrf.mxu0
    %v6553 = vadd.f32 0.0, %v6552
    %6554 = vmatmul.bf16.gmra.mxu0 %v6487
    %v6555 = vpop.f32.mrf.mxu0
    %v6556 = vadd.f32 0.0, %v6555
    %v6557 = vpop.f32.mrf.mxu0
    %v6558 = vadd.f32 0.0, %v6557
    %6559 = vmatmul.bf16.gmra.mxu0 %v6490
    %v6560 = vpop.f32.mrf.mxu0
    %v6561 = vadd.f32 0.0, %v6560
    %v6562 = vpop.f32.mrf.mxu0
    %v6563 = vadd.f32 0.0, %v6562
    %6564 = vmatmul.bf16.gmra.mxu0 %v6493
    %v6565 = vpop.f32.mrf.mxu0
    %v6566 = vadd.f32 0.0, %v6565
    %v6567 = vpop.f32.mrf.mxu0
    %v6568 = vadd.f32 0.0, %v6567
    %6569 = vmatmul.bf16.gmra.mxu0 %v6496
    %v6570 = vpop.f32.mrf.mxu0
    %v6571 = vadd.f32 0.0, %v6570
    %v6572 = vpop.f32.mrf.mxu0
    %v6573 = vadd.f32 0.0, %v6572
    %6574 = vmatmul.bf16.gmra.mxu0 %v6499
    %v6575 = vpop.f32.mrf.mxu0
    %v6576 = vadd.f32 0.0, %v6575
    %v6577 = vpop.f32.mrf.mxu0
    %v6578 = vadd.f32 0.0, %v6577
    %6579 = vmatmul.bf16.gmra.mxu0 %v6502
    %v6580 = vpop.f32.mrf.mxu0
    %v6581 = vadd.f32 0.0, %v6580
    %v6582 = vpop.f32.mrf.mxu0
    %v6583 = vadd.f32 0.0, %v6582
    %6584 = vmatmul.bf16.gmra.mxu0 %v6505
    %v6585 = vpop.f32.mrf.mxu0
    %v6586 = vadd.f32 0.0, %v6585
    %v6587 = vpop.f32.mrf.mxu0
    %v6588 = vadd.f32 0.0, %v6587
    %6589 = vmatmul.bf16.gmra.mxu0 %v6508
    %v6590 = vpop.f32.mrf.mxu0
    %v6591 = vadd.f32 0.0, %v6590
    %v6592 = vpop.f32.mrf.mxu0
    %v6593 = vadd.f32 0.0, %v6592
    %6594 = vmatmul.bf16.gmra.mxu0 %v6511
    %v6595 = vpop.f32.mrf.mxu0
    %v6596 = vadd.f32 0.0, %v6595
    %v6597 = vpop.f32.mrf.mxu0
    %v6598 = vadd.f32 0.0, %v6597
    %6599 = vmatmul.bf16.gmra.mxu0 %v6514
    %v6600 = vpop.f32.mrf.mxu0
    %v6601 = vadd.f32 0.0, %v6600
    %v6602 = vpop.f32.mrf.mxu0
    %v6603 = vadd.f32 0.0, %v6602
    %6604 = vdwg.mxu0
    %v6637 = vunpack.c.l.b16 %v6379
    %v6638 = vunpack.c.l.b16 %v6380
    %v6639 = vunpack.c.l.b16 %v6381
    %v6640 = vunpack.c.l.b16 %v6382
    %v6641 = vunpack.c.l.b16 %v6383
    %v6642 = vunpack.c.l.b16 %v6384
    %v6643 = vunpack.c.l.b16 %v6385
    %v6644 = vunpack.c.l.b16 %v6386
    %v6645 = vunpack.c.l.b16 %v6387
    %v6646 = vunpack.c.l.b16 %v6388
    %v6647 = vunpack.c.l.b16 %v6389
    %v6648 = vunpack.c.l.b16 %v6390
    %v6649 = vunpack.c.l.b16 %v6391
    %v6650 = vunpack.c.l.b16 %v6392
    %v6651 = vunpack.c.l.b16 %v6393
    %v6652 = vunpack.c.l.b16 %v6394
    %v6653 = vunpack.c.l.b16 %v6395
    %v6654 = vunpack.c.l.b16 %v6396
    %v6655 = vunpack.c.l.b16 %v6397
    %v6656 = vunpack.c.l.b16 %v6398
    %v6657 = vunpack.c.l.b16 %v6399
    %v6658 = vunpack.c.l.b16 %v6400
    %v6659 = vunpack.c.l.b16 %v6401
    %v6660 = vunpack.c.l.b16 %v6402
    %v6661 = vunpack.c.l.b16 %v6403
    %v6662 = vunpack.c.l.b16 %v6404
    %v6663 = vunpack.c.l.b16 %v6405
    %v6664 = vunpack.c.l.b16 %v6406
    %v6665 = vunpack.c.l.b16 %v6407
    %v6666 = vunpack.c.l.b16 %v6408
    %v6667 = vunpack.c.l.b16 %v6409
    %v6668 = vunpack.c.l.b16 %v6410
    %v6669 = vpack.c.b16 %v6638, %v6637
    %v6670 = vpack.c.b16 %v6640, %v6639
    %v6671 = vpack.c.b16 %v6642, %v6641
    %v6672 = vpack.c.b16 %v6644, %v6643
    %v6673 = vpack.c.b16 %v6646, %v6645
    %v6674 = vpack.c.b16 %v6648, %v6647
    %v6675 = vpack.c.b16 %v6650, %v6649
    %v6676 = vpack.c.b16 %v6652, %v6651
    %v6677 = vpack.c.b16 %v6654, %v6653
    %v6678 = vpack.c.b16 %v6656, %v6655
    %v6679 = vpack.c.b16 %v6658, %v6657
    %v6680 = vpack.c.b16 %v6660, %v6659
    %v6681 = vpack.c.b16 %v6662, %v6661
    %v6682 = vpack.c.b16 %v6664, %v6663
    %v6683 = vpack.c.b16 %v6666, %v6665
    %v6684 = vpack.c.b16 %v6668, %v6667
    %6701 = vmatpush.bf16.msra.mxu0 %v6676
    %6702 = vmatpush.bf16.msra.mxu0 %v6675
    %6703 = vmatpush.bf16.msra.mxu0 %v6674
    %6704 = vmatpush.bf16.msra.mxu0 %v6673
    %6705 = vmatpush.bf16.msra.mxu0 %v6672
    %6706 = vmatpush.bf16.msra.mxu0 %v6671
    %6707 = vmatpush.bf16.msra.mxu0 %v6670
    %6708 = vmatpush.bf16.msra.mxu0 %v6669
    %6709 = vmatmul.bf16.gmra.mxu0 %v6347
    %v6710 = vpop.f32.mrf.mxu0
    %v6711 = vadd.f32 %v6526, %v6710
    %v6712 = vpop.f32.mrf.mxu0
    %v6713 = vadd.f32 %v6528, %v6712
    %6714 = vmatmul.bf16.gmra.mxu0 %v6349
    %v6715 = vpop.f32.mrf.mxu0
    %v6716 = vadd.f32 %v6531, %v6715
    %v6717 = vpop.f32.mrf.mxu0
    %v6718 = vadd.f32 %v6533, %v6717
    %6719 = vmatmul.bf16.gmra.mxu0 %v6351
    %v6720 = vpop.f32.mrf.mxu0
    %v6721 = vadd.f32 %v6536, %v6720
    %v6722 = vpop.f32.mrf.mxu0
    %v6723 = vadd.f32 %v6538, %v6722
    %6724 = vmatmul.bf16.gmra.mxu0 %v6353
    %v6725 = vpop.f32.mrf.mxu0
    %v6726 = vadd.f32 %v6541, %v6725
    %v6727 = vpop.f32.mrf.mxu0
    %v6728 = vadd.f32 %v6543, %v6727
    %6729 = vmatmul.bf16.gmra.mxu0 %v6355
    %v6730 = vpop.f32.mrf.mxu0
    %v6731 = vadd.f32 %v6546, %v6730
    %v6732 = vpop.f32.mrf.mxu0
    %v6733 = vadd.f32 %v6548, %v6732
    %6734 = vmatmul.bf16.gmra.mxu0 %v6357
    %v6735 = vpop.f32.mrf.mxu0
    %v6736 = vadd.f32 %v6551, %v6735
    %v6737 = vpop.f32.mrf.mxu0
    %v6738 = vadd.f32 %v6553, %v6737
    %6739 = vmatmul.bf16.gmra.mxu0 %v6359
    %v6740 = vpop.f32.mrf.mxu0
    %v6741 = vadd.f32 %v6556, %v6740
    %v6742 = vpop.f32.mrf.mxu0
    %v6743 = vadd.f32 %v6558, %v6742
    %6744 = vmatmul.bf16.gmra.mxu0 %v6361
    %v6745 = vpop.f32.mrf.mxu0
    %v6746 = vadd.f32 %v6561, %v6745
    %v6747 = vpop.f32.mrf.mxu0
    %v6748 = vadd.f32 %v6563, %v6747
    %6749 = vmatmul.bf16.gmra.mxu0 %v6363
    %v6750 = vpop.f32.mrf.mxu0
    %v6751 = vadd.f32 %v6566, %v6750
    %v6752 = vpop.f32.mrf.mxu0
    %v6753 = vadd.f32 %v6568, %v6752
    %6754 = vmatmul.bf16.gmra.mxu0 %v6365
    %v6755 = vpop.f32.mrf.mxu0
    %v6756 = vadd.f32 %v6571, %v6755
    %v6757 = vpop.f32.mrf.mxu0
    %v6758 = vadd.f32 %v6573, %v6757
    %6759 = vmatmul.bf16.gmra.mxu0 %v6367
    %v6760 = vpop.f32.mrf.mxu0
    %v6761 = vadd.f32 %v6576, %v6760
    %v6762 = vpop.f32.mrf.mxu0
    %v6763 = vadd.f32 %v6578, %v6762
    %6764 = vmatmul.bf16.gmra.mxu0 %v6369
    %v6765 = vpop.f32.mrf.mxu0
    %v6766 = vadd.f32 %v6581, %v6765
    %v6767 = vpop.f32.mrf.mxu0
    %v6768 = vadd.f32 %v6583, %v6767
    %6769 = vmatmul.bf16.gmra.mxu0 %v6371
    %v6770 = vpop.f32.mrf.mxu0
    %v6771 = vadd.f32 %v6586, %v6770
    %v6772 = vpop.f32.mrf.mxu0
    %v6773 = vadd.f32 %v6588, %v6772
    %6774 = vmatmul.bf16.gmra.mxu0 %v6373
    %v6775 = vpop.f32.mrf.mxu0
    %v6776 = vadd.f32 %v6591, %v6775
    %v6777 = vpop.f32.mrf.mxu0
    %v6778 = vadd.f32 %v6593, %v6777
    %6779 = vmatmul.bf16.gmra.mxu0 %v6375
    %v6780 = vpop.f32.mrf.mxu0
    %v6781 = vadd.f32 %v6596, %v6780
    %v6782 = vpop.f32.mrf.mxu0
    %v6783 = vadd.f32 %v6598, %v6782
    %6784 = vmatmul.bf16.gmra.mxu0 %v6377
    %v6785 = vpop.f32.mrf.mxu0
    %v6786 = vadd.f32 %v6601, %v6785
    %v6787 = vpop.f32.mrf.mxu0
    %v6788 = vadd.f32 %v6603, %v6787
    %6789 = vdwg.mxu0
    %6790 = vmatpush.bf16.msra.mxu0 %v6684
    %6791 = vmatpush.bf16.msra.mxu0 %v6683
    %6792 = vmatpush.bf16.msra.mxu0 %v6682
    %6793 = vmatpush.bf16.msra.mxu0 %v6681
    %6794 = vmatpush.bf16.msra.mxu0 %v6680
    %6795 = vmatpush.bf16.msra.mxu0 %v6679
    %6796 = vmatpush.bf16.msra.mxu0 %v6678
    %6797 = vmatpush.bf16.msra.mxu0 %v6677
    %6798 = vmatmul.bf16.gmra.mxu0 %v6348
    %v6799 = vpop.f32.mrf.mxu0
    %v6800 = vadd.f32 %v6711, %v6799
    %v6801 = vpop.f32.mrf.mxu0
    %v6802 = vadd.f32 %v6713, %v6801
    %6803 = vmatmul.bf16.gmra.mxu0 %v6350
    %v6804 = vpop.f32.mrf.mxu0
    %v6805 = vadd.f32 %v6716, %v6804
    %v6806 = vpop.f32.mrf.mxu0
    %v6807 = vadd.f32 %v6718, %v6806
    %6808 = vmatmul.bf16.gmra.mxu0 %v6352
    %v6809 = vpop.f32.mrf.mxu0
    %v6810 = vadd.f32 %v6721, %v6809
    %v6811 = vpop.f32.mrf.mxu0
    %v6812 = vadd.f32 %v6723, %v6811
    %6813 = vmatmul.bf16.gmra.mxu0 %v6354
    %v6814 = vpop.f32.mrf.mxu0
    %v6815 = vadd.f32 %v6726, %v6814
    %v6816 = vpop.f32.mrf.mxu0
    %v6817 = vadd.f32 %v6728, %v6816
    %6818 = vmatmul.bf16.gmra.mxu0 %v6356
    %v6819 = vpop.f32.mrf.mxu0
    %v6820 = vadd.f32 %v6731, %v6819
    %v6821 = vpop.f32.mrf.mxu0
    %v6822 = vadd.f32 %v6733, %v6821
    %6823 = vmatmul.bf16.gmra.mxu0 %v6358
    %v6824 = vpop.f32.mrf.mxu0
    %v6825 = vadd.f32 %v6736, %v6824
    %v6826 = vpop.f32.mrf.mxu0
    %v6827 = vadd.f32 %v6738, %v6826
    %6828 = vmatmul.bf16.gmra.mxu0 %v6360
    %v6829 = vpop.f32.mrf.mxu0
    %v6830 = vadd.f32 %v6741, %v6829
    %v6831 = vpop.f32.mrf.mxu0
    %v6832 = vadd.f32 %v6743, %v6831
    %6833 = vmatmul.bf16.gmra.mxu0 %v6362
    %v6834 = vpop.f32.mrf.mxu0
    %v6835 = vadd.f32 %v6746, %v6834
    %v6836 = vpop.f32.mrf.mxu0
    %v6837 = vadd.f32 %v6748, %v6836
    %6838 = vmatmul.bf16.gmra.mxu0 %v6364
    %v6839 = vpop.f32.mrf.mxu0
    %v6840 = vadd.f32 %v6751, %v6839
    %v6841 = vpop.f32.mrf.mxu0
    %v6842 = vadd.f32 %v6753, %v6841
    %6843 = vmatmul.bf16.gmra.mxu0 %v6366
    %v6844 = vpop.f32.mrf.mxu0
    %v6845 = vadd.f32 %v6756, %v6844
    %v6846 = vpop.f32.mrf.mxu0
    %v6847 = vadd.f32 %v6758, %v6846
    %6848 = vmatmul.bf16.gmra.mxu0 %v6368
    %v6849 = vpop.f32.mrf.mxu0
    %v6850 = vadd.f32 %v6761, %v6849
    %v6851 = vpop.f32.mrf.mxu0
    %v6852 = vadd.f32 %v6763, %v6851
    %6853 = vmatmul.bf16.gmra.mxu0 %v6370
    %v6854 = vpop.f32.mrf.mxu0
    %v6855 = vadd.f32 %v6766, %v6854
    %v6856 = vpop.f32.mrf.mxu0
    %v6857 = vadd.f32 %v6768, %v6856
    %6858 = vmatmul.bf16.gmra.mxu0 %v6372
    %v6859 = vpop.f32.mrf.mxu0
    %v6860 = vadd.f32 %v6771, %v6859
    %v6861 = vpop.f32.mrf.mxu0
    %v6862 = vadd.f32 %v6773, %v6861
    %6863 = vmatmul.bf16.gmra.mxu0 %v6374
    %v6864 = vpop.f32.mrf.mxu0
    %v6865 = vadd.f32 %v6776, %v6864
    %v6866 = vpop.f32.mrf.mxu0
    %v6867 = vadd.f32 %v6778, %v6866
    %6868 = vmatmul.bf16.gmra.mxu0 %v6376
    %v6869 = vpop.f32.mrf.mxu0
    %v6870 = vadd.f32 %v6781, %v6869
    %v6871 = vpop.f32.mrf.mxu0
    %v6872 = vadd.f32 %v6783, %v6871
    %6873 = vmatmul.bf16.gmra.mxu0 %v6378
    %v6874 = vpop.f32.mrf.mxu0
    %v6875 = vadd.f32 %v6786, %v6874
    %v6876 = vpop.f32.mrf.mxu0
    %v6877 = vadd.f32 %v6788, %v6876
    %6878 = vdwg.mxu0
    %v6879 = vld [vmem:[%s21] sm:$0x1]
    %v6881 = vperm.slane %v6879, 0
    %v6883 = vadd.f32 %v6800, %v6881
    %v6884 = vadd.f32 %v6802, %v6881
    %v6885 = vadd.f32 %v6805, %v6881
    %v6886 = vadd.f32 %v6807, %v6881
    %v6887 = vadd.f32 %v6810, %v6881
    %v6888 = vadd.f32 %v6812, %v6881
    %v6889 = vadd.f32 %v6815, %v6881
    %v6890 = vadd.f32 %v6817, %v6881
    %v6891 = vadd.f32 %v6820, %v6881
    %v6892 = vadd.f32 %v6822, %v6881
    %v6893 = vadd.f32 %v6825, %v6881
    %v6894 = vadd.f32 %v6827, %v6881
    %v6895 = vadd.f32 %v6830, %v6881
    %v6896 = vadd.f32 %v6832, %v6881
    %v6897 = vadd.f32 %v6835, %v6881
    %v6898 = vadd.f32 %v6837, %v6881
    %v6899 = vadd.f32 %v6840, %v6881
    %v6900 = vadd.f32 %v6842, %v6881
    %v6901 = vadd.f32 %v6845, %v6881
    %v6902 = vadd.f32 %v6847, %v6881
    %v6903 = vadd.f32 %v6850, %v6881
    %v6904 = vadd.f32 %v6852, %v6881
    %v6905 = vadd.f32 %v6855, %v6881
    %v6906 = vadd.f32 %v6857, %v6881
    %v6907 = vadd.f32 %v6860, %v6881
    %v6908 = vadd.f32 %v6862, %v6881
    %v6909 = vadd.f32 %v6865, %v6881
    %v6910 = vadd.f32 %v6867, %v6881
    %v6911 = vadd.f32 %v6870, %v6881
    %v6912 = vadd.f32 %v6872, %v6881
    %v6913 = vadd.f32 %v6875, %v6881
    %v6914 = vadd.f32 %v6877, %v6881
    %v6915 = vmax.f32 %v6883, 0.0
    %v6916 = vmax.f32 %v6884, 0.0
    %v6917 = vmax.f32 %v6885, 0.0
    %v6918 = vmax.f32 %v6886, 0.0
    %v6919 = vmax.f32 %v6887, 0.0
    %v6920 = vmax.f32 %v6888, 0.0
    %v6921 = vmax.f32 %v6889, 0.0
    %v6922 = vmax.f32 %v6890, 0.0
    %v6923 = vmax.f32 %v6891, 0.0
    %v6924 = vmax.f32 %v6892, 0.0
    %v6925 = vmax.f32 %v6893, 0.0
    %v6926 = vmax.f32 %v6894, 0.0
    %v6927 = vmax.f32 %v6895, 0.0
    %v6928 = vmax.f32 %v6896, 0.0
    %v6929 = vmax.f32 %v6897, 0.0
    %v6930 = vmax.f32 %v6898, 0.0
    %v6931 = vmax.f32 %v6899, 0.0
    %v6932 = vmax.f32 %v6900, 0.0
    %v6933 = vmax.f32 %v6901, 0.0
    %v6934 = vmax.f32 %v6902, 0.0
    %v6935 = vmax.f32 %v6903, 0.0
    %v6936 = vmax.f32 %v6904, 0.0
    %v6937 = vmax.f32 %v6905, 0.0
    %v6938 = vmax.f32 %v6906, 0.0
    %v6939 = vmax.f32 %v6907, 0.0
    %v6940 = vmax.f32 %v6908, 0.0
    %v6941 = vmax.f32 %v6909, 0.0
    %v6942 = vmax.f32 %v6910, 0.0
    %v6943 = vmax.f32 %v6911, 0.0
    %v6944 = vmax.f32 %v6912, 0.0
    %v6945 = vmax.f32 %v6913, 0.0
    %v6946 = vmax.f32 %v6914, 0.0
    %v6947 = vpack.c.bf16 %v6916, %v6915
    %v6948 = vpack.c.bf16 %v6918, %v6917
    %v6949 = vpack.c.bf16 %v6920, %v6919
    %v6950 = vpack.c.bf16 %v6922, %v6921
    %v6951 = vpack.c.bf16 %v6924, %v6923
    %v6952 = vpack.c.bf16 %v6926, %v6925
    %v6953 = vpack.c.bf16 %v6928, %v6927
    %v6954 = vpack.c.bf16 %v6930, %v6929
    %v6955 = vpack.c.bf16 %v6932, %v6931
    %v6956 = vpack.c.bf16 %v6934, %v6933
    %v6957 = vpack.c.bf16 %v6936, %v6935
    %v6958 = vpack.c.bf16 %v6938, %v6937
    %v6959 = vpack.c.bf16 %v6940, %v6939
    %v6960 = vpack.c.bf16 %v6942, %v6941
    %v6961 = vpack.c.bf16 %v6944, %v6943
    %v6962 = vpack.c.bf16 %v6946, %v6945
    %v6963 = vld [vmem:[%s22] sm:$0xf]
    %v6964 = vld [vmem:[%s22 + $0x4] sm:$0xf]
    %v6965 = vld [vmem:[%s22 + $0x8] sm:$0xf]
    %v6966 = vld [vmem:[%s22 + $0xc] sm:$0xf]
    %v6967 = vld [vmem:[%s22 + $0x10] sm:$0xf]
    %v6968 = vld [vmem:[%s22 + $0x14] sm:$0xf]
    %v6969 = vld [vmem:[%s22 + $0x18] sm:$0xf]
    %v6970 = vld [vmem:[%s22 + $0x1c] sm:$0xf]
    %v6971 = vld [vmem:[%s22 + $0x20] sm:$0xf]
    %v6972 = vld [vmem:[%s22 + $0x24] sm:$0xf]
    %v6973 = vld [vmem:[%s22 + $0x28] sm:$0xf]
    %v6974 = vld [vmem:[%s22 + $0x2c] sm:$0xf]
    %v6975 = vld [vmem:[%s22 + $0x30] sm:$0xf]
    %v6976 = vld [vmem:[%s22 + $0x34] sm:$0xf]
    %v6977 = vld [vmem:[%s22 + $0x38] sm:$0xf]
    %v6978 = vld [vmem:[%s22 + $0x3c] sm:$0xf]
    %v6979 = vld [vmem:[%s23] sm:$0x1]
    %v6981 = vperm.slane %v6979, 0
    %v6999 = vunpack.c.l.b16 %v6963
    %v7000 = vunpack.c.l.b16 %v6964
    %v7001 = vunpack.c.l.b16 %v6965
    %v7002 = vunpack.c.l.b16 %v6966
    %v7003 = vunpack.c.l.b16 %v6967
    %v7004 = vunpack.c.l.b16 %v6968
    %v7005 = vunpack.c.l.b16 %v6969
    %v7006 = vunpack.c.l.b16 %v6970
    %v7007 = vunpack.c.l.b16 %v6971
    %v7008 = vunpack.c.l.b16 %v6972
    %v7009 = vunpack.c.l.b16 %v6973
    %v7010 = vunpack.c.l.b16 %v6974
    %v7011 = vunpack.c.l.b16 %v6975
    %v7012 = vunpack.c.l.b16 %v6976
    %v7013 = vunpack.c.l.b16 %v6977
    %v7014 = vunpack.c.l.b16 %v6978
    %v7015 = vpack.c.b16 %v7000, %v6999
    %v7016 = vpack.c.b16 %v7002, %v7001
    %v7017 = vpack.c.b16 %v7004, %v7003
    %v7018 = vpack.c.b16 %v7006, %v7005
    %v7019 = vpack.c.b16 %v7008, %v7007
    %v7020 = vpack.c.b16 %v7010, %v7009
    %v7021 = vpack.c.b16 %v7012, %v7011
    %v7022 = vpack.c.b16 %v7014, %v7013
    %7031 = vmatpush.bf16.msra.mxu0 %v7022
    %7032 = vmatpush.bf16.msra.mxu0 %v7021
    %7033 = vmatpush.bf16.msra.mxu0 %v7020
    %7034 = vmatpush.bf16.msra.mxu0 %v7019
    %7035 = vmatpush.bf16.msra.mxu0 %v7018
    %7036 = vmatpush.bf16.msra.mxu0 %v7017
    %7037 = vmatpush.bf16.msra.mxu0 %v7016
    %7038 = vmatpush.bf16.msra.mxu0 %v7015
    %7039 = vmatmul.bf16.gmra.mxu0 %v6947
    %v7040 = vpop.f32.mrf.mxu0
    %v7041 = vadd.f32 %v6981, %v7040
    %v7042 = vpop.f32.mrf.mxu0
    %v7043 = vadd.f32 %v6981, %v7042
    %7044 = vmatmul.bf16.gmra.mxu0 %v6948
    %v7045 = vpop.f32.mrf.mxu0
    %v7046 = vadd.f32 %v6981, %v7045
    %v7047 = vpop.f32.mrf.mxu0
    %v7048 = vadd.f32 %v6981, %v7047
    %7049 = vmatmul.bf16.gmra.mxu0 %v6949
    %v7050 = vpop.f32.mrf.mxu0
    %v7051 = vadd.f32 %v6981, %v7050
    %v7052 = vpop.f32.mrf.mxu0
    %v7053 = vadd.f32 %v6981, %v7052
    %7054 = vmatmul.bf16.gmra.mxu0 %v6950
    %v7055 = vpop.f32.mrf.mxu0
    %v7056 = vadd.f32 %v6981, %v7055
    %v7057 = vpop.f32.mrf.mxu0
    %v7058 = vadd.f32 %v6981, %v7057
    %7059 = vmatmul.bf16.gmra.mxu0 %v6951
    %v7060 = vpop.f32.mrf.mxu0
    %v7061 = vadd.f32 %v6981, %v7060
    %v7062 = vpop.f32.mrf.mxu0
    %v7063 = vadd.f32 %v6981, %v7062
    %7064 = vmatmul.bf16.gmra.mxu0 %v6952
    %v7065 = vpop.f32.mrf.mxu0
    %v7066 = vadd.f32 %v6981, %v7065
    %v7067 = vpop.f32.mrf.mxu0
    %v7068 = vadd.f32 %v6981, %v7067
    %7069 = vmatmul.bf16.gmra.mxu0 %v6953
    %v7070 = vpop.f32.mrf.mxu0
    %v7071 = vadd.f32 %v6981, %v7070
    %v7072 = vpop.f32.mrf.mxu0
    %v7073 = vadd.f32 %v6981, %v7072
    %7074 = vmatmul.bf16.gmra.mxu0 %v6954
    %v7075 = vpop.f32.mrf.mxu0
    %v7076 = vadd.f32 %v6981, %v7075
    %v7077 = vpop.f32.mrf.mxu0
    %v7078 = vadd.f32 %v6981, %v7077
    %7079 = vmatmul.bf16.gmra.mxu0 %v6955
    %v7080 = vpop.f32.mrf.mxu0
    %v7081 = vadd.f32 %v6981, %v7080
    %v7082 = vpop.f32.mrf.mxu0
    %v7083 = vadd.f32 %v6981, %v7082
    %7084 = vmatmul.bf16.gmra.mxu0 %v6956
    %v7085 = vpop.f32.mrf.mxu0
    %v7086 = vadd.f32 %v6981, %v7085
    %v7087 = vpop.f32.mrf.mxu0
    %v7088 = vadd.f32 %v6981, %v7087
    %7089 = vmatmul.bf16.gmra.mxu0 %v6957
    %v7090 = vpop.f32.mrf.mxu0
    %v7091 = vadd.f32 %v6981, %v7090
    %v7092 = vpop.f32.mrf.mxu0
    %v7093 = vadd.f32 %v6981, %v7092
    %7094 = vmatmul.bf16.gmra.mxu0 %v6958
    %v7095 = vpop.f32.mrf.mxu0
    %v7096 = vadd.f32 %v6981, %v7095
    %v7097 = vpop.f32.mrf.mxu0
    %v7098 = vadd.f32 %v6981, %v7097
    %7099 = vmatmul.bf16.gmra.mxu0 %v6959
    %v7100 = vpop.f32.mrf.mxu0
    %v7101 = vadd.f32 %v6981, %v7100
    %v7102 = vpop.f32.mrf.mxu0
    %v7103 = vadd.f32 %v6981, %v7102
    %7104 = vmatmul.bf16.gmra.mxu0 %v6960
    %v7105 = vpop.f32.mrf.mxu0
    %v7106 = vadd.f32 %v6981, %v7105
    %v7107 = vpop.f32.mrf.mxu0
    %v7108 = vadd.f32 %v6981, %v7107
    %7109 = vmatmul.bf16.gmra.mxu0 %v6961
    %v7110 = vpop.f32.mrf.mxu0
    %v7111 = vadd.f32 %v6981, %v7110
    %v7112 = vpop.f32.mrf.mxu0
    %v7113 = vadd.f32 %v6981, %v7112
    %7114 = vmatmul.bf16.gmra.mxu0 %v6962
    %v7115 = vpop.f32.mrf.mxu0
    %v7116 = vadd.f32 %v6981, %v7115
    %v7117 = vpop.f32.mrf.mxu0
    %v7118 = vadd.f32 %v6981, %v7117
    %7119 = vdwg.mxu0
    %v7120 = vxor.u32 %v7041, 2147483648
    %v7121 = vxor.u32 %v7043, 2147483648
    %v7122 = vxor.u32 %v7046, 2147483648
    %v7123 = vxor.u32 %v7048, 2147483648
    %v7124 = vxor.u32 %v7051, 2147483648
    %v7125 = vxor.u32 %v7053, 2147483648
    %v7126 = vxor.u32 %v7056, 2147483648
    %v7127 = vxor.u32 %v7058, 2147483648
    %v7128 = vxor.u32 %v7061, 2147483648
    %v7129 = vxor.u32 %v7063, 2147483648
    %v7130 = vxor.u32 %v7066, 2147483648
    %v7131 = vxor.u32 %v7068, 2147483648
    %v7132 = vxor.u32 %v7071, 2147483648
    %v7133 = vxor.u32 %v7073, 2147483648
    %v7134 = vxor.u32 %v7076, 2147483648
    %v7135 = vxor.u32 %v7078, 2147483648
    %v7136 = vxor.u32 %v7081, 2147483648
    %v7137 = vxor.u32 %v7083, 2147483648
    %v7138 = vxor.u32 %v7086, 2147483648
    %v7139 = vxor.u32 %v7088, 2147483648
    %v7140 = vxor.u32 %v7091, 2147483648
    %v7141 = vxor.u32 %v7093, 2147483648
    %v7142 = vxor.u32 %v7096, 2147483648
    %v7143 = vxor.u32 %v7098, 2147483648
    %v7144 = vxor.u32 %v7101, 2147483648
    %v7145 = vxor.u32 %v7103, 2147483648
    %v7146 = vxor.u32 %v7106, 2147483648
    %v7147 = vxor.u32 %v7108, 2147483648
    %v7148 = vxor.u32 %v7111, 2147483648
    %v7149 = vxor.u32 %v7113, 2147483648
    %v7150 = vxor.u32 %v7116, 2147483648
    %v7151 = vxor.u32 %v7118, 2147483648
    %v7152 = vmul.f32 %v7120, 1.442695
    %v7153 = vpow.pop %v7152
    %v7154 = vmul.f32 %v7121, 1.442695
    %v7155 = vpow.pop %v7154
    %v7156 = vmul.f32 %v7122, 1.442695
    %v7157 = vpow.pop %v7156
    %v7158 = vmul.f32 %v7123, 1.442695
    %v7159 = vpow.pop %v7158
    %v7160 = vmul.f32 %v7124, 1.442695
    %v7161 = vpow.pop %v7160
    %v7162 = vmul.f32 %v7125, 1.442695
    %v7163 = vpow.pop %v7162
    %v7164 = vmul.f32 %v7126, 1.442695
    %v7165 = vpow.pop %v7164
    %v7166 = vmul.f32 %v7127, 1.442695
    %v7167 = vpow.pop %v7166
    %v7168 = vmul.f32 %v7128, 1.442695
    %v7169 = vpow.pop %v7168
    %v7170 = vmul.f32 %v7129, 1.442695
    %v7171 = vpow.pop %v7170
    %v7172 = vmul.f32 %v7130, 1.442695
    %v7173 = vpow.pop %v7172
    %v7174 = vmul.f32 %v7131, 1.442695
    %v7175 = vpow.pop %v7174
    %v7176 = vmul.f32 %v7132, 1.442695
    %v7177 = vpow.pop %v7176
    %v7178 = vmul.f32 %v7133, 1.442695
    %v7179 = vpow.pop %v7178
    %v7180 = vmul.f32 %v7134, 1.442695
    %v7181 = vpow.pop %v7180
    %v7182 = vmul.f32 %v7135, 1.442695
    %v7183 = vpow.pop %v7182
    %v7184 = vmul.f32 %v7136, 1.442695
    %v7185 = vpow.pop %v7184
    %v7186 = vmul.f32 %v7137, 1.442695
    %v7187 = vpow.pop %v7186
    %v7188 = vmul.f32 %v7138, 1.442695
    %v7189 = vpow.pop %v7188
    %v7190 = vmul.f32 %v7139, 1.442695
    %v7191 = vpow.pop %v7190
    %v7192 = vmul.f32 %v7140, 1.442695
    %v7193 = vpow.pop %v7192
    %v7194 = vmul.f32 %v7141, 1.442695
    %v7195 = vpow.pop %v7194
    %v7196 = vmul.f32 %v7142, 1.442695
    %v7197 = vpow.pop %v7196
    %v7198 = vmul.f32 %v7143, 1.442695
    %v7199 = vpow.pop %v7198
    %v7200 = vmul.f32 %v7144, 1.442695
    %v7201 = vpow.pop %v7200
    %v7202 = vmul.f32 %v7145, 1.442695
    %v7203 = vpow.pop %v7202
    %v7204 = vmul.f32 %v7146, 1.442695
    %v7205 = vpow.pop %v7204
    %v7206 = vmul.f32 %v7147, 1.442695
    %v7207 = vpow.pop %v7206
    %v7208 = vmul.f32 %v7148, 1.442695
    %v7209 = vpow.pop %v7208
    %v7210 = vmul.f32 %v7149, 1.442695
    %v7211 = vpow.pop %v7210
    %v7212 = vmul.f32 %v7150, 1.442695
    %v7213 = vpow.pop %v7212
    %v7214 = vmul.f32 %v7151, 1.442695
    %v7215 = vpow.pop %v7214
    %v7216 = vadd.f32 %v7153, 1.0
    %v7217 = vadd.f32 %v7155, 1.0
    %v7218 = vadd.f32 %v7157, 1.0
    %v7219 = vadd.f32 %v7159, 1.0
    %v7220 = vadd.f32 %v7161, 1.0
    %v7221 = vadd.f32 %v7163, 1.0
    %v7222 = vadd.f32 %v7165, 1.0
    %v7223 = vadd.f32 %v7167, 1.0
    %v7224 = vadd.f32 %v7169, 1.0
    %v7225 = vadd.f32 %v7171, 1.0
    %v7226 = vadd.f32 %v7173, 1.0
    %v7227 = vadd.f32 %v7175, 1.0
    %v7228 = vadd.f32 %v7177, 1.0
    %v7229 = vadd.f32 %v7179, 1.0
    %v7230 = vadd.f32 %v7181, 1.0
    %v7231 = vadd.f32 %v7183, 1.0
    %v7232 = vadd.f32 %v7185, 1.0
    %v7233 = vadd.f32 %v7187, 1.0
    %v7234 = vadd.f32 %v7189, 1.0
    %v7235 = vadd.f32 %v7191, 1.0
    %v7236 = vadd.f32 %v7193, 1.0
    %v7237 = vadd.f32 %v7195, 1.0
    %v7238 = vadd.f32 %v7197, 1.0
    %v7239 = vadd.f32 %v7199, 1.0
    %v7240 = vadd.f32 %v7201, 1.0
    %v7241 = vadd.f32 %v7203, 1.0
    %v7242 = vadd.f32 %v7205, 1.0
    %v7243 = vadd.f32 %v7207, 1.0
    %v7244 = vadd.f32 %v7209, 1.0
    %v7245 = vadd.f32 %v7211, 1.0
    %v7246 = vadd.f32 %v7213, 1.0
    %v7247 = vadd.f32 %v7215, 1.0
    %v7248 = vrcp.pop %v7216
    %v7249 = vmul.f32 %v7216, %v7248
    %v7250 = vsub.f32 1.0, %v7249
    %v7251 = vmul.f32 %v7248, %v7250
    %v7252 = vadd.f32 %v7248, %v7251
    %vm7253 = vweird.f32 %v7216
    %vm7254 = vweird.f32 %v7248
    %vm7255 = vmor %vm7253, %vm7254
    %v7256 = vsel %vm7255, %v7248, %v7252
    %v7257 = vand.u32 2147483647, %v7216
    %vm7258 = vcmp.eq.f32.partialorder %v7257, 8.507059e+37
    %v7259 = vand.u32 %v7216, 2147483648
    %v7260 = vor.u32 1.1754944e-38, %v7259
    %v7261 = vsel %vm7258, %v7260, %v7256
    %v7262 = vmul.f32 1.0, %v7261
    %v7263 = vrcp.pop %v7217
    %v7264 = vmul.f32 %v7217, %v7263
    %v7265 = vsub.f32 1.0, %v7264
    %v7266 = vmul.f32 %v7263, %v7265
    %v7267 = vadd.f32 %v7263, %v7266
    %vm7268 = vweird.f32 %v7217
    %vm7269 = vweird.f32 %v7263
    %vm7270 = vmor %vm7268, %vm7269
    %v7271 = vsel %vm7270, %v7263, %v7267
    %v7272 = vand.u32 2147483647, %v7217
    %vm7273 = vcmp.eq.f32.partialorder %v7272, 8.507059e+37
    %v7274 = vand.u32 %v7217, 2147483648
    %v7275 = vor.u32 1.1754944e-38, %v7274
    %v7276 = vsel %vm7273, %v7275, %v7271
    %v7277 = vmul.f32 1.0, %v7276
    %v7278 = vrcp.pop %v7218
    %v7279 = vmul.f32 %v7218, %v7278
    %v7280 = vsub.f32 1.0, %v7279
    %v7281 = vmul.f32 %v7278, %v7280
    %v7282 = vadd.f32 %v7278, %v7281
    %vm7283 = vweird.f32 %v7218
    %vm7284 = vweird.f32 %v7278
    %vm7285 = vmor %vm7283, %vm7284
    %v7286 = vsel %vm7285, %v7278, %v7282
    %v7287 = vand.u32 2147483647, %v7218
    %vm7288 = vcmp.eq.f32.partialorder %v7287, 8.507059e+37
    %v7289 = vand.u32 %v7218, 2147483648
    %v7290 = vor.u32 1.1754944e-38, %v7289
    %v7291 = vsel %vm7288, %v7290, %v7286
    %v7292 = vmul.f32 1.0, %v7291
    %v7293 = vrcp.pop %v7219
    %v7294 = vmul.f32 %v7219, %v7293
    %v7295 = vsub.f32 1.0, %v7294
    %v7296 = vmul.f32 %v7293, %v7295
    %v7297 = vadd.f32 %v7293, %v7296
    %vm7298 = vweird.f32 %v7219
    %vm7299 = vweird.f32 %v7293
    %vm7300 = vmor %vm7298, %vm7299
    %v7301 = vsel %vm7300, %v7293, %v7297
    %v7302 = vand.u32 2147483647, %v7219
    %vm7303 = vcmp.eq.f32.partialorder %v7302, 8.507059e+37
    %v7304 = vand.u32 %v7219, 2147483648
    %v7305 = vor.u32 1.1754944e-38, %v7304
    %v7306 = vsel %vm7303, %v7305, %v7301
    %v7307 = vmul.f32 1.0, %v7306
    %v7308 = vrcp.pop %v7220
    %v7309 = vmul.f32 %v7220, %v7308
    %v7310 = vsub.f32 1.0, %v7309
    %v7311 = vmul.f32 %v7308, %v7310
    %v7312 = vadd.f32 %v7308, %v7311
    %vm7313 = vweird.f32 %v7220
    %vm7314 = vweird.f32 %v7308
    %vm7315 = vmor %vm7313, %vm7314
    %v7316 = vsel %vm7315, %v7308, %v7312
    %v7317 = vand.u32 2147483647, %v7220
    %vm7318 = vcmp.eq.f32.partialorder %v7317, 8.507059e+37
    %v7319 = vand.u32 %v7220, 2147483648
    %v7320 = vor.u32 1.1754944e-38, %v7319
    %v7321 = vsel %vm7318, %v7320, %v7316
    %v7322 = vmul.f32 1.0, %v7321
    %v7323 = vrcp.pop %v7221
    %v7324 = vmul.f32 %v7221, %v7323
    %v7325 = vsub.f32 1.0, %v7324
    %v7326 = vmul.f32 %v7323, %v7325
    %v7327 = vadd.f32 %v7323, %v7326
    %vm7328 = vweird.f32 %v7221
    %vm7329 = vweird.f32 %v7323
    %vm7330 = vmor %vm7328, %vm7329
    %v7331 = vsel %vm7330, %v7323, %v7327
    %v7332 = vand.u32 2147483647, %v7221
    %vm7333 = vcmp.eq.f32.partialorder %v7332, 8.507059e+37
    %v7334 = vand.u32 %v7221, 2147483648
    %v7335 = vor.u32 1.1754944e-38, %v7334
    %v7336 = vsel %vm7333, %v7335, %v7331
    %v7337 = vmul.f32 1.0, %v7336
    %v7338 = vrcp.pop %v7222
    %v7339 = vmul.f32 %v7222, %v7338
    %v7340 = vsub.f32 1.0, %v7339
    %v7341 = vmul.f32 %v7338, %v7340
    %v7342 = vadd.f32 %v7338, %v7341
    %vm7343 = vweird.f32 %v7222
    %vm7344 = vweird.f32 %v7338
    %vm7345 = vmor %vm7343, %vm7344
    %v7346 = vsel %vm7345, %v7338, %v7342
    %v7347 = vand.u32 2147483647, %v7222
    %vm7348 = vcmp.eq.f32.partialorder %v7347, 8.507059e+37
    %v7349 = vand.u32 %v7222, 2147483648
    %v7350 = vor.u32 1.1754944e-38, %v7349
    %v7351 = vsel %vm7348, %v7350, %v7346
    %v7352 = vmul.f32 1.0, %v7351
    %v7353 = vrcp.pop %v7223
    %v7354 = vmul.f32 %v7223, %v7353
    %v7355 = vsub.f32 1.0, %v7354
    %v7356 = vmul.f32 %v7353, %v7355
    %v7357 = vadd.f32 %v7353, %v7356
    %vm7358 = vweird.f32 %v7223
    %vm7359 = vweird.f32 %v7353
    %vm7360 = vmor %vm7358, %vm7359
    %v7361 = vsel %vm7360, %v7353, %v7357
    %v7362 = vand.u32 2147483647, %v7223
    %vm7363 = vcmp.eq.f32.partialorder %v7362, 8.507059e+37
    %v7364 = vand.u32 %v7223, 2147483648
    %v7365 = vor.u32 1.1754944e-38, %v7364
    %v7366 = vsel %vm7363, %v7365, %v7361
    %v7367 = vmul.f32 1.0, %v7366
    %v7368 = vrcp.pop %v7224
    %v7369 = vmul.f32 %v7224, %v7368
    %v7370 = vsub.f32 1.0, %v7369
    %v7371 = vmul.f32 %v7368, %v7370
    %v7372 = vadd.f32 %v7368, %v7371
    %vm7373 = vweird.f32 %v7224
    %vm7374 = vweird.f32 %v7368
    %vm7375 = vmor %vm7373, %vm7374
    %v7376 = vsel %vm7375, %v7368, %v7372
    %v7377 = vand.u32 2147483647, %v7224
    %vm7378 = vcmp.eq.f32.partialorder %v7377, 8.507059e+37
    %v7379 = vand.u32 %v7224, 2147483648
    %v7380 = vor.u32 1.1754944e-38, %v7379
    %v7381 = vsel %vm7378, %v7380, %v7376
    %v7382 = vmul.f32 1.0, %v7381
    %v7383 = vrcp.pop %v7225
    %v7384 = vmul.f32 %v7225, %v7383
    %v7385 = vsub.f32 1.0, %v7384
    %v7386 = vmul.f32 %v7383, %v7385
    %v7387 = vadd.f32 %v7383, %v7386
    %vm7388 = vweird.f32 %v7225
    %vm7389 = vweird.f32 %v7383
    %vm7390 = vmor %vm7388, %vm7389
    %v7391 = vsel %vm7390, %v7383, %v7387
    %v7392 = vand.u32 2147483647, %v7225
    %vm7393 = vcmp.eq.f32.partialorder %v7392, 8.507059e+37
    %v7394 = vand.u32 %v7225, 2147483648
    %v7395 = vor.u32 1.1754944e-38, %v7394
    %v7396 = vsel %vm7393, %v7395, %v7391
    %v7397 = vmul.f32 1.0, %v7396
    %v7398 = vrcp.pop %v7226
    %v7399 = vmul.f32 %v7226, %v7398
    %v7400 = vsub.f32 1.0, %v7399
    %v7401 = vmul.f32 %v7398, %v7400
    %v7402 = vadd.f32 %v7398, %v7401
    %vm7403 = vweird.f32 %v7226
    %vm7404 = vweird.f32 %v7398
    %vm7405 = vmor %vm7403, %vm7404
    %v7406 = vsel %vm7405, %v7398, %v7402
    %v7407 = vand.u32 2147483647, %v7226
    %vm7408 = vcmp.eq.f32.partialorder %v7407, 8.507059e+37
    %v7409 = vand.u32 %v7226, 2147483648
    %v7410 = vor.u32 1.1754944e-38, %v7409
    %v7411 = vsel %vm7408, %v7410, %v7406
    %v7412 = vmul.f32 1.0, %v7411
    %v7413 = vrcp.pop %v7227
    %v7414 = vmul.f32 %v7227, %v7413
    %v7415 = vsub.f32 1.0, %v7414
    %v7416 = vmul.f32 %v7413, %v7415
    %v7417 = vadd.f32 %v7413, %v7416
    %vm7418 = vweird.f32 %v7227
    %vm7419 = vweird.f32 %v7413
    %vm7420 = vmor %vm7418, %vm7419
    %v7421 = vsel %vm7420, %v7413, %v7417
    %v7422 = vand.u32 2147483647, %v7227
    %vm7423 = vcmp.eq.f32.partialorder %v7422, 8.507059e+37
    %v7424 = vand.u32 %v7227, 2147483648
    %v7425 = vor.u32 1.1754944e-38, %v7424
    %v7426 = vsel %vm7423, %v7425, %v7421
    %v7427 = vmul.f32 1.0, %v7426
    %v7428 = vrcp.pop %v7228
    %v7429 = vmul.f32 %v7228, %v7428
    %v7430 = vsub.f32 1.0, %v7429
    %v7431 = vmul.f32 %v7428, %v7430
    %v7432 = vadd.f32 %v7428, %v7431
    %vm7433 = vweird.f32 %v7228
    %vm7434 = vweird.f32 %v7428
    %vm7435 = vmor %vm7433, %vm7434
    %v7436 = vsel %vm7435, %v7428, %v7432
    %v7437 = vand.u32 2147483647, %v7228
    %vm7438 = vcmp.eq.f32.partialorder %v7437, 8.507059e+37
    %v7439 = vand.u32 %v7228, 2147483648
    %v7440 = vor.u32 1.1754944e-38, %v7439
    %v7441 = vsel %vm7438, %v7440, %v7436
    %v7442 = vmul.f32 1.0, %v7441
    %v7443 = vrcp.pop %v7229
    %v7444 = vmul.f32 %v7229, %v7443
    %v7445 = vsub.f32 1.0, %v7444
    %v7446 = vmul.f32 %v7443, %v7445
    %v7447 = vadd.f32 %v7443, %v7446
    %vm7448 = vweird.f32 %v7229
    %vm7449 = vweird.f32 %v7443
    %vm7450 = vmor %vm7448, %vm7449
    %v7451 = vsel %vm7450, %v7443, %v7447
    %v7452 = vand.u32 2147483647, %v7229
    %vm7453 = vcmp.eq.f32.partialorder %v7452, 8.507059e+37
    %v7454 = vand.u32 %v7229, 2147483648
    %v7455 = vor.u32 1.1754944e-38, %v7454
    %v7456 = vsel %vm7453, %v7455, %v7451
    %v7457 = vmul.f32 1.0, %v7456
    %v7458 = vrcp.pop %v7230
    %v7459 = vmul.f32 %v7230, %v7458
    %v7460 = vsub.f32 1.0, %v7459
    %v7461 = vmul.f32 %v7458, %v7460
    %v7462 = vadd.f32 %v7458, %v7461
    %vm7463 = vweird.f32 %v7230
    %vm7464 = vweird.f32 %v7458
    %vm7465 = vmor %vm7463, %vm7464
    %v7466 = vsel %vm7465, %v7458, %v7462
    %v7467 = vand.u32 2147483647, %v7230
    %vm7468 = vcmp.eq.f32.partialorder %v7467, 8.507059e+37
    %v7469 = vand.u32 %v7230, 2147483648
    %v7470 = vor.u32 1.1754944e-38, %v7469
    %v7471 = vsel %vm7468, %v7470, %v7466
    %v7472 = vmul.f32 1.0, %v7471
    %v7473 = vrcp.pop %v7231
    %v7474 = vmul.f32 %v7231, %v7473
    %v7475 = vsub.f32 1.0, %v7474
    %v7476 = vmul.f32 %v7473, %v7475
    %v7477 = vadd.f32 %v7473, %v7476
    %vm7478 = vweird.f32 %v7231
    %vm7479 = vweird.f32 %v7473
    %vm7480 = vmor %vm7478, %vm7479
    %v7481 = vsel %vm7480, %v7473, %v7477
    %v7482 = vand.u32 2147483647, %v7231
    %vm7483 = vcmp.eq.f32.partialorder %v7482, 8.507059e+37
    %v7484 = vand.u32 %v7231, 2147483648
    %v7485 = vor.u32 1.1754944e-38, %v7484
    %v7486 = vsel %vm7483, %v7485, %v7481
    %v7487 = vmul.f32 1.0, %v7486
    %v7488 = vrcp.pop %v7232
    %v7489 = vmul.f32 %v7232, %v7488
    %v7490 = vsub.f32 1.0, %v7489
    %v7491 = vmul.f32 %v7488, %v7490
    %v7492 = vadd.f32 %v7488, %v7491
    %vm7493 = vweird.f32 %v7232
    %vm7494 = vweird.f32 %v7488
    %vm7495 = vmor %vm7493, %vm7494
    %v7496 = vsel %vm7495, %v7488, %v7492
    %v7497 = vand.u32 2147483647, %v7232
    %vm7498 = vcmp.eq.f32.partialorder %v7497, 8.507059e+37
    %v7499 = vand.u32 %v7232, 2147483648
    %v7500 = vor.u32 1.1754944e-38, %v7499
    %v7501 = vsel %vm7498, %v7500, %v7496
    %v7502 = vmul.f32 1.0, %v7501
    %v7503 = vrcp.pop %v7233
    %v7504 = vmul.f32 %v7233, %v7503
    %v7505 = vsub.f32 1.0, %v7504
    %v7506 = vmul.f32 %v7503, %v7505
    %v7507 = vadd.f32 %v7503, %v7506
    %vm7508 = vweird.f32 %v7233
    %vm7509 = vweird.f32 %v7503
    %vm7510 = vmor %vm7508, %vm7509
    %v7511 = vsel %vm7510, %v7503, %v7507
    %v7512 = vand.u32 2147483647, %v7233
    %vm7513 = vcmp.eq.f32.partialorder %v7512, 8.507059e+37
    %v7514 = vand.u32 %v7233, 2147483648
    %v7515 = vor.u32 1.1754944e-38, %v7514
    %v7516 = vsel %vm7513, %v7515, %v7511
    %v7517 = vmul.f32 1.0, %v7516
    %v7518 = vrcp.pop %v7234
    %v7519 = vmul.f32 %v7234, %v7518
    %v7520 = vsub.f32 1.0, %v7519
    %v7521 = vmul.f32 %v7518, %v7520
    %v7522 = vadd.f32 %v7518, %v7521
    %vm7523 = vweird.f32 %v7234
    %vm7524 = vweird.f32 %v7518
    %vm7525 = vmor %vm7523, %vm7524
    %v7526 = vsel %vm7525, %v7518, %v7522
    %v7527 = vand.u32 2147483647, %v7234
    %vm7528 = vcmp.eq.f32.partialorder %v7527, 8.507059e+37
    %v7529 = vand.u32 %v7234, 2147483648
    %v7530 = vor.u32 1.1754944e-38, %v7529
    %v7531 = vsel %vm7528, %v7530, %v7526
    %v7532 = vmul.f32 1.0, %v7531
    %v7533 = vrcp.pop %v7235
    %v7534 = vmul.f32 %v7235, %v7533
    %v7535 = vsub.f32 1.0, %v7534
    %v7536 = vmul.f32 %v7533, %v7535
    %v7537 = vadd.f32 %v7533, %v7536
    %vm7538 = vweird.f32 %v7235
    %vm7539 = vweird.f32 %v7533
    %vm7540 = vmor %vm7538, %vm7539
    %v7541 = vsel %vm7540, %v7533, %v7537
    %v7542 = vand.u32 2147483647, %v7235
    %vm7543 = vcmp.eq.f32.partialorder %v7542, 8.507059e+37
    %v7544 = vand.u32 %v7235, 2147483648
    %v7545 = vor.u32 1.1754944e-38, %v7544
    %v7546 = vsel %vm7543, %v7545, %v7541
    %v7547 = vmul.f32 1.0, %v7546
    %v7548 = vrcp.pop %v7236
    %v7549 = vmul.f32 %v7236, %v7548
    %v7550 = vsub.f32 1.0, %v7549
    %v7551 = vmul.f32 %v7548, %v7550
    %v7552 = vadd.f32 %v7548, %v7551
    %vm7553 = vweird.f32 %v7236
    %vm7554 = vweird.f32 %v7548
    %vm7555 = vmor %vm7553, %vm7554
    %v7556 = vsel %vm7555, %v7548, %v7552
    %v7557 = vand.u32 2147483647, %v7236
    %vm7558 = vcmp.eq.f32.partialorder %v7557, 8.507059e+37
    %v7559 = vand.u32 %v7236, 2147483648
    %v7560 = vor.u32 1.1754944e-38, %v7559
    %v7561 = vsel %vm7558, %v7560, %v7556
    %v7562 = vmul.f32 1.0, %v7561
    %v7563 = vrcp.pop %v7237
    %v7564 = vmul.f32 %v7237, %v7563
    %v7565 = vsub.f32 1.0, %v7564
    %v7566 = vmul.f32 %v7563, %v7565
    %v7567 = vadd.f32 %v7563, %v7566
    %vm7568 = vweird.f32 %v7237
    %vm7569 = vweird.f32 %v7563
    %vm7570 = vmor %vm7568, %vm7569
    %v7571 = vsel %vm7570, %v7563, %v7567
    %v7572 = vand.u32 2147483647, %v7237
    %vm7573 = vcmp.eq.f32.partialorder %v7572, 8.507059e+37
    %v7574 = vand.u32 %v7237, 2147483648
    %v7575 = vor.u32 1.1754944e-38, %v7574
    %v7576 = vsel %vm7573, %v7575, %v7571
    %v7577 = vmul.f32 1.0, %v7576
    %v7578 = vrcp.pop %v7238
    %v7579 = vmul.f32 %v7238, %v7578
    %v7580 = vsub.f32 1.0, %v7579
    %v7581 = vmul.f32 %v7578, %v7580
    %v7582 = vadd.f32 %v7578, %v7581
    %vm7583 = vweird.f32 %v7238
    %vm7584 = vweird.f32 %v7578
    %vm7585 = vmor %vm7583, %vm7584
    %v7586 = vsel %vm7585, %v7578, %v7582
    %v7587 = vand.u32 2147483647, %v7238
    %vm7588 = vcmp.eq.f32.partialorder %v7587, 8.507059e+37
    %v7589 = vand.u32 %v7238, 2147483648
    %v7590 = vor.u32 1.1754944e-38, %v7589
    %v7591 = vsel %vm7588, %v7590, %v7586
    %v7592 = vmul.f32 1.0, %v7591
    %v7593 = vrcp.pop %v7239
    %v7594 = vmul.f32 %v7239, %v7593
    %v7595 = vsub.f32 1.0, %v7594
    %v7596 = vmul.f32 %v7593, %v7595
    %v7597 = vadd.f32 %v7593, %v7596
    %vm7598 = vweird.f32 %v7239
    %vm7599 = vweird.f32 %v7593
    %vm7600 = vmor %vm7598, %vm7599
    %v7601 = vsel %vm7600, %v7593, %v7597
    %v7602 = vand.u32 2147483647, %v7239
    %vm7603 = vcmp.eq.f32.partialorder %v7602, 8.507059e+37
    %v7604 = vand.u32 %v7239, 2147483648
    %v7605 = vor.u32 1.1754944e-38, %v7604
    %v7606 = vsel %vm7603, %v7605, %v7601
    %v7607 = vmul.f32 1.0, %v7606
    %v7608 = vrcp.pop %v7240
    %v7609 = vmul.f32 %v7240, %v7608
    %v7610 = vsub.f32 1.0, %v7609
    %v7611 = vmul.f32 %v7608, %v7610
    %v7612 = vadd.f32 %v7608, %v7611
    %vm7613 = vweird.f32 %v7240
    %vm7614 = vweird.f32 %v7608
    %vm7615 = vmor %vm7613, %vm7614
    %v7616 = vsel %vm7615, %v7608, %v7612
    %v7617 = vand.u32 2147483647, %v7240
    %vm7618 = vcmp.eq.f32.partialorder %v7617, 8.507059e+37
    %v7619 = vand.u32 %v7240, 2147483648
    %v7620 = vor.u32 1.1754944e-38, %v7619
    %v7621 = vsel %vm7618, %v7620, %v7616
    %v7622 = vmul.f32 1.0, %v7621
    %v7623 = vrcp.pop %v7241
    %v7624 = vmul.f32 %v7241, %v7623
    %v7625 = vsub.f32 1.0, %v7624
    %v7626 = vmul.f32 %v7623, %v7625
    %v7627 = vadd.f32 %v7623, %v7626
    %vm7628 = vweird.f32 %v7241
    %vm7629 = vweird.f32 %v7623
    %vm7630 = vmor %vm7628, %vm7629
    %v7631 = vsel %vm7630, %v7623, %v7627
    %v7632 = vand.u32 2147483647, %v7241
    %vm7633 = vcmp.eq.f32.partialorder %v7632, 8.507059e+37
    %v7634 = vand.u32 %v7241, 2147483648
    %v7635 = vor.u32 1.1754944e-38, %v7634
    %v7636 = vsel %vm7633, %v7635, %v7631
    %v7637 = vmul.f32 1.0, %v7636
    %v7638 = vrcp.pop %v7242
    %v7639 = vmul.f32 %v7242, %v7638
    %v7640 = vsub.f32 1.0, %v7639
    %v7641 = vmul.f32 %v7638, %v7640
    %v7642 = vadd.f32 %v7638, %v7641
    %vm7643 = vweird.f32 %v7242
    %vm7644 = vweird.f32 %v7638
    %vm7645 = vmor %vm7643, %vm7644
    %v7646 = vsel %vm7645, %v7638, %v7642
    %v7647 = vand.u32 2147483647, %v7242
    %vm7648 = vcmp.eq.f32.partialorder %v7647, 8.507059e+37
    %v7649 = vand.u32 %v7242, 2147483648
    %v7650 = vor.u32 1.1754944e-38, %v7649
    %v7651 = vsel %vm7648, %v7650, %v7646
    %v7652 = vmul.f32 1.0, %v7651
    %v7653 = vrcp.pop %v7243
    %v7654 = vmul.f32 %v7243, %v7653
    %v7655 = vsub.f32 1.0, %v7654
    %v7656 = vmul.f32 %v7653, %v7655
    %v7657 = vadd.f32 %v7653, %v7656
    %vm7658 = vweird.f32 %v7243
    %vm7659 = vweird.f32 %v7653
    %vm7660 = vmor %vm7658, %vm7659
    %v7661 = vsel %vm7660, %v7653, %v7657
    %v7662 = vand.u32 2147483647, %v7243
    %vm7663 = vcmp.eq.f32.partialorder %v7662, 8.507059e+37
    %v7664 = vand.u32 %v7243, 2147483648
    %v7665 = vor.u32 1.1754944e-38, %v7664
    %v7666 = vsel %vm7663, %v7665, %v7661
    %v7667 = vmul.f32 1.0, %v7666
    %v7668 = vrcp.pop %v7244
    %v7669 = vmul.f32 %v7244, %v7668
    %v7670 = vsub.f32 1.0, %v7669
    %v7671 = vmul.f32 %v7668, %v7670
    %v7672 = vadd.f32 %v7668, %v7671
    %vm7673 = vweird.f32 %v7244
    %vm7674 = vweird.f32 %v7668
    %vm7675 = vmor %vm7673, %vm7674
    %v7676 = vsel %vm7675, %v7668, %v7672
    %v7677 = vand.u32 2147483647, %v7244
    %vm7678 = vcmp.eq.f32.partialorder %v7677, 8.507059e+37
    %v7679 = vand.u32 %v7244, 2147483648
    %v7680 = vor.u32 1.1754944e-38, %v7679
    %v7681 = vsel %vm7678, %v7680, %v7676
    %v7682 = vmul.f32 1.0, %v7681
    %v7683 = vrcp.pop %v7245
    %v7684 = vmul.f32 %v7245, %v7683
    %v7685 = vsub.f32 1.0, %v7684
    %v7686 = vmul.f32 %v7683, %v7685
    %v7687 = vadd.f32 %v7683, %v7686
    %vm7688 = vweird.f32 %v7245
    %vm7689 = vweird.f32 %v7683
    %vm7690 = vmor %vm7688, %vm7689
    %v7691 = vsel %vm7690, %v7683, %v7687
    %v7692 = vand.u32 2147483647, %v7245
    %vm7693 = vcmp.eq.f32.partialorder %v7692, 8.507059e+37
    %v7694 = vand.u32 %v7245, 2147483648
    %v7695 = vor.u32 1.1754944e-38, %v7694
    %v7696 = vsel %vm7693, %v7695, %v7691
    %v7697 = vmul.f32 1.0, %v7696
    %v7698 = vrcp.pop %v7246
    %v7699 = vmul.f32 %v7246, %v7698
    %v7700 = vsub.f32 1.0, %v7699
    %v7701 = vmul.f32 %v7698, %v7700
    %v7702 = vadd.f32 %v7698, %v7701
    %vm7703 = vweird.f32 %v7246
    %vm7704 = vweird.f32 %v7698
    %vm7705 = vmor %vm7703, %vm7704
    %v7706 = vsel %vm7705, %v7698, %v7702
    %v7707 = vand.u32 2147483647, %v7246
    %vm7708 = vcmp.eq.f32.partialorder %v7707, 8.507059e+37
    %v7709 = vand.u32 %v7246, 2147483648
    %v7710 = vor.u32 1.1754944e-38, %v7709
    %v7711 = vsel %vm7708, %v7710, %v7706
    %v7712 = vmul.f32 1.0, %v7711
    %v7713 = vrcp.pop %v7247
    %v7714 = vmul.f32 %v7247, %v7713
    %v7715 = vsub.f32 1.0, %v7714
    %v7716 = vmul.f32 %v7713, %v7715
    %v7717 = vadd.f32 %v7713, %v7716
    %vm7718 = vweird.f32 %v7247
    %vm7719 = vweird.f32 %v7713
    %vm7720 = vmor %vm7718, %vm7719
    %v7721 = vsel %vm7720, %v7713, %v7717
    %v7722 = vand.u32 2147483647, %v7247
    %vm7723 = vcmp.eq.f32.partialorder %v7722, 8.507059e+37
    %v7724 = vand.u32 %v7247, 2147483648
    %v7725 = vor.u32 1.1754944e-38, %v7724
    %v7726 = vsel %vm7723, %v7725, %v7721
    %v7727 = vmul.f32 1.0, %v7726
    %vm7728 = vcmask 23552
    %7729 = vst.msk [vmem:[%s24] sm:$0xff] %vm7728, %v7262
    %7730 = vst.msk [vmem:[%s24 + $0x8] sm:$0xff] %vm7728, %v7277
    %7731 = vst.msk [vmem:[%s24 + $0x10] sm:$0xff] %vm7728, %v7292
    %7732 = vst.msk [vmem:[%s24 + $0x18] sm:$0xff] %vm7728, %v7307
    %7733 = vst.msk [vmem:[%s24 + $0x20] sm:$0xff] %vm7728, %v7322
    %7734 = vst.msk [vmem:[%s24 + $0x28] sm:$0xff] %vm7728, %v7337
    %7735 = vst.msk [vmem:[%s24 + $0x30] sm:$0xff] %vm7728, %v7352
    %7736 = vst.msk [vmem:[%s24 + $0x38] sm:$0xff] %vm7728, %v7367
    %7737 = vst.msk [vmem:[%s24 + $0x40] sm:$0xff] %vm7728, %v7382
    %7738 = vst.msk [vmem:[%s24 + $0x48] sm:$0xff] %vm7728, %v7397
    %7739 = vst.msk [vmem:[%s24 + $0x50] sm:$0xff] %vm7728, %v7412
    %7740 = vst.msk [vmem:[%s24 + $0x58] sm:$0xff] %vm7728, %v7427
    %7741 = vst.msk [vmem:[%s24 + $0x60] sm:$0xff] %vm7728, %v7442
    %7742 = vst.msk [vmem:[%s24 + $0x68] sm:$0xff] %vm7728, %v7457
    %7743 = vst.msk [vmem:[%s24 + $0x70] sm:$0xff] %vm7728, %v7472
    %7744 = vst.msk [vmem:[%s24 + $0x78] sm:$0xff] %vm7728, %v7487
    %7745 = vst.msk [vmem:[%s24 + $0x80] sm:$0xff] %vm7728, %v7502
    %7746 = vst.msk [vmem:[%s24 + $0x88] sm:$0xff] %vm7728, %v7517
    %7747 = vst.msk [vmem:[%s24 + $0x90] sm:$0xff] %vm7728, %v7532
    %7748 = vst.msk [vmem:[%s24 + $0x98] sm:$0xff] %vm7728, %v7547
    %7749 = vst.msk [vmem:[%s24 + $0xa0] sm:$0xff] %vm7728, %v7562
    %7750 = vst.msk [vmem:[%s24 + $0xa8] sm:$0xff] %vm7728, %v7577
    %7751 = vst.msk [vmem:[%s24 + $0xb0] sm:$0xff] %vm7728, %v7592
    %7752 = vst.msk [vmem:[%s24 + $0xb8] sm:$0xff] %vm7728, %v7607
    %7753 = vst.msk [vmem:[%s24 + $0xc0] sm:$0xff] %vm7728, %v7622
    %7754 = vst.msk [vmem:[%s24 + $0xc8] sm:$0xff] %vm7728, %v7637
    %7755 = vst.msk [vmem:[%s24 + $0xd0] sm:$0xff] %vm7728, %v7652
    %7756 = vst.msk [vmem:[%s24 + $0xd8] sm:$0xff] %vm7728, %v7667
    %7757 = vst.msk [vmem:[%s24 + $0xe0] sm:$0xff] %vm7728, %v7682
    %7758 = vst.msk [vmem:[%s24 + $0xe8] sm:$0xff] %vm7728, %v7697
    %7759 = vst.msk [vmem:[%s24 + $0xf0] sm:$0xff] %vm7728, %v7712
    %7760 = vst.msk [vmem:[%s24 + $0xf8] sm:$0xff] %vm7728, %v7727
    %7793 = vrot.lane.b32.xlu0 %v6315, 3
    %v7794 = vpop.permute.xlu0 %7793
    %7795 = vrot.lane.b32.xlu0 %v6316, 3
    %v7796 = vpop.permute.xlu0 %7795
    %7797 = vrot.lane.b32.xlu0 %v6317, 3
    %v7798 = vpop.permute.xlu0 %7797
    %7799 = vrot.lane.b32.xlu0 %v6318, 3
    %v7800 = vpop.permute.xlu0 %7799
    %7801 = vrot.lane.b32.xlu0 %v6319, 3
    %v7802 = vpop.permute.xlu0 %7801
    %7803 = vrot.lane.b32.xlu0 %v6320, 3
    %v7804 = vpop.permute.xlu0 %7803
    %7805 = vrot.lane.b32.xlu0 %v6321, 3
    %v7806 = vpop.permute.xlu0 %7805
    %7807 = vrot.lane.b32.xlu0 %v6322, 3
    %v7808 = vpop.permute.xlu0 %7807
    %7809 = vrot.lane.b32.xlu0 %v6323, 3
    %v7810 = vpop.permute.xlu0 %7809
    %7811 = vrot.lane.b32.xlu0 %v6324, 3
    %v7812 = vpop.permute.xlu0 %7811
    %7813 = vrot.lane.b32.xlu0 %v6325, 3
    %v7814 = vpop.permute.xlu0 %7813
    %7815 = vrot.lane.b32.xlu0 %v6326, 3
    %v7816 = vpop.permute.xlu0 %7815
    %7817 = vrot.lane.b32.xlu0 %v6327, 3
    %v7818 = vpop.permute.xlu0 %7817
    %7819 = vrot.lane.b32.xlu0 %v6328, 3
    %v7820 = vpop.permute.xlu0 %7819
    %7821 = vrot.lane.b32.xlu0 %v6329, 3
    %v7822 = vpop.permute.xlu0 %7821
    %7823 = vrot.lane.b32.xlu0 %v6330, 3
    %v7824 = vpop.permute.xlu0 %7823
    %7825 = vrot.lane.b32.xlu0 %v6331, 3
    %v7826 = vpop.permute.xlu0 %7825
    %7827 = vrot.lane.b32.xlu0 %v6332, 3
    %v7828 = vpop.permute.xlu0 %7827
    %7829 = vrot.lane.b32.xlu0 %v6333, 3
    %v7830 = vpop.permute.xlu0 %7829
    %7831 = vrot.lane.b32.xlu0 %v6334, 3
    %v7832 = vpop.permute.xlu0 %7831
    %7833 = vrot.lane.b32.xlu0 %v6335, 3
    %v7834 = vpop.permute.xlu0 %7833
    %7835 = vrot.lane.b32.xlu0 %v6336, 3
    %v7836 = vpop.permute.xlu0 %7835
    %7837 = vrot.lane.b32.xlu0 %v6337, 3
    %v7838 = vpop.permute.xlu0 %7837
    %7839 = vrot.lane.b32.xlu0 %v6338, 3
    %v7840 = vpop.permute.xlu0 %7839
    %7841 = vrot.lane.b32.xlu0 %v6339, 3
    %v7842 = vpop.permute.xlu0 %7841
    %7843 = vrot.lane.b32.xlu0 %v6340, 3
    %v7844 = vpop.permute.xlu0 %7843
    %7845 = vrot.lane.b32.xlu0 %v6341, 3
    %v7846 = vpop.permute.xlu0 %7845
    %7847 = vrot.lane.b32.xlu0 %v6342, 3
    %v7848 = vpop.permute.xlu0 %7847
    %7849 = vrot.lane.b32.xlu0 %v6343, 3
    %v7850 = vpop.permute.xlu0 %7849
    %7851 = vrot.lane.b32.xlu0 %v6344, 3
    %v7852 = vpop.permute.xlu0 %7851
    %7853 = vrot.lane.b32.xlu0 %v6345, 3
    %v7854 = vpop.permute.xlu0 %7853
    %7855 = vrot.lane.b32.xlu0 %v6346, 3
    %v7856 = vpop.permute.xlu0 %7855
    %vm7889 = vcmask 31768
    %7890 = vst.msk [vmem:[%s24] sm:$0xff] %vm7889, %v7794
    %7891 = vst.msk [vmem:[%s24 + $0x8] sm:$0xff] %vm7889, %v7796
    %7892 = vst.msk [vmem:[%s24 + $0x10] sm:$0xff] %vm7889, %v7798
    %7893 = vst.msk [vmem:[%s24 + $0x18] sm:$0xff] %vm7889, %v7800
    %7894 = vst.msk [vmem:[%s24 + $0x20] sm:$0xff] %vm7889, %v7802
    %7895 = vst.msk [vmem:[%s24 + $0x28] sm:$0xff] %vm7889, %v7804
    %7896 = vst.msk [vmem:[%s24 + $0x30] sm:$0xff] %vm7889, %v7806
    %7897 = vst.msk [vmem:[%s24 + $0x38] sm:$0xff] %vm7889, %v7808
    %7898 = vst.msk [vmem:[%s24 + $0x40] sm:$0xff] %vm7889, %v7810
    %7899 = vst.msk [vmem:[%s24 + $0x48] sm:$0xff] %vm7889, %v7812
    %7900 = vst.msk [vmem:[%s24 + $0x50] sm:$0xff] %vm7889, %v7814
    %7901 = vst.msk [vmem:[%s24 + $0x58] sm:$0xff] %vm7889, %v7816
    %7902 = vst.msk [vmem:[%s24 + $0x60] sm:$0xff] %vm7889, %v7818
    %7903 = vst.msk [vmem:[%s24 + $0x68] sm:$0xff] %vm7889, %v7820
    %7904 = vst.msk [vmem:[%s24 + $0x70] sm:$0xff] %vm7889, %v7822
    %7905 = vst.msk [vmem:[%s24 + $0x78] sm:$0xff] %vm7889, %v7824
    %7906 = vst.msk [vmem:[%s24 + $0x80] sm:$0xff] %vm7889, %v7826
    %7907 = vst.msk [vmem:[%s24 + $0x88] sm:$0xff] %vm7889, %v7828
    %7908 = vst.msk [vmem:[%s24 + $0x90] sm:$0xff] %vm7889, %v7830
    %7909 = vst.msk [vmem:[%s24 + $0x98] sm:$0xff] %vm7889, %v7832
    %7910 = vst.msk [vmem:[%s24 + $0xa0] sm:$0xff] %vm7889, %v7834
    %7911 = vst.msk [vmem:[%s24 + $0xa8] sm:$0xff] %vm7889, %v7836
    %7912 = vst.msk [vmem:[%s24 + $0xb0] sm:$0xff] %vm7889, %v7838
    %7913 = vst.msk [vmem:[%s24 + $0xb8] sm:$0xff] %vm7889, %v7840
    %7914 = vst.msk [vmem:[%s24 + $0xc0] sm:$0xff] %vm7889, %v7842
    %7915 = vst.msk [vmem:[%s24 + $0xc8] sm:$0xff] %vm7889, %v7844
    %7916 = vst.msk [vmem:[%s24 + $0xd0] sm:$0xff] %vm7889, %v7846
    %7917 = vst.msk [vmem:[%s24 + $0xd8] sm:$0xff] %vm7889, %v7848
    %7918 = vst.msk [vmem:[%s24 + $0xe0] sm:$0xff] %vm7889, %v7850
    %7919 = vst.msk [vmem:[%s24 + $0xe8] sm:$0xff] %vm7889, %v7852
    %7920 = vst.msk [vmem:[%s24 + $0xf0] sm:$0xff] %vm7889, %v7854
    %7921 = vst.msk [vmem:[%s24 + $0xf8] sm:$0xff] %vm7889, %v7856
    // Predicated region
    $region122: #{tpu_custom_call.1} parent=1 // pred_check
      _
    $region123: #{tpu_custom_call.1} parent=1 // pred_check_branch
      %7923 = sbr.rel (0) target = $region125
    $region124: #{tpu_custom_call.1} parent=1 // pred_region
      _
    $region125: #{tpu_custom_call.1} parent=1 // pred_fallthru
      _
    // Predicated region
    $region126: #{tpu_custom_call.1} parent=1 // pred_check
      _
    $region127: #{tpu_custom_call.1} parent=1 // pred_check_branch
      %7925 = sbr.rel (0) target = $region129
    $region128: #{tpu_custom_call.1} parent=1 // pred_region
      _
    $region129: #{tpu_custom_call.1} parent=1 // pred_fallthru
      _
    %7926 = vsyncpa [#allocation3], 1
    %7927 = vsyncpa [#allocation5], 1
    %7928 = vsyncpa [#allocation8], 1
    %7929 = vsyncpa [#allocation11], 1

</llo_original>
